<compile_context>
chip_gen: v5e
topology: v5e:2x2
jax: 0.10.0
libtpu: 0.0.40
codegen_flags: <defaults>
</compile_context>

<pallas_src>
import jax
import jax.numpy as jnp
from jax.experimental import pallas as pl
from jax.experimental.pallas import tpu as pltpu


# ----------------------------------------------------------------------------
# Pallas kernels
# ----------------------------------------------------------------------------

def _matmul_bias_relu6_kernel(x_ref, w_ref, bias_ref, o_ref):
    # x: (tm, K) bf16, w: (K, tn) bf16 (BN scale pre-folded), bias: (1, tn) f32
    acc = jnp.dot(x_ref[...], w_ref[...], preferred_element_type=jnp.float32)
    y = acc + bias_ref[...]
    o_ref[...] = jnp.clip(y, 0.0, 6.0).astype(o_ref.dtype)


def _dw_s1_kernel(x_ref, w_ref, b_ref, o_ref):
    # stride-1 depthwise 3x3.
    # x: (1, H+2, W+2, C) bf16 (padded image), w: (9, 1, C) f32 (scale folded),
    # b: (1, C) f32, o: (1, H, W, C) bf16
    H, W = o_ref.shape[1], o_ref.shape[2]
    xp = x_ref[0]                                   # (H+2, W+2, C) bf16
    acc = None
    for dy in range(3):
        for dx in range(3):
            t = dy * 3 + dx
            tap = xp[dy:dy + H, dx:dx + W, :] * w_ref[t]   # -> f32
            acc = tap if acc is None else acc + tap
    y = acc + b_ref[...]
    o_ref[...] = jnp.clip(y, 0.0, 6.0)[None].astype(o_ref.dtype)


def _dw_s2_kernel(p00_ref, p01_ref, p10_ref, p11_ref, w_ref, b_ref, o_ref):
    # stride-2 depthwise 3x3 on pixel-unshuffled phases (no strided access).
    # p00: (1, Ho+1, Wo+1, C)  p01: (1, Ho+1, Wo, C)
    # p10: (1, Ho,   Wo+1, C)  p11: (1, Ho,   Wo, C)
    Ho, Wo = o_ref.shape[1], o_ref.shape[2]
    p00 = p00_ref[0]
    p01 = p01_ref[0]
    p10 = p10_ref[0]
    p11 = p11_ref[0]
    acc = (p00[:Ho, :Wo, :] * w_ref[0]            # (dy, dx) = (0, 0)
           + p01[:Ho, :Wo, :] * w_ref[1]          # (0, 1)
           + p00[:Ho, 1:1 + Wo, :] * w_ref[2]     # (0, 2)
           + p10[:Ho, :Wo, :] * w_ref[3]          # (1, 0)
           + p11[:Ho, :Wo, :] * w_ref[4]          # (1, 1)
           + p10[:Ho, 1:1 + Wo, :] * w_ref[5]     # (1, 2)
           + p00[1:1 + Ho, :Wo, :] * w_ref[6]     # (2, 0)
           + p01[1:1 + Ho, :Wo, :] * w_ref[7]     # (2, 1)
           + p00[1:1 + Ho, 1:1 + Wo, :] * w_ref[8])  # (2, 2)
    y = acc + b_ref[...]
    o_ref[...] = jnp.clip(y, 0.0, 6.0)[None].astype(o_ref.dtype)


def _avgpool_kernel(x_ref, o_ref):
    # x: (1, P, C) bf16 -> o: (1, 1, C) f32 global spatial mean
    o_ref[...] = jnp.mean(x_ref[...].astype(jnp.float32), axis=1, keepdims=True)


def _fc_softmax_kernel(x_ref, w_ref, b_ref, o_ref):
    # x: (N, C) f32, w: (C, num_classes) f32, b: (1, num_classes) f32
    y = jnp.dot(x_ref[...], w_ref[...], preferred_element_type=jnp.float32)
    y = y + b_ref[...]
    y = y - jnp.max(y, axis=-1, keepdims=True)
    e = jnp.exp(y)
    o_ref[...] = (e / jnp.sum(e, axis=-1, keepdims=True)).astype(o_ref.dtype)


# ----------------------------------------------------------------------------
# Kernel wrappers (glue: padding, im2col for first conv, reshapes)
# ----------------------------------------------------------------------------

_VMEM_LIMIT = 32 * 1024 * 1024


def matmul_bias_relu6(x, w, bias, out_dtype=jnp.bfloat16):
    # x: (M, K) bf16, w: (K, N) bf16, bias: (N,) f32
    M, K = x.shape
    N = w.shape[1]
    tm = 512 if M >= 512 else M
    tn = N if N <= 512 else 512
    grid = (pl.cdiv(M, tm), pl.cdiv(N, tn))
    flops = 2 * M * K * N
    bytes_accessed = 2 * (M * K + K * N + M * N) + 4 * N
    return pl.pallas_call(
        _matmul_bias_relu6_kernel,
        out_shape=jax.ShapeDtypeStruct((M, N), out_dtype),
        grid=grid,
        in_specs=[
            pl.BlockSpec((tm, K), lambda i, j: (i, 0)),
            pl.BlockSpec((K, tn), lambda i, j: (0, j)),
            pl.BlockSpec((1, tn), lambda i, j: (0, j)),
        ],
        out_specs=pl.BlockSpec((tm, tn), lambda i, j: (i, j)),
        compiler_params=pltpu.CompilerParams(
            dimension_semantics=("parallel", "parallel"),
            vmem_limit_bytes=_VMEM_LIMIT),
        cost_estimate=pl.CostEstimate(flops=flops, transcendentals=0,
                                      bytes_accessed=bytes_accessed),
    )(x, w, bias.reshape(1, N))


def conv3x3_s2_bn_relu6(x_nhwc, wm, bias):
    # First layer: ConstantPad2d((0,1,0,1)) + 3x3 stride-2 conv + BN + ReLU6.
    # wm: (Kpad, Cout) bf16 with BN scale folded, K padded 27 -> 32 for the MXU.
    N, H, W, Cin = x_nhwc.shape
    Cout = wm.shape[1]
    Kp = wm.shape[0]
    xp = jnp.pad(x_nhwc, ((0, 0), (0, 1), (0, 1), (0, 0)))
    Ho, Wo = H // 2, W // 2
    cols = []
    for dy in range(3):
        for dx in range(3):
            cols.append(xp[:, dy:dy + 2 * (Ho - 1) + 1:2,
                            dx:dx + 2 * (Wo - 1) + 1:2, :])
    cols = jnp.stack(cols, axis=3).reshape(N * Ho * Wo, 9 * Cin)
    cols = jnp.pad(cols, ((0, 0), (0, Kp - 9 * Cin))).astype(jnp.bfloat16)
    out = matmul_bias_relu6(cols, wm, bias)
    return out.reshape(N, Ho, Wo, Cout)


def depthwise_bn_relu6_s1(x, w9, bias):
    # x: (N, H, W, C) bf16; symmetric pad 1; one padded image per grid step.
    N, H, W, C = x.shape
    xp = jnp.pad(x, ((0, 0), (1, 1), (1, 1), (0, 0)))
    return pl.pallas_call(
        _dw_s1_kernel,
        out_shape=jax.ShapeDtypeStruct((N, H, W, C), x.dtype),
        grid=(N,),
        in_specs=[
            pl.BlockSpec((1, H + 2, W + 2, C), lambda n: (n, 0, 0, 0)),
            pl.BlockSpec((9, 1, C), lambda n: (0, 0, 0)),
            pl.BlockSpec((1, C), lambda n: (0, 0)),
        ],
        out_specs=pl.BlockSpec((1, H, W, C), lambda n: (n, 0, 0, 0)),
        compiler_params=pltpu.CompilerParams(
            dimension_semantics=("parallel",),
            vmem_limit_bytes=_VMEM_LIMIT),
    )(xp, w9, bias.reshape(1, C))


def depthwise_bn_relu6_s2(x, w9, bias):
    # x: (N, H, W, C) bf16; ConstantPad2d((0,1,0,1)); 4-phase pixel unshuffle.
    N, H, W, C = x.shape
    Ho, Wo = H // 2, W // 2
    xp = jnp.pad(x, ((0, 0), (0, 1), (0, 1), (0, 0)))
    p00 = xp[:, 0::2, 0::2, :]      # (N, Ho+1, Wo+1, C)
    p01 = xp[:, 0::2, 1::2, :]      # (N, Ho+1, Wo,   C)
    p10 = xp[:, 1::2, 0::2, :]      # (N, Ho,   Wo+1, C)
    p11 = xp[:, 1::2, 1::2, :]      # (N, Ho,   Wo,   C)
    return pl.pallas_call(
        _dw_s2_kernel,
        out_shape=jax.ShapeDtypeStruct((N, Ho, Wo, C), x.dtype),
        grid=(N,),
        in_specs=[
            pl.BlockSpec((1, Ho + 1, Wo + 1, C), lambda n: (n, 0, 0, 0)),
            pl.BlockSpec((1, Ho + 1, Wo, C), lambda n: (n, 0, 0, 0)),
            pl.BlockSpec((1, Ho, Wo + 1, C), lambda n: (n, 0, 0, 0)),
            pl.BlockSpec((1, Ho, Wo, C), lambda n: (n, 0, 0, 0)),
            pl.BlockSpec((9, 1, C), lambda n: (0, 0, 0)),
            pl.BlockSpec((1, C), lambda n: (0, 0)),
        ],
        out_specs=pl.BlockSpec((1, Ho, Wo, C), lambda n: (n, 0, 0, 0)),
        compiler_params=pltpu.CompilerParams(
            dimension_semantics=("parallel",),
            vmem_limit_bytes=_VMEM_LIMIT),
    )(p00, p01, p10, p11, w9, bias.reshape(1, C))


def pointwise_bn_relu6(x_nhwc, wm, bias):
    N, H, W, Cin = x_nhwc.shape
    Cout = wm.shape[1]
    out = matmul_bias_relu6(x_nhwc.reshape(N * H * W, Cin), wm, bias)
    return out.reshape(N, H, W, Cout)


def global_avgpool(x_nhwc):
    N, H, W, C = x_nhwc.shape
    x = x_nhwc.reshape(N, H * W, C)
    out = pl.pallas_call(
        _avgpool_kernel,
        out_shape=jax.ShapeDtypeStruct((N, 1, C), jnp.float32),
        grid=(N,),
        in_specs=[pl.BlockSpec((1, H * W, C), lambda n: (n, 0, 0))],
        out_specs=pl.BlockSpec((1, 1, C), lambda n: (n, 0, 0)),
        compiler_params=pltpu.CompilerParams(
            dimension_semantics=("parallel",)),
    )(x)
    return out.reshape(N, C)


def fc_softmax(x_nc, wm, b):
    N, C = x_nc.shape
    num_classes = wm.shape[1]
    return pl.pallas_call(
        _fc_softmax_kernel,
        out_shape=jax.ShapeDtypeStruct((N, num_classes), jnp.float32),
        grid=(1,),
        in_specs=[
            pl.BlockSpec((N, C), lambda i: (0, 0)),
            pl.BlockSpec((C, num_classes), lambda i: (0, 0)),
            pl.BlockSpec((1, num_classes), lambda i: (0, 0)),
        ],
        out_specs=pl.BlockSpec((N, num_classes), lambda i: (0, 0)),
    )(x_nc.astype(jnp.float32), wm.astype(jnp.float32),
      b.reshape(1, num_classes))


# ----------------------------------------------------------------------------
# Model
# ----------------------------------------------------------------------------

_DW_CFG = [
    (32, 64, 1), (64, 128, 2), (128, 128, 1), (128, 256, 2), (256, 256, 1),
    (256, 512, 2), (512, 512, 1), (512, 512, 1), (512, 512, 1), (512, 512, 1),
    (512, 512, 1), (512, 1024, 2), (1024, 1024, 1),
]


def _bn_fold(key, c, eps=1e-3):
    k1, k2, k3, k4 = jax.random.split(key, 4)
    gamma = 1.0 + 0.1 * jax.random.normal(k1, (c,), jnp.float32)
    beta = 0.1 * jax.random.normal(k2, (c,), jnp.float32)
    mean = 0.1 * jax.random.normal(k3, (c,), jnp.float32)
    var = 1.0 + 0.1 * jnp.abs(jax.random.normal(k4, (c,), jnp.float32))
    scale = gamma / jnp.sqrt(var + eps)
    bias = beta - mean * scale
    return scale, bias


class MobileNetV1Pallas:
    def __init__(self, num_classes, alpha=1.0, input_size=224,
                 include_top=False, key=None):
        self.num_classes = num_classes
        self.alpha = alpha
        self.input_size = input_size
        self.include_top = include_top
        key = jax.random.PRNGKey(0) if key is None else key
        self.params = self._init_params(key)
        self.fparams = self._fold_params(self.params)

    def _init_params(self, key):
        a = self.alpha
        p = {}
        c0 = int(32 * a)
        key, k = jax.random.split(key)
        p["conv0_w"] = jax.random.normal(k, (c0, 3, 3, 3), jnp.float32) * (27.0 ** -0.5)
        key, k = jax.random.split(key)
        p["conv0_scale"], p["conv0_bias"] = _bn_fold(k, c0)
        for i, (inp, oup, _stride) in enumerate(_DW_CFG):
            ci, co = int(inp * a), int(oup * a)
            blk = {}
            key, k = jax.random.split(key)
            blk["dw_w"] = jax.random.normal(k, (3, 3, ci), jnp.float32) * (9.0 ** -0.5)
            key, k = jax.random.split(key)
            blk["bn1_scale"], blk["bn1_bias"] = _bn_fold(k, ci)
            key, k = jax.random.split(key)
            blk["pw_w"] = jax.random.normal(k, (co, ci, 1, 1), jnp.float32) * (float(ci) ** -0.5)
            key, k = jax.random.split(key)
            blk["bn2_scale"], blk["bn2_bias"] = _bn_fold(k, co)
            p[f"dw{i}"] = blk
        if self.include_top:
            c_last = int(1024 * a)
            key, k = jax.random.split(key)
            p["fc_w"] = jax.random.normal(
                k, (self.num_classes, c_last, 1, 1), jnp.float32) * (float(c_last) ** -0.5)
            key, k = jax.random.split(key)
            p["fc_b"] = 0.1 * jax.random.normal(k, (self.num_classes,), jnp.float32)
        return p

    def _fold_params(self, p):
        # Fold BN scale into the conv weights; keep the bias for the epilogue.
        a = self.alpha
        f = {}
        c0 = int(32 * a)
        wm = jnp.transpose(p["conv0_w"], (2, 3, 1, 0)).reshape(27, c0)
        wm = wm * p["conv0_scale"][None, :]
        wm = jnp.pad(wm, ((0, 32 - 27), (0, 0)))        # pad K 27 -> 32 for MXU
        f["conv0_wm"] = wm.astype(jnp.bfloat16)
        f["conv0_bias"] = p["conv0_bias"]
        for i, (inp, oup, _stride) in enumerate(_DW_CFG):
            ci, co = int(inp * a), int(oup * a)
            blk = p[f"dw{i}"]
            w9 = blk["dw_w"].reshape(9, 1, ci) * blk["bn1_scale"].reshape(1, 1, ci)
            pwm = blk["pw_w"].reshape(co, ci).T * blk["bn2_scale"][None, :]
            f[f"dw{i}"] = {
                "dw_w9": w9.astype(jnp.float32),
                "bn1_bias": blk["bn1_bias"],
                "pw_wm": pwm.astype(jnp.bfloat16),
                "bn2_bias": blk["bn2_bias"],
            }
        if self.include_top:
            c_last = int(1024 * a)
            f["fc_wm"] = p["fc_w"].reshape(self.num_classes, c_last).T
            f["fc_b"] = p["fc_b"]
        return f

    def __call__(self, x_nchw):
        return self.forward(x_nchw)

    def forward(self, x_nchw):
        f = self.fparams
        x = jnp.transpose(x_nchw, (0, 2, 3, 1)).astype(jnp.bfloat16)  # NCHW->NHWC
        x = conv3x3_s2_bn_relu6(x, f["conv0_wm"], f["conv0_bias"])
        for i, (_inp, _oup, stride) in enumerate(_DW_CFG):
            blk = f[f"dw{i}"]
            if stride == 2:
                x = depthwise_bn_relu6_s2(x, blk["dw_w9"], blk["bn1_bias"])
            else:
                x = depthwise_bn_relu6_s1(x, blk["dw_w9"], blk["bn1_bias"])
            x = pointwise_bn_relu6(x, blk["pw_wm"], blk["bn2_bias"])
        # AvgPool2d(input_size // 32): here H == W == input_size // 32 -> global mean.
        N, H, W, C = x.shape
        assert H == W == self.input_size // 32
        pooled = global_avgpool(x)                      # (N, C) f32
        if self.include_top:
            return fc_softmax(pooled, f["fc_wm"], f["fc_b"])   # (N, num_classes)
        return pooled.reshape(N, C, 1, 1)               # NCHW, matches PyTorch


# ----------------------------------------------------------------------------
# Main
# ----------------------------------------------------------------------------

if __name__ == "__main__":
    key = jax.random.PRNGKey(0)
    pkey, xkey = jax.random.split(key)

    # Small config: alpha=0.25 (channels 8..256), input_size=32, batch=2.
    num_classes = 10
    model = MobileNetV1Pallas(num_classes, alpha=0.25, input_size=32,
                              include_top=False, key=pkey)

    x = jax.random.normal(xkey, (2, 3, 32, 32), jnp.float32)   # NCHW, like PyTorch

    out = jax.jit(model.forward)(x)
    out = jax.block_until_ready(out)
    assert out.shape == (2, int(1024 * 0.25), 1, 1), out.shape
    assert bool(jnp.all(jnp.isfinite(out)))

    # Also exercise the include_top path (fc 1x1 conv + softmax kernel).
    model_top = MobileNetV1Pallas(num_classes, alpha=0.25, input_size=32,
                                  include_top=True, key=pkey)
    probs = jax.block_until_ready(jax.jit(model_top.forward)(x))
    assert probs.shape == (2, num_classes)
    assert bool(jnp.allclose(jnp.sum(probs, axis=1), 1.0, atol=1e-3))

    print("KERNEL_OK")
</pallas_src>

<mosaic_0001>
module attributes {stable_mosaic.version = 11 : i64} {
  func.func @_matmul_bias_relu6_kernel(%arg0: i32, %arg1: i32, %arg2: memref<512x32xbf16, #tpu.memory_space<vmem>>, %arg3: memref<32x8xbf16, #tpu.memory_space<vmem>>, %arg4: memref<1x8xf32, #tpu.memory_space<vmem>>, %arg5: memref<512x8xbf16, #tpu.memory_space<vmem>>) attributes {dimension_semantics = [#tpu.dimension_semantics<parallel>, #tpu.dimension_semantics<parallel>], iteration_bounds = array<i64: 1, 1>, scalar_prefetch = 0 : i64, scratch_operands = 0 : i64, tpu.core_type = #tpu.core_type<tc>, window_params = [{transform_indices = @transform_0, window_bounds = array<i64: 512, 32>}, {transform_indices = @transform_1, window_bounds = array<i64: 32, 8>}, {transform_indices = @transform_2, window_bounds = array<i64: 1, 8>}, {transform_indices = @transform_3, window_bounds = array<i64: 512, 8>}]} {
    %c0 = arith.constant 0 : index
    %c0_0 = arith.constant 0 : index
    %0 = vector.load %arg2[%c0, %c0_0] : memref<512x32xbf16, #tpu.memory_space<vmem>>, vector<512x32xbf16>
    %c0_1 = arith.constant 0 : index
    %c0_2 = arith.constant 0 : index
    %1 = vector.load %arg3[%c0_1, %c0_2] : memref<32x8xbf16, #tpu.memory_space<vmem>>, vector<32x8xbf16>
    %cst = arith.constant dense<0.000000e+00> : vector<512x8xf32>
    %2 = tpu.matmul %0, %1, %cst {dimension_numbers = #tpu.dot_dimension_numbers<[1], [0], [0], [1], [0, 0, 1, 1], [], []>} : vector<512x32xbf16>, vector<32x8xbf16>, vector<512x8xf32> -> vector<512x8xf32>
    %c0_3 = arith.constant 0 : index
    %c0_4 = arith.constant 0 : index
    %3 = vector.load %arg4[%c0_3, %c0_4] : memref<1x8xf32, #tpu.memory_space<vmem>>, vector<1x8xf32>
    %4 = vector.broadcast %3 : vector<1x8xf32> to vector<512x8xf32>
    %5 = arith.addf %2, %4 : vector<512x8xf32>
    %cst_5 = arith.constant 0.000000e+00 : f32
    %cst_6 = arith.constant 6.000000e+00 : f32
    %6 = vector.broadcast %cst_5 : f32 to vector<512x8xf32>
    %7 = arith.maximumf %6, %5 : vector<512x8xf32>
    %8 = vector.broadcast %cst_6 : f32 to vector<512x8xf32>
    %9 = arith.minimumf %8, %7 : vector<512x8xf32>
    %10 = arith.truncf %9 : vector<512x8xf32> to vector<512x8xbf16>
    %c0_7 = arith.constant 0 : index
    %c0_8 = arith.constant 0 : index
    %11 = vector.load %arg5[%c0_7, %c0_8] : memref<512x8xbf16, #tpu.memory_space<vmem>>, vector<512x8xbf16>
    tpu.vector_store %arg5[%c0_7, %c0_8], %10 {strides = array<i32>} : memref<512x8xbf16, #tpu.memory_space<vmem>>, vector<512x8xbf16>,
    return
  }
  func.func @transform_0(%arg0: i32, %arg1: i32) -> (i32, i32) {
    %c0_i32 = arith.constant 0 : i32
    %c0_i32_0 = arith.constant 0 : i32
    return %arg0, %c0_i32 : i32, i32
  }
  func.func @transform_1(%arg0: i32, %arg1: i32) -> (i32, i32) {
    %c0_i32 = arith.constant 0 : i32
    %c0_i32_0 = arith.constant 0 : i32
    return %c0_i32, %arg1 : i32, i32
  }
  func.func @transform_2(%arg0: i32, %arg1: i32) -> (i32, i32) {
    %c0_i32 = arith.constant 0 : i32
    %c0_i32_0 = arith.constant 0 : i32
    return %c0_i32, %arg1 : i32, i32
  }
  func.func @transform_3(%arg0: i32, %arg1: i32) -> (i32, i32) {
    %c0_i32 = arith.constant 0 : i32
    return %arg0, %arg1 : i32, i32
  }
}

module attributes {stable_mosaic.version = 11 : i64} {
  func.func @_dw_s1_kernel(%arg0: i32, %arg1: memref<1x18x18x8xbf16, #tpu.memory_space<vmem>>, %arg2: memref<9x1x8xf32, #tpu.memory_space<vmem>>, %arg3: memref<1x8xf32, #tpu.memory_space<vmem>>, %arg4: memref<1x16x16x8xbf16, #tpu.memory_space<vmem>>) attributes {dimension_semantics = [#tpu.dimension_semantics<parallel>], iteration_bounds = array<i64: 2>, scalar_prefetch = 0 : i64, scratch_operands = 0 : i64, tpu.core_type = #tpu.core_type<tc>, window_params = [{transform_indices = @transform_0, window_bounds = array<i64: 1, 18, 18, 8>}, {pipeline_mode = #tpu.pipeline_mode<synchronous>, transform_indices = @transform_1, window_bounds = array<i64: 9, 1, 8>}, {pipeline_mode = #tpu.pipeline_mode<synchronous>, transform_indices = @transform_2, window_bounds = array<i64: 1, 8>}, {transform_indices = @transform_3, window_bounds = array<i64: 1, 16, 16, 8>}]} {
    %c0 = arith.constant 0 : index
    %c0_0 = arith.constant 0 : index
    %c0_1 = arith.constant 0 : index
    %c0_2 = arith.constant 0 : index
    %0 = vector.load %arg1[%c0, %c0_0, %c0_1, %c0_2] : memref<1x18x18x8xbf16, #tpu.memory_space<vmem>>, vector<1x18x18x8xbf16>
    %1 = vector.shape_cast %0 : vector<1x18x18x8xbf16> to vector<18x18x8xbf16>
    %2 = vector.extract_strided_slice %1 {offsets = [0, 0, 0], sizes = [16, 16, 8], strides = [1, 1, 1]} : vector<18x18x8xbf16> to vector<16x16x8xbf16>
    %c0_3 = arith.constant 0 : index
    %c0_4 = arith.constant 0 : index
    %c0_5 = arith.constant 0 : index
    %3 = vector.load %arg2[%c0_3, %c0_4, %c0_5] : memref<9x1x8xf32, #tpu.memory_space<vmem>>, vector<1x1x8xf32>
    %4 = vector.shape_cast %3 : vector<1x1x8xf32> to vector<1x8xf32>
    %5 = arith.extf %2 : vector<16x16x8xbf16> to vector<16x16x8xf32>
    %6 = vector.shape_cast %4 : vector<1x8xf32> to vector<1x1x8xf32>
    %7 = vector.broadcast %6 : vector<1x1x8xf32> to vector<16x16x8xf32>
    %8 = arith.mulf %5, %7 : vector<16x16x8xf32>
    %9 = vector.extract_strided_slice %1 {offsets = [0, 1, 0], sizes = [16, 16, 8], strides = [1, 1, 1]} : vector<18x18x8xbf16> to vector<16x16x8xbf16>
    %c1 = arith.constant 1 : index
    %c0_6 = arith.constant 0 : index
    %c0_7 = arith.constant 0 : index
    %10 = vector.load %arg2[%c1, %c0_6, %c0_7] : memref<9x1x8xf32, #tpu.memory_space<vmem>>, vector<1x1x8xf32>
    %11 = vector.shape_cast %10 : vector<1x1x8xf32> to vector<1x8xf32>
    %12 = arith.extf %9 : vector<16x16x8xbf16> to vector<16x16x8xf32>
    %13 = vector.shape_cast %11 : vector<1x8xf32> to vector<1x1x8xf32>
    %14 = vector.broadcast %13 : vector<1x1x8xf32> to vector<16x16x8xf32>
    %15 = arith.mulf %12, %14 : vector<16x16x8xf32>
    %16 = arith.addf %8, %15 : vector<16x16x8xf32>
    %17 = vector.extract_strided_slice %1 {offsets = [0, 2, 0], sizes = [16, 16, 8], strides = [1, 1, 1]} : vector<18x18x8xbf16> to vector<16x16x8xbf16>
    %c2 = arith.constant 2 : index
    %c0_8 = arith.constant 0 : index
    %c0_9 = arith.constant 0 : index
    %18 = vector.load %arg2[%c2, %c0_8, %c0_9] : memref<9x1x8xf32, #tpu.memory_space<vmem>>, vector<1x1x8xf32>
    %19 = vector.shape_cast %18 : vector<1x1x8xf32> to vector<1x8xf32>
    %20 = arith.extf %17 : vector<16x16x8xbf16> to vector<16x16x8xf32>
    %21 = vector.shape_cast %19 : vector<1x8xf32> to vector<1x1x8xf32>
    %22 = vector.broadcast %21 : vector<1x1x8xf32> to vector<16x16x8xf32>
    %23 = arith.mulf %20, %22 : vector<16x16x8xf32>
    %24 = arith.addf %16, %23 : vector<16x16x8xf32>
    %25 = vector.extract_strided_slice %1 {offsets = [1, 0, 0], sizes = [16, 16, 8], strides = [1, 1, 1]} : vector<18x18x8xbf16> to vector<16x16x8xbf16>
    %c3 = arith.constant 3 : index
    %c0_10 = arith.constant 0 : index
    %c0_11 = arith.constant 0 : index
    %26 = vector.load %arg2[%c3, %c0_10, %c0_11] : memref<9x1x8xf32, #tpu.memory_space<vmem>>, vector<1x1x8xf32>
    %27 = vector.shape_cast %26 : vector<1x1x8xf32> to vector<1x8xf32>
    %28 = arith.extf %25 : vector<16x16x8xbf16> to vector<16x16x8xf32>
    %29 = vector.shape_cast %27 : vector<1x8xf32> to vector<1x1x8xf32>
    %30 = vector.broadcast %29 : vector<1x1x8xf32> to vector<16x16x8xf32>
    %31 = arith.mulf %28, %30 : vector<16x16x8xf32>
    %32 = arith.addf %24, %31 : vector<16x16x8xf32>
    %33 = vector.extract_strided_slice %1 {offsets = [1, 1, 0], sizes = [16, 16, 8], strides = [1, 1, 1]} : vector<18x18x8xbf16> to vector<16x16x8xbf16>
    %c4 = arith.constant 4 : index
    %c0_12 = arith.constant 0 : index
    %c0_13 = arith.constant 0 : index
    %34 = vector.load %arg2[%c4, %c0_12, %c0_13] : memref<9x1x8xf32, #tpu.memory_space<vmem>>, vector<1x1x8xf32>
    %35 = vector.shape_cast %34 : vector<1x1x8xf32> to vector<1x8xf32>
    %36 = arith.extf %33 : vector<16x16x8xbf16> to vector<16x16x8xf32>
    %37 = vector.shape_cast %35 : vector<1x8xf32> to vector<1x1x8xf32>
    %38 = vector.broadcast %37 : vector<1x1x8xf32> to vector<16x16x8xf32>
    %39 = arith.mulf %36, %38 : vector<16x16x8xf32>
    %40 = arith.addf %32, %39 : vector<16x16x8xf32>
    %41 = vector.extract_strided_slice %1 {offsets = [1, 2, 0], sizes = [16, 16, 8], strides = [1, 1, 1]} : vector<18x18x8xbf16> to vector<16x16x8xbf16>
    %c5 = arith.constant 5 : index
    %c0_14 = arith.constant 0 : index
    %c0_15 = arith.constant 0 : index
    %42 = vector.load %arg2[%c5, %c0_14, %c0_15] : memref<9x1x8xf32, #tpu.memory_space<vmem>>, vector<1x1x8xf32>
    %43 = vector.shape_cast %42 : vector<1x1x8xf32> to vector<1x8xf32>
    %44 = arith.extf %41 : vector<16x16x8xbf16> to vector<16x16x8xf32>
    %45 = vector.shape_cast %43 : vector<1x8xf32> to vector<1x1x8xf32>
    %46 = vector.broadcast %45 : vector<1x1x8xf32> to vector<16x16x8xf32>
    %47 = arith.mulf %44, %46 : vector<16x16x8xf32>
    %48 = arith.addf %40, %47 : vector<16x16x8xf32>
    %49 = vector.extract_strided_slice %1 {offsets = [2, 0, 0], sizes = [16, 16, 8], strides = [1, 1, 1]} : vector<18x18x8xbf16> to vector<16x16x8xbf16>
    %c6 = arith.constant 6 : index
    %c0_16 = arith.constant 0 : index
    %c0_17 = arith.constant 0 : index
    %50 = vector.load %arg2[%c6, %c0_16, %c0_17] : memref<9x1x8xf32, #tpu.memory_space<vmem>>, vector<1x1x8xf32>
    %51 = vector.shape_cast %50 : vector<1x1x8xf32> to vector<1x8xf32>
    %52 = arith.extf %49 : vector<16x16x8xbf16> to vector<16x16x8xf32>
    %53 = vector.shape_cast %51 : vector<1x8xf32> to vector<1x1x8xf32>
    %54 = vector.broadcast %53 : vector<1x1x8xf32> to vector<16x16x8xf32>
    %55 = arith.mulf %52, %54 : vector<16x16x8xf32>
    %56 = arith.addf %48, %55 : vector<16x16x8xf32>
    %57 = vector.extract_strided_slice %1 {offsets = [2, 1, 0], sizes = [16, 16, 8], strides = [1, 1, 1]} : vector<18x18x8xbf16> to vector<16x16x8xbf16>
    %c7 = arith.constant 7 : index
    %c0_18 = arith.constant 0 : index
    %c0_19 = arith.constant 0 : index
    %58 = vector.load %arg2[%c7, %c0_18, %c0_19] : memref<9x1x8xf32, #tpu.memory_space<vmem>>, vector<1x1x8xf32>
    %59 = vector.shape_cast %58 : vector<1x1x8xf32> to vector<1x8xf32>
    %60 = arith.extf %57 : vector<16x16x8xbf16> to vector<16x16x8xf32>
    %61 = vector.shape_cast %59 : vector<1x8xf32> to vector<1x1x8xf32>
    %62 = vector.broadcast %61 : vector<1x1x8xf32> to vector<16x16x8xf32>
    %63 = arith.mulf %60, %62 : vector<16x16x8xf32>
    %64 = arith.addf %56, %63 : vector<16x16x8xf32>
    %65 = vector.extract_strided_slice %1 {offsets = [2, 2, 0], sizes = [16, 16, 8], strides = [1, 1, 1]} : vector<18x18x8xbf16> to vector<16x16x8xbf16>
    %c8 = arith.constant 8 : index
    %c0_20 = arith.constant 0 : index
    %c0_21 = arith.constant 0 : index
    %66 = vector.load %arg2[%c8, %c0_20, %c0_21] : memref<9x1x8xf32, #tpu.memory_space<vmem>>, vector<1x1x8xf32>
    %67 = vector.shape_cast %66 : vector<1x1x8xf32> to vector<1x8xf32>
    %68 = arith.extf %65 : vector<16x16x8xbf16> to vector<16x16x8xf32>
    %69 = vector.shape_cast %67 : vector<1x8xf32> to vector<1x1x8xf32>
    %70 = vector.broadcast %69 : vector<1x1x8xf32> to vector<16x16x8xf32>
    %71 = arith.mulf %68, %70 : vector<16x16x8xf32>
    %72 = arith.addf %64, %71 : vector<16x16x8xf32>
    %c0_22 = arith.constant 0 : index
    %c0_23 = arith.constant 0 : index
    %73 = vector.load %arg3[%c0_22, %c0_23] : memref<1x8xf32, #tpu.memory_space<vmem>>, vector<1x8xf32>
    %74 = vector.shape_cast %73 : vector<1x8xf32> to vector<1x1x8xf32>
    %75 = vector.broadcast %74 : vector<1x1x8xf32> to vector<16x16x8xf32>
    %76 = arith.addf %72, %75 : vector<16x16x8xf32>
    %cst = arith.constant 0.000000e+00 : f32
    %cst_24 = arith.constant 6.000000e+00 : f32
    %77 = vector.broadcast %cst : f32 to vector<16x16x8xf32>
    %78 = arith.maximumf %77, %76 : vector<16x16x8xf32>
    %79 = vector.broadcast %cst_24 : f32 to vector<16x16x8xf32>
    %80 = arith.minimumf %79, %78 : vector<16x16x8xf32>
    %81 = vector.shape_cast %80 : vector<16x16x8xf32> to vector<1x16x16x8xf32>
    %82 = arith.truncf %81 : vector<1x16x16x8xf32> to vector<1x16x16x8xbf16>
    %c0_25 = arith.constant 0 : index
    %c0_26 = arith.constant 0 : index
    %c0_27 = arith.constant 0 : index
    %c0_28 = arith.constant 0 : index
    %83 = vector.load %arg4[%c0_25, %c0_26, %c0_27, %c0_28] : memref<1x16x16x8xbf16, #tpu.memory_space<vmem>>, vector<1x16x16x8xbf16>
    tpu.vector_store %arg4[%c0_25, %c0_26, %c0_27, %c0_28], %82 {strides = array<i32>} : memref<1x16x16x8xbf16, #tpu.memory_space<vmem>>, vector<1x16x16x8xbf16>,
    return
  }
  func.func @transform_0(%arg0: i32) -> (i32, i32, i32, i32) {
    %c0_i32 = arith.constant 0 : i32
    %c0_i32_0 = arith.constant 0 : i32
    %c0_i32_1 = arith.constant 0 : i32
    %c0_i32_2 = arith.constant 0 : i32
    return %arg0, %c0_i32, %c0_i32_0, %c0_i32_1 : i32, i32, i32, i32
  }
  func.func @transform_1(%arg0: i32) -> (i32, i32, i32) {
    %c0_i32 = arith.constant 0 : i32
    %c0_i32_0 = arith.constant 0 : i32
    %c0_i32_1 = arith.constant 0 : i32
    %c0_i32_2 = arith.constant 0 : i32
    return %c0_i32, %c0_i32_0, %c0_i32_1 : i32, i32, i32
  }
  func.func @transform_2(%arg0: i32) -> (i32, i32) {
    %c0_i32 = arith.constant 0 : i32
    %c0_i32_0 = arith.constant 0 : i32
    %c0_i32_1 = arith.constant 0 : i32
    return %c0_i32, %c0_i32_0 : i32, i32
  }
  func.func @transform_3(%arg0: i32) -> (i32, i32, i32, i32) {
    %c0_i32 = arith.constant 0 : i32
    %c0_i32_0 = arith.constant 0 : i32
    %c0_i32_1 = arith.constant 0 : i32
    %c0_i32_2 = arith.constant 0 : i32
    return %arg0, %c0_i32, %c0_i32_0, %c0_i32_1 : i32, i32, i32, i32
  }
}

module attributes {stable_mosaic.version = 11 : i64} {
  func.func @_matmul_bias_relu6_kernel(%arg0: i32, %arg1: i32, %arg2: memref<512x8xbf16, #tpu.memory_space<vmem>>, %arg3: memref<8x16xbf16, #tpu.memory_space<vmem>>, %arg4: memref<1x16xf32, #tpu.memory_space<vmem>>, %arg5: memref<512x16xbf16, #tpu.memory_space<vmem>>) attributes {dimension_semantics = [#tpu.dimension_semantics<parallel>, #tpu.dimension_semantics<parallel>], iteration_bounds = array<i64: 1, 1>, scalar_prefetch = 0 : i64, scratch_operands = 0 : i64, tpu.core_type = #tpu.core_type<tc>, window_params = [{transform_indices = @transform_0, window_bounds = array<i64: 512, 8>}, {transform_indices = @transform_1, window_bounds = array<i64: 8, 16>}, {transform_indices = @transform_2, window_bounds = array<i64: 1, 16>}, {transform_indices = @transform_3, window_bounds = array<i64: 512, 16>}]} {
    %c0 = arith.constant 0 : index
    %c0_0 = arith.constant 0 : index
    %0 = vector.load %arg2[%c0, %c0_0] : memref<512x8xbf16, #tpu.memory_space<vmem>>, vector<512x8xbf16>
    %c0_1 = arith.constant 0 : index
    %c0_2 = arith.constant 0 : index
    %1 = vector.load %arg3[%c0_1, %c0_2] : memref<8x16xbf16, #tpu.memory_space<vmem>>, vector<8x16xbf16>
    %cst = arith.constant dense<0.000000e+00> : vector<512x16xf32>
    %2 = tpu.matmul %0, %1, %cst {dimension_numbers = #tpu.dot_dimension_numbers<[1], [0], [0], [1], [0, 0, 1, 1], [], []>} : vector<512x8xbf16>, vector<8x16xbf16>, vector<512x16xf32> -> vector<512x16xf32>
    %c0_3 = arith.constant 0 : index
    %c0_4 = arith.constant 0 : index
    %3 = vector.load %arg4[%c0_3, %c0_4] : memref<1x16xf32, #tpu.memory_space<vmem>>, vector<1x16xf32>
    %4 = vector.broadcast %3 : vector<1x16xf32> to vector<512x16xf32>
    %5 = arith.addf %2, %4 : vector<512x16xf32>
    %cst_5 = arith.constant 0.000000e+00 : f32
    %cst_6 = arith.constant 6.000000e+00 : f32
    %6 = vector.broadcast %cst_5 : f32 to vector<512x16xf32>
    %7 = arith.maximumf %6, %5 : vector<512x16xf32>
    %8 = vector.broadcast %cst_6 : f32 to vector<512x16xf32>
    %9 = arith.minimumf %8, %7 : vector<512x16xf32>
    %10 = arith.truncf %9 : vector<512x16xf32> to vector<512x16xbf16>
    %c0_7 = arith.constant 0 : index
    %c0_8 = arith.constant 0 : index
    %11 = vector.load %arg5[%c0_7, %c0_8] : memref<512x16xbf16, #tpu.memory_space<vmem>>, vector<512x16xbf16>
    tpu.vector_store %arg5[%c0_7, %c0_8], %10 {strides = array<i32>} : memref<512x16xbf16, #tpu.memory_space<vmem>>, vector<512x16xbf16>,
    return
  }
  func.func @transform_0(%arg0: i32, %arg1: i32) -> (i32, i32) {
    %c0_i32 = arith.constant 0 : i32
    %c0_i32_0 = arith.constant 0 : i32
    return %arg0, %c0_i32 : i32, i32
  }
  func.func @transform_1(%arg0: i32, %arg1: i32) -> (i32, i32) {
    %c0_i32 = arith.constant 0 : i32
    %c0_i32_0 = arith.constant 0 : i32
    return %c0_i32, %arg1 : i32, i32
  }
  func.func @transform_2(%arg0: i32, %arg1: i32) -> (i32, i32) {
    %c0_i32 = arith.constant 0 : i32
    %c0_i32_0 = arith.constant 0 : i32
    return %c0_i32, %arg1 : i32, i32
  }
  func.func @transform_3(%arg0: i32, %arg1: i32) -> (i32, i32) {
    %c0_i32 = arith.constant 0 : i32
    return %arg0, %arg1 : i32, i32
  }
}

module attributes {stable_mosaic.version = 11 : i64} {
  func.func @_dw_s2_kernel(%arg0: i32, %arg1: memref<1x9x9x16xbf16, #tpu.memory_space<vmem>>, %arg2: memref<1x9x8x16xbf16, #tpu.memory_space<vmem>>, %arg3: memref<1x8x9x16xbf16, #tpu.memory_space<vmem>>, %arg4: memref<1x8x8x16xbf16, #tpu.memory_space<vmem>>, %arg5: memref<9x1x16xf32, #tpu.memory_space<vmem>>, %arg6: memref<1x16xf32, #tpu.memory_space<vmem>>, %arg7: memref<1x8x8x16xbf16, #tpu.memory_space<vmem>>) attributes {dimension_semantics = [#tpu.dimension_semantics<parallel>], iteration_bounds = array<i64: 2>, scalar_prefetch = 0 : i64, scratch_operands = 0 : i64, tpu.core_type = #tpu.core_type<tc>, window_params = [{transform_indices = @transform_0, window_bounds = array<i64: 1, 9, 9, 16>}, {transform_indices = @transform_1, window_bounds = array<i64: 1, 9, 8, 16>}, {transform_indices = @transform_2, window_bounds = array<i64: 1, 8, 9, 16>}, {transform_indices = @transform_3, window_bounds = array<i64: 1, 8, 8, 16>}, {pipeline_mode = #tpu.pipeline_mode<synchronous>, transform_indices = @transform_4, window_bounds = array<i64: 9, 1, 16>}, {pipeline_mode = #tpu.pipeline_mode<synchronous>, transform_indices = @transform_5, window_bounds = array<i64: 1, 16>}, {transform_indices = @transform_6, window_bounds = array<i64: 1, 8, 8, 16>}]} {
    %c0 = arith.constant 0 : index
    %c0_0 = arith.constant 0 : index
    %c0_1 = arith.constant 0 : index
    %c0_2 = arith.constant 0 : index
    %0 = vector.load %arg1[%c0, %c0_0, %c0_1, %c0_2] : memref<1x9x9x16xbf16, #tpu.memory_space<vmem>>, vector<1x9x9x16xbf16>
    %1 = vector.shape_cast %0 : vector<1x9x9x16xbf16> to vector<9x9x16xbf16>
    %c0_3 = arith.constant 0 : index
    %c0_4 = arith.constant 0 : index
    %c0_5 = arith.constant 0 : index
    %c0_6 = arith.constant 0 : index
    %2 = vector.load %arg2[%c0_3, %c0_4, %c0_5, %c0_6] : memref<1x9x8x16xbf16, #tpu.memory_space<vmem>>, vector<1x9x8x16xbf16>
    %3 = vector.shape_cast %2 : vector<1x9x8x16xbf16> to vector<9x8x16xbf16>
    %c0_7 = arith.constant 0 : index
    %c0_8 = arith.constant 0 : index
    %c0_9 = arith.constant 0 : index
    %c0_10 = arith.constant 0 : index
    %4 = vector.load %arg3[%c0_7, %c0_8, %c0_9, %c0_10] : memref<1x8x9x16xbf16, #tpu.memory_space<vmem>>, vector<1x8x9x16xbf16>
    %5 = vector.shape_cast %4 : vector<1x8x9x16xbf16> to vector<8x9x16xbf16>
    %c0_11 = arith.constant 0 : index
    %c0_12 = arith.constant 0 : index
    %c0_13 = arith.constant 0 : index
    %c0_14 = arith.constant 0 : index
    %6 = vector.load %arg4[%c0_11, %c0_12, %c0_13, %c0_14] : memref<1x8x8x16xbf16, #tpu.memory_space<vmem>>, vector<1x8x8x16xbf16>
    %7 = vector.shape_cast %6 : vector<1x8x8x16xbf16> to vector<8x8x16xbf16>
    %8 = vector.extract_strided_slice %1 {offsets = [0, 0, 0], sizes = [8, 8, 16], strides = [1, 1, 1]} : vector<9x9x16xbf16> to vector<8x8x16xbf16>
    %c0_15 = arith.constant 0 : index
    %c0_16 = arith.constant 0 : index
    %c0_17 = arith.constant 0 : index
    %9 = vector.load %arg5[%c0_15, %c0_16, %c0_17] : memref<9x1x16xf32, #tpu.memory_space<vmem>>, vector<1x1x16xf32>
    %10 = vector.shape_cast %9 : vector<1x1x16xf32> to vector<1x16xf32>
    %11 = arith.extf %8 : vector<8x8x16xbf16> to vector<8x8x16xf32>
    %12 = vector.shape_cast %10 : vector<1x16xf32> to vector<1x1x16xf32>
    %13 = vector.broadcast %12 : vector<1x1x16xf32> to vector<8x8x16xf32>
    %14 = arith.mulf %11, %13 : vector<8x8x16xf32>
    %15 = vector.extract_strided_slice %3 {offsets = [0, 0, 0], sizes = [8, 8, 16], strides = [1, 1, 1]} : vector<9x8x16xbf16> to vector<8x8x16xbf16>
    %c1 = arith.constant 1 : index
    %c0_18 = arith.constant 0 : index
    %c0_19 = arith.constant 0 : index
    %16 = vector.load %arg5[%c1, %c0_18, %c0_19] : memref<9x1x16xf32, #tpu.memory_space<vmem>>, vector<1x1x16xf32>
    %17 = vector.shape_cast %16 : vector<1x1x16xf32> to vector<1x16xf32>
    %18 = arith.extf %15 : vector<8x8x16xbf16> to vector<8x8x16xf32>
    %19 = vector.shape_cast %17 : vector<1x16xf32> to vector<1x1x16xf32>
    %20 = vector.broadcast %19 : vector<1x1x16xf32> to vector<8x8x16xf32>
    %21 = arith.mulf %18, %20 : vector<8x8x16xf32>
    %22 = arith.addf %14, %21 : vector<8x8x16xf32>
    %23 = vector.extract_strided_slice %1 {offsets = [0, 1, 0], sizes = [8, 8, 16], strides = [1, 1, 1]} : vector<9x9x16xbf16> to vector<8x8x16xbf16>
    %c2 = arith.constant 2 : index
    %c0_20 = arith.constant 0 : index
    %c0_21 = arith.constant 0 : index
    %24 = vector.load %arg5[%c2, %c0_20, %c0_21] : memref<9x1x16xf32, #tpu.memory_space<vmem>>, vector<1x1x16xf32>
    %25 = vector.shape_cast %24 : vector<1x1x16xf32> to vector<1x16xf32>
    %26 = arith.extf %23 : vector<8x8x16xbf16> to vector<8x8x16xf32>
    %27 = vector.shape_cast %25 : vector<1x16xf32> to vector<1x1x16xf32>
    %28 = vector.broadcast %27 : vector<1x1x16xf32> to vector<8x8x16xf32>
    %29 = arith.mulf %26, %28 : vector<8x8x16xf32>
    %30 = arith.addf %22, %29 : vector<8x8x16xf32>
    %31 = vector.extract_strided_slice %5 {offsets = [0, 0, 0], sizes = [8, 8, 16], strides = [1, 1, 1]} : vector<8x9x16xbf16> to vector<8x8x16xbf16>
    %c3 = arith.constant 3 : index
    %c0_22 = arith.constant 0 : index
    %c0_23 = arith.constant 0 : index
    %32 = vector.load %arg5[%c3, %c0_22, %c0_23] : memref<9x1x16xf32, #tpu.memory_space<vmem>>, vector<1x1x16xf32>
    %33 = vector.shape_cast %32 : vector<1x1x16xf32> to vector<1x16xf32>
    %34 = arith.extf %31 : vector<8x8x16xbf16> to vector<8x8x16xf32>
    %35 = vector.shape_cast %33 : vector<1x16xf32> to vector<1x1x16xf32>
    %36 = vector.broadcast %35 : vector<1x1x16xf32> to vector<8x8x16xf32>
    %37 = arith.mulf %34, %36 : vector<8x8x16xf32>
    %38 = arith.addf %30, %37 : vector<8x8x16xf32>
    %c4 = arith.constant 4 : index
    %c0_24 = arith.constant 0 : index
    %c0_25 = arith.constant 0 : index
    %39 = vector.load %arg5[%c4, %c0_24, %c0_25] : memref<9x1x16xf32, #tpu.memory_space<vmem>>, vector<1x1x16xf32>
    %40 = vector.shape_cast %39 : vector<1x1x16xf32> to vector<1x16xf32>
    %41 = arith.extf %7 : vector<8x8x16xbf16> to vector<8x8x16xf32>
    %42 = vector.shape_cast %40 : vector<1x16xf32> to vector<1x1x16xf32>
    %43 = vector.broadcast %42 : vector<1x1x16xf32> to vector<8x8x16xf32>
    %44 = arith.mulf %41, %43 : vector<8x8x16xf32>
    %45 = arith.addf %38, %44 : vector<8x8x16xf32>
    %46 = vector.extract_strided_slice %5 {offsets = [0, 1, 0], sizes = [8, 8, 16], strides = [1, 1, 1]} : vector<8x9x16xbf16> to vector<8x8x16xbf16>
    %c5 = arith.constant 5 : index
    %c0_26 = arith.constant 0 : index
    %c0_27 = arith.constant 0 : index
    %47 = vector.load %arg5[%c5, %c0_26, %c0_27] : memref<9x1x16xf32, #tpu.memory_space<vmem>>, vector<1x1x16xf32>
    %48 = vector.shape_cast %47 : vector<1x1x16xf32> to vector<1x16xf32>
    %49 = arith.extf %46 : vector<8x8x16xbf16> to vector<8x8x16xf32>
    %50 = vector.shape_cast %48 : vector<1x16xf32> to vector<1x1x16xf32>
    %51 = vector.broadcast %50 : vector<1x1x16xf32> to vector<8x8x16xf32>
    %52 = arith.mulf %49, %51 : vector<8x8x16xf32>
    %53 = arith.addf %45, %52 : vector<8x8x16xf32>
    %54 = vector.extract_strided_slice %1 {offsets = [1, 0, 0], sizes = [8, 8, 16], strides = [1, 1, 1]} : vector<9x9x16xbf16> to vector<8x8x16xbf16>
    %c6 = arith.constant 6 : index
    %c0_28 = arith.constant 0 : index
    %c0_29 = arith.constant 0 : index
    %55 = vector.load %arg5[%c6, %c0_28, %c0_29] : memref<9x1x16xf32, #tpu.memory_space<vmem>>, vector<1x1x16xf32>
    %56 = vector.shape_cast %55 : vector<1x1x16xf32> to vector<1x16xf32>
    %57 = arith.extf %54 : vector<8x8x16xbf16> to vector<8x8x16xf32>
    %58 = vector.shape_cast %56 : vector<1x16xf32> to vector<1x1x16xf32>
    %59 = vector.broadcast %58 : vector<1x1x16xf32> to vector<8x8x16xf32>
    %60 = arith.mulf %57, %59 : vector<8x8x16xf32>
    %61 = arith.addf %53, %60 : vector<8x8x16xf32>
    %62 = vector.extract_strided_slice %3 {offsets = [1, 0, 0], sizes = [8, 8, 16], strides = [1, 1, 1]} : vector<9x8x16xbf16> to vector<8x8x16xbf16>
    %c7 = arith.constant 7 : index
    %c0_30 = arith.constant 0 : index
    %c0_31 = arith.constant 0 : index
    %63 = vector.load %arg5[%c7, %c0_30, %c0_31] : memref<9x1x16xf32, #tpu.memory_space<vmem>>, vector<1x1x16xf32>
    %64 = vector.shape_cast %63 : vector<1x1x16xf32> to vector<1x16xf32>
    %65 = arith.extf %62 : vector<8x8x16xbf16> to vector<8x8x16xf32>
    %66 = vector.shape_cast %64 : vector<1x16xf32> to vector<1x1x16xf32>
    %67 = vector.broadcast %66 : vector<1x1x16xf32> to vector<8x8x16xf32>
    %68 = arith.mulf %65, %67 : vector<8x8x16xf32>
    %69 = arith.addf %61, %68 : vector<8x8x16xf32>
    %70 = vector.extract_strided_slice %1 {offsets = [1, 1, 0], sizes = [8, 8, 16], strides = [1, 1, 1]} : vector<9x9x16xbf16> to vector<8x8x16xbf16>
    %c8 = arith.constant 8 : index
    %c0_32 = arith.constant 0 : index
    %c0_33 = arith.constant 0 : index
    %71 = vector.load %arg5[%c8, %c0_32, %c0_33] : memref<9x1x16xf32, #tpu.memory_space<vmem>>, vector<1x1x16xf32>
    %72 = vector.shape_cast %71 : vector<1x1x16xf32> to vector<1x16xf32>
    %73 = arith.extf %70 : vector<8x8x16xbf16> to vector<8x8x16xf32>
    %74 = vector.shape_cast %72 : vector<1x16xf32> to vector<1x1x16xf32>
    %75 = vector.broadcast %74 : vector<1x1x16xf32> to vector<8x8x16xf32>
    %76 = arith.mulf %73, %75 : vector<8x8x16xf32>
    %77 = arith.addf %69, %76 : vector<8x8x16xf32>
    %c0_34 = arith.constant 0 : index
    %c0_35 = arith.constant 0 : index
    %78 = vector.load %arg6[%c0_34, %c0_35] : memref<1x16xf32, #tpu.memory_space<vmem>>, vector<1x16xf32>
    %79 = vector.shape_cast %78 : vector<1x16xf32> to vector<1x1x16xf32>
    %80 = vector.broadcast %79 : vector<1x1x16xf32> to vector<8x8x16xf32>
    %81 = arith.addf %77, %80 : vector<8x8x16xf32>
    %cst = arith.constant 0.000000e+00 : f32
    %cst_36 = arith.constant 6.000000e+00 : f32
    %82 = vector.broadcast %cst : f32 to vector<8x8x16xf32>
    %83 = arith.maximumf %82, %81 : vector<8x8x16xf32>
    %84 = vector.broadcast %cst_36 : f32 to vector<8x8x16xf32>
    %85 = arith.minimumf %84, %83 : vector<8x8x16xf32>
    %86 = vector.shape_cast %85 : vector<8x8x16xf32> to vector<1x8x8x16xf32>
    %87 = arith.truncf %86 : vector<1x8x8x16xf32> to vector<1x8x8x16xbf16>
    %c0_37 = arith.constant 0 : index
    %c0_38 = arith.constant 0 : index
    %c0_39 = arith.constant 0 : index
    %c0_40 = arith.constant 0 : index
    %88 = vector.load %arg7[%c0_37, %c0_38, %c0_39, %c0_40] : memref<1x8x8x16xbf16, #tpu.memory_space<vmem>>, vector<1x8x8x16xbf16>
    tpu.vector_store %arg7[%c0_37, %c0_38, %c0_39, %c0_40], %87 {strides = array<i32>} : memref<1x8x8x16xbf16, #tpu.memory_space<vmem>>, vector<1x8x8x16xbf16>,
    return
  }
  func.func @transform_0(%arg0: i32) -> (i32, i32, i32, i32) {
    %c0_i32 = arith.constant 0 : i32
    %c0_i32_0 = arith.constant 0 : i32
    %c0_i32_1 = arith.constant 0 : i32
    %c0_i32_2 = arith.constant 0 : i32
    return %arg0, %c0_i32, %c0_i32_0, %c0_i32_1 : i32, i32, i32, i32
  }
  func.func @transform_1(%arg0: i32) -> (i32, i32, i32, i32) {
    %c0_i32 = arith.constant 0 : i32
    %c0_i32_0 = arith.constant 0 : i32
    %c0_i32_1 = arith.constant 0 : i32
    %c0_i32_2 = arith.constant 0 : i32
    return %arg0, %c0_i32, %c0_i32_0, %c0_i32_1 : i32, i32, i32, i32
  }
  func.func @transform_2(%arg0: i32) -> (i32, i32, i32, i32) {
    %c0_i32 = arith.constant 0 : i32
    %c0_i32_0 = arith.constant 0 : i32
    %c0_i32_1 = arith.constant 0 : i32
    %c0_i32_2 = arith.constant 0 : i32
    return %arg0, %c0_i32, %c0_i32_0, %c0_i32_1 : i32, i32, i32, i32
  }
  func.func @transform_3(%arg0: i32) -> (i32, i32, i32, i32) {
    %c0_i32 = arith.constant 0 : i32
    %c0_i32_0 = arith.constant 0 : i32
    %c0_i32_1 = arith.constant 0 : i32
    %c0_i32_2 = arith.constant 0 : i32
    return %arg0, %c0_i32, %c0_i32_0, %c0_i32_1 : i32, i32, i32, i32
  }
  func.func @transform_4(%arg0: i32) -> (i32, i32, i32) {
    %c0_i32 = arith.constant 0 : i32
    %c0_i32_0 = arith.constant 0 : i32
    %c0_i32_1 = arith.constant 0 : i32
    %c0_i32_2 = arith.constant 0 : i32
    return %c0_i32, %c0_i32_0, %c0_i32_1 : i32, i32, i32
  }
  func.func @transform_5(%arg0: i32) -> (i32, i32) {
    %c0_i32 = arith.constant 0 : i32
    %c0_i32_0 = arith.constant 0 : i32
    %c0_i32_1 = arith.constant 0 : i32
    return %c0_i32, %c0_i32_0 : i32, i32
  }
  func.func @transform_6(%arg0: i32) -> (i32, i32, i32, i32) {
    %c0_i32 = arith.constant 0 : i32
    %c0_i32_0 = arith.constant 0 : i32
    %c0_i32_1 = arith.constant 0 : i32
    %c0_i32_2 = arith.constant 0 : i32
    return %arg0, %c0_i32, %c0_i32_0, %c0_i32_1 : i32, i32, i32, i32
  }
}

module attributes {stable_mosaic.version = 11 : i64} {
  func.func @_matmul_bias_relu6_kernel(%arg0: i32, %arg1: i32, %arg2: memref<128x16xbf16, #tpu.memory_space<vmem>>, %arg3: memref<16x32xbf16, #tpu.memory_space<vmem>>, %arg4: memref<1x32xf32, #tpu.memory_space<vmem>>, %arg5: memref<128x32xbf16, #tpu.memory_space<vmem>>) attributes {dimension_semantics = [#tpu.dimension_semantics<parallel>, #tpu.dimension_semantics<parallel>], iteration_bounds = array<i64: 1, 1>, scalar_prefetch = 0 : i64, scratch_operands = 0 : i64, tpu.core_type = #tpu.core_type<tc>, window_params = [{transform_indices = @transform_0, window_bounds = array<i64: 128, 16>}, {transform_indices = @transform_1, window_bounds = array<i64: 16, 32>}, {transform_indices = @transform_2, window_bounds = array<i64: 1, 32>}, {transform_indices = @transform_3, window_bounds = array<i64: 128, 32>}]} {
    %c0 = arith.constant 0 : index
    %c0_0 = arith.constant 0 : index
    %0 = vector.load %arg2[%c0, %c0_0] : memref<128x16xbf16, #tpu.memory_space<vmem>>, vector<128x16xbf16>
    %c0_1 = arith.constant 0 : index
    %c0_2 = arith.constant 0 : index
    %1 = vector.load %arg3[%c0_1, %c0_2] : memref<16x32xbf16, #tpu.memory_space<vmem>>, vector<16x32xbf16>
    %cst = arith.constant dense<0.000000e+00> : vector<128x32xf32>
    %2 = tpu.matmul %0, %1, %cst {dimension_numbers = #tpu.dot_dimension_numbers<[1], [0], [0], [1], [0, 0, 1, 1], [], []>} : vector<128x16xbf16>, vector<16x32xbf16>, vector<128x32xf32> -> vector<128x32xf32>
    %c0_3 = arith.constant 0 : index
    %c0_4 = arith.constant 0 : index
    %3 = vector.load %arg4[%c0_3, %c0_4] : memref<1x32xf32, #tpu.memory_space<vmem>>, vector<1x32xf32>
    %4 = vector.broadcast %3 : vector<1x32xf32> to vector<128x32xf32>
    %5 = arith.addf %2, %4 : vector<128x32xf32>
    %cst_5 = arith.constant 0.000000e+00 : f32
    %cst_6 = arith.constant 6.000000e+00 : f32
    %6 = vector.broadcast %cst_5 : f32 to vector<128x32xf32>
    %7 = arith.maximumf %6, %5 : vector<128x32xf32>
    %8 = vector.broadcast %cst_6 : f32 to vector<128x32xf32>
    %9 = arith.minimumf %8, %7 : vector<128x32xf32>
    %10 = arith.truncf %9 : vector<128x32xf32> to vector<128x32xbf16>
    %c0_7 = arith.constant 0 : index
    %c0_8 = arith.constant 0 : index
    %11 = vector.load %arg5[%c0_7, %c0_8] : memref<128x32xbf16, #tpu.memory_space<vmem>>, vector<128x32xbf16>
    tpu.vector_store %arg5[%c0_7, %c0_8], %10 {strides = array<i32>} : memref<128x32xbf16, #tpu.memory_space<vmem>>, vector<128x32xbf16>,
    return
  }
  func.func @transform_0(%arg0: i32, %arg1: i32) -> (i32, i32) {
    %c0_i32 = arith.constant 0 : i32
    %c0_i32_0 = arith.constant 0 : i32
    return %arg0, %c0_i32 : i32, i32
  }
  func.func @transform_1(%arg0: i32, %arg1: i32) -> (i32, i32) {
    %c0_i32 = arith.constant 0 : i32
    %c0_i32_0 = arith.constant 0 : i32
    return %c0_i32, %arg1 : i32, i32
  }
  func.func @transform_2(%arg0: i32, %arg1: i32) -> (i32, i32) {
    %c0_i32 = arith.constant 0 : i32
    %c0_i32_0 = arith.constant 0 : i32
    return %c0_i32, %arg1 : i32, i32
  }
  func.func @transform_3(%arg0: i32, %arg1: i32) -> (i32, i32) {
    %c0_i32 = arith.constant 0 : i32
    return %arg0, %arg1 : i32, i32
  }
}

module attributes {stable_mosaic.version = 11 : i64} {
  func.func @_dw_s1_kernel(%arg0: i32, %arg1: memref<1x10x10x32xbf16, #tpu.memory_space<vmem>>, %arg2: memref<9x1x32xf32, #tpu.memory_space<vmem>>, %arg3: memref<1x32xf32, #tpu.memory_space<vmem>>, %arg4: memref<1x8x8x32xbf16, #tpu.memory_space<vmem>>) attributes {dimension_semantics = [#tpu.dimension_semantics<parallel>], iteration_bounds = array<i64: 2>, scalar_prefetch = 0 : i64, scratch_operands = 0 : i64, tpu.core_type = #tpu.core_type<tc>, window_params = [{transform_indices = @transform_0, window_bounds = array<i64: 1, 10, 10, 32>}, {pipeline_mode = #tpu.pipeline_mode<synchronous>, transform_indices = @transform_1, window_bounds = array<i64: 9, 1, 32>}, {pipeline_mode = #tpu.pipeline_mode<synchronous>, transform_indices = @transform_2, window_bounds = array<i64: 1, 32>}, {transform_indices = @transform_3, window_bounds = array<i64: 1, 8, 8, 32>}]} {
    %c0 = arith.constant 0 : index
    %c0_0 = arith.constant 0 : index
    %c0_1 = arith.constant 0 : index
    %c0_2 = arith.constant 0 : index
    %0 = vector.load %arg1[%c0, %c0_0, %c0_1, %c0_2] : memref<1x10x10x32xbf16, #tpu.memory_space<vmem>>, vector<1x10x10x32xbf16>
    %1 = vector.shape_cast %0 : vector<1x10x10x32xbf16> to vector<10x10x32xbf16>
    %2 = vector.extract_strided_slice %1 {offsets = [0, 0, 0], sizes = [8, 8, 32], strides = [1, 1, 1]} : vector<10x10x32xbf16> to vector<8x8x32xbf16>
    %c0_3 = arith.constant 0 : index
    %c0_4 = arith.constant 0 : index
    %c0_5 = arith.constant 0 : index
    %3 = vector.load %arg2[%c0_3, %c0_4, %c0_5] : memref<9x1x32xf32, #tpu.memory_space<vmem>>, vector<1x1x32xf32>
    %4 = vector.shape_cast %3 : vector<1x1x32xf32> to vector<1x32xf32>
    %5 = arith.extf %2 : vector<8x8x32xbf16> to vector<8x8x32xf32>
    %6 = vector.shape_cast %4 : vector<1x32xf32> to vector<1x1x32xf32>
    %7 = vector.broadcast %6 : vector<1x1x32xf32> to vector<8x8x32xf32>
    %8 = arith.mulf %5, %7 : vector<8x8x32xf32>
    %9 = vector.extract_strided_slice %1 {offsets = [0, 1, 0], sizes = [8, 8, 32], strides = [1, 1, 1]} : vector<10x10x32xbf16> to vector<8x8x32xbf16>
    %c1 = arith.constant 1 : index
    %c0_6 = arith.constant 0 : index
    %c0_7 = arith.constant 0 : index
    %10 = vector.load %arg2[%c1, %c0_6, %c0_7] : memref<9x1x32xf32, #tpu.memory_space<vmem>>, vector<1x1x32xf32>
    %11 = vector.shape_cast %10 : vector<1x1x32xf32> to vector<1x32xf32>
    %12 = arith.extf %9 : vector<8x8x32xbf16> to vector<8x8x32xf32>
    %13 = vector.shape_cast %11 : vector<1x32xf32> to vector<1x1x32xf32>
    %14 = vector.broadcast %13 : vector<1x1x32xf32> to vector<8x8x32xf32>
    %15 = arith.mulf %12, %14 : vector<8x8x32xf32>
    %16 = arith.addf %8, %15 : vector<8x8x32xf32>
    %17 = vector.extract_strided_slice %1 {offsets = [0, 2, 0], sizes = [8, 8, 32], strides = [1, 1, 1]} : vector<10x10x32xbf16> to vector<8x8x32xbf16>
    %c2 = arith.constant 2 : index
    %c0_8 = arith.constant 0 : index
    %c0_9 = arith.constant 0 : index
    %18 = vector.load %arg2[%c2, %c0_8, %c0_9] : memref<9x1x32xf32, #tpu.memory_space<vmem>>, vector<1x1x32xf32>
    %19 = vector.shape_cast %18 : vector<1x1x32xf32> to vector<1x32xf32>
    %20 = arith.extf %17 : vector<8x8x32xbf16> to vector<8x8x32xf32>
    %21 = vector.shape_cast %19 : vector<1x32xf32> to vector<1x1x32xf32>
    %22 = vector.broadcast %21 : vector<1x1x32xf32> to vector<8x8x32xf32>
    %23 = arith.mulf %20, %22 : vector<8x8x32xf32>
    %24 = arith.addf %16, %23 : vector<8x8x32xf32>
    %25 = vector.extract_strided_slice %1 {offsets = [1, 0, 0], sizes = [8, 8, 32], strides = [1, 1, 1]} : vector<10x10x32xbf16> to vector<8x8x32xbf16>
    %c3 = arith.constant 3 : index
    %c0_10 = arith.constant 0 : index
    %c0_11 = arith.constant 0 : index
    %26 = vector.load %arg2[%c3, %c0_10, %c0_11] : memref<9x1x32xf32, #tpu.memory_space<vmem>>, vector<1x1x32xf32>
    %27 = vector.shape_cast %26 : vector<1x1x32xf32> to vector<1x32xf32>
    %28 = arith.extf %25 : vector<8x8x32xbf16> to vector<8x8x32xf32>
    %29 = vector.shape_cast %27 : vector<1x32xf32> to vector<1x1x32xf32>
    %30 = vector.broadcast %29 : vector<1x1x32xf32> to vector<8x8x32xf32>
    %31 = arith.mulf %28, %30 : vector<8x8x32xf32>
    %32 = arith.addf %24, %31 : vector<8x8x32xf32>
    %33 = vector.extract_strided_slice %1 {offsets = [1, 1, 0], sizes = [8, 8, 32], strides = [1, 1, 1]} : vector<10x10x32xbf16> to vector<8x8x32xbf16>
    %c4 = arith.constant 4 : index
    %c0_12 = arith.constant 0 : index
    %c0_13 = arith.constant 0 : index
    %34 = vector.load %arg2[%c4, %c0_12, %c0_13] : memref<9x1x32xf32, #tpu.memory_space<vmem>>, vector<1x1x32xf32>
    %35 = vector.shape_cast %34 : vector<1x1x32xf32> to vector<1x32xf32>
    %36 = arith.extf %33 : vector<8x8x32xbf16> to vector<8x8x32xf32>
    %37 = vector.shape_cast %35 : vector<1x32xf32> to vector<1x1x32xf32>
    %38 = vector.broadcast %37 : vector<1x1x32xf32> to vector<8x8x32xf32>
    %39 = arith.mulf %36, %38 : vector<8x8x32xf32>
    %40 = arith.addf %32, %39 : vector<8x8x32xf32>
    %41 = vector.extract_strided_slice %1 {offsets = [1, 2, 0], sizes = [8, 8, 32], strides = [1, 1, 1]} : vector<10x10x32xbf16> to vector<8x8x32xbf16>
    %c5 = arith.constant 5 : index
    %c0_14 = arith.constant 0 : index
    %c0_15 = arith.constant 0 : index
    %42 = vector.load %arg2[%c5, %c0_14, %c0_15] : memref<9x1x32xf32, #tpu.memory_space<vmem>>, vector<1x1x32xf32>
    %43 = vector.shape_cast %42 : vector<1x1x32xf32> to vector<1x32xf32>
    %44 = arith.extf %41 : vector<8x8x32xbf16> to vector<8x8x32xf32>
    %45 = vector.shape_cast %43 : vector<1x32xf32> to vector<1x1x32xf32>
    %46 = vector.broadcast %45 : vector<1x1x32xf32> to vector<8x8x32xf32>
    %47 = arith.mulf %44, %46 : vector<8x8x32xf32>
    %48 = arith.addf %40, %47 : vector<8x8x32xf32>
    %49 = vector.extract_strided_slice %1 {offsets = [2, 0, 0], sizes = [8, 8, 32], strides = [1, 1, 1]} : vector<10x10x32xbf16> to vector<8x8x32xbf16>
    %c6 = arith.constant 6 : index
    %c0_16 = arith.constant 0 : index
    %c0_17 = arith.constant 0 : index
    %50 = vector.load %arg2[%c6, %c0_16, %c0_17] : memref<9x1x32xf32, #tpu.memory_space<vmem>>, vector<1x1x32xf32>
    %51 = vector.shape_cast %50 : vector<1x1x32xf32> to vector<1x32xf32>
    %52 = arith.extf %49 : vector<8x8x32xbf16> to vector<8x8x32xf32>
    %53 = vector.shape_cast %51 : vector<1x32xf32> to vector<1x1x32xf32>
    %54 = vector.broadcast %53 : vector<1x1x32xf32> to vector<8x8x32xf32>
    %55 = arith.mulf %52, %54 : vector<8x8x32xf32>
    %56 = arith.addf %48, %55 : vector<8x8x32xf32>
    %57 = vector.extract_strided_slice %1 {offsets = [2, 1, 0], sizes = [8, 8, 32], strides = [1, 1, 1]} : vector<10x10x32xbf16> to vector<8x8x32xbf16>
    %c7 = arith.constant 7 : index
    %c0_18 = arith.constant 0 : index
    %c0_19 = arith.constant 0 : index
    %58 = vector.load %arg2[%c7, %c0_18, %c0_19] : memref<9x1x32xf32, #tpu.memory_space<vmem>>, vector<1x1x32xf32>
    %59 = vector.shape_cast %58 : vector<1x1x32xf32> to vector<1x32xf32>
    %60 = arith.extf %57 : vector<8x8x32xbf16> to vector<8x8x32xf32>
    %61 = vector.shape_cast %59 : vector<1x32xf32> to vector<1x1x32xf32>
    %62 = vector.broadcast %61 : vector<1x1x32xf32> to vector<8x8x32xf32>
    %63 = arith.mulf %60, %62 : vector<8x8x32xf32>
    %64 = arith.addf %56, %63 : vector<8x8x32xf32>
    %65 = vector.extract_strided_slice %1 {offsets = [2, 2, 0], sizes = [8, 8, 32], strides = [1, 1, 1]} : vector<10x10x32xbf16> to vector<8x8x32xbf16>
    %c8 = arith.constant 8 : index
    %c0_20 = arith.constant 0 : index
    %c0_21 = arith.constant 0 : index
    %66 = vector.load %arg2[%c8, %c0_20, %c0_21] : memref<9x1x32xf32, #tpu.memory_space<vmem>>, vector<1x1x32xf32>
    %67 = vector.shape_cast %66 : vector<1x1x32xf32> to vector<1x32xf32>
    %68 = arith.extf %65 : vector<8x8x32xbf16> to vector<8x8x32xf32>
    %69 = vector.shape_cast %67 : vector<1x32xf32> to vector<1x1x32xf32>
    %70 = vector.broadcast %69 : vector<1x1x32xf32> to vector<8x8x32xf32>
    %71 = arith.mulf %68, %70 : vector<8x8x32xf32>
    %72 = arith.addf %64, %71 : vector<8x8x32xf32>
    %c0_22 = arith.constant 0 : index
    %c0_23 = arith.constant 0 : index
    %73 = vector.load %arg3[%c0_22, %c0_23] : memref<1x32xf32, #tpu.memory_space<vmem>>, vector<1x32xf32>
    %74 = vector.shape_cast %73 : vector<1x32xf32> to vector<1x1x32xf32>
    %75 = vector.broadcast %74 : vector<1x1x32xf32> to vector<8x8x32xf32>
    %76 = arith.addf %72, %75 : vector<8x8x32xf32>
    %cst = arith.constant 0.000000e+00 : f32
    %cst_24 = arith.constant 6.000000e+00 : f32
    %77 = vector.broadcast %cst : f32 to vector<8x8x32xf32>
    %78 = arith.maximumf %77, %76 : vector<8x8x32xf32>
    %79 = vector.broadcast %cst_24 : f32 to vector<8x8x32xf32>
    %80 = arith.minimumf %79, %78 : vector<8x8x32xf32>
    %81 = vector.shape_cast %80 : vector<8x8x32xf32> to vector<1x8x8x32xf32>
    %82 = arith.truncf %81 : vector<1x8x8x32xf32> to vector<1x8x8x32xbf16>
    %c0_25 = arith.constant 0 : index
    %c0_26 = arith.constant 0 : index
    %c0_27 = arith.constant 0 : index
    %c0_28 = arith.constant 0 : index
    %83 = vector.load %arg4[%c0_25, %c0_26, %c0_27, %c0_28] : memref<1x8x8x32xbf16, #tpu.memory_space<vmem>>, vector<1x8x8x32xbf16>
    tpu.vector_store %arg4[%c0_25, %c0_26, %c0_27, %c0_28], %82 {strides = array<i32>} : memref<1x8x8x32xbf16, #tpu.memory_space<vmem>>, vector<1x8x8x32xbf16>,
    return
  }
  func.func @transform_0(%arg0: i32) -> (i32, i32, i32, i32) {
    %c0_i32 = arith.constant 0 : i32
    %c0_i32_0 = arith.constant 0 : i32
    %c0_i32_1 = arith.constant 0 : i32
    %c0_i32_2 = arith.constant 0 : i32
    return %arg0, %c0_i32, %c0_i32_0, %c0_i32_1 : i32, i32, i32, i32
  }
  func.func @transform_1(%arg0: i32) -> (i32, i32, i32) {
    %c0_i32 = arith.constant 0 : i32
    %c0_i32_0 = arith.constant 0 : i32
    %c0_i32_1 = arith.constant 0 : i32
    %c0_i32_2 = arith.constant 0 : i32
    return %c0_i32, %c0_i32_0, %c0_i32_1 : i32, i32, i32
  }
  func.func @transform_2(%arg0: i32) -> (i32, i32) {
    %c0_i32 = arith.constant 0 : i32
    %c0_i32_0 = arith.constant 0 : i32
    %c0_i32_1 = arith.constant 0 : i32
    return %c0_i32, %c0_i32_0 : i32, i32
  }
  func.func @transform_3(%arg0: i32) -> (i32, i32, i32, i32) {
    %c0_i32 = arith.constant 0 : i32
    %c0_i32_0 = arith.constant 0 : i32
    %c0_i32_1 = arith.constant 0 : i32
    %c0_i32_2 = arith.constant 0 : i32
    return %arg0, %c0_i32, %c0_i32_0, %c0_i32_1 : i32, i32, i32, i32
  }
}

module attributes {stable_mosaic.version = 11 : i64} {
  func.func @_matmul_bias_relu6_kernel(%arg0: i32, %arg1: i32, %arg2: memref<128x32xbf16, #tpu.memory_space<vmem>>, %arg3: memref<32x32xbf16, #tpu.memory_space<vmem>>, %arg4: memref<1x32xf32, #tpu.memory_space<vmem>>, %arg5: memref<128x32xbf16, #tpu.memory_space<vmem>>) attributes {dimension_semantics = [#tpu.dimension_semantics<parallel>, #tpu.dimension_semantics<parallel>], iteration_bounds = array<i64: 1, 1>, scalar_prefetch = 0 : i64, scratch_operands = 0 : i64, tpu.core_type = #tpu.core_type<tc>, window_params = [{transform_indices = @transform_0, window_bounds = array<i64: 128, 32>}, {transform_indices = @transform_1, window_bounds = array<i64: 32, 32>}, {transform_indices = @transform_2, window_bounds = array<i64: 1, 32>}, {transform_indices = @transform_3, window_bounds = array<i64: 128, 32>}]} {
    %c0 = arith.constant 0 : index
    %c0_0 = arith.constant 0 : index
    %0 = vector.load %arg2[%c0, %c0_0] : memref<128x32xbf16, #tpu.memory_space<vmem>>, vector<128x32xbf16>
    %c0_1 = arith.constant 0 : index
    %c0_2 = arith.constant 0 : index
    %1 = vector.load %arg3[%c0_1, %c0_2] : memref<32x32xbf16, #tpu.memory_space<vmem>>, vector<32x32xbf16>
    %cst = arith.constant dense<0.000000e+00> : vector<128x32xf32>
    %2 = tpu.matmul %0, %1, %cst {dimension_numbers = #tpu.dot_dimension_numbers<[1], [0], [0], [1], [0, 0, 1, 1], [], []>} : vector<128x32xbf16>, vector<32x32xbf16>, vector<128x32xf32> -> vector<128x32xf32>
    %c0_3 = arith.constant 0 : index
    %c0_4 = arith.constant 0 : index
    %3 = vector.load %arg4[%c0_3, %c0_4] : memref<1x32xf32, #tpu.memory_space<vmem>>, vector<1x32xf32>
    %4 = vector.broadcast %3 : vector<1x32xf32> to vector<128x32xf32>
    %5 = arith.addf %2, %4 : vector<128x32xf32>
    %cst_5 = arith.constant 0.000000e+00 : f32
    %cst_6 = arith.constant 6.000000e+00 : f32
    %6 = vector.broadcast %cst_5 : f32 to vector<128x32xf32>
    %7 = arith.maximumf %6, %5 : vector<128x32xf32>
    %8 = vector.broadcast %cst_6 : f32 to vector<128x32xf32>
    %9 = arith.minimumf %8, %7 : vector<128x32xf32>
    %10 = arith.truncf %9 : vector<128x32xf32> to vector<128x32xbf16>
    %c0_7 = arith.constant 0 : index
    %c0_8 = arith.constant 0 : index
    %11 = vector.load %arg5[%c0_7, %c0_8] : memref<128x32xbf16, #tpu.memory_space<vmem>>, vector<128x32xbf16>
    tpu.vector_store %arg5[%c0_7, %c0_8], %10 {strides = array<i32>} : memref<128x32xbf16, #tpu.memory_space<vmem>>, vector<128x32xbf16>,
    return
  }
  func.func @transform_0(%arg0: i32, %arg1: i32) -> (i32, i32) {
    %c0_i32 = arith.constant 0 : i32
    %c0_i32_0 = arith.constant 0 : i32
    return %arg0, %c0_i32 : i32, i32
  }
  func.func @transform_1(%arg0: i32, %arg1: i32) -> (i32, i32) {
    %c0_i32 = arith.constant 0 : i32
    %c0_i32_0 = arith.constant 0 : i32
    return %c0_i32, %arg1 : i32, i32
  }
  func.func @transform_2(%arg0: i32, %arg1: i32) -> (i32, i32) {
    %c0_i32 = arith.constant 0 : i32
    %c0_i32_0 = arith.constant 0 : i32
    return %c0_i32, %arg1 : i32, i32
  }
  func.func @transform_3(%arg0: i32, %arg1: i32) -> (i32, i32) {
    %c0_i32 = arith.constant 0 : i32
    return %arg0, %arg1 : i32, i32
  }
}

module attributes {stable_mosaic.version = 11 : i64} {
  func.func @_matmul_bias_relu6_kernel(%arg0: i32, %arg1: i32, %arg2: memref<32x32xbf16, #tpu.memory_space<vmem>>, %arg3: memref<32x64xbf16, #tpu.memory_space<vmem>>, %arg4: memref<1x64xf32, #tpu.memory_space<vmem>>, %arg5: memref<32x64xbf16, #tpu.memory_space<vmem>>) attributes {dimension_semantics = [#tpu.dimension_semantics<parallel>, #tpu.dimension_semantics<parallel>], iteration_bounds = array<i64: 1, 1>, scalar_prefetch = 0 : i64, scratch_operands = 0 : i64, tpu.core_type = #tpu.core_type<tc>, window_params = [{transform_indices = @transform_0, window_bounds = array<i64: 32, 32>}, {transform_indices = @transform_1, window_bounds = array<i64: 32, 64>}, {transform_indices = @transform_2, window_bounds = array<i64: 1, 64>}, {transform_indices = @transform_3, window_bounds = array<i64: 32, 64>}]} {
    %c0 = arith.constant 0 : index
    %c0_0 = arith.constant 0 : index
    %0 = vector.load %arg2[%c0, %c0_0] : memref<32x32xbf16, #tpu.memory_space<vmem>>, vector<32x32xbf16>
    %c0_1 = arith.constant 0 : index
    %c0_2 = arith.constant 0 : index
    %1 = vector.load %arg3[%c0_1, %c0_2] : memref<32x64xbf16, #tpu.memory_space<vmem>>, vector<32x64xbf16>
    %cst = arith.constant dense<0.000000e+00> : vector<32x64xf32>
    %2 = tpu.matmul %0, %1, %cst {dimension_numbers = #tpu.dot_dimension_numbers<[1], [0], [0], [1], [0, 0, 1, 1], [], []>} : vector<32x32xbf16>, vector<32x64xbf16>, vector<32x64xf32> -> vector<32x64xf32>
    %c0_3 = arith.constant 0 : index
    %c0_4 = arith.constant 0 : index
    %3 = vector.load %arg4[%c0_3, %c0_4] : memref<1x64xf32, #tpu.memory_space<vmem>>, vector<1x64xf32>
    %4 = vector.broadcast %3 : vector<1x64xf32> to vector<32x64xf32>
    %5 = arith.addf %2, %4 : vector<32x64xf32>
    %cst_5 = arith.constant 0.000000e+00 : f32
    %cst_6 = arith.constant 6.000000e+00 : f32
    %6 = vector.broadcast %cst_5 : f32 to vector<32x64xf32>
    %7 = arith.maximumf %6, %5 : vector<32x64xf32>
    %8 = vector.broadcast %cst_6 : f32 to vector<32x64xf32>
    %9 = arith.minimumf %8, %7 : vector<32x64xf32>
    %10 = arith.truncf %9 : vector<32x64xf32> to vector<32x64xbf16>
    %c0_7 = arith.constant 0 : index
    %c0_8 = arith.constant 0 : index
    %11 = vector.load %arg5[%c0_7, %c0_8] : memref<32x64xbf16, #tpu.memory_space<vmem>>, vector<32x64xbf16>
    tpu.vector_store %arg5[%c0_7, %c0_8], %10 {strides = array<i32>} : memref<32x64xbf16, #tpu.memory_space<vmem>>, vector<32x64xbf16>,
    return
  }
  func.func @transform_0(%arg0: i32, %arg1: i32) -> (i32, i32) {
    %c0_i32 = arith.constant 0 : i32
    %c0_i32_0 = arith.constant 0 : i32
    return %arg0, %c0_i32 : i32, i32
  }
  func.func @transform_1(%arg0: i32, %arg1: i32) -> (i32, i32) {
    %c0_i32 = arith.constant 0 : i32
    %c0_i32_0 = arith.constant 0 : i32
    return %c0_i32, %arg1 : i32, i32
  }
  func.func @transform_2(%arg0: i32, %arg1: i32) -> (i32, i32) {
    %c0_i32 = arith.constant 0 : i32
    %c0_i32_0 = arith.constant 0 : i32
    return %c0_i32, %arg1 : i32, i32
  }
  func.func @transform_3(%arg0: i32, %arg1: i32) -> (i32, i32) {
    %c0_i32 = arith.constant 0 : i32
    return %arg0, %arg1 : i32, i32
  }
}

module attributes {stable_mosaic.version = 11 : i64} {
  func.func @_dw_s2_kernel(%arg0: i32, %arg1: memref<1x5x5x32xbf16, #tpu.memory_space<vmem>>, %arg2: memref<1x5x4x32xbf16, #tpu.memory_space<vmem>>, %arg3: memref<1x4x5x32xbf16, #tpu.memory_space<vmem>>, %arg4: memref<1x4x4x32xbf16, #tpu.memory_space<vmem>>, %arg5: memref<9x1x32xf32, #tpu.memory_space<vmem>>, %arg6: memref<1x32xf32, #tpu.memory_space<vmem>>, %arg7: memref<1x4x4x32xbf16, #tpu.memory_space<vmem>>) attributes {dimension_semantics = [#tpu.dimension_semantics<parallel>], iteration_bounds = array<i64: 2>, scalar_prefetch = 0 : i64, scratch_operands = 0 : i64, tpu.core_type = #tpu.core_type<tc>, window_params = [{transform_indices = @transform_0, window_bounds = array<i64: 1, 5, 5, 32>}, {transform_indices = @transform_1, window_bounds = array<i64: 1, 5, 4, 32>}, {transform_indices = @transform_2, window_bounds = array<i64: 1, 4, 5, 32>}, {transform_indices = @transform_3, window_bounds = array<i64: 1, 4, 4, 32>}, {pipeline_mode = #tpu.pipeline_mode<synchronous>, transform_indices = @transform_4, window_bounds = array<i64: 9, 1, 32>}, {pipeline_mode = #tpu.pipeline_mode<synchronous>, transform_indices = @transform_5, window_bounds = array<i64: 1, 32>}, {transform_indices = @transform_6, window_bounds = array<i64: 1, 4, 4, 32>}]} {
    %c0 = arith.constant 0 : index
    %c0_0 = arith.constant 0 : index
    %c0_1 = arith.constant 0 : index
    %c0_2 = arith.constant 0 : index
    %0 = vector.load %arg1[%c0, %c0_0, %c0_1, %c0_2] : memref<1x5x5x32xbf16, #tpu.memory_space<vmem>>, vector<1x5x5x32xbf16>
    %1 = vector.shape_cast %0 : vector<1x5x5x32xbf16> to vector<5x5x32xbf16>
    %c0_3 = arith.constant 0 : index
    %c0_4 = arith.constant 0 : index
    %c0_5 = arith.constant 0 : index
    %c0_6 = arith.constant 0 : index
    %2 = vector.load %arg2[%c0_3, %c0_4, %c0_5, %c0_6] : memref<1x5x4x32xbf16, #tpu.memory_space<vmem>>, vector<1x5x4x32xbf16>
    %3 = vector.shape_cast %2 : vector<1x5x4x32xbf16> to vector<5x4x32xbf16>
    %c0_7 = arith.constant 0 : index
    %c0_8 = arith.constant 0 : index
    %c0_9 = arith.constant 0 : index
    %c0_10 = arith.constant 0 : index
    %4 = vector.load %arg3[%c0_7, %c0_8, %c0_9, %c0_10] : memref<1x4x5x32xbf16, #tpu.memory_space<vmem>>, vector<1x4x5x32xbf16>
    %5 = vector.shape_cast %4 : vector<1x4x5x32xbf16> to vector<4x5x32xbf16>
    %c0_11 = arith.constant 0 : index
    %c0_12 = arith.constant 0 : index
    %c0_13 = arith.constant 0 : index
    %c0_14 = arith.constant 0 : index
    %6 = vector.load %arg4[%c0_11, %c0_12, %c0_13, %c0_14] : memref<1x4x4x32xbf16, #tpu.memory_space<vmem>>, vector<1x4x4x32xbf16>
    %7 = vector.shape_cast %6 : vector<1x4x4x32xbf16> to vector<4x4x32xbf16>
    %8 = vector.extract_strided_slice %1 {offsets = [0, 0, 0], sizes = [4, 4, 32], strides = [1, 1, 1]} : vector<5x5x32xbf16> to vector<4x4x32xbf16>
    %c0_15 = arith.constant 0 : index
    %c0_16 = arith.constant 0 : index
    %c0_17 = arith.constant 0 : index
    %9 = vector.load %arg5[%c0_15, %c0_16, %c0_17] : memref<9x1x32xf32, #tpu.memory_space<vmem>>, vector<1x1x32xf32>
    %10 = vector.shape_cast %9 : vector<1x1x32xf32> to vector<1x32xf32>
    %11 = arith.extf %8 : vector<4x4x32xbf16> to vector<4x4x32xf32>
    %12 = vector.shape_cast %10 : vector<1x32xf32> to vector<1x1x32xf32>
    %13 = vector.broadcast %12 : vector<1x1x32xf32> to vector<4x4x32xf32>
    %14 = arith.mulf %11, %13 : vector<4x4x32xf32>
    %15 = vector.extract_strided_slice %3 {offsets = [0, 0, 0], sizes = [4, 4, 32], strides = [1, 1, 1]} : vector<5x4x32xbf16> to vector<4x4x32xbf16>
    %c1 = arith.constant 1 : index
    %c0_18 = arith.constant 0 : index
    %c0_19 = arith.constant 0 : index
    %16 = vector.load %arg5[%c1, %c0_18, %c0_19] : memref<9x1x32xf32, #tpu.memory_space<vmem>>, vector<1x1x32xf32>
    %17 = vector.shape_cast %16 : vector<1x1x32xf32> to vector<1x32xf32>
    %18 = arith.extf %15 : vector<4x4x32xbf16> to vector<4x4x32xf32>
    %19 = vector.shape_cast %17 : vector<1x32xf32> to vector<1x1x32xf32>
    %20 = vector.broadcast %19 : vector<1x1x32xf32> to vector<4x4x32xf32>
    %21 = arith.mulf %18, %20 : vector<4x4x32xf32>
    %22 = arith.addf %14, %21 : vector<4x4x32xf32>
    %23 = vector.extract_strided_slice %1 {offsets = [0, 1, 0], sizes = [4, 4, 32], strides = [1, 1, 1]} : vector<5x5x32xbf16> to vector<4x4x32xbf16>
    %c2 = arith.constant 2 : index
    %c0_20 = arith.constant 0 : index
    %c0_21 = arith.constant 0 : index
    %24 = vector.load %arg5[%c2, %c0_20, %c0_21] : memref<9x1x32xf32, #tpu.memory_space<vmem>>, vector<1x1x32xf32>
    %25 = vector.shape_cast %24 : vector<1x1x32xf32> to vector<1x32xf32>
    %26 = arith.extf %23 : vector<4x4x32xbf16> to vector<4x4x32xf32>
    %27 = vector.shape_cast %25 : vector<1x32xf32> to vector<1x1x32xf32>
    %28 = vector.broadcast %27 : vector<1x1x32xf32> to vector<4x4x32xf32>
    %29 = arith.mulf %26, %28 : vector<4x4x32xf32>
    %30 = arith.addf %22, %29 : vector<4x4x32xf32>
    %31 = vector.extract_strided_slice %5 {offsets = [0, 0, 0], sizes = [4, 4, 32], strides = [1, 1, 1]} : vector<4x5x32xbf16> to vector<4x4x32xbf16>
    %c3 = arith.constant 3 : index
    %c0_22 = arith.constant 0 : index
    %c0_23 = arith.constant 0 : index
    %32 = vector.load %arg5[%c3, %c0_22, %c0_23] : memref<9x1x32xf32, #tpu.memory_space<vmem>>, vector<1x1x32xf32>
    %33 = vector.shape_cast %32 : vector<1x1x32xf32> to vector<1x32xf32>
    %34 = arith.extf %31 : vector<4x4x32xbf16> to vector<4x4x32xf32>
    %35 = vector.shape_cast %33 : vector<1x32xf32> to vector<1x1x32xf32>
    %36 = vector.broadcast %35 : vector<1x1x32xf32> to vector<4x4x32xf32>
    %37 = arith.mulf %34, %36 : vector<4x4x32xf32>
    %38 = arith.addf %30, %37 : vector<4x4x32xf32>
    %c4 = arith.constant 4 : index
    %c0_24 = arith.constant 0 : index
    %c0_25 = arith.constant 0 : index
    %39 = vector.load %arg5[%c4, %c0_24, %c0_25] : memref<9x1x32xf32, #tpu.memory_space<vmem>>, vector<1x1x32xf32>
    %40 = vector.shape_cast %39 : vector<1x1x32xf32> to vector<1x32xf32>
    %41 = arith.extf %7 : vector<4x4x32xbf16> to vector<4x4x32xf32>
    %42 = vector.shape_cast %40 : vector<1x32xf32> to vector<1x1x32xf32>
    %43 = vector.broadcast %42 : vector<1x1x32xf32> to vector<4x4x32xf32>
    %44 = arith.mulf %41, %43 : vector<4x4x32xf32>
    %45 = arith.addf %38, %44 : vector<4x4x32xf32>
    %46 = vector.extract_strided_slice %5 {offsets = [0, 1, 0], sizes = [4, 4, 32], strides = [1, 1, 1]} : vector<4x5x32xbf16> to vector<4x4x32xbf16>
    %c5 = arith.constant 5 : index
    %c0_26 = arith.constant 0 : index
    %c0_27 = arith.constant 0 : index
    %47 = vector.load %arg5[%c5, %c0_26, %c0_27] : memref<9x1x32xf32, #tpu.memory_space<vmem>>, vector<1x1x32xf32>
    %48 = vector.shape_cast %47 : vector<1x1x32xf32> to vector<1x32xf32>
    %49 = arith.extf %46 : vector<4x4x32xbf16> to vector<4x4x32xf32>
    %50 = vector.shape_cast %48 : vector<1x32xf32> to vector<1x1x32xf32>
    %51 = vector.broadcast %50 : vector<1x1x32xf32> to vector<4x4x32xf32>
    %52 = arith.mulf %49, %51 : vector<4x4x32xf32>
    %53 = arith.addf %45, %52 : vector<4x4x32xf32>
    %54 = vector.extract_strided_slice %1 {offsets = [1, 0, 0], sizes = [4, 4, 32], strides = [1, 1, 1]} : vector<5x5x32xbf16> to vector<4x4x32xbf16>
    %c6 = arith.constant 6 : index
    %c0_28 = arith.constant 0 : index
    %c0_29 = arith.constant 0 : index
    %55 = vector.load %arg5[%c6, %c0_28, %c0_29] : memref<9x1x32xf32, #tpu.memory_space<vmem>>, vector<1x1x32xf32>
    %56 = vector.shape_cast %55 : vector<1x1x32xf32> to vector<1x32xf32>
    %57 = arith.extf %54 : vector<4x4x32xbf16> to vector<4x4x32xf32>
    %58 = vector.shape_cast %56 : vector<1x32xf32> to vector<1x1x32xf32>
    %59 = vector.broadcast %58 : vector<1x1x32xf32> to vector<4x4x32xf32>
    %60 = arith.mulf %57, %59 : vector<4x4x32xf32>
    %61 = arith.addf %53, %60 : vector<4x4x32xf32>
    %62 = vector.extract_strided_slice %3 {offsets = [1, 0, 0], sizes = [4, 4, 32], strides = [1, 1, 1]} : vector<5x4x32xbf16> to vector<4x4x32xbf16>
    %c7 = arith.constant 7 : index
    %c0_30 = arith.constant 0 : index
    %c0_31 = arith.constant 0 : index
    %63 = vector.load %arg5[%c7, %c0_30, %c0_31] : memref<9x1x32xf32, #tpu.memory_space<vmem>>, vector<1x1x32xf32>
    %64 = vector.shape_cast %63 : vector<1x1x32xf32> to vector<1x32xf32>
    %65 = arith.extf %62 : vector<4x4x32xbf16> to vector<4x4x32xf32>
    %66 = vector.shape_cast %64 : vector<1x32xf32> to vector<1x1x32xf32>
    %67 = vector.broadcast %66 : vector<1x1x32xf32> to vector<4x4x32xf32>
    %68 = arith.mulf %65, %67 : vector<4x4x32xf32>
    %69 = arith.addf %61, %68 : vector<4x4x32xf32>
    %70 = vector.extract_strided_slice %1 {offsets = [1, 1, 0], sizes = [4, 4, 32], strides = [1, 1, 1]} : vector<5x5x32xbf16> to vector<4x4x32xbf16>
    %c8 = arith.constant 8 : index
    %c0_32 = arith.constant 0 : index
    %c0_33 = arith.constant 0 : index
    %71 = vector.load %arg5[%c8, %c0_32, %c0_33] : memref<9x1x32xf32, #tpu.memory_space<vmem>>, vector<1x1x32xf32>
    %72 = vector.shape_cast %71 : vector<1x1x32xf32> to vector<1x32xf32>
    %73 = arith.extf %70 : vector<4x4x32xbf16> to vector<4x4x32xf32>
    %74 = vector.shape_cast %72 : vector<1x32xf32> to vector<1x1x32xf32>
    %75 = vector.broadcast %74 : vector<1x1x32xf32> to vector<4x4x32xf32>
    %76 = arith.mulf %73, %75 : vector<4x4x32xf32>
    %77 = arith.addf %69, %76 : vector<4x4x32xf32>
    %c0_34 = arith.constant 0 : index
    %c0_35 = arith.constant 0 : index
    %78 = vector.load %arg6[%c0_34, %c0_35] : memref<1x32xf32, #tpu.memory_space<vmem>>, vector<1x32xf32>
    %79 = vector.shape_cast %78 : vector<1x32xf32> to vector<1x1x32xf32>
    %80 = vector.broadcast %79 : vector<1x1x32xf32> to vector<4x4x32xf32>
    %81 = arith.addf %77, %80 : vector<4x4x32xf32>
    %cst = arith.constant 0.000000e+00 : f32
    %cst_36 = arith.constant 6.000000e+00 : f32
    %82 = vector.broadcast %cst : f32 to vector<4x4x32xf32>
    %83 = arith.maximumf %82, %81 : vector<4x4x32xf32>
    %84 = vector.broadcast %cst_36 : f32 to vector<4x4x32xf32>
    %85 = arith.minimumf %84, %83 : vector<4x4x32xf32>
    %86 = vector.shape_cast %85 : vector<4x4x32xf32> to vector<1x4x4x32xf32>
    %87 = arith.truncf %86 : vector<1x4x4x32xf32> to vector<1x4x4x32xbf16>
    %c0_37 = arith.constant 0 : index
    %c0_38 = arith.constant 0 : index
    %c0_39 = arith.constant 0 : index
    %c0_40 = arith.constant 0 : index
    %88 = vector.load %arg7[%c0_37, %c0_38, %c0_39, %c0_40] : memref<1x4x4x32xbf16, #tpu.memory_space<vmem>>, vector<1x4x4x32xbf16>
    tpu.vector_store %arg7[%c0_37, %c0_38, %c0_39, %c0_40], %87 {strides = array<i32>} : memref<1x4x4x32xbf16, #tpu.memory_space<vmem>>, vector<1x4x4x32xbf16>,
    return
  }
  func.func @transform_0(%arg0: i32) -> (i32, i32, i32, i32) {
    %c0_i32 = arith.constant 0 : i32
    %c0_i32_0 = arith.constant 0 : i32
    %c0_i32_1 = arith.constant 0 : i32
    %c0_i32_2 = arith.constant 0 : i32
    return %arg0, %c0_i32, %c0_i32_0, %c0_i32_1 : i32, i32, i32, i32
  }
  func.func @transform_1(%arg0: i32) -> (i32, i32, i32, i32) {
    %c0_i32 = arith.constant 0 : i32
    %c0_i32_0 = arith.constant 0 : i32
    %c0_i32_1 = arith.constant 0 : i32
    %c0_i32_2 = arith.constant 0 : i32
    return %arg0, %c0_i32, %c0_i32_0, %c0_i32_1 : i32, i32, i32, i32
  }
  func.func @transform_2(%arg0: i32) -> (i32, i32, i32, i32) {
    %c0_i32 = arith.constant 0 : i32
    %c0_i32_0 = arith.constant 0 : i32
    %c0_i32_1 = arith.constant 0 : i32
    %c0_i32_2 = arith.constant 0 : i32
    return %arg0, %c0_i32, %c0_i32_0, %c0_i32_1 : i32, i32, i32, i32
  }
  func.func @transform_3(%arg0: i32) -> (i32, i32, i32, i32) {
    %c0_i32 = arith.constant 0 : i32
    %c0_i32_0 = arith.constant 0 : i32
    %c0_i32_1 = arith.constant 0 : i32
    %c0_i32_2 = arith.constant 0 : i32
    return %arg0, %c0_i32, %c0_i32_0, %c0_i32_1 : i32, i32, i32, i32
  }
  func.func @transform_4(%arg0: i32) -> (i32, i32, i32) {
    %c0_i32 = arith.constant 0 : i32
    %c0_i32_0 = arith.constant 0 : i32
    %c0_i32_1 = arith.constant 0 : i32
    %c0_i32_2 = arith.constant 0 : i32
    return %c0_i32, %c0_i32_0, %c0_i32_1 : i32, i32, i32
  }
  func.func @transform_5(%arg0: i32) -> (i32, i32) {
    %c0_i32 = arith.constant 0 : i32
    %c0_i32_0 = arith.constant 0 : i32
    %c0_i32_1 = arith.constant 0 : i32
    return %c0_i32, %c0_i32_0 : i32, i32
  }
  func.func @transform_6(%arg0: i32) -> (i32, i32, i32, i32) {
    %c0_i32 = arith.constant 0 : i32
    %c0_i32_0 = arith.constant 0 : i32
    %c0_i32_1 = arith.constant 0 : i32
    %c0_i32_2 = arith.constant 0 : i32
    return %arg0, %c0_i32, %c0_i32_0, %c0_i32_1 : i32, i32, i32, i32
  }
}

module attributes {stable_mosaic.version = 11 : i64} {
  func.func @_matmul_bias_relu6_kernel(%arg0: i32, %arg1: i32, %arg2: memref<32x64xbf16, #tpu.memory_space<vmem>>, %arg3: memref<64x64xbf16, #tpu.memory_space<vmem>>, %arg4: memref<1x64xf32, #tpu.memory_space<vmem>>, %arg5: memref<32x64xbf16, #tpu.memory_space<vmem>>) attributes {dimension_semantics = [#tpu.dimension_semantics<parallel>, #tpu.dimension_semantics<parallel>], iteration_bounds = array<i64: 1, 1>, scalar_prefetch = 0 : i64, scratch_operands = 0 : i64, tpu.core_type = #tpu.core_type<tc>, window_params = [{transform_indices = @transform_0, window_bounds = array<i64: 32, 64>}, {transform_indices = @transform_1, window_bounds = array<i64: 64, 64>}, {transform_indices = @transform_2, window_bounds = array<i64: 1, 64>}, {transform_indices = @transform_3, window_bounds = array<i64: 32, 64>}]} {
    %c0 = arith.constant 0 : index
    %c0_0 = arith.constant 0 : index
    %0 = vector.load %arg2[%c0, %c0_0] : memref<32x64xbf16, #tpu.memory_space<vmem>>, vector<32x64xbf16>
    %c0_1 = arith.constant 0 : index
    %c0_2 = arith.constant 0 : index
    %1 = vector.load %arg3[%c0_1, %c0_2] : memref<64x64xbf16, #tpu.memory_space<vmem>>, vector<64x64xbf16>
    %cst = arith.constant dense<0.000000e+00> : vector<32x64xf32>
    %2 = tpu.matmul %0, %1, %cst {dimension_numbers = #tpu.dot_dimension_numbers<[1], [0], [0], [1], [0, 0, 1, 1], [], []>} : vector<32x64xbf16>, vector<64x64xbf16>, vector<32x64xf32> -> vector<32x64xf32>
    %c0_3 = arith.constant 0 : index
    %c0_4 = arith.constant 0 : index
    %3 = vector.load %arg4[%c0_3, %c0_4] : memref<1x64xf32, #tpu.memory_space<vmem>>, vector<1x64xf32>
    %4 = vector.broadcast %3 : vector<1x64xf32> to vector<32x64xf32>
    %5 = arith.addf %2, %4 : vector<32x64xf32>
    %cst_5 = arith.constant 0.000000e+00 : f32
    %cst_6 = arith.constant 6.000000e+00 : f32
    %6 = vector.broadcast %cst_5 : f32 to vector<32x64xf32>
    %7 = arith.maximumf %6, %5 : vector<32x64xf32>
    %8 = vector.broadcast %cst_6 : f32 to vector<32x64xf32>
    %9 = arith.minimumf %8, %7 : vector<32x64xf32>
    %10 = arith.truncf %9 : vector<32x64xf32> to vector<32x64xbf16>
    %c0_7 = arith.constant 0 : index
    %c0_8 = arith.constant 0 : index
    %11 = vector.load %arg5[%c0_7, %c0_8] : memref<32x64xbf16, #tpu.memory_space<vmem>>, vector<32x64xbf16>
    tpu.vector_store %arg5[%c0_7, %c0_8], %10 {strides = array<i32>} : memref<32x64xbf16, #tpu.memory_space<vmem>>, vector<32x64xbf16>,
    return
  }
  func.func @transform_0(%arg0: i32, %arg1: i32) -> (i32, i32) {
    %c0_i32 = arith.constant 0 : i32
    %c0_i32_0 = arith.constant 0 : i32
    return %arg0, %c0_i32 : i32, i32
  }
  func.func @transform_1(%arg0: i32, %arg1: i32) -> (i32, i32) {
    %c0_i32 = arith.constant 0 : i32
    %c0_i32_0 = arith.constant 0 : i32
    return %c0_i32, %arg1 : i32, i32
  }
  func.func @transform_2(%arg0: i32, %arg1: i32) -> (i32, i32) {
    %c0_i32 = arith.constant 0 : i32
    %c0_i32_0 = arith.constant 0 : i32
    return %c0_i32, %arg1 : i32, i32
  }
  func.func @transform_3(%arg0: i32, %arg1: i32) -> (i32, i32) {
    %c0_i32 = arith.constant 0 : i32
    return %arg0, %arg1 : i32, i32
  }
}

module attributes {stable_mosaic.version = 11 : i64} {
  func.func @_dw_s1_kernel(%arg0: i32, %arg1: memref<1x6x6x64xbf16, #tpu.memory_space<vmem>>, %arg2: memref<9x1x64xf32, #tpu.memory_space<vmem>>, %arg3: memref<1x64xf32, #tpu.memory_space<vmem>>, %arg4: memref<1x4x4x64xbf16, #tpu.memory_space<vmem>>) attributes {dimension_semantics = [#tpu.dimension_semantics<parallel>], iteration_bounds = array<i64: 2>, scalar_prefetch = 0 : i64, scratch_operands = 0 : i64, tpu.core_type = #tpu.core_type<tc>, window_params = [{transform_indices = @transform_0, window_bounds = array<i64: 1, 6, 6, 64>}, {pipeline_mode = #tpu.pipeline_mode<synchronous>, transform_indices = @transform_1, window_bounds = array<i64: 9, 1, 64>}, {pipeline_mode = #tpu.pipeline_mode<synchronous>, transform_indices = @transform_2, window_bounds = array<i64: 1, 64>}, {transform_indices = @transform_3, window_bounds = array<i64: 1, 4, 4, 64>}]} {
    %c0 = arith.constant 0 : index
    %c0_0 = arith.constant 0 : index
    %c0_1 = arith.constant 0 : index
    %c0_2 = arith.constant 0 : index
    %0 = vector.load %arg1[%c0, %c0_0, %c0_1, %c0_2] : memref<1x6x6x64xbf16, #tpu.memory_space<vmem>>, vector<1x6x6x64xbf16>
    %1 = vector.shape_cast %0 : vector<1x6x6x64xbf16> to vector<6x6x64xbf16>
    %2 = vector.extract_strided_slice %1 {offsets = [0, 0, 0], sizes = [4, 4, 64], strides = [1, 1, 1]} : vector<6x6x64xbf16> to vector<4x4x64xbf16>
    %c0_3 = arith.constant 0 : index
    %c0_4 = arith.constant 0 : index
    %c0_5 = arith.constant 0 : index
    %3 = vector.load %arg2[%c0_3, %c0_4, %c0_5] : memref<9x1x64xf32, #tpu.memory_space<vmem>>, vector<1x1x64xf32>
    %4 = vector.shape_cast %3 : vector<1x1x64xf32> to vector<1x64xf32>
    %5 = arith.extf %2 : vector<4x4x64xbf16> to vector<4x4x64xf32>
    %6 = vector.shape_cast %4 : vector<1x64xf32> to vector<1x1x64xf32>
    %7 = vector.broadcast %6 : vector<1x1x64xf32> to vector<4x4x64xf32>
    %8 = arith.mulf %5, %7 : vector<4x4x64xf32>
    %9 = vector.extract_strided_slice %1 {offsets = [0, 1, 0], sizes = [4, 4, 64], strides = [1, 1, 1]} : vector<6x6x64xbf16> to vector<4x4x64xbf16>
    %c1 = arith.constant 1 : index
    %c0_6 = arith.constant 0 : index
    %c0_7 = arith.constant 0 : index
    %10 = vector.load %arg2[%c1, %c0_6, %c0_7] : memref<9x1x64xf32, #tpu.memory_space<vmem>>, vector<1x1x64xf32>
    %11 = vector.shape_cast %10 : vector<1x1x64xf32> to vector<1x64xf32>
    %12 = arith.extf %9 : vector<4x4x64xbf16> to vector<4x4x64xf32>
    %13 = vector.shape_cast %11 : vector<1x64xf32> to vector<1x1x64xf32>
    %14 = vector.broadcast %13 : vector<1x1x64xf32> to vector<4x4x64xf32>
    %15 = arith.mulf %12, %14 : vector<4x4x64xf32>
    %16 = arith.addf %8, %15 : vector<4x4x64xf32>
    %17 = vector.extract_strided_slice %1 {offsets = [0, 2, 0], sizes = [4, 4, 64], strides = [1, 1, 1]} : vector<6x6x64xbf16> to vector<4x4x64xbf16>
    %c2 = arith.constant 2 : index
    %c0_8 = arith.constant 0 : index
    %c0_9 = arith.constant 0 : index
    %18 = vector.load %arg2[%c2, %c0_8, %c0_9] : memref<9x1x64xf32, #tpu.memory_space<vmem>>, vector<1x1x64xf32>
    %19 = vector.shape_cast %18 : vector<1x1x64xf32> to vector<1x64xf32>
    %20 = arith.extf %17 : vector<4x4x64xbf16> to vector<4x4x64xf32>
    %21 = vector.shape_cast %19 : vector<1x64xf32> to vector<1x1x64xf32>
    %22 = vector.broadcast %21 : vector<1x1x64xf32> to vector<4x4x64xf32>
    %23 = arith.mulf %20, %22 : vector<4x4x64xf32>
    %24 = arith.addf %16, %23 : vector<4x4x64xf32>
    %25 = vector.extract_strided_slice %1 {offsets = [1, 0, 0], sizes = [4, 4, 64], strides = [1, 1, 1]} : vector<6x6x64xbf16> to vector<4x4x64xbf16>
    %c3 = arith.constant 3 : index
    %c0_10 = arith.constant 0 : index
    %c0_11 = arith.constant 0 : index
    %26 = vector.load %arg2[%c3, %c0_10, %c0_11] : memref<9x1x64xf32, #tpu.memory_space<vmem>>, vector<1x1x64xf32>
    %27 = vector.shape_cast %26 : vector<1x1x64xf32> to vector<1x64xf32>
    %28 = arith.extf %25 : vector<4x4x64xbf16> to vector<4x4x64xf32>
    %29 = vector.shape_cast %27 : vector<1x64xf32> to vector<1x1x64xf32>
    %30 = vector.broadcast %29 : vector<1x1x64xf32> to vector<4x4x64xf32>
    %31 = arith.mulf %28, %30 : vector<4x4x64xf32>
    %32 = arith.addf %24, %31 : vector<4x4x64xf32>
    %33 = vector.extract_strided_slice %1 {offsets = [1, 1, 0], sizes = [4, 4, 64], strides = [1, 1, 1]} : vector<6x6x64xbf16> to vector<4x4x64xbf16>
    %c4 = arith.constant 4 : index
    %c0_12 = arith.constant 0 : index
    %c0_13 = arith.constant 0 : index
    %34 = vector.load %arg2[%c4, %c0_12, %c0_13] : memref<9x1x64xf32, #tpu.memory_space<vmem>>, vector<1x1x64xf32>
    %35 = vector.shape_cast %34 : vector<1x1x64xf32> to vector<1x64xf32>
    %36 = arith.extf %33 : vector<4x4x64xbf16> to vector<4x4x64xf32>
    %37 = vector.shape_cast %35 : vector<1x64xf32> to vector<1x1x64xf32>
    %38 = vector.broadcast %37 : vector<1x1x64xf32> to vector<4x4x64xf32>
    %39 = arith.mulf %36, %38 : vector<4x4x64xf32>
    %40 = arith.addf %32, %39 : vector<4x4x64xf32>
    %41 = vector.extract_strided_slice %1 {offsets = [1, 2, 0], sizes = [4, 4, 64], strides = [1, 1, 1]} : vector<6x6x64xbf16> to vector<4x4x64xbf16>
    %c5 = arith.constant 5 : index
    %c0_14 = arith.constant 0 : index
    %c0_15 = arith.constant 0 : index
    %42 = vector.load %arg2[%c5, %c0_14, %c0_15] : memref<9x1x64xf32, #tpu.memory_space<vmem>>, vector<1x1x64xf32>
    %43 = vector.shape_cast %42 : vector<1x1x64xf32> to vector<1x64xf32>
    %44 = arith.extf %41 : vector<4x4x64xbf16> to vector<4x4x64xf32>
    %45 = vector.shape_cast %43 : vector<1x64xf32> to vector<1x1x64xf32>
    %46 = vector.broadcast %45 : vector<1x1x64xf32> to vector<4x4x64xf32>
    %47 = arith.mulf %44, %46 : vector<4x4x64xf32>
    %48 = arith.addf %40, %47 : vector<4x4x64xf32>
    %49 = vector.extract_strided_slice %1 {offsets = [2, 0, 0], sizes = [4, 4, 64], strides = [1, 1, 1]} : vector<6x6x64xbf16> to vector<4x4x64xbf16>
    %c6 = arith.constant 6 : index
    %c0_16 = arith.constant 0 : index
    %c0_17 = arith.constant 0 : index
    %50 = vector.load %arg2[%c6, %c0_16, %c0_17] : memref<9x1x64xf32, #tpu.memory_space<vmem>>, vector<1x1x64xf32>
    %51 = vector.shape_cast %50 : vector<1x1x64xf32> to vector<1x64xf32>
    %52 = arith.extf %49 : vector<4x4x64xbf16> to vector<4x4x64xf32>
    %53 = vector.shape_cast %51 : vector<1x64xf32> to vector<1x1x64xf32>
    %54 = vector.broadcast %53 : vector<1x1x64xf32> to vector<4x4x64xf32>
    %55 = arith.mulf %52, %54 : vector<4x4x64xf32>
    %56 = arith.addf %48, %55 : vector<4x4x64xf32>
    %57 = vector.extract_strided_slice %1 {offsets = [2, 1, 0], sizes = [4, 4, 64], strides = [1, 1, 1]} : vector<6x6x64xbf16> to vector<4x4x64xbf16>
    %c7 = arith.constant 7 : index
    %c0_18 = arith.constant 0 : index
    %c0_19 = arith.constant 0 : index
    %58 = vector.load %arg2[%c7, %c0_18, %c0_19] : memref<9x1x64xf32, #tpu.memory_space<vmem>>, vector<1x1x64xf32>
    %59 = vector.shape_cast %58 : vector<1x1x64xf32> to vector<1x64xf32>
    %60 = arith.extf %57 : vector<4x4x64xbf16> to vector<4x4x64xf32>
    %61 = vector.shape_cast %59 : vector<1x64xf32> to vector<1x1x64xf32>
    %62 = vector.broadcast %61 : vector<1x1x64xf32> to vector<4x4x64xf32>
    %63 = arith.mulf %60, %62 : vector<4x4x64xf32>
    %64 = arith.addf %56, %63 : vector<4x4x64xf32>
    %65 = vector.extract_strided_slice %1 {offsets = [2, 2, 0], sizes = [4, 4, 64], strides = [1, 1, 1]} : vector<6x6x64xbf16> to vector<4x4x64xbf16>
    %c8 = arith.constant 8 : index
    %c0_20 = arith.constant 0 : index
    %c0_21 = arith.constant 0 : index
    %66 = vector.load %arg2[%c8, %c0_20, %c0_21] : memref<9x1x64xf32, #tpu.memory_space<vmem>>, vector<1x1x64xf32>
    %67 = vector.shape_cast %66 : vector<1x1x64xf32> to vector<1x64xf32>
    %68 = arith.extf %65 : vector<4x4x64xbf16> to vector<4x4x64xf32>
    %69 = vector.shape_cast %67 : vector<1x64xf32> to vector<1x1x64xf32>
    %70 = vector.broadcast %69 : vector<1x1x64xf32> to vector<4x4x64xf32>
    %71 = arith.mulf %68, %70 : vector<4x4x64xf32>
    %72 = arith.addf %64, %71 : vector<4x4x64xf32>
    %c0_22 = arith.constant 0 : index
    %c0_23 = arith.constant 0 : index
    %73 = vector.load %arg3[%c0_22, %c0_23] : memref<1x64xf32, #tpu.memory_space<vmem>>, vector<1x64xf32>
    %74 = vector.shape_cast %73 : vector<1x64xf32> to vector<1x1x64xf32>
    %75 = vector.broadcast %74 : vector<1x1x64xf32> to vector<4x4x64xf32>
    %76 = arith.addf %72, %75 : vector<4x4x64xf32>
    %cst = arith.constant 0.000000e+00 : f32
    %cst_24 = arith.constant 6.000000e+00 : f32
    %77 = vector.broadcast %cst : f32 to vector<4x4x64xf32>
    %78 = arith.maximumf %77, %76 : vector<4x4x64xf32>
    %79 = vector.broadcast %cst_24 : f32 to vector<4x4x64xf32>
    %80 = arith.minimumf %79, %78 : vector<4x4x64xf32>
    %81 = vector.shape_cast %80 : vector<4x4x64xf32> to vector<1x4x4x64xf32>
    %82 = arith.truncf %81 : vector<1x4x4x64xf32> to vector<1x4x4x64xbf16>
    %c0_25 = arith.constant 0 : index
    %c0_26 = arith.constant 0 : index
    %c0_27 = arith.constant 0 : index
    %c0_28 = arith.constant 0 : index
    %83 = vector.load %arg4[%c0_25, %c0_26, %c0_27, %c0_28] : memref<1x4x4x64xbf16, #tpu.memory_space<vmem>>, vector<1x4x4x64xbf16>
    tpu.vector_store %arg4[%c0_25, %c0_26, %c0_27, %c0_28], %82 {strides = array<i32>} : memref<1x4x4x64xbf16, #tpu.memory_space<vmem>>, vector<1x4x4x64xbf16>,
    return
  }
  func.func @transform_0(%arg0: i32) -> (i32, i32, i32, i32) {
    %c0_i32 = arith.constant 0 : i32
    %c0_i32_0 = arith.constant 0 : i32
    %c0_i32_1 = arith.constant 0 : i32
    %c0_i32_2 = arith.constant 0 : i32
    return %arg0, %c0_i32, %c0_i32_0, %c0_i32_1 : i32, i32, i32, i32
  }
  func.func @transform_1(%arg0: i32) -> (i32, i32, i32) {
    %c0_i32 = arith.constant 0 : i32
    %c0_i32_0 = arith.constant 0 : i32
    %c0_i32_1 = arith.constant 0 : i32
    %c0_i32_2 = arith.constant 0 : i32
    return %c0_i32, %c0_i32_0, %c0_i32_1 : i32, i32, i32
  }
  func.func @transform_2(%arg0: i32) -> (i32, i32) {
    %c0_i32 = arith.constant 0 : i32
    %c0_i32_0 = arith.constant 0 : i32
    %c0_i32_1 = arith.constant 0 : i32
    return %c0_i32, %c0_i32_0 : i32, i32
  }
  func.func @transform_3(%arg0: i32) -> (i32, i32, i32, i32) {
    %c0_i32 = arith.constant 0 : i32
    %c0_i32_0 = arith.constant 0 : i32
    %c0_i32_1 = arith.constant 0 : i32
    %c0_i32_2 = arith.constant 0 : i32
    return %arg0, %c0_i32, %c0_i32_0, %c0_i32_1 : i32, i32, i32, i32
  }
}

module attributes {stable_mosaic.version = 11 : i64} {
  func.func @_dw_s2_kernel(%arg0: i32, %arg1: memref<1x3x3x64xbf16, #tpu.memory_space<vmem>>, %arg2: memref<1x3x2x64xbf16, #tpu.memory_space<vmem>>, %arg3: memref<1x2x3x64xbf16, #tpu.memory_space<vmem>>, %arg4: memref<1x2x2x64xbf16, #tpu.memory_space<vmem>>, %arg5: memref<9x1x64xf32, #tpu.memory_space<vmem>>, %arg6: memref<1x64xf32, #tpu.memory_space<vmem>>, %arg7: memref<1x2x2x64xbf16, #tpu.memory_space<vmem>>) attributes {dimension_semantics = [#tpu.dimension_semantics<parallel>], iteration_bounds = array<i64: 2>, scalar_prefetch = 0 : i64, scratch_operands = 0 : i64, tpu.core_type = #tpu.core_type<tc>, window_params = [{transform_indices = @transform_0, window_bounds = array<i64: 1, 3, 3, 64>}, {transform_indices = @transform_1, window_bounds = array<i64: 1, 3, 2, 64>}, {transform_indices = @transform_2, window_bounds = array<i64: 1, 2, 3, 64>}, {transform_indices = @transform_3, window_bounds = array<i64: 1, 2, 2, 64>}, {pipeline_mode = #tpu.pipeline_mode<synchronous>, transform_indices = @transform_4, window_bounds = array<i64: 9, 1, 64>}, {pipeline_mode = #tpu.pipeline_mode<synchronous>, transform_indices = @transform_5, window_bounds = array<i64: 1, 64>}, {transform_indices = @transform_6, window_bounds = array<i64: 1, 2, 2, 64>}]} {
    %c0 = arith.constant 0 : index
    %c0_0 = arith.constant 0 : index
    %c0_1 = arith.constant 0 : index
    %c0_2 = arith.constant 0 : index
    %0 = vector.load %arg1[%c0, %c0_0, %c0_1, %c0_2] : memref<1x3x3x64xbf16, #tpu.memory_space<vmem>>, vector<1x3x3x64xbf16>
    %1 = vector.shape_cast %0 : vector<1x3x3x64xbf16> to vector<3x3x64xbf16>
    %c0_3 = arith.constant 0 : index
    %c0_4 = arith.constant 0 : index
    %c0_5 = arith.constant 0 : index
    %c0_6 = arith.constant 0 : index
    %2 = vector.load %arg2[%c0_3, %c0_4, %c0_5, %c0_6] : memref<1x3x2x64xbf16, #tpu.memory_space<vmem>>, vector<1x3x2x64xbf16>
    %3 = vector.shape_cast %2 : vector<1x3x2x64xbf16> to vector<3x2x64xbf16>
    %c0_7 = arith.constant 0 : index
    %c0_8 = arith.constant 0 : index
    %c0_9 = arith.constant 0 : index
    %c0_10 = arith.constant 0 : index
    %4 = vector.load %arg3[%c0_7, %c0_8, %c0_9, %c0_10] : memref<1x2x3x64xbf16, #tpu.memory_space<vmem>>, vector<1x2x3x64xbf16>
    %5 = vector.shape_cast %4 : vector<1x2x3x64xbf16> to vector<2x3x64xbf16>
    %c0_11 = arith.constant 0 : index
    %c0_12 = arith.constant 0 : index
    %c0_13 = arith.constant 0 : index
    %c0_14 = arith.constant 0 : index
    %6 = vector.load %arg4[%c0_11, %c0_12, %c0_13, %c0_14] : memref<1x2x2x64xbf16, #tpu.memory_space<vmem>>, vector<1x2x2x64xbf16>
    %7 = vector.shape_cast %6 : vector<1x2x2x64xbf16> to vector<2x2x64xbf16>
    %8 = vector.extract_strided_slice %1 {offsets = [0, 0, 0], sizes = [2, 2, 64], strides = [1, 1, 1]} : vector<3x3x64xbf16> to vector<2x2x64xbf16>
    %c0_15 = arith.constant 0 : index
    %c0_16 = arith.constant 0 : index
    %c0_17 = arith.constant 0 : index
    %9 = vector.load %arg5[%c0_15, %c0_16, %c0_17] : memref<9x1x64xf32, #tpu.memory_space<vmem>>, vector<1x1x64xf32>
    %10 = vector.shape_cast %9 : vector<1x1x64xf32> to vector<1x64xf32>
    %11 = arith.extf %8 : vector<2x2x64xbf16> to vector<2x2x64xf32>
    %12 = vector.shape_cast %10 : vector<1x64xf32> to vector<1x1x64xf32>
    %13 = vector.broadcast %12 : vector<1x1x64xf32> to vector<2x2x64xf32>
    %14 = arith.mulf %11, %13 : vector<2x2x64xf32>
    %15 = vector.extract_strided_slice %3 {offsets = [0, 0, 0], sizes = [2, 2, 64], strides = [1, 1, 1]} : vector<3x2x64xbf16> to vector<2x2x64xbf16>
    %c1 = arith.constant 1 : index
    %c0_18 = arith.constant 0 : index
    %c0_19 = arith.constant 0 : index
    %16 = vector.load %arg5[%c1, %c0_18, %c0_19] : memref<9x1x64xf32, #tpu.memory_space<vmem>>, vector<1x1x64xf32>
    %17 = vector.shape_cast %16 : vector<1x1x64xf32> to vector<1x64xf32>
    %18 = arith.extf %15 : vector<2x2x64xbf16> to vector<2x2x64xf32>
    %19 = vector.shape_cast %17 : vector<1x64xf32> to vector<1x1x64xf32>
    %20 = vector.broadcast %19 : vector<1x1x64xf32> to vector<2x2x64xf32>
    %21 = arith.mulf %18, %20 : vector<2x2x64xf32>
    %22 = arith.addf %14, %21 : vector<2x2x64xf32>
    %23 = vector.extract_strided_slice %1 {offsets = [0, 1, 0], sizes = [2, 2, 64], strides = [1, 1, 1]} : vector<3x3x64xbf16> to vector<2x2x64xbf16>
    %c2 = arith.constant 2 : index
    %c0_20 = arith.constant 0 : index
    %c0_21 = arith.constant 0 : index
    %24 = vector.load %arg5[%c2, %c0_20, %c0_21] : memref<9x1x64xf32, #tpu.memory_space<vmem>>, vector<1x1x64xf32>
    %25 = vector.shape_cast %24 : vector<1x1x64xf32> to vector<1x64xf32>
    %26 = arith.extf %23 : vector<2x2x64xbf16> to vector<2x2x64xf32>
    %27 = vector.shape_cast %25 : vector<1x64xf32> to vector<1x1x64xf32>
    %28 = vector.broadcast %27 : vector<1x1x64xf32> to vector<2x2x64xf32>
    %29 = arith.mulf %26, %28 : vector<2x2x64xf32>
    %30 = arith.addf %22, %29 : vector<2x2x64xf32>
    %31 = vector.extract_strided_slice %5 {offsets = [0, 0, 0], sizes = [2, 2, 64], strides = [1, 1, 1]} : vector<2x3x64xbf16> to vector<2x2x64xbf16>
    %c3 = arith.constant 3 : index
    %c0_22 = arith.constant 0 : index
    %c0_23 = arith.constant 0 : index
    %32 = vector.load %arg5[%c3, %c0_22, %c0_23] : memref<9x1x64xf32, #tpu.memory_space<vmem>>, vector<1x1x64xf32>
    %33 = vector.shape_cast %32 : vector<1x1x64xf32> to vector<1x64xf32>
    %34 = arith.extf %31 : vector<2x2x64xbf16> to vector<2x2x64xf32>
    %35 = vector.shape_cast %33 : vector<1x64xf32> to vector<1x1x64xf32>
    %36 = vector.broadcast %35 : vector<1x1x64xf32> to vector<2x2x64xf32>
    %37 = arith.mulf %34, %36 : vector<2x2x64xf32>
    %38 = arith.addf %30, %37 : vector<2x2x64xf32>
    %c4 = arith.constant 4 : index
    %c0_24 = arith.constant 0 : index
    %c0_25 = arith.constant 0 : index
    %39 = vector.load %arg5[%c4, %c0_24, %c0_25] : memref<9x1x64xf32, #tpu.memory_space<vmem>>, vector<1x1x64xf32>
    %40 = vector.shape_cast %39 : vector<1x1x64xf32> to vector<1x64xf32>
    %41 = arith.extf %7 : vector<2x2x64xbf16> to vector<2x2x64xf32>
    %42 = vector.shape_cast %40 : vector<1x64xf32> to vector<1x1x64xf32>
    %43 = vector.broadcast %42 : vector<1x1x64xf32> to vector<2x2x64xf32>
    %44 = arith.mulf %41, %43 : vector<2x2x64xf32>
    %45 = arith.addf %38, %44 : vector<2x2x64xf32>
    %46 = vector.extract_strided_slice %5 {offsets = [0, 1, 0], sizes = [2, 2, 64], strides = [1, 1, 1]} : vector<2x3x64xbf16> to vector<2x2x64xbf16>
    %c5 = arith.constant 5 : index
    %c0_26 = arith.constant 0 : index
    %c0_27 = arith.constant 0 : index
    %47 = vector.load %arg5[%c5, %c0_26, %c0_27] : memref<9x1x64xf32, #tpu.memory_space<vmem>>, vector<1x1x64xf32>
    %48 = vector.shape_cast %47 : vector<1x1x64xf32> to vector<1x64xf32>
    %49 = arith.extf %46 : vector<2x2x64xbf16> to vector<2x2x64xf32>
    %50 = vector.shape_cast %48 : vector<1x64xf32> to vector<1x1x64xf32>
    %51 = vector.broadcast %50 : vector<1x1x64xf32> to vector<2x2x64xf32>
    %52 = arith.mulf %49, %51 : vector<2x2x64xf32>
    %53 = arith.addf %45, %52 : vector<2x2x64xf32>
    %54 = vector.extract_strided_slice %1 {offsets = [1, 0, 0], sizes = [2, 2, 64], strides = [1, 1, 1]} : vector<3x3x64xbf16> to vector<2x2x64xbf16>
    %c6 = arith.constant 6 : index
    %c0_28 = arith.constant 0 : index
    %c0_29 = arith.constant 0 : index
    %55 = vector.load %arg5[%c6, %c0_28, %c0_29] : memref<9x1x64xf32, #tpu.memory_space<vmem>>, vector<1x1x64xf32>
    %56 = vector.shape_cast %55 : vector<1x1x64xf32> to vector<1x64xf32>
    %57 = arith.extf %54 : vector<2x2x64xbf16> to vector<2x2x64xf32>
    %58 = vector.shape_cast %56 : vector<1x64xf32> to vector<1x1x64xf32>
    %59 = vector.broadcast %58 : vector<1x1x64xf32> to vector<2x2x64xf32>
    %60 = arith.mulf %57, %59 : vector<2x2x64xf32>
    %61 = arith.addf %53, %60 : vector<2x2x64xf32>
    %62 = vector.extract_strided_slice %3 {offsets = [1, 0, 0], sizes = [2, 2, 64], strides = [1, 1, 1]} : vector<3x2x64xbf16> to vector<2x2x64xbf16>
    %c7 = arith.constant 7 : index
    %c0_30 = arith.constant 0 : index
    %c0_31 = arith.constant 0 : index
    %63 = vector.load %arg5[%c7, %c0_30, %c0_31] : memref<9x1x64xf32, #tpu.memory_space<vmem>>, vector<1x1x64xf32>
    %64 = vector.shape_cast %63 : vector<1x1x64xf32> to vector<1x64xf32>
    %65 = arith.extf %62 : vector<2x2x64xbf16> to vector<2x2x64xf32>
    %66 = vector.shape_cast %64 : vector<1x64xf32> to vector<1x1x64xf32>
    %67 = vector.broadcast %66 : vector<1x1x64xf32> to vector<2x2x64xf32>
    %68 = arith.mulf %65, %67 : vector<2x2x64xf32>
    %69 = arith.addf %61, %68 : vector<2x2x64xf32>
    %70 = vector.extract_strided_slice %1 {offsets = [1, 1, 0], sizes = [2, 2, 64], strides = [1, 1, 1]} : vector<3x3x64xbf16> to vector<2x2x64xbf16>
    %c8 = arith.constant 8 : index
    %c0_32 = arith.constant 0 : index
    %c0_33 = arith.constant 0 : index
    %71 = vector.load %arg5[%c8, %c0_32, %c0_33] : memref<9x1x64xf32, #tpu.memory_space<vmem>>, vector<1x1x64xf32>
    %72 = vector.shape_cast %71 : vector<1x1x64xf32> to vector<1x64xf32>
    %73 = arith.extf %70 : vector<2x2x64xbf16> to vector<2x2x64xf32>
    %74 = vector.shape_cast %72 : vector<1x64xf32> to vector<1x1x64xf32>
    %75 = vector.broadcast %74 : vector<1x1x64xf32> to vector<2x2x64xf32>
    %76 = arith.mulf %73, %75 : vector<2x2x64xf32>
    %77 = arith.addf %69, %76 : vector<2x2x64xf32>
    %c0_34 = arith.constant 0 : index
    %c0_35 = arith.constant 0 : index
    %78 = vector.load %arg6[%c0_34, %c0_35] : memref<1x64xf32, #tpu.memory_space<vmem>>, vector<1x64xf32>
    %79 = vector.shape_cast %78 : vector<1x64xf32> to vector<1x1x64xf32>
    %80 = vector.broadcast %79 : vector<1x1x64xf32> to vector<2x2x64xf32>
    %81 = arith.addf %77, %80 : vector<2x2x64xf32>
    %cst = arith.constant 0.000000e+00 : f32
    %cst_36 = arith.constant 6.000000e+00 : f32
    %82 = vector.broadcast %cst : f32 to vector<2x2x64xf32>
    %83 = arith.maximumf %82, %81 : vector<2x2x64xf32>
    %84 = vector.broadcast %cst_36 : f32 to vector<2x2x64xf32>
    %85 = arith.minimumf %84, %83 : vector<2x2x64xf32>
    %86 = vector.shape_cast %85 : vector<2x2x64xf32> to vector<1x2x2x64xf32>
    %87 = arith.truncf %86 : vector<1x2x2x64xf32> to vector<1x2x2x64xbf16>
    %c0_37 = arith.constant 0 : index
    %c0_38 = arith.constant 0 : index
    %c0_39 = arith.constant 0 : index
    %c0_40 = arith.constant 0 : index
    %88 = vector.load %arg7[%c0_37, %c0_38, %c0_39, %c0_40] : memref<1x2x2x64xbf16, #tpu.memory_space<vmem>>, vector<1x2x2x64xbf16>
    tpu.vector_store %arg7[%c0_37, %c0_38, %c0_39, %c0_40], %87 {strides = array<i32>} : memref<1x2x2x64xbf16, #tpu.memory_space<vmem>>, vector<1x2x2x64xbf16>,
    return
  }
  func.func @transform_0(%arg0: i32) -> (i32, i32, i32, i32) {
    %c0_i32 = arith.constant 0 : i32
    %c0_i32_0 = arith.constant 0 : i32
    %c0_i32_1 = arith.constant 0 : i32
    %c0_i32_2 = arith.constant 0 : i32
    return %arg0, %c0_i32, %c0_i32_0, %c0_i32_1 : i32, i32, i32, i32
  }
  func.func @transform_1(%arg0: i32) -> (i32, i32, i32, i32) {
    %c0_i32 = arith.constant 0 : i32
    %c0_i32_0 = arith.constant 0 : i32
    %c0_i32_1 = arith.constant 0 : i32
    %c0_i32_2 = arith.constant 0 : i32
    return %arg0, %c0_i32, %c0_i32_0, %c0_i32_1 : i32, i32, i32, i32
  }
  func.func @transform_2(%arg0: i32) -> (i32, i32, i32, i32) {
    %c0_i32 = arith.constant 0 : i32
    %c0_i32_0 = arith.constant 0 : i32
    %c0_i32_1 = arith.constant 0 : i32
    %c0_i32_2 = arith.constant 0 : i32
    return %arg0, %c0_i32, %c0_i32_0, %c0_i32_1 : i32, i32, i32, i32
  }
  func.func @transform_3(%arg0: i32) -> (i32, i32, i32, i32) {
    %c0_i32 = arith.constant 0 : i32
    %c0_i32_0 = arith.constant 0 : i32
    %c0_i32_1 = arith.constant 0 : i32
    %c0_i32_2 = arith.constant 0 : i32
    return %arg0, %c0_i32, %c0_i32_0, %c0_i32_1 : i32, i32, i32, i32
  }
  func.func @transform_4(%arg0: i32) -> (i32, i32, i32) {
    %c0_i32 = arith.constant 0 : i32
    %c0_i32_0 = arith.constant 0 : i32
    %c0_i32_1 = arith.constant 0 : i32
    %c0_i32_2 = arith.constant 0 : i32
    return %c0_i32, %c0_i32_0, %c0_i32_1 : i32, i32, i32
  }
  func.func @transform_5(%arg0: i32) -> (i32, i32) {
    %c0_i32 = arith.constant 0 : i32
    %c0_i32_0 = arith.constant 0 : i32
    %c0_i32_1 = arith.constant 0 : i32
    return %c0_i32, %c0_i32_0 : i32, i32
  }
  func.func @transform_6(%arg0: i32) -> (i32, i32, i32, i32) {
    %c0_i32 = arith.constant 0 : i32
    %c0_i32_0 = arith.constant 0 : i32
    %c0_i32_1 = arith.constant 0 : i32
    %c0_i32_2 = arith.constant 0 : i32
    return %arg0, %c0_i32, %c0_i32_0, %c0_i32_1 : i32, i32, i32, i32
  }
}

module attributes {stable_mosaic.version = 11 : i64} {
  func.func @_matmul_bias_relu6_kernel(%arg0: i32, %arg1: i32, %arg2: memref<8x64xbf16, #tpu.memory_space<vmem>>, %arg3: memref<64x128xbf16, #tpu.memory_space<vmem>>, %arg4: memref<1x128xf32, #tpu.memory_space<vmem>>, %arg5: memref<8x128xbf16, #tpu.memory_space<vmem>>) attributes {dimension_semantics = [#tpu.dimension_semantics<parallel>, #tpu.dimension_semantics<parallel>], iteration_bounds = array<i64: 1, 1>, scalar_prefetch = 0 : i64, scratch_operands = 0 : i64, tpu.core_type = #tpu.core_type<tc>, window_params = [{transform_indices = @transform_0, window_bounds = array<i64: 8, 64>}, {transform_indices = @transform_1, window_bounds = array<i64: 64, 128>}, {transform_indices = @transform_2, window_bounds = array<i64: 1, 128>}, {transform_indices = @transform_3, window_bounds = array<i64: 8, 128>}]} {
    %c0 = arith.constant 0 : index
    %c0_0 = arith.constant 0 : index
    %0 = vector.load %arg2[%c0, %c0_0] : memref<8x64xbf16, #tpu.memory_space<vmem>>, vector<8x64xbf16>
    %c0_1 = arith.constant 0 : index
    %c0_2 = arith.constant 0 : index
    %1 = vector.load %arg3[%c0_1, %c0_2] : memref<64x128xbf16, #tpu.memory_space<vmem>>, vector<64x128xbf16>
    %cst = arith.constant dense<0.000000e+00> : vector<8x128xf32>
    %2 = tpu.matmul %0, %1, %cst {dimension_numbers = #tpu.dot_dimension_numbers<[1], [0], [0], [1], [0, 0, 1, 1], [], []>} : vector<8x64xbf16>, vector<64x128xbf16>, vector<8x128xf32> -> vector<8x128xf32>
    %c0_3 = arith.constant 0 : index
    %c0_4 = arith.constant 0 : index
    %3 = vector.load %arg4[%c0_3, %c0_4] : memref<1x128xf32, #tpu.memory_space<vmem>>, vector<1x128xf32>
    %4 = vector.broadcast %3 : vector<1x128xf32> to vector<8x128xf32>
    %5 = arith.addf %2, %4 : vector<8x128xf32>
    %cst_5 = arith.constant 0.000000e+00 : f32
    %cst_6 = arith.constant 6.000000e+00 : f32
    %6 = vector.broadcast %cst_5 : f32 to vector<8x128xf32>
    %7 = arith.maximumf %6, %5 : vector<8x128xf32>
    %8 = vector.broadcast %cst_6 : f32 to vector<8x128xf32>
    %9 = arith.minimumf %8, %7 : vector<8x128xf32>
    %10 = arith.truncf %9 : vector<8x128xf32> to vector<8x128xbf16>
    %c0_7 = arith.constant 0 : index
    %c0_8 = arith.constant 0 : index
    %11 = vector.load %arg5[%c0_7, %c0_8] : memref<8x128xbf16, #tpu.memory_space<vmem>>, vector<8x128xbf16>
    tpu.vector_store %arg5[%c0_7, %c0_8], %10 {strides = array<i32>} : memref<8x128xbf16, #tpu.memory_space<vmem>>, vector<8x128xbf16>,
    return
  }
  func.func @transform_0(%arg0: i32, %arg1: i32) -> (i32, i32) {
    %c0_i32 = arith.constant 0 : i32
    %c0_i32_0 = arith.constant 0 : i32
    return %arg0, %c0_i32 : i32, i32
  }
  func.func @transform_1(%arg0: i32, %arg1: i32) -> (i32, i32) {
    %c0_i32 = arith.constant 0 : i32
    %c0_i32_0 = arith.constant 0 : i32
    return %c0_i32, %arg1 : i32, i32
  }
  func.func @transform_2(%arg0: i32, %arg1: i32) -> (i32, i32) {
    %c0_i32 = arith.constant 0 : i32
    %c0_i32_0 = arith.constant 0 : i32
    return %c0_i32, %arg1 : i32, i32
  }
  func.func @transform_3(%arg0: i32, %arg1: i32) -> (i32, i32) {
    %c0_i32 = arith.constant 0 : i32
    return %arg0, %arg1 : i32, i32
  }
}

module attributes {stable_mosaic.version = 11 : i64} {
  func.func @_dw_s1_kernel(%arg0: i32, %arg1: memref<1x4x4x128xbf16, #tpu.memory_space<vmem>>, %arg2: memref<9x1x128xf32, #tpu.memory_space<vmem>>, %arg3: memref<1x128xf32, #tpu.memory_space<vmem>>, %arg4: memref<1x2x2x128xbf16, #tpu.memory_space<vmem>>) attributes {dimension_semantics = [#tpu.dimension_semantics<parallel>], iteration_bounds = array<i64: 2>, scalar_prefetch = 0 : i64, scratch_operands = 0 : i64, tpu.core_type = #tpu.core_type<tc>, window_params = [{transform_indices = @transform_0, window_bounds = array<i64: 1, 4, 4, 128>}, {pipeline_mode = #tpu.pipeline_mode<synchronous>, transform_indices = @transform_1, window_bounds = array<i64: 9, 1, 128>}, {pipeline_mode = #tpu.pipeline_mode<synchronous>, transform_indices = @transform_2, window_bounds = array<i64: 1, 128>}, {transform_indices = @transform_3, window_bounds = array<i64: 1, 2, 2, 128>}]} {
    %c0 = arith.constant 0 : index
    %c0_0 = arith.constant 0 : index
    %c0_1 = arith.constant 0 : index
    %c0_2 = arith.constant 0 : index
    %0 = vector.load %arg1[%c0, %c0_0, %c0_1, %c0_2] : memref<1x4x4x128xbf16, #tpu.memory_space<vmem>>, vector<1x4x4x128xbf16>
    %1 = vector.shape_cast %0 : vector<1x4x4x128xbf16> to vector<4x4x128xbf16>
    %2 = vector.extract_strided_slice %1 {offsets = [0, 0, 0], sizes = [2, 2, 128], strides = [1, 1, 1]} : vector<4x4x128xbf16> to vector<2x2x128xbf16>
    %c0_3 = arith.constant 0 : index
    %c0_4 = arith.constant 0 : index
    %c0_5 = arith.constant 0 : index
    %3 = vector.load %arg2[%c0_3, %c0_4, %c0_5] : memref<9x1x128xf32, #tpu.memory_space<vmem>>, vector<1x1x128xf32>
    %4 = vector.shape_cast %3 : vector<1x1x128xf32> to vector<1x128xf32>
    %5 = arith.extf %2 : vector<2x2x128xbf16> to vector<2x2x128xf32>
    %6 = vector.shape_cast %4 : vector<1x128xf32> to vector<1x1x128xf32>
    %7 = vector.broadcast %6 : vector<1x1x128xf32> to vector<2x2x128xf32>
    %8 = arith.mulf %5, %7 : vector<2x2x128xf32>
    %9 = vector.extract_strided_slice %1 {offsets = [0, 1, 0], sizes = [2, 2, 128], strides = [1, 1, 1]} : vector<4x4x128xbf16> to vector<2x2x128xbf16>
    %c1 = arith.constant 1 : index
    %c0_6 = arith.constant 0 : index
    %c0_7 = arith.constant 0 : index
    %10 = vector.load %arg2[%c1, %c0_6, %c0_7] : memref<9x1x128xf32, #tpu.memory_space<vmem>>, vector<1x1x128xf32>
    %11 = vector.shape_cast %10 : vector<1x1x128xf32> to vector<1x128xf32>
    %12 = arith.extf %9 : vector<2x2x128xbf16> to vector<2x2x128xf32>
    %13 = vector.shape_cast %11 : vector<1x128xf32> to vector<1x1x128xf32>
    %14 = vector.broadcast %13 : vector<1x1x128xf32> to vector<2x2x128xf32>
    %15 = arith.mulf %12, %14 : vector<2x2x128xf32>
    %16 = arith.addf %8, %15 : vector<2x2x128xf32>
    %17 = vector.extract_strided_slice %1 {offsets = [0, 2, 0], sizes = [2, 2, 128], strides = [1, 1, 1]} : vector<4x4x128xbf16> to vector<2x2x128xbf16>
    %c2 = arith.constant 2 : index
    %c0_8 = arith.constant 0 : index
    %c0_9 = arith.constant 0 : index
    %18 = vector.load %arg2[%c2, %c0_8, %c0_9] : memref<9x1x128xf32, #tpu.memory_space<vmem>>, vector<1x1x128xf32>
    %19 = vector.shape_cast %18 : vector<1x1x128xf32> to vector<1x128xf32>
    %20 = arith.extf %17 : vector<2x2x128xbf16> to vector<2x2x128xf32>
    %21 = vector.shape_cast %19 : vector<1x128xf32> to vector<1x1x128xf32>
    %22 = vector.broadcast %21 : vector<1x1x128xf32> to vector<2x2x128xf32>
    %23 = arith.mulf %20, %22 : vector<2x2x128xf32>
    %24 = arith.addf %16, %23 : vector<2x2x128xf32>
    %25 = vector.extract_strided_slice %1 {offsets = [1, 0, 0], sizes = [2, 2, 128], strides = [1, 1, 1]} : vector<4x4x128xbf16> to vector<2x2x128xbf16>
    %c3 = arith.constant 3 : index
    %c0_10 = arith.constant 0 : index
    %c0_11 = arith.constant 0 : index
    %26 = vector.load %arg2[%c3, %c0_10, %c0_11] : memref<9x1x128xf32, #tpu.memory_space<vmem>>, vector<1x1x128xf32>
    %27 = vector.shape_cast %26 : vector<1x1x128xf32> to vector<1x128xf32>
    %28 = arith.extf %25 : vector<2x2x128xbf16> to vector<2x2x128xf32>
    %29 = vector.shape_cast %27 : vector<1x128xf32> to vector<1x1x128xf32>
    %30 = vector.broadcast %29 : vector<1x1x128xf32> to vector<2x2x128xf32>
    %31 = arith.mulf %28, %30 : vector<2x2x128xf32>
    %32 = arith.addf %24, %31 : vector<2x2x128xf32>
    %33 = vector.extract_strided_slice %1 {offsets = [1, 1, 0], sizes = [2, 2, 128], strides = [1, 1, 1]} : vector<4x4x128xbf16> to vector<2x2x128xbf16>
    %c4 = arith.constant 4 : index
    %c0_12 = arith.constant 0 : index
    %c0_13 = arith.constant 0 : index
    %34 = vector.load %arg2[%c4, %c0_12, %c0_13] : memref<9x1x128xf32, #tpu.memory_space<vmem>>, vector<1x1x128xf32>
    %35 = vector.shape_cast %34 : vector<1x1x128xf32> to vector<1x128xf32>
    %36 = arith.extf %33 : vector<2x2x128xbf16> to vector<2x2x128xf32>
    %37 = vector.shape_cast %35 : vector<1x128xf32> to vector<1x1x128xf32>
    %38 = vector.broadcast %37 : vector<1x1x128xf32> to vector<2x2x128xf32>
    %39 = arith.mulf %36, %38 : vector<2x2x128xf32>
    %40 = arith.addf %32, %39 : vector<2x2x128xf32>
    %41 = vector.extract_strided_slice %1 {offsets = [1, 2, 0], sizes = [2, 2, 128], strides = [1, 1, 1]} : vector<4x4x128xbf16> to vector<2x2x128xbf16>
    %c5 = arith.constant 5 : index
    %c0_14 = arith.constant 0 : index
    %c0_15 = arith.constant 0 : index
    %42 = vector.load %arg2[%c5, %c0_14, %c0_15] : memref<9x1x128xf32, #tpu.memory_space<vmem>>, vector<1x1x128xf32>
    %43 = vector.shape_cast %42 : vector<1x1x128xf32> to vector<1x128xf32>
    %44 = arith.extf %41 : vector<2x2x128xbf16> to vector<2x2x128xf32>
    %45 = vector.shape_cast %43 : vector<1x128xf32> to vector<1x1x128xf32>
    %46 = vector.broadcast %45 : vector<1x1x128xf32> to vector<2x2x128xf32>
    %47 = arith.mulf %44, %46 : vector<2x2x128xf32>
    %48 = arith.addf %40, %47 : vector<2x2x128xf32>
    %49 = vector.extract_strided_slice %1 {offsets = [2, 0, 0], sizes = [2, 2, 128], strides = [1, 1, 1]} : vector<4x4x128xbf16> to vector<2x2x128xbf16>
    %c6 = arith.constant 6 : index
    %c0_16 = arith.constant 0 : index
    %c0_17 = arith.constant 0 : index
    %50 = vector.load %arg2[%c6, %c0_16, %c0_17] : memref<9x1x128xf32, #tpu.memory_space<vmem>>, vector<1x1x128xf32>
    %51 = vector.shape_cast %50 : vector<1x1x128xf32> to vector<1x128xf32>
    %52 = arith.extf %49 : vector<2x2x128xbf16> to vector<2x2x128xf32>
    %53 = vector.shape_cast %51 : vector<1x128xf32> to vector<1x1x128xf32>
    %54 = vector.broadcast %53 : vector<1x1x128xf32> to vector<2x2x128xf32>
    %55 = arith.mulf %52, %54 : vector<2x2x128xf32>
    %56 = arith.addf %48, %55 : vector<2x2x128xf32>
    %57 = vector.extract_strided_slice %1 {offsets = [2, 1, 0], sizes = [2, 2, 128], strides = [1, 1, 1]} : vector<4x4x128xbf16> to vector<2x2x128xbf16>
    %c7 = arith.constant 7 : index
    %c0_18 = arith.constant 0 : index
    %c0_19 = arith.constant 0 : index
    %58 = vector.load %arg2[%c7, %c0_18, %c0_19] : memref<9x1x128xf32, #tpu.memory_space<vmem>>, vector<1x1x128xf32>
    %59 = vector.shape_cast %58 : vector<1x1x128xf32> to vector<1x128xf32>
    %60 = arith.extf %57 : vector<2x2x128xbf16> to vector<2x2x128xf32>
    %61 = vector.shape_cast %59 : vector<1x128xf32> to vector<1x1x128xf32>
    %62 = vector.broadcast %61 : vector<1x1x128xf32> to vector<2x2x128xf32>
    %63 = arith.mulf %60, %62 : vector<2x2x128xf32>
    %64 = arith.addf %56, %63 : vector<2x2x128xf32>
    %65 = vector.extract_strided_slice %1 {offsets = [2, 2, 0], sizes = [2, 2, 128], strides = [1, 1, 1]} : vector<4x4x128xbf16> to vector<2x2x128xbf16>
    %c8 = arith.constant 8 : index
    %c0_20 = arith.constant 0 : index
    %c0_21 = arith.constant 0 : index
    %66 = vector.load %arg2[%c8, %c0_20, %c0_21] : memref<9x1x128xf32, #tpu.memory_space<vmem>>, vector<1x1x128xf32>
    %67 = vector.shape_cast %66 : vector<1x1x128xf32> to vector<1x128xf32>
    %68 = arith.extf %65 : vector<2x2x128xbf16> to vector<2x2x128xf32>
    %69 = vector.shape_cast %67 : vector<1x128xf32> to vector<1x1x128xf32>
    %70 = vector.broadcast %69 : vector<1x1x128xf32> to vector<2x2x128xf32>
    %71 = arith.mulf %68, %70 : vector<2x2x128xf32>
    %72 = arith.addf %64, %71 : vector<2x2x128xf32>
    %c0_22 = arith.constant 0 : index
    %c0_23 = arith.constant 0 : index
    %73 = vector.load %arg3[%c0_22, %c0_23] : memref<1x128xf32, #tpu.memory_space<vmem>>, vector<1x128xf32>
    %74 = vector.shape_cast %73 : vector<1x128xf32> to vector<1x1x128xf32>
    %75 = vector.broadcast %74 : vector<1x1x128xf32> to vector<2x2x128xf32>
    %76 = arith.addf %72, %75 : vector<2x2x128xf32>
    %cst = arith.constant 0.000000e+00 : f32
    %cst_24 = arith.constant 6.000000e+00 : f32
    %77 = vector.broadcast %cst : f32 to vector<2x2x128xf32>
    %78 = arith.maximumf %77, %76 : vector<2x2x128xf32>
    %79 = vector.broadcast %cst_24 : f32 to vector<2x2x128xf32>
    %80 = arith.minimumf %79, %78 : vector<2x2x128xf32>
    %81 = vector.shape_cast %80 : vector<2x2x128xf32> to vector<1x2x2x128xf32>
    %82 = arith.truncf %81 : vector<1x2x2x128xf32> to vector<1x2x2x128xbf16>
    %c0_25 = arith.constant 0 : index
    %c0_26 = arith.constant 0 : index
    %c0_27 = arith.constant 0 : index
    %c0_28 = arith.constant 0 : index
    %83 = vector.load %arg4[%c0_25, %c0_26, %c0_27, %c0_28] : memref<1x2x2x128xbf16, #tpu.memory_space<vmem>>, vector<1x2x2x128xbf16>
    tpu.vector_store %arg4[%c0_25, %c0_26, %c0_27, %c0_28], %82 {strides = array<i32>} : memref<1x2x2x128xbf16, #tpu.memory_space<vmem>>, vector<1x2x2x128xbf16>,
    return
  }
  func.func @transform_0(%arg0: i32) -> (i32, i32, i32, i32) {
    %c0_i32 = arith.constant 0 : i32
    %c0_i32_0 = arith.constant 0 : i32
    %c0_i32_1 = arith.constant 0 : i32
    %c0_i32_2 = arith.constant 0 : i32
    return %arg0, %c0_i32, %c0_i32_0, %c0_i32_1 : i32, i32, i32, i32
  }
  func.func @transform_1(%arg0: i32) -> (i32, i32, i32) {
    %c0_i32 = arith.constant 0 : i32
    %c0_i32_0 = arith.constant 0 : i32
    %c0_i32_1 = arith.constant 0 : i32
    %c0_i32_2 = arith.constant 0 : i32
    return %c0_i32, %c0_i32_0, %c0_i32_1 : i32, i32, i32
  }
  func.func @transform_2(%arg0: i32) -> (i32, i32) {
    %c0_i32 = arith.constant 0 : i32
    %c0_i32_0 = arith.constant 0 : i32
    %c0_i32_1 = arith.constant 0 : i32
    return %c0_i32, %c0_i32_0 : i32, i32
  }
  func.func @transform_3(%arg0: i32) -> (i32, i32, i32, i32) {
    %c0_i32 = arith.constant 0 : i32
    %c0_i32_0 = arith.constant 0 : i32
    %c0_i32_1 = arith.constant 0 : i32
    %c0_i32_2 = arith.constant 0 : i32
    return %arg0, %c0_i32, %c0_i32_0, %c0_i32_1 : i32, i32, i32, i32
  }
}

module attributes {stable_mosaic.version = 11 : i64} {
  func.func @_matmul_bias_relu6_kernel(%arg0: i32, %arg1: i32, %arg2: memref<8x128xbf16, #tpu.memory_space<vmem>>, %arg3: memref<128x128xbf16, #tpu.memory_space<vmem>>, %arg4: memref<1x128xf32, #tpu.memory_space<vmem>>, %arg5: memref<8x128xbf16, #tpu.memory_space<vmem>>) attributes {dimension_semantics = [#tpu.dimension_semantics<parallel>, #tpu.dimension_semantics<parallel>], iteration_bounds = array<i64: 1, 1>, scalar_prefetch = 0 : i64, scratch_operands = 0 : i64, tpu.core_type = #tpu.core_type<tc>, window_params = [{transform_indices = @transform_0, window_bounds = array<i64: 8, 128>}, {transform_indices = @transform_1, window_bounds = array<i64: 128, 128>}, {transform_indices = @transform_2, window_bounds = array<i64: 1, 128>}, {transform_indices = @transform_3, window_bounds = array<i64: 8, 128>}]} {
    %c0 = arith.constant 0 : index
    %c0_0 = arith.constant 0 : index
    %0 = vector.load %arg2[%c0, %c0_0] : memref<8x128xbf16, #tpu.memory_space<vmem>>, vector<8x128xbf16>
    %c0_1 = arith.constant 0 : index
    %c0_2 = arith.constant 0 : index
    %1 = vector.load %arg3[%c0_1, %c0_2] : memref<128x128xbf16, #tpu.memory_space<vmem>>, vector<128x128xbf16>
    %cst = arith.constant dense<0.000000e+00> : vector<8x128xf32>
    %2 = tpu.matmul %0, %1, %cst {dimension_numbers = #tpu.dot_dimension_numbers<[1], [0], [0], [1], [0, 0, 1, 1], [], []>} : vector<8x128xbf16>, vector<128x128xbf16>, vector<8x128xf32> -> vector<8x128xf32>
    %c0_3 = arith.constant 0 : index
    %c0_4 = arith.constant 0 : index
    %3 = vector.load %arg4[%c0_3, %c0_4] : memref<1x128xf32, #tpu.memory_space<vmem>>, vector<1x128xf32>
    %4 = vector.broadcast %3 : vector<1x128xf32> to vector<8x128xf32>
    %5 = arith.addf %2, %4 : vector<8x128xf32>
    %cst_5 = arith.constant 0.000000e+00 : f32
    %cst_6 = arith.constant 6.000000e+00 : f32
    %6 = vector.broadcast %cst_5 : f32 to vector<8x128xf32>
    %7 = arith.maximumf %6, %5 : vector<8x128xf32>
    %8 = vector.broadcast %cst_6 : f32 to vector<8x128xf32>
    %9 = arith.minimumf %8, %7 : vector<8x128xf32>
    %10 = arith.truncf %9 : vector<8x128xf32> to vector<8x128xbf16>
    %c0_7 = arith.constant 0 : index
    %c0_8 = arith.constant 0 : index
    %11 = vector.load %arg5[%c0_7, %c0_8] : memref<8x128xbf16, #tpu.memory_space<vmem>>, vector<8x128xbf16>
    tpu.vector_store %arg5[%c0_7, %c0_8], %10 {strides = array<i32>} : memref<8x128xbf16, #tpu.memory_space<vmem>>, vector<8x128xbf16>,
    return
  }
  func.func @transform_0(%arg0: i32, %arg1: i32) -> (i32, i32) {
    %c0_i32 = arith.constant 0 : i32
    %c0_i32_0 = arith.constant 0 : i32
    return %arg0, %c0_i32 : i32, i32
  }
  func.func @transform_1(%arg0: i32, %arg1: i32) -> (i32, i32) {
    %c0_i32 = arith.constant 0 : i32
    %c0_i32_0 = arith.constant 0 : i32
    return %c0_i32, %arg1 : i32, i32
  }
  func.func @transform_2(%arg0: i32, %arg1: i32) -> (i32, i32) {
    %c0_i32 = arith.constant 0 : i32
    %c0_i32_0 = arith.constant 0 : i32
    return %c0_i32, %arg1 : i32, i32
  }
  func.func @transform_3(%arg0: i32, %arg1: i32) -> (i32, i32) {
    %c0_i32 = arith.constant 0 : i32
    return %arg0, %arg1 : i32, i32
  }
}

module attributes {stable_mosaic.version = 11 : i64} {
  func.func @_dw_s2_kernel(%arg0: i32, %arg1: memref<1x2x2x128xbf16, #tpu.memory_space<vmem>>, %arg2: memref<1x2x1x128xbf16, #tpu.memory_space<vmem>>, %arg3: memref<1x1x2x128xbf16, #tpu.memory_space<vmem>>, %arg4: memref<1x1x1x128xbf16, #tpu.memory_space<vmem>>, %arg5: memref<9x1x128xf32, #tpu.memory_space<vmem>>, %arg6: memref<1x128xf32, #tpu.memory_space<vmem>>, %arg7: memref<1x1x1x128xbf16, #tpu.memory_space<vmem>>) attributes {dimension_semantics = [#tpu.dimension_semantics<parallel>], iteration_bounds = array<i64: 2>, scalar_prefetch = 0 : i64, scratch_operands = 0 : i64, tpu.core_type = #tpu.core_type<tc>, window_params = [{transform_indices = @transform_0, window_bounds = array<i64: 1, 2, 2, 128>}, {transform_indices = @transform_1, window_bounds = array<i64: 1, 2, 1, 128>}, {transform_indices = @transform_2, window_bounds = array<i64: 1, 1, 2, 128>}, {transform_indices = @transform_3, window_bounds = array<i64: 1, 1, 1, 128>}, {pipeline_mode = #tpu.pipeline_mode<synchronous>, transform_indices = @transform_4, window_bounds = array<i64: 9, 1, 128>}, {pipeline_mode = #tpu.pipeline_mode<synchronous>, transform_indices = @transform_5, window_bounds = array<i64: 1, 128>}, {transform_indices = @transform_6, window_bounds = array<i64: 1, 1, 1, 128>}]} {
    %c0 = arith.constant 0 : index
    %c0_0 = arith.constant 0 : index
    %c0_1 = arith.constant 0 : index
    %c0_2 = arith.constant 0 : index
    %0 = vector.load %arg1[%c0, %c0_0, %c0_1, %c0_2] : memref<1x2x2x128xbf16, #tpu.memory_space<vmem>>, vector<1x2x2x128xbf16>
    %1 = vector.shape_cast %0 : vector<1x2x2x128xbf16> to vector<2x2x128xbf16>
    %c0_3 = arith.constant 0 : index
    %c0_4 = arith.constant 0 : index
    %c0_5 = arith.constant 0 : index
    %c0_6 = arith.constant 0 : index
    %2 = vector.load %arg2[%c0_3, %c0_4, %c0_5, %c0_6] : memref<1x2x1x128xbf16, #tpu.memory_space<vmem>>, vector<1x2x1x128xbf16>
    %3 = vector.shape_cast %2 : vector<1x2x1x128xbf16> to vector<2x1x128xbf16>
    %c0_7 = arith.constant 0 : index
    %c0_8 = arith.constant 0 : index
    %c0_9 = arith.constant 0 : index
    %c0_10 = arith.constant 0 : index
    %4 = vector.load %arg3[%c0_7, %c0_8, %c0_9, %c0_10] : memref<1x1x2x128xbf16, #tpu.memory_space<vmem>>, vector<1x1x2x128xbf16>
    %5 = vector.shape_cast %4 : vector<1x1x2x128xbf16> to vector<1x2x128xbf16>
    %c0_11 = arith.constant 0 : index
    %c0_12 = arith.constant 0 : index
    %c0_13 = arith.constant 0 : index
    %c0_14 = arith.constant 0 : index
    %6 = vector.load %arg4[%c0_11, %c0_12, %c0_13, %c0_14] : memref<1x1x1x128xbf16, #tpu.memory_space<vmem>>, vector<1x1x1x128xbf16>
    %7 = vector.shape_cast %6 : vector<1x1x1x128xbf16> to vector<1x1x128xbf16>
    %8 = vector.extract_strided_slice %1 {offsets = [0, 0, 0], sizes = [1, 1, 128], strides = [1, 1, 1]} : vector<2x2x128xbf16> to vector<1x1x128xbf16>
    %c0_15 = arith.constant 0 : index
    %c0_16 = arith.constant 0 : index
    %c0_17 = arith.constant 0 : index
    %9 = vector.load %arg5[%c0_15, %c0_16, %c0_17] : memref<9x1x128xf32, #tpu.memory_space<vmem>>, vector<1x1x128xf32>
    %10 = vector.shape_cast %9 : vector<1x1x128xf32> to vector<1x128xf32>
    %11 = arith.extf %8 : vector<1x1x128xbf16> to vector<1x1x128xf32>
    %12 = vector.shape_cast %10 : vector<1x128xf32> to vector<1x1x128xf32>
    %13 = arith.mulf %11, %12 : vector<1x1x128xf32>
    %14 = vector.extract_strided_slice %3 {offsets = [0, 0, 0], sizes = [1, 1, 128], strides = [1, 1, 1]} : vector<2x1x128xbf16> to vector<1x1x128xbf16>
    %c1 = arith.constant 1 : index
    %c0_18 = arith.constant 0 : index
    %c0_19 = arith.constant 0 : index
    %15 = vector.load %arg5[%c1, %c0_18, %c0_19] : memref<9x1x128xf32, #tpu.memory_space<vmem>>, vector<1x1x128xf32>
    %16 = vector.shape_cast %15 : vector<1x1x128xf32> to vector<1x128xf32>
    %17 = arith.extf %14 : vector<1x1x128xbf16> to vector<1x1x128xf32>
    %18 = vector.shape_cast %16 : vector<1x128xf32> to vector<1x1x128xf32>
    %19 = arith.mulf %17, %18 : vector<1x1x128xf32>
    %20 = arith.addf %13, %19 : vector<1x1x128xf32>
    %21 = vector.extract_strided_slice %1 {offsets = [0, 1, 0], sizes = [1, 1, 128], strides = [1, 1, 1]} : vector<2x2x128xbf16> to vector<1x1x128xbf16>
    %c2 = arith.constant 2 : index
    %c0_20 = arith.constant 0 : index
    %c0_21 = arith.constant 0 : index
    %22 = vector.load %arg5[%c2, %c0_20, %c0_21] : memref<9x1x128xf32, #tpu.memory_space<vmem>>, vector<1x1x128xf32>
    %23 = vector.shape_cast %22 : vector<1x1x128xf32> to vector<1x128xf32>
    %24 = arith.extf %21 : vector<1x1x128xbf16> to vector<1x1x128xf32>
    %25 = vector.shape_cast %23 : vector<1x128xf32> to vector<1x1x128xf32>
    %26 = arith.mulf %24, %25 : vector<1x1x128xf32>
    %27 = arith.addf %20, %26 : vector<1x1x128xf32>
    %28 = vector.extract_strided_slice %5 {offsets = [0, 0, 0], sizes = [1, 1, 128], strides = [1, 1, 1]} : vector<1x2x128xbf16> to vector<1x1x128xbf16>
    %c3 = arith.constant 3 : index
    %c0_22 = arith.constant 0 : index
    %c0_23 = arith.constant 0 : index
    %29 = vector.load %arg5[%c3, %c0_22, %c0_23] : memref<9x1x128xf32, #tpu.memory_space<vmem>>, vector<1x1x128xf32>
    %30 = vector.shape_cast %29 : vector<1x1x128xf32> to vector<1x128xf32>
    %31 = arith.extf %28 : vector<1x1x128xbf16> to vector<1x1x128xf32>
    %32 = vector.shape_cast %30 : vector<1x128xf32> to vector<1x1x128xf32>
    %33 = arith.mulf %31, %32 : vector<1x1x128xf32>
    %34 = arith.addf %27, %33 : vector<1x1x128xf32>
    %c4 = arith.constant 4 : index
    %c0_24 = arith.constant 0 : index
    %c0_25 = arith.constant 0 : index
    %35 = vector.load %arg5[%c4, %c0_24, %c0_25] : memref<9x1x128xf32, #tpu.memory_space<vmem>>, vector<1x1x128xf32>
    %36 = vector.shape_cast %35 : vector<1x1x128xf32> to vector<1x128xf32>
    %37 = arith.extf %7 : vector<1x1x128xbf16> to vector<1x1x128xf32>
    %38 = vector.shape_cast %36 : vector<1x128xf32> to vector<1x1x128xf32>
    %39 = arith.mulf %37, %38 : vector<1x1x128xf32>
    %40 = arith.addf %34, %39 : vector<1x1x128xf32>
    %41 = vector.extract_strided_slice %5 {offsets = [0, 1, 0], sizes = [1, 1, 128], strides = [1, 1, 1]} : vector<1x2x128xbf16> to vector<1x1x128xbf16>
    %c5 = arith.constant 5 : index
    %c0_26 = arith.constant 0 : index
    %c0_27 = arith.constant 0 : index
    %42 = vector.load %arg5[%c5, %c0_26, %c0_27] : memref<9x1x128xf32, #tpu.memory_space<vmem>>, vector<1x1x128xf32>
    %43 = vector.shape_cast %42 : vector<1x1x128xf32> to vector<1x128xf32>
    %44 = arith.extf %41 : vector<1x1x128xbf16> to vector<1x1x128xf32>
    %45 = vector.shape_cast %43 : vector<1x128xf32> to vector<1x1x128xf32>
    %46 = arith.mulf %44, %45 : vector<1x1x128xf32>
    %47 = arith.addf %40, %46 : vector<1x1x128xf32>
    %48 = vector.extract_strided_slice %1 {offsets = [1, 0, 0], sizes = [1, 1, 128], strides = [1, 1, 1]} : vector<2x2x128xbf16> to vector<1x1x128xbf16>
    %c6 = arith.constant 6 : index
    %c0_28 = arith.constant 0 : index
    %c0_29 = arith.constant 0 : index
    %49 = vector.load %arg5[%c6, %c0_28, %c0_29] : memref<9x1x128xf32, #tpu.memory_space<vmem>>, vector<1x1x128xf32>
    %50 = vector.shape_cast %49 : vector<1x1x128xf32> to vector<1x128xf32>
    %51 = arith.extf %48 : vector<1x1x128xbf16> to vector<1x1x128xf32>
    %52 = vector.shape_cast %50 : vector<1x128xf32> to vector<1x1x128xf32>
    %53 = arith.mulf %51, %52 : vector<1x1x128xf32>
    %54 = arith.addf %47, %53 : vector<1x1x128xf32>
    %55 = vector.extract_strided_slice %3 {offsets = [1, 0, 0], sizes = [1, 1, 128], strides = [1, 1, 1]} : vector<2x1x128xbf16> to vector<1x1x128xbf16>
    %c7 = arith.constant 7 : index
    %c0_30 = arith.constant 0 : index
    %c0_31 = arith.constant 0 : index
    %56 = vector.load %arg5[%c7, %c0_30, %c0_31] : memref<9x1x128xf32, #tpu.memory_space<vmem>>, vector<1x1x128xf32>
    %57 = vector.shape_cast %56 : vector<1x1x128xf32> to vector<1x128xf32>
    %58 = arith.extf %55 : vector<1x1x128xbf16> to vector<1x1x128xf32>
    %59 = vector.shape_cast %57 : vector<1x128xf32> to vector<1x1x128xf32>
    %60 = arith.mulf %58, %59 : vector<1x1x128xf32>
    %61 = arith.addf %54, %60 : vector<1x1x128xf32>
    %62 = vector.extract_strided_slice %1 {offsets = [1, 1, 0], sizes = [1, 1, 128], strides = [1, 1, 1]} : vector<2x2x128xbf16> to vector<1x1x128xbf16>
    %c8 = arith.constant 8 : index
    %c0_32 = arith.constant 0 : index
    %c0_33 = arith.constant 0 : index
    %63 = vector.load %arg5[%c8, %c0_32, %c0_33] : memref<9x1x128xf32, #tpu.memory_space<vmem>>, vector<1x1x128xf32>
    %64 = vector.shape_cast %63 : vector<1x1x128xf32> to vector<1x128xf32>
    %65 = arith.extf %62 : vector<1x1x128xbf16> to vector<1x1x128xf32>
    %66 = vector.shape_cast %64 : vector<1x128xf32> to vector<1x1x128xf32>
    %67 = arith.mulf %65, %66 : vector<1x1x128xf32>
    %68 = arith.addf %61, %67 : vector<1x1x128xf32>
    %c0_34 = arith.constant 0 : index
    %c0_35 = arith.constant 0 : index
    %69 = vector.load %arg6[%c0_34, %c0_35] : memref<1x128xf32, #tpu.memory_space<vmem>>, vector<1x128xf32>
    %70 = vector.shape_cast %69 : vector<1x128xf32> to vector<1x1x128xf32>
    %71 = arith.addf %68, %70 : vector<1x1x128xf32>
    %cst = arith.constant 0.000000e+00 : f32
    %cst_36 = arith.constant 6.000000e+00 : f32
    %72 = vector.broadcast %cst : f32 to vector<1x1x128xf32>
    %73 = arith.maximumf %72, %71 : vector<1x1x128xf32>
    %74 = vector.broadcast %cst_36 : f32 to vector<1x1x128xf32>
    %75 = arith.minimumf %74, %73 : vector<1x1x128xf32>
    %76 = vector.shape_cast %75 : vector<1x1x128xf32> to vector<1x1x1x128xf32>
    %77 = arith.truncf %76 : vector<1x1x1x128xf32> to vector<1x1x1x128xbf16>
    %c0_37 = arith.constant 0 : index
    %c0_38 = arith.constant 0 : index
    %c0_39 = arith.constant 0 : index
    %c0_40 = arith.constant 0 : index
    %78 = vector.load %arg7[%c0_37, %c0_38, %c0_39, %c0_40] : memref<1x1x1x128xbf16, #tpu.memory_space<vmem>>, vector<1x1x1x128xbf16>
    tpu.vector_store %arg7[%c0_37, %c0_38, %c0_39, %c0_40], %77 {strides = array<i32>} : memref<1x1x1x128xbf16, #tpu.memory_space<vmem>>, vector<1x1x1x128xbf16>,
    return
  }
  func.func @transform_0(%arg0: i32) -> (i32, i32, i32, i32) {
    %c0_i32 = arith.constant 0 : i32
    %c0_i32_0 = arith.constant 0 : i32
    %c0_i32_1 = arith.constant 0 : i32
    %c0_i32_2 = arith.constant 0 : i32
    return %arg0, %c0_i32, %c0_i32_0, %c0_i32_1 : i32, i32, i32, i32
  }
  func.func @transform_1(%arg0: i32) -> (i32, i32, i32, i32) {
    %c0_i32 = arith.constant 0 : i32
    %c0_i32_0 = arith.constant 0 : i32
    %c0_i32_1 = arith.constant 0 : i32
    %c0_i32_2 = arith.constant 0 : i32
    return %arg0, %c0_i32, %c0_i32_0, %c0_i32_1 : i32, i32, i32, i32
  }
  func.func @transform_2(%arg0: i32) -> (i32, i32, i32, i32) {
    %c0_i32 = arith.constant 0 : i32
    %c0_i32_0 = arith.constant 0 : i32
    %c0_i32_1 = arith.constant 0 : i32
    %c0_i32_2 = arith.constant 0 : i32
    return %arg0, %c0_i32, %c0_i32_0, %c0_i32_1 : i32, i32, i32, i32
  }
  func.func @transform_3(%arg0: i32) -> (i32, i32, i32, i32) {
    %c0_i32 = arith.constant 0 : i32
    %c0_i32_0 = arith.constant 0 : i32
    %c0_i32_1 = arith.constant 0 : i32
    %c0_i32_2 = arith.constant 0 : i32
    return %arg0, %c0_i32, %c0_i32_0, %c0_i32_1 : i32, i32, i32, i32
  }
  func.func @transform_4(%arg0: i32) -> (i32, i32, i32) {
    %c0_i32 = arith.constant 0 : i32
    %c0_i32_0 = arith.constant 0 : i32
    %c0_i32_1 = arith.constant 0 : i32
    %c0_i32_2 = arith.constant 0 : i32
    return %c0_i32, %c0_i32_0, %c0_i32_1 : i32, i32, i32
  }
  func.func @transform_5(%arg0: i32) -> (i32, i32) {
    %c0_i32 = arith.constant 0 : i32
    %c0_i32_0 = arith.constant 0 : i32
    %c0_i32_1 = arith.constant 0 : i32
    return %c0_i32, %c0_i32_0 : i32, i32
  }
  func.func @transform_6(%arg0: i32) -> (i32, i32, i32, i32) {
    %c0_i32 = arith.constant 0 : i32
    %c0_i32_0 = arith.constant 0 : i32
    %c0_i32_1 = arith.constant 0 : i32
    %c0_i32_2 = arith.constant 0 : i32
    return %arg0, %c0_i32, %c0_i32_0, %c0_i32_1 : i32, i32, i32, i32
  }
}

module attributes {stable_mosaic.version = 11 : i64} {
  func.func @_matmul_bias_relu6_kernel(%arg0: i32, %arg1: i32, %arg2: memref<2x128xbf16, #tpu.memory_space<vmem>>, %arg3: memref<128x256xbf16, #tpu.memory_space<vmem>>, %arg4: memref<1x256xf32, #tpu.memory_space<vmem>>, %arg5: memref<2x256xbf16, #tpu.memory_space<vmem>>) attributes {dimension_semantics = [#tpu.dimension_semantics<parallel>, #tpu.dimension_semantics<parallel>], iteration_bounds = array<i64: 1, 1>, scalar_prefetch = 0 : i64, scratch_operands = 0 : i64, tpu.core_type = #tpu.core_type<tc>, window_params = [{transform_indices = @transform_0, window_bounds = array<i64: 2, 128>}, {transform_indices = @transform_1, window_bounds = array<i64: 128, 256>}, {transform_indices = @transform_2, window_bounds = array<i64: 1, 256>}, {transform_indices = @transform_3, window_bounds = array<i64: 2, 256>}]} {
    %c0 = arith.constant 0 : index
    %c0_0 = arith.constant 0 : index
    %0 = vector.load %arg2[%c0, %c0_0] : memref<2x128xbf16, #tpu.memory_space<vmem>>, vector<2x128xbf16>
    %c0_1 = arith.constant 0 : index
    %c0_2 = arith.constant 0 : index
    %1 = vector.load %arg3[%c0_1, %c0_2] : memref<128x256xbf16, #tpu.memory_space<vmem>>, vector<128x256xbf16>
    %cst = arith.constant dense<0.000000e+00> : vector<2x256xf32>
    %2 = tpu.matmul %0, %1, %cst {dimension_numbers = #tpu.dot_dimension_numbers<[1], [0], [0], [1], [0, 0, 1, 1], [], []>} : vector<2x128xbf16>, vector<128x256xbf16>, vector<2x256xf32> -> vector<2x256xf32>
    %c0_3 = arith.constant 0 : index
    %c0_4 = arith.constant 0 : index
    %3 = vector.load %arg4[%c0_3, %c0_4] : memref<1x256xf32, #tpu.memory_space<vmem>>, vector<1x256xf32>
    %4 = vector.broadcast %3 : vector<1x256xf32> to vector<2x256xf32>
    %5 = arith.addf %2, %4 : vector<2x256xf32>
    %cst_5 = arith.constant 0.000000e+00 : f32
    %cst_6 = arith.constant 6.000000e+00 : f32
    %6 = vector.broadcast %cst_5 : f32 to vector<2x256xf32>
    %7 = arith.maximumf %6, %5 : vector<2x256xf32>
    %8 = vector.broadcast %cst_6 : f32 to vector<2x256xf32>
    %9 = arith.minimumf %8, %7 : vector<2x256xf32>
    %10 = arith.truncf %9 : vector<2x256xf32> to vector<2x256xbf16>
    %c0_7 = arith.constant 0 : index
    %c0_8 = arith.constant 0 : index
    %11 = vector.load %arg5[%c0_7, %c0_8] : memref<2x256xbf16, #tpu.memory_space<vmem>>, vector<2x256xbf16>
    tpu.vector_store %arg5[%c0_7, %c0_8], %10 {strides = array<i32>} : memref<2x256xbf16, #tpu.memory_space<vmem>>, vector<2x256xbf16>,
    return
  }
  func.func @transform_0(%arg0: i32, %arg1: i32) -> (i32, i32) {
    %c0_i32 = arith.constant 0 : i32
    %c0_i32_0 = arith.constant 0 : i32
    return %arg0, %c0_i32 : i32, i32
  }
  func.func @transform_1(%arg0: i32, %arg1: i32) -> (i32, i32) {
    %c0_i32 = arith.constant 0 : i32
    %c0_i32_0 = arith.constant 0 : i32
    return %c0_i32, %arg1 : i32, i32
  }
  func.func @transform_2(%arg0: i32, %arg1: i32) -> (i32, i32) {
    %c0_i32 = arith.constant 0 : i32
    %c0_i32_0 = arith.constant 0 : i32
    return %c0_i32, %arg1 : i32, i32
  }
  func.func @transform_3(%arg0: i32, %arg1: i32) -> (i32, i32) {
    %c0_i32 = arith.constant 0 : i32
    return %arg0, %arg1 : i32, i32
  }
}

module attributes {stable_mosaic.version = 11 : i64} {
  func.func @_dw_s1_kernel(%arg0: i32, %arg1: memref<1x3x3x256xbf16, #tpu.memory_space<vmem>>, %arg2: memref<9x1x256xf32, #tpu.memory_space<vmem>>, %arg3: memref<1x256xf32, #tpu.memory_space<vmem>>, %arg4: memref<1x1x1x256xbf16, #tpu.memory_space<vmem>>) attributes {dimension_semantics = [#tpu.dimension_semantics<parallel>], iteration_bounds = array<i64: 2>, scalar_prefetch = 0 : i64, scratch_operands = 0 : i64, tpu.core_type = #tpu.core_type<tc>, window_params = [{transform_indices = @transform_0, window_bounds = array<i64: 1, 3, 3, 256>}, {pipeline_mode = #tpu.pipeline_mode<synchronous>, transform_indices = @transform_1, window_bounds = array<i64: 9, 1, 256>}, {pipeline_mode = #tpu.pipeline_mode<synchronous>, transform_indices = @transform_2, window_bounds = array<i64: 1, 256>}, {transform_indices = @transform_3, window_bounds = array<i64: 1, 1, 1, 256>}]} {
    %c0 = arith.constant 0 : index
    %c0_0 = arith.constant 0 : index
    %c0_1 = arith.constant 0 : index
    %c0_2 = arith.constant 0 : index
    %0 = vector.load %arg1[%c0, %c0_0, %c0_1, %c0_2] : memref<1x3x3x256xbf16, #tpu.memory_space<vmem>>, vector<1x3x3x256xbf16>
    %1 = vector.shape_cast %0 : vector<1x3x3x256xbf16> to vector<3x3x256xbf16>
    %2 = vector.extract_strided_slice %1 {offsets = [0, 0, 0], sizes = [1, 1, 256], strides = [1, 1, 1]} : vector<3x3x256xbf16> to vector<1x1x256xbf16>
    %c0_3 = arith.constant 0 : index
    %c0_4 = arith.constant 0 : index
    %c0_5 = arith.constant 0 : index
    %3 = vector.load %arg2[%c0_3, %c0_4, %c0_5] : memref<9x1x256xf32, #tpu.memory_space<vmem>>, vector<1x1x256xf32>
    %4 = vector.shape_cast %3 : vector<1x1x256xf32> to vector<1x256xf32>
    %5 = arith.extf %2 : vector<1x1x256xbf16> to vector<1x1x256xf32>
    %6 = vector.shape_cast %4 : vector<1x256xf32> to vector<1x1x256xf32>
    %7 = arith.mulf %5, %6 : vector<1x1x256xf32>
    %8 = vector.extract_strided_slice %1 {offsets = [0, 1, 0], sizes = [1, 1, 256], strides = [1, 1, 1]} : vector<3x3x256xbf16> to vector<1x1x256xbf16>
    %c1 = arith.constant 1 : index
    %c0_6 = arith.constant 0 : index
    %c0_7 = arith.constant 0 : index
    %9 = vector.load %arg2[%c1, %c0_6, %c0_7] : memref<9x1x256xf32, #tpu.memory_space<vmem>>, vector<1x1x256xf32>
    %10 = vector.shape_cast %9 : vector<1x1x256xf32> to vector<1x256xf32>
    %11 = arith.extf %8 : vector<1x1x256xbf16> to vector<1x1x256xf32>
    %12 = vector.shape_cast %10 : vector<1x256xf32> to vector<1x1x256xf32>
    %13 = arith.mulf %11, %12 : vector<1x1x256xf32>
    %14 = arith.addf %7, %13 : vector<1x1x256xf32>
    %15 = vector.extract_strided_slice %1 {offsets = [0, 2, 0], sizes = [1, 1, 256], strides = [1, 1, 1]} : vector<3x3x256xbf16> to vector<1x1x256xbf16>
    %c2 = arith.constant 2 : index
    %c0_8 = arith.constant 0 : index
    %c0_9 = arith.constant 0 : index
    %16 = vector.load %arg2[%c2, %c0_8, %c0_9] : memref<9x1x256xf32, #tpu.memory_space<vmem>>, vector<1x1x256xf32>
    %17 = vector.shape_cast %16 : vector<1x1x256xf32> to vector<1x256xf32>
    %18 = arith.extf %15 : vector<1x1x256xbf16> to vector<1x1x256xf32>
    %19 = vector.shape_cast %17 : vector<1x256xf32> to vector<1x1x256xf32>
    %20 = arith.mulf %18, %19 : vector<1x1x256xf32>
    %21 = arith.addf %14, %20 : vector<1x1x256xf32>
    %22 = vector.extract_strided_slice %1 {offsets = [1, 0, 0], sizes = [1, 1, 256], strides = [1, 1, 1]} : vector<3x3x256xbf16> to vector<1x1x256xbf16>
    %c3 = arith.constant 3 : index
    %c0_10 = arith.constant 0 : index
    %c0_11 = arith.constant 0 : index
    %23 = vector.load %arg2[%c3, %c0_10, %c0_11] : memref<9x1x256xf32, #tpu.memory_space<vmem>>, vector<1x1x256xf32>
    %24 = vector.shape_cast %23 : vector<1x1x256xf32> to vector<1x256xf32>
    %25 = arith.extf %22 : vector<1x1x256xbf16> to vector<1x1x256xf32>
    %26 = vector.shape_cast %24 : vector<1x256xf32> to vector<1x1x256xf32>
    %27 = arith.mulf %25, %26 : vector<1x1x256xf32>
    %28 = arith.addf %21, %27 : vector<1x1x256xf32>
    %29 = vector.extract_strided_slice %1 {offsets = [1, 1, 0], sizes = [1, 1, 256], strides = [1, 1, 1]} : vector<3x3x256xbf16> to vector<1x1x256xbf16>
    %c4 = arith.constant 4 : index
    %c0_12 = arith.constant 0 : index
    %c0_13 = arith.constant 0 : index
    %30 = vector.load %arg2[%c4, %c0_12, %c0_13] : memref<9x1x256xf32, #tpu.memory_space<vmem>>, vector<1x1x256xf32>
    %31 = vector.shape_cast %30 : vector<1x1x256xf32> to vector<1x256xf32>
    %32 = arith.extf %29 : vector<1x1x256xbf16> to vector<1x1x256xf32>
    %33 = vector.shape_cast %31 : vector<1x256xf32> to vector<1x1x256xf32>
    %34 = arith.mulf %32, %33 : vector<1x1x256xf32>
    %35 = arith.addf %28, %34 : vector<1x1x256xf32>
    %36 = vector.extract_strided_slice %1 {offsets = [1, 2, 0], sizes = [1, 1, 256], strides = [1, 1, 1]} : vector<3x3x256xbf16> to vector<1x1x256xbf16>
    %c5 = arith.constant 5 : index
    %c0_14 = arith.constant 0 : index
    %c0_15 = arith.constant 0 : index
    %37 = vector.load %arg2[%c5, %c0_14, %c0_15] : memref<9x1x256xf32, #tpu.memory_space<vmem>>, vector<1x1x256xf32>
    %38 = vector.shape_cast %37 : vector<1x1x256xf32> to vector<1x256xf32>
    %39 = arith.extf %36 : vector<1x1x256xbf16> to vector<1x1x256xf32>
    %40 = vector.shape_cast %38 : vector<1x256xf32> to vector<1x1x256xf32>
    %41 = arith.mulf %39, %40 : vector<1x1x256xf32>
    %42 = arith.addf %35, %41 : vector<1x1x256xf32>
    %43 = vector.extract_strided_slice %1 {offsets = [2, 0, 0], sizes = [1, 1, 256], strides = [1, 1, 1]} : vector<3x3x256xbf16> to vector<1x1x256xbf16>
    %c6 = arith.constant 6 : index
    %c0_16 = arith.constant 0 : index
    %c0_17 = arith.constant 0 : index
    %44 = vector.load %arg2[%c6, %c0_16, %c0_17] : memref<9x1x256xf32, #tpu.memory_space<vmem>>, vector<1x1x256xf32>
    %45 = vector.shape_cast %44 : vector<1x1x256xf32> to vector<1x256xf32>
    %46 = arith.extf %43 : vector<1x1x256xbf16> to vector<1x1x256xf32>
    %47 = vector.shape_cast %45 : vector<1x256xf32> to vector<1x1x256xf32>
    %48 = arith.mulf %46, %47 : vector<1x1x256xf32>
    %49 = arith.addf %42, %48 : vector<1x1x256xf32>
    %50 = vector.extract_strided_slice %1 {offsets = [2, 1, 0], sizes = [1, 1, 256], strides = [1, 1, 1]} : vector<3x3x256xbf16> to vector<1x1x256xbf16>
    %c7 = arith.constant 7 : index
    %c0_18 = arith.constant 0 : index
    %c0_19 = arith.constant 0 : index
    %51 = vector.load %arg2[%c7, %c0_18, %c0_19] : memref<9x1x256xf32, #tpu.memory_space<vmem>>, vector<1x1x256xf32>
    %52 = vector.shape_cast %51 : vector<1x1x256xf32> to vector<1x256xf32>
    %53 = arith.extf %50 : vector<1x1x256xbf16> to vector<1x1x256xf32>
    %54 = vector.shape_cast %52 : vector<1x256xf32> to vector<1x1x256xf32>
    %55 = arith.mulf %53, %54 : vector<1x1x256xf32>
    %56 = arith.addf %49, %55 : vector<1x1x256xf32>
    %57 = vector.extract_strided_slice %1 {offsets = [2, 2, 0], sizes = [1, 1, 256], strides = [1, 1, 1]} : vector<3x3x256xbf16> to vector<1x1x256xbf16>
    %c8 = arith.constant 8 : index
    %c0_20 = arith.constant 0 : index
    %c0_21 = arith.constant 0 : index
    %58 = vector.load %arg2[%c8, %c0_20, %c0_21] : memref<9x1x256xf32, #tpu.memory_space<vmem>>, vector<1x1x256xf32>
    %59 = vector.shape_cast %58 : vector<1x1x256xf32> to vector<1x256xf32>
    %60 = arith.extf %57 : vector<1x1x256xbf16> to vector<1x1x256xf32>
    %61 = vector.shape_cast %59 : vector<1x256xf32> to vector<1x1x256xf32>
    %62 = arith.mulf %60, %61 : vector<1x1x256xf32>
    %63 = arith.addf %56, %62 : vector<1x1x256xf32>
    %c0_22 = arith.constant 0 : index
    %c0_23 = arith.constant 0 : index
    %64 = vector.load %arg3[%c0_22, %c0_23] : memref<1x256xf32, #tpu.memory_space<vmem>>, vector<1x256xf32>
    %65 = vector.shape_cast %64 : vector<1x256xf32> to vector<1x1x256xf32>
    %66 = arith.addf %63, %65 : vector<1x1x256xf32>
    %cst = arith.constant 0.000000e+00 : f32
    %cst_24 = arith.constant 6.000000e+00 : f32
    %67 = vector.broadcast %cst : f32 to vector<1x1x256xf32>
    %68 = arith.maximumf %67, %66 : vector<1x1x256xf32>
    %69 = vector.broadcast %cst_24 : f32 to vector<1x1x256xf32>
    %70 = arith.minimumf %69, %68 : vector<1x1x256xf32>
    %71 = vector.shape_cast %70 : vector<1x1x256xf32> to vector<1x1x1x256xf32>
    %72 = arith.truncf %71 : vector<1x1x1x256xf32> to vector<1x1x1x256xbf16>
    %c0_25 = arith.constant 0 : index
    %c0_26 = arith.constant 0 : index
    %c0_27 = arith.constant 0 : index
    %c0_28 = arith.constant 0 : index
    %73 = vector.load %arg4[%c0_25, %c0_26, %c0_27, %c0_28] : memref<1x1x1x256xbf16, #tpu.memory_space<vmem>>, vector<1x1x1x256xbf16>
    tpu.vector_store %arg4[%c0_25, %c0_26, %c0_27, %c0_28], %72 {strides = array<i32>} : memref<1x1x1x256xbf16, #tpu.memory_space<vmem>>, vector<1x1x1x256xbf16>,
    return
  }
  func.func @transform_0(%arg0: i32) -> (i32, i32, i32, i32) {
    %c0_i32 = arith.constant 0 : i32
    %c0_i32_0 = arith.constant 0 : i32
    %c0_i32_1 = arith.constant 0 : i32
    %c0_i32_2 = arith.constant 0 : i32
    return %arg0, %c0_i32, %c0_i32_0, %c0_i32_1 : i32, i32, i32, i32
  }
  func.func @transform_1(%arg0: i32) -> (i32, i32, i32) {
    %c0_i32 = arith.constant 0 : i32
    %c0_i32_0 = arith.constant 0 : i32
    %c0_i32_1 = arith.constant 0 : i32
    %c0_i32_2 = arith.constant 0 : i32
    return %c0_i32, %c0_i32_0, %c0_i32_1 : i32, i32, i32
  }
  func.func @transform_2(%arg0: i32) -> (i32, i32) {
    %c0_i32 = arith.constant 0 : i32
    %c0_i32_0 = arith.constant 0 : i32
    %c0_i32_1 = arith.constant 0 : i32
    return %c0_i32, %c0_i32_0 : i32, i32
  }
  func.func @transform_3(%arg0: i32) -> (i32, i32, i32, i32) {
    %c0_i32 = arith.constant 0 : i32
    %c0_i32_0 = arith.constant 0 : i32
    %c0_i32_1 = arith.constant 0 : i32
    %c0_i32_2 = arith.constant 0 : i32
    return %arg0, %c0_i32, %c0_i32_0, %c0_i32_1 : i32, i32, i32, i32
  }
}

module attributes {stable_mosaic.version = 11 : i64} {
  func.func @_matmul_bias_relu6_kernel(%arg0: i32, %arg1: i32, %arg2: memref<2x256xbf16, #tpu.memory_space<vmem>>, %arg3: memref<256x256xbf16, #tpu.memory_space<vmem>>, %arg4: memref<1x256xf32, #tpu.memory_space<vmem>>, %arg5: memref<2x256xbf16, #tpu.memory_space<vmem>>) attributes {dimension_semantics = [#tpu.dimension_semantics<parallel>, #tpu.dimension_semantics<parallel>], iteration_bounds = array<i64: 1, 1>, scalar_prefetch = 0 : i64, scratch_operands = 0 : i64, tpu.core_type = #tpu.core_type<tc>, window_params = [{transform_indices = @transform_0, window_bounds = array<i64: 2, 256>}, {transform_indices = @transform_1, window_bounds = array<i64: 256, 256>}, {transform_indices = @transform_2, window_bounds = array<i64: 1, 256>}, {transform_indices = @transform_3, window_bounds = array<i64: 2, 256>}]} {
    %c0 = arith.constant 0 : index
    %c0_0 = arith.constant 0 : index
    %0 = vector.load %arg2[%c0, %c0_0] : memref<2x256xbf16, #tpu.memory_space<vmem>>, vector<2x256xbf16>
    %c0_1 = arith.constant 0 : index
    %c0_2 = arith.constant 0 : index
    %1 = vector.load %arg3[%c0_1, %c0_2] : memref<256x256xbf16, #tpu.memory_space<vmem>>, vector<256x256xbf16>
    %cst = arith.constant dense<0.000000e+00> : vector<2x256xf32>
    %2 = tpu.matmul %0, %1, %cst {dimension_numbers = #tpu.dot_dimension_numbers<[1], [0], [0], [1], [0, 0, 1, 1], [], []>} : vector<2x256xbf16>, vector<256x256xbf16>, vector<2x256xf32> -> vector<2x256xf32>
    %c0_3 = arith.constant 0 : index
    %c0_4 = arith.constant 0 : index
    %3 = vector.load %arg4[%c0_3, %c0_4] : memref<1x256xf32, #tpu.memory_space<vmem>>, vector<1x256xf32>
    %4 = vector.broadcast %3 : vector<1x256xf32> to vector<2x256xf32>
    %5 = arith.addf %2, %4 : vector<2x256xf32>
    %cst_5 = arith.constant 0.000000e+00 : f32
    %cst_6 = arith.constant 6.000000e+00 : f32
    %6 = vector.broadcast %cst_5 : f32 to vector<2x256xf32>
    %7 = arith.maximumf %6, %5 : vector<2x256xf32>
    %8 = vector.broadcast %cst_6 : f32 to vector<2x256xf32>
    %9 = arith.minimumf %8, %7 : vector<2x256xf32>
    %10 = arith.truncf %9 : vector<2x256xf32> to vector<2x256xbf16>
    %c0_7 = arith.constant 0 : index
    %c0_8 = arith.constant 0 : index
    %11 = vector.load %arg5[%c0_7, %c0_8] : memref<2x256xbf16, #tpu.memory_space<vmem>>, vector<2x256xbf16>
    tpu.vector_store %arg5[%c0_7, %c0_8], %10 {strides = array<i32>} : memref<2x256xbf16, #tpu.memory_space<vmem>>, vector<2x256xbf16>,
    return
  }
  func.func @transform_0(%arg0: i32, %arg1: i32) -> (i32, i32) {
    %c0_i32 = arith.constant 0 : i32
    %c0_i32_0 = arith.constant 0 : i32
    return %arg0, %c0_i32 : i32, i32
  }
  func.func @transform_1(%arg0: i32, %arg1: i32) -> (i32, i32) {
    %c0_i32 = arith.constant 0 : i32
    %c0_i32_0 = arith.constant 0 : i32
    return %c0_i32, %arg1 : i32, i32
  }
  func.func @transform_2(%arg0: i32, %arg1: i32) -> (i32, i32) {
    %c0_i32 = arith.constant 0 : i32
    %c0_i32_0 = arith.constant 0 : i32
    return %c0_i32, %arg1 : i32, i32
  }
  func.func @transform_3(%arg0: i32, %arg1: i32) -> (i32, i32) {
    %c0_i32 = arith.constant 0 : i32
    return %arg0, %arg1 : i32, i32
  }
}

module attributes {stable_mosaic.version = 11 : i64} {
  func.func @_avgpool_kernel(%arg0: i32, %arg1: memref<1x1x256xbf16, #tpu.memory_space<vmem>>, %arg2: memref<1x1x256xf32, #tpu.memory_space<vmem>>) attributes {dimension_semantics = [#tpu.dimension_semantics<parallel>], iteration_bounds = array<i64: 2>, scalar_prefetch = 0 : i64, scratch_operands = 0 : i64, tpu.core_type = #tpu.core_type<tc>, window_params = [{transform_indices = @transform_0, window_bounds = array<i64: 1, 1, 256>}, {transform_indices = @transform_1, window_bounds = array<i64: 1, 1, 256>}]} {
    %c0 = arith.constant 0 : index
    %c0_0 = arith.constant 0 : index
    %c0_1 = arith.constant 0 : index
    %0 = vector.load %arg1[%c0, %c0_0, %c0_1] : memref<1x1x256xbf16, #tpu.memory_space<vmem>>, vector<1x1x256xbf16>
    %1 = arith.extf %0 : vector<1x1x256xbf16> to vector<1x1x256xf32>
    %cst = arith.constant dense<0.000000e+00> : vector<1x256xf32>
    %2 = vector.multi_reduction <add>, %1, %cst [1] : vector<1x1x256xf32> to vector<1x256xf32>
    %3 = vector.shape_cast %2 : vector<1x256xf32> to vector<1x1x256xf32>
    %cst_2 = arith.constant 1.000000e+00 : f32
    %4 = vector.broadcast %cst_2 : f32 to vector<1x1x256xf32>
    %5 = arith.divf %3, %4 : vector<1x1x256xf32>
    %c0_3 = arith.constant 0 : index
    %c0_4 = arith.constant 0 : index
    %c0_5 = arith.constant 0 : index
    %6 = vector.load %arg2[%c0_3, %c0_4, %c0_5] : memref<1x1x256xf32, #tpu.memory_space<vmem>>, vector<1x1x256xf32>
    tpu.vector_store %arg2[%c0_3, %c0_4, %c0_5], %5 {strides = array<i32>} : memref<1x1x256xf32, #tpu.memory_space<vmem>>, vector<1x1x256xf32>,
    return
  }
  func.func @transform_0(%arg0: i32) -> (i32, i32, i32) {
    %c0_i32 = arith.constant 0 : i32
    %c0_i32_0 = arith.constant 0 : i32
    %c0_i32_1 = arith.constant 0 : i32
    return %arg0, %c0_i32, %c0_i32_0 : i32, i32, i32
  }
  func.func @transform_1(%arg0: i32) -> (i32, i32, i32) {
    %c0_i32 = arith.constant 0 : i32
    %c0_i32_0 = arith.constant 0 : i32
    %c0_i32_1 = arith.constant 0 : i32
    return %arg0, %c0_i32, %c0_i32_0 : i32, i32, i32
  }
}

</mosaic_0001>

<llo_original>
// kernel: forward.28
$region0: #{forward.28}
  #allocation0 [shape = 'u32[]', space=smem, size = 0x4, offset = 0x4, fixed_abs, tag = 'smem constant byte address 0x4 - core index']
  #allocation1 [shape = 'u32[72,128]{1,0:T(1,128)}', space=vmem, size = 0x9000, scoped, tag = 'internal scratch']
  %s0 = inlined_call_operand.vmem [shape: bf16[512,32], index: 0, kind: input, shape index: {}]
  %s1 = inlined_call_operand.vmem [shape: bf16[32,8], index: 1, kind: input, shape index: {}]
  %s2 = inlined_call_operand.vmem [shape: f32[1,8], index: 2, kind: input, shape index: {}]
  %s3 = inlined_call_operand.vmem [shape: bf16[512,8], index: 3, kind: output, shape index: {}]
  %s4 = sld [smem:[#allocation0]]
  $region22: #{forward.28} parent=0
    _
  %s6 = ssub.s32 1, %s4
  %s7 = scalar_select 0, %s6, %s4
  // Predicated region
  $region2: #{forward.28} parent=0 // pred_check
    _
  $region3: #{forward.28} parent=0 // pred_check_branch
    %9 = sbr.rel (0) target = $region5
  $region4: #{forward.28} parent=0 // pred_region
    _
  $region5: #{forward.28} parent=0 // pred_fallthru
    _
  // Predicated region
  $region6: #{forward.28} parent=0 // pred_check
    _
  $region7: #{forward.28} parent=0 // pred_check_branch
    %11 = sbr.rel (0) target = $region9
  $region8: #{forward.28} parent=0 // pred_region
    _
  $region9: #{forward.28} parent=0 // pred_fallthru
    _
  // Predicated region
  $region10: #{forward.28} parent=0 // pred_check
    _
  $region11: #{forward.28} parent=0 // pred_check_branch
    %13 = sbr.rel (0) target = $region13
  $region12: #{forward.28} parent=0 // pred_region
    _
  $region13: #{forward.28} parent=0 // pred_fallthru
    _
  %v15 = vld [vmem:[%s0] sm:$0xf]
  %v16 = vld [vmem:[%s0 + $0x4] sm:$0xf]
  %v17 = vld [vmem:[%s0 + $0x8] sm:$0xf]
  %v18 = vld [vmem:[%s0 + $0xc] sm:$0xf]
  %v19 = vld [vmem:[%s0 + $0x10] sm:$0xf]
  %v20 = vld [vmem:[%s0 + $0x14] sm:$0xf]
  %v21 = vld [vmem:[%s0 + $0x18] sm:$0xf]
  %v22 = vld [vmem:[%s0 + $0x1c] sm:$0xf]
  %v23 = vld [vmem:[%s0 + $0x20] sm:$0xf]
  %v24 = vld [vmem:[%s0 + $0x24] sm:$0xf]
  %v25 = vld [vmem:[%s0 + $0x28] sm:$0xf]
  %v26 = vld [vmem:[%s0 + $0x2c] sm:$0xf]
  %v27 = vld [vmem:[%s0 + $0x30] sm:$0xf]
  %v28 = vld [vmem:[%s0 + $0x34] sm:$0xf]
  %v29 = vld [vmem:[%s0 + $0x38] sm:$0xf]
  %v30 = vld [vmem:[%s0 + $0x3c] sm:$0xf]
  %v31 = vld [vmem:[%s0 + $0x40] sm:$0xf]
  %v32 = vld [vmem:[%s0 + $0x44] sm:$0xf]
  %v33 = vld [vmem:[%s0 + $0x48] sm:$0xf]
  %v34 = vld [vmem:[%s0 + $0x4c] sm:$0xf]
  %v35 = vld [vmem:[%s0 + $0x50] sm:$0xf]
  %v36 = vld [vmem:[%s0 + $0x54] sm:$0xf]
  %v37 = vld [vmem:[%s0 + $0x58] sm:$0xf]
  %v38 = vld [vmem:[%s0 + $0x5c] sm:$0xf]
  %v39 = vld [vmem:[%s0 + $0x60] sm:$0xf]
  %v40 = vld [vmem:[%s0 + $0x64] sm:$0xf]
  %v41 = vld [vmem:[%s0 + $0x68] sm:$0xf]
  %v42 = vld [vmem:[%s0 + $0x6c] sm:$0xf]
  %v43 = vld [vmem:[%s0 + $0x70] sm:$0xf]
  %v44 = vld [vmem:[%s0 + $0x74] sm:$0xf]
  %v45 = vld [vmem:[%s0 + $0x78] sm:$0xf]
  %v46 = vld [vmem:[%s0 + $0x7c] sm:$0xf]
  %v47 = vld [vmem:[%s0 + $0x80] sm:$0xf]
  %v48 = vld [vmem:[%s0 + $0x84] sm:$0xf]
  %v49 = vld [vmem:[%s0 + $0x88] sm:$0xf]
  %v50 = vld [vmem:[%s0 + $0x8c] sm:$0xf]
  %v51 = vld [vmem:[%s0 + $0x90] sm:$0xf]
  %v52 = vld [vmem:[%s0 + $0x94] sm:$0xf]
  %v53 = vld [vmem:[%s0 + $0x98] sm:$0xf]
  %v54 = vld [vmem:[%s0 + $0x9c] sm:$0xf]
  %v55 = vld [vmem:[%s0 + $0xa0] sm:$0xf]
  %v56 = vld [vmem:[%s0 + $0xa4] sm:$0xf]
  %v57 = vld [vmem:[%s0 + $0xa8] sm:$0xf]
  %v58 = vld [vmem:[%s0 + $0xac] sm:$0xf]
  %v59 = vld [vmem:[%s0 + $0xb0] sm:$0xf]
  %v60 = vld [vmem:[%s0 + $0xb4] sm:$0xf]
  %v61 = vld [vmem:[%s0 + $0xb8] sm:$0xf]
  %v62 = vld [vmem:[%s0 + $0xbc] sm:$0xf]
  %v63 = vld [vmem:[%s0 + $0xc0] sm:$0xf]
  %v64 = vld [vmem:[%s0 + $0xc4] sm:$0xf]
  %v65 = vld [vmem:[%s0 + $0xc8] sm:$0xf]
  %v66 = vld [vmem:[%s0 + $0xcc] sm:$0xf]
  %v67 = vld [vmem:[%s0 + $0xd0] sm:$0xf]
  %v68 = vld [vmem:[%s0 + $0xd4] sm:$0xf]
  %v69 = vld [vmem:[%s0 + $0xd8] sm:$0xf]
  %v70 = vld [vmem:[%s0 + $0xdc] sm:$0xf]
  %v71 = vld [vmem:[%s0 + $0xe0] sm:$0xf]
  %v72 = vld [vmem:[%s0 + $0xe4] sm:$0xf]
  %v73 = vld [vmem:[%s0 + $0xe8] sm:$0xf]
  %v74 = vld [vmem:[%s0 + $0xec] sm:$0xf]
  %v75 = vld [vmem:[%s0 + $0xf0] sm:$0xf]
  %v76 = vld [vmem:[%s0 + $0xf4] sm:$0xf]
  %v77 = vld [vmem:[%s0 + $0xf8] sm:$0xf]
  %v78 = vld [vmem:[%s0 + $0xfc] sm:$0xf]
  %v79 = vld [vmem:[%s1] sm:$0xf]
  %v80 = vld [vmem:[%s1 + $0x4] sm:$0xf]
  %v81 = vld [vmem:[%s1 + $0x8] sm:$0xf]
  %v82 = vld [vmem:[%s1 + $0xc] sm:$0xf]
  %v83 = vld [vmem:[%s2] sm:$0x1]
  %v85 = vperm.slane %v83, 0
  %v151 = vunpack.c.l.b16 %v15
  %v152 = vunpack.c.l.b16 %v16
  %v153 = vunpack.c.l.b16 %v17
  %v154 = vunpack.c.l.b16 %v18
  %v155 = vunpack.c.l.b16 %v19
  %v156 = vunpack.c.l.b16 %v20
  %v157 = vunpack.c.l.b16 %v21
  %v158 = vunpack.c.l.b16 %v22
  %v159 = vunpack.c.l.b16 %v23
  %v160 = vunpack.c.l.b16 %v24
  %v161 = vunpack.c.l.b16 %v25
  %v162 = vunpack.c.l.b16 %v26
  %v163 = vunpack.c.l.b16 %v27
  %v164 = vunpack.c.l.b16 %v28
  %v165 = vunpack.c.l.b16 %v29
  %v166 = vunpack.c.l.b16 %v30
  %v167 = vunpack.c.l.b16 %v31
  %v168 = vunpack.c.l.b16 %v32
  %v169 = vunpack.c.l.b16 %v33
  %v170 = vunpack.c.l.b16 %v34
  %v171 = vunpack.c.l.b16 %v35
  %v172 = vunpack.c.l.b16 %v36
  %v173 = vunpack.c.l.b16 %v37
  %v174 = vunpack.c.l.b16 %v38
  %v175 = vunpack.c.l.b16 %v39
  %v176 = vunpack.c.l.b16 %v40
  %v177 = vunpack.c.l.b16 %v41
  %v178 = vunpack.c.l.b16 %v42
  %v179 = vunpack.c.l.b16 %v43
  %v180 = vunpack.c.l.b16 %v44
  %v181 = vunpack.c.l.b16 %v45
  %v182 = vunpack.c.l.b16 %v46
  %v183 = vunpack.c.l.b16 %v47
  %v184 = vunpack.c.l.b16 %v48
  %v185 = vunpack.c.l.b16 %v49
  %v186 = vunpack.c.l.b16 %v50
  %v187 = vunpack.c.l.b16 %v51
  %v188 = vunpack.c.l.b16 %v52
  %v189 = vunpack.c.l.b16 %v53
  %v190 = vunpack.c.l.b16 %v54
  %v191 = vunpack.c.l.b16 %v55
  %v192 = vunpack.c.l.b16 %v56
  %v193 = vunpack.c.l.b16 %v57
  %v194 = vunpack.c.l.b16 %v58
  %v195 = vunpack.c.l.b16 %v59
  %v196 = vunpack.c.l.b16 %v60
  %v197 = vunpack.c.l.b16 %v61
  %v198 = vunpack.c.l.b16 %v62
  %v199 = vunpack.c.l.b16 %v63
  %v200 = vunpack.c.l.b16 %v64
  %v201 = vunpack.c.l.b16 %v65
  %v202 = vunpack.c.l.b16 %v66
  %v203 = vunpack.c.l.b16 %v67
  %v204 = vunpack.c.l.b16 %v68
  %v205 = vunpack.c.l.b16 %v69
  %v206 = vunpack.c.l.b16 %v70
  %v207 = vunpack.c.l.b16 %v71
  %v208 = vunpack.c.l.b16 %v72
  %v209 = vunpack.c.l.b16 %v73
  %v210 = vunpack.c.l.b16 %v74
  %v211 = vunpack.c.l.b16 %v75
  %v212 = vunpack.c.l.b16 %v76
  %v213 = vunpack.c.l.b16 %v77
  %v214 = vunpack.c.l.b16 %v78
  %v215 = vpack.c.b16 %v152, %v151
  %v216 = vpack.c.b16 %v154, %v153
  %v217 = vpack.c.b16 %v156, %v155
  %v218 = vpack.c.b16 %v158, %v157
  %v219 = vpack.c.b16 %v160, %v159
  %v220 = vpack.c.b16 %v162, %v161
  %v221 = vpack.c.b16 %v164, %v163
  %v222 = vpack.c.b16 %v166, %v165
  %v223 = vpack.c.b16 %v168, %v167
  %v224 = vpack.c.b16 %v170, %v169
  %v225 = vpack.c.b16 %v172, %v171
  %v226 = vpack.c.b16 %v174, %v173
  %v227 = vpack.c.b16 %v176, %v175
  %v228 = vpack.c.b16 %v178, %v177
  %v229 = vpack.c.b16 %v180, %v179
  %v230 = vpack.c.b16 %v182, %v181
  %v231 = vpack.c.b16 %v184, %v183
  %v232 = vpack.c.b16 %v186, %v185
  %v233 = vpack.c.b16 %v188, %v187
  %v234 = vpack.c.b16 %v190, %v189
  %v235 = vpack.c.b16 %v192, %v191
  %v236 = vpack.c.b16 %v194, %v193
  %v237 = vpack.c.b16 %v196, %v195
  %v238 = vpack.c.b16 %v198, %v197
  %v239 = vpack.c.b16 %v200, %v199
  %v240 = vpack.c.b16 %v202, %v201
  %v241 = vpack.c.b16 %v204, %v203
  %v242 = vpack.c.b16 %v206, %v205
  %v243 = vpack.c.b16 %v208, %v207
  %v244 = vpack.c.b16 %v210, %v209
  %v245 = vpack.c.b16 %v212, %v211
  %v246 = vpack.c.b16 %v214, %v213
  %v251 = vunpack.c.l.b16 %v79
  %v252 = vunpack.c.l.b16 %v80
  %v253 = vunpack.c.l.b16 %v81
  %v254 = vunpack.c.l.b16 %v82
  %v255 = vpack.c.b16 %v252, %v251
  %v256 = vpack.c.b16 %v254, %v253
  %vm259 = vcmask 261120
  %v261 = vsel %vm259, %v215, 0
  %v264 = vsel %vm259, %v216, 0
  %v267 = vsel %vm259, %v217, 0
  %v270 = vsel %vm259, %v218, 0
  %v273 = vsel %vm259, %v219, 0
  %v276 = vsel %vm259, %v220, 0
  %v279 = vsel %vm259, %v221, 0
  %v282 = vsel %vm259, %v222, 0
  %v285 = vsel %vm259, %v223, 0
  %v288 = vsel %vm259, %v224, 0
  %v291 = vsel %vm259, %v225, 0
  %v294 = vsel %vm259, %v226, 0
  %v297 = vsel %vm259, %v227, 0
  %v300 = vsel %vm259, %v228, 0
  %v303 = vsel %vm259, %v229, 0
  %v306 = vsel %vm259, %v230, 0
  %v309 = vsel %vm259, %v231, 0
  %v312 = vsel %vm259, %v232, 0
  %v315 = vsel %vm259, %v233, 0
  %v318 = vsel %vm259, %v234, 0
  %v321 = vsel %vm259, %v235, 0
  %v324 = vsel %vm259, %v236, 0
  %v327 = vsel %vm259, %v237, 0
  %v330 = vsel %vm259, %v238, 0
  %v333 = vsel %vm259, %v239, 0
  %v336 = vsel %vm259, %v240, 0
  %v339 = vsel %vm259, %v241, 0
  %v342 = vsel %vm259, %v242, 0
  %v345 = vsel %vm259, %v243, 0
  %v348 = vsel %vm259, %v244, 0
  %v351 = vsel %vm259, %v245, 0
  %v354 = vsel %vm259, %v246, 0
  %356 = vmatpush.bf16.msra.mxu0 0
  %357 = vmatpush.bf16.msra.mxu0 0
  %358 = vmatpush.bf16.msra.mxu0 0
  %359 = vmatpush.bf16.msra.mxu0 0
  %360 = vmatpush.bf16.msra.mxu0 0
  %361 = vmatpush.bf16.msra.mxu0 0
  %362 = vmatpush.bf16.msra.mxu0 %v256
  %363 = vmatpush.bf16.msra.mxu0 %v255
  %364 = vmatmul.bf16.gmra.mxu0 %v261
  %v365 = vpop.f32.mrf.mxu0
  %v366 = vadd.f32 %v85, %v365
  %v367 = vpop.f32.mrf.mxu0
  %v368 = vadd.f32 %v85, %v367
  %369 = vmatmul.bf16.gmra.mxu0 %v264
  %v370 = vpop.f32.mrf.mxu0
  %v371 = vadd.f32 %v85, %v370
  %v372 = vpop.f32.mrf.mxu0
  %v373 = vadd.f32 %v85, %v372
  %374 = vmatmul.bf16.gmra.mxu0 %v267
  %v375 = vpop.f32.mrf.mxu0
  %v376 = vadd.f32 %v85, %v375
  %v377 = vpop.f32.mrf.mxu0
  %v378 = vadd.f32 %v85, %v377
  %379 = vmatmul.bf16.gmra.mxu0 %v270
  %v380 = vpop.f32.mrf.mxu0
  %v381 = vadd.f32 %v85, %v380
  %v382 = vpop.f32.mrf.mxu0
  %v383 = vadd.f32 %v85, %v382
  %384 = vmatmul.bf16.gmra.mxu0 %v273
  %v385 = vpop.f32.mrf.mxu0
  %v386 = vadd.f32 %v85, %v385
  %v387 = vpop.f32.mrf.mxu0
  %v388 = vadd.f32 %v85, %v387
  %389 = vmatmul.bf16.gmra.mxu0 %v276
  %v390 = vpop.f32.mrf.mxu0
  %v391 = vadd.f32 %v85, %v390
  %v392 = vpop.f32.mrf.mxu0
  %v393 = vadd.f32 %v85, %v392
  %394 = vmatmul.bf16.gmra.mxu0 %v279
  %v395 = vpop.f32.mrf.mxu0
  %v396 = vadd.f32 %v85, %v395
  %v397 = vpop.f32.mrf.mxu0
  %v398 = vadd.f32 %v85, %v397
  %399 = vmatmul.bf16.gmra.mxu0 %v282
  %v400 = vpop.f32.mrf.mxu0
  %v401 = vadd.f32 %v85, %v400
  %v402 = vpop.f32.mrf.mxu0
  %v403 = vadd.f32 %v85, %v402
  %404 = vmatmul.bf16.gmra.mxu0 %v285
  %v405 = vpop.f32.mrf.mxu0
  %v406 = vadd.f32 %v85, %v405
  %v407 = vpop.f32.mrf.mxu0
  %v408 = vadd.f32 %v85, %v407
  %409 = vmatmul.bf16.gmra.mxu0 %v288
  %v410 = vpop.f32.mrf.mxu0
  %v411 = vadd.f32 %v85, %v410
  %v412 = vpop.f32.mrf.mxu0
  %v413 = vadd.f32 %v85, %v412
  %414 = vmatmul.bf16.gmra.mxu0 %v291
  %v415 = vpop.f32.mrf.mxu0
  %v416 = vadd.f32 %v85, %v415
  %v417 = vpop.f32.mrf.mxu0
  %v418 = vadd.f32 %v85, %v417
  %419 = vmatmul.bf16.gmra.mxu0 %v294
  %v420 = vpop.f32.mrf.mxu0
  %v421 = vadd.f32 %v85, %v420
  %v422 = vpop.f32.mrf.mxu0
  %v423 = vadd.f32 %v85, %v422
  %424 = vmatmul.bf16.gmra.mxu0 %v297
  %v425 = vpop.f32.mrf.mxu0
  %v426 = vadd.f32 %v85, %v425
  %v427 = vpop.f32.mrf.mxu0
  %v428 = vadd.f32 %v85, %v427
  %429 = vmatmul.bf16.gmra.mxu0 %v300
  %v430 = vpop.f32.mrf.mxu0
  %v431 = vadd.f32 %v85, %v430
  %v432 = vpop.f32.mrf.mxu0
  %v433 = vadd.f32 %v85, %v432
  %434 = vmatmul.bf16.gmra.mxu0 %v303
  %v435 = vpop.f32.mrf.mxu0
  %v436 = vadd.f32 %v85, %v435
  %v437 = vpop.f32.mrf.mxu0
  %v438 = vadd.f32 %v85, %v437
  %439 = vmatmul.bf16.gmra.mxu0 %v306
  %v440 = vpop.f32.mrf.mxu0
  %v441 = vadd.f32 %v85, %v440
  %v442 = vpop.f32.mrf.mxu0
  %v443 = vadd.f32 %v85, %v442
  %444 = vmatmul.bf16.gmra.mxu0 %v309
  %v445 = vpop.f32.mrf.mxu0
  %v446 = vadd.f32 %v85, %v445
  %v447 = vpop.f32.mrf.mxu0
  %v448 = vadd.f32 %v85, %v447
  %449 = vmatmul.bf16.gmra.mxu0 %v312
  %v450 = vpop.f32.mrf.mxu0
  %v451 = vadd.f32 %v85, %v450
  %v452 = vpop.f32.mrf.mxu0
  %v453 = vadd.f32 %v85, %v452
  %454 = vmatmul.bf16.gmra.mxu0 %v315
  %v455 = vpop.f32.mrf.mxu0
  %v456 = vadd.f32 %v85, %v455
  %v457 = vpop.f32.mrf.mxu0
  %v458 = vadd.f32 %v85, %v457
  %459 = vmatmul.bf16.gmra.mxu0 %v318
  %v460 = vpop.f32.mrf.mxu0
  %v461 = vadd.f32 %v85, %v460
  %v462 = vpop.f32.mrf.mxu0
  %v463 = vadd.f32 %v85, %v462
  %464 = vmatmul.bf16.gmra.mxu0 %v321
  %v465 = vpop.f32.mrf.mxu0
  %v466 = vadd.f32 %v85, %v465
  %v467 = vpop.f32.mrf.mxu0
  %v468 = vadd.f32 %v85, %v467
  %469 = vmatmul.bf16.gmra.mxu0 %v324
  %v470 = vpop.f32.mrf.mxu0
  %v471 = vadd.f32 %v85, %v470
  %v472 = vpop.f32.mrf.mxu0
  %v473 = vadd.f32 %v85, %v472
  %474 = vmatmul.bf16.gmra.mxu0 %v327
  %v475 = vpop.f32.mrf.mxu0
  %v476 = vadd.f32 %v85, %v475
  %v477 = vpop.f32.mrf.mxu0
  %v478 = vadd.f32 %v85, %v477
  %479 = vmatmul.bf16.gmra.mxu0 %v330
  %v480 = vpop.f32.mrf.mxu0
  %v481 = vadd.f32 %v85, %v480
  %v482 = vpop.f32.mrf.mxu0
  %v483 = vadd.f32 %v85, %v482
  %484 = vmatmul.bf16.gmra.mxu0 %v333
  %v485 = vpop.f32.mrf.mxu0
  %v486 = vadd.f32 %v85, %v485
  %v487 = vpop.f32.mrf.mxu0
  %v488 = vadd.f32 %v85, %v487
  %489 = vmatmul.bf16.gmra.mxu0 %v336
  %v490 = vpop.f32.mrf.mxu0
  %v491 = vadd.f32 %v85, %v490
  %v492 = vpop.f32.mrf.mxu0
  %v493 = vadd.f32 %v85, %v492
  %494 = vmatmul.bf16.gmra.mxu0 %v339
  %v495 = vpop.f32.mrf.mxu0
  %v496 = vadd.f32 %v85, %v495
  %v497 = vpop.f32.mrf.mxu0
  %v498 = vadd.f32 %v85, %v497
  %499 = vmatmul.bf16.gmra.mxu0 %v342
  %v500 = vpop.f32.mrf.mxu0
  %v501 = vadd.f32 %v85, %v500
  %v502 = vpop.f32.mrf.mxu0
  %v503 = vadd.f32 %v85, %v502
  %504 = vmatmul.bf16.gmra.mxu0 %v345
  %v505 = vpop.f32.mrf.mxu0
  %v506 = vadd.f32 %v85, %v505
  %v507 = vpop.f32.mrf.mxu0
  %v508 = vadd.f32 %v85, %v507
  %509 = vmatmul.bf16.gmra.mxu0 %v348
  %v510 = vpop.f32.mrf.mxu0
  %v511 = vadd.f32 %v85, %v510
  %v512 = vpop.f32.mrf.mxu0
  %v513 = vadd.f32 %v85, %v512
  %514 = vmatmul.bf16.gmra.mxu0 %v351
  %v515 = vpop.f32.mrf.mxu0
  %v516 = vadd.f32 %v85, %v515
  %v517 = vpop.f32.mrf.mxu0
  %v518 = vadd.f32 %v85, %v517
  %519 = vmatmul.bf16.gmra.mxu0 %v354
  %v520 = vpop.f32.mrf.mxu0
  %v521 = vadd.f32 %v85, %v520
  %v522 = vpop.f32.mrf.mxu0
  %v523 = vadd.f32 %v85, %v522
  %524 = vdwg.mxu0
  %v525 = vmax.f32 %v366, 0.0
  %v526 = vmax.f32 %v368, 0.0
  %v527 = vmax.f32 %v371, 0.0
  %v528 = vmax.f32 %v373, 0.0
  %v529 = vmax.f32 %v376, 0.0
  %v530 = vmax.f32 %v378, 0.0
  %v531 = vmax.f32 %v381, 0.0
  %v532 = vmax.f32 %v383, 0.0
  %v533 = vmax.f32 %v386, 0.0
  %v534 = vmax.f32 %v388, 0.0
  %v535 = vmax.f32 %v391, 0.0
  %v536 = vmax.f32 %v393, 0.0
  %v537 = vmax.f32 %v396, 0.0
  %v538 = vmax.f32 %v398, 0.0
  %v539 = vmax.f32 %v401, 0.0
  %v540 = vmax.f32 %v403, 0.0
  %v541 = vmax.f32 %v406, 0.0
  %v542 = vmax.f32 %v408, 0.0
  %v543 = vmax.f32 %v411, 0.0
  %v544 = vmax.f32 %v413, 0.0
  %v545 = vmax.f32 %v416, 0.0
  %v546 = vmax.f32 %v418, 0.0
  %v547 = vmax.f32 %v421, 0.0
  %v548 = vmax.f32 %v423, 0.0
  %v549 = vmax.f32 %v426, 0.0
  %v550 = vmax.f32 %v428, 0.0
  %v551 = vmax.f32 %v431, 0.0
  %v552 = vmax.f32 %v433, 0.0
  %v553 = vmax.f32 %v436, 0.0
  %v554 = vmax.f32 %v438, 0.0
  %v555 = vmax.f32 %v441, 0.0
  %v556 = vmax.f32 %v443, 0.0
  %v557 = vmax.f32 %v446, 0.0
  %v558 = vmax.f32 %v448, 0.0
  %v559 = vmax.f32 %v451, 0.0
  %v560 = vmax.f32 %v453, 0.0
  %v561 = vmax.f32 %v456, 0.0
  %v562 = vmax.f32 %v458, 0.0
  %v563 = vmax.f32 %v461, 0.0
  %v564 = vmax.f32 %v463, 0.0
  %v565 = vmax.f32 %v466, 0.0
  %v566 = vmax.f32 %v468, 0.0
  %v567 = vmax.f32 %v471, 0.0
  %v568 = vmax.f32 %v473, 0.0
  %v569 = vmax.f32 %v476, 0.0
  %v570 = vmax.f32 %v478, 0.0
  %v571 = vmax.f32 %v481, 0.0
  %v572 = vmax.f32 %v483, 0.0
  %v573 = vmax.f32 %v486, 0.0
  %v574 = vmax.f32 %v488, 0.0
  %v575 = vmax.f32 %v491, 0.0
  %v576 = vmax.f32 %v493, 0.0
  %v577 = vmax.f32 %v496, 0.0
  %v578 = vmax.f32 %v498, 0.0
  %v579 = vmax.f32 %v501, 0.0
  %v580 = vmax.f32 %v503, 0.0
  %v581 = vmax.f32 %v506, 0.0
  %v582 = vmax.f32 %v508, 0.0
  %v583 = vmax.f32 %v511, 0.0
  %v584 = vmax.f32 %v513, 0.0
  %v585 = vmax.f32 %v516, 0.0
  %v586 = vmax.f32 %v518, 0.0
  %v587 = vmax.f32 %v521, 0.0
  %v588 = vmax.f32 %v523, 0.0
  %v589 = vmin.f32 %v525, 6.0
  %v590 = vmin.f32 %v526, 6.0
  %v591 = vmin.f32 %v527, 6.0
  %v592 = vmin.f32 %v528, 6.0
  %v593 = vmin.f32 %v529, 6.0
  %v594 = vmin.f32 %v530, 6.0
  %v595 = vmin.f32 %v531, 6.0
  %v596 = vmin.f32 %v532, 6.0
  %v597 = vmin.f32 %v533, 6.0
  %v598 = vmin.f32 %v534, 6.0
  %v599 = vmin.f32 %v535, 6.0
  %v600 = vmin.f32 %v536, 6.0
  %v601 = vmin.f32 %v537, 6.0
  %v602 = vmin.f32 %v538, 6.0
  %v603 = vmin.f32 %v539, 6.0
  %v604 = vmin.f32 %v540, 6.0
  %v605 = vmin.f32 %v541, 6.0
  %v606 = vmin.f32 %v542, 6.0
  %v607 = vmin.f32 %v543, 6.0
  %v608 = vmin.f32 %v544, 6.0
  %v609 = vmin.f32 %v545, 6.0
  %v610 = vmin.f32 %v546, 6.0
  %v611 = vmin.f32 %v547, 6.0
  %v612 = vmin.f32 %v548, 6.0
  %v613 = vmin.f32 %v549, 6.0
  %v614 = vmin.f32 %v550, 6.0
  %v615 = vmin.f32 %v551, 6.0
  %v616 = vmin.f32 %v552, 6.0
  %v617 = vmin.f32 %v553, 6.0
  %v618 = vmin.f32 %v554, 6.0
  %v619 = vmin.f32 %v555, 6.0
  %v620 = vmin.f32 %v556, 6.0
  %v621 = vmin.f32 %v557, 6.0
  %v622 = vmin.f32 %v558, 6.0
  %v623 = vmin.f32 %v559, 6.0
  %v624 = vmin.f32 %v560, 6.0
  %v625 = vmin.f32 %v561, 6.0
  %v626 = vmin.f32 %v562, 6.0
  %v627 = vmin.f32 %v563, 6.0
  %v628 = vmin.f32 %v564, 6.0
  %v629 = vmin.f32 %v565, 6.0
  %v630 = vmin.f32 %v566, 6.0
  %v631 = vmin.f32 %v567, 6.0
  %v632 = vmin.f32 %v568, 6.0
  %v633 = vmin.f32 %v569, 6.0
  %v634 = vmin.f32 %v570, 6.0
  %v635 = vmin.f32 %v571, 6.0
  %v636 = vmin.f32 %v572, 6.0
  %v637 = vmin.f32 %v573, 6.0
  %v638 = vmin.f32 %v574, 6.0
  %v639 = vmin.f32 %v575, 6.0
  %v640 = vmin.f32 %v576, 6.0
  %v641 = vmin.f32 %v577, 6.0
  %v642 = vmin.f32 %v578, 6.0
  %v643 = vmin.f32 %v579, 6.0
  %v644 = vmin.f32 %v580, 6.0
  %v645 = vmin.f32 %v581, 6.0
  %v646 = vmin.f32 %v582, 6.0
  %v647 = vmin.f32 %v583, 6.0
  %v648 = vmin.f32 %v584, 6.0
  %v649 = vmin.f32 %v585, 6.0
  %v650 = vmin.f32 %v586, 6.0
  %v651 = vmin.f32 %v587, 6.0
  %v652 = vmin.f32 %v588, 6.0
  %v653 = vpack.c.bf16 %v589, %v589
  %v654 = vpack.c.bf16 %v590, %v590
  %v655 = vpack.c.bf16 %v591, %v591
  %v656 = vpack.c.bf16 %v592, %v592
  %v657 = vpack.c.bf16 %v593, %v593
  %v658 = vpack.c.bf16 %v594, %v594
  %v659 = vpack.c.bf16 %v595, %v595
  %v660 = vpack.c.bf16 %v596, %v596
  %v661 = vpack.c.bf16 %v597, %v597
  %v662 = vpack.c.bf16 %v598, %v598
  %v663 = vpack.c.bf16 %v599, %v599
  %v664 = vpack.c.bf16 %v600, %v600
  %v665 = vpack.c.bf16 %v601, %v601
  %v666 = vpack.c.bf16 %v602, %v602
  %v667 = vpack.c.bf16 %v603, %v603
  %v668 = vpack.c.bf16 %v604, %v604
  %v669 = vpack.c.bf16 %v605, %v605
  %v670 = vpack.c.bf16 %v606, %v606
  %v671 = vpack.c.bf16 %v607, %v607
  %v672 = vpack.c.bf16 %v608, %v608
  %v673 = vpack.c.bf16 %v609, %v609
  %v674 = vpack.c.bf16 %v610, %v610
  %v675 = vpack.c.bf16 %v611, %v611
  %v676 = vpack.c.bf16 %v612, %v612
  %v677 = vpack.c.bf16 %v613, %v613
  %v678 = vpack.c.bf16 %v614, %v614
  %v679 = vpack.c.bf16 %v615, %v615
  %v680 = vpack.c.bf16 %v616, %v616
  %v681 = vpack.c.bf16 %v617, %v617
  %v682 = vpack.c.bf16 %v618, %v618
  %v683 = vpack.c.bf16 %v619, %v619
  %v684 = vpack.c.bf16 %v620, %v620
  %v685 = vpack.c.bf16 %v621, %v621
  %v686 = vpack.c.bf16 %v622, %v622
  %v687 = vpack.c.bf16 %v623, %v623
  %v688 = vpack.c.bf16 %v624, %v624
  %v689 = vpack.c.bf16 %v625, %v625
  %v690 = vpack.c.bf16 %v626, %v626
  %v691 = vpack.c.bf16 %v627, %v627
  %v692 = vpack.c.bf16 %v628, %v628
  %v693 = vpack.c.bf16 %v629, %v629
  %v694 = vpack.c.bf16 %v630, %v630
  %v695 = vpack.c.bf16 %v631, %v631
  %v696 = vpack.c.bf16 %v632, %v632
  %v697 = vpack.c.bf16 %v633, %v633
  %v698 = vpack.c.bf16 %v634, %v634
  %v699 = vpack.c.bf16 %v635, %v635
  %v700 = vpack.c.bf16 %v636, %v636
  %v701 = vpack.c.bf16 %v637, %v637
  %v702 = vpack.c.bf16 %v638, %v638
  %v703 = vpack.c.bf16 %v639, %v639
  %v704 = vpack.c.bf16 %v640, %v640
  %v705 = vpack.c.bf16 %v641, %v641
  %v706 = vpack.c.bf16 %v642, %v642
  %v707 = vpack.c.bf16 %v643, %v643
  %v708 = vpack.c.bf16 %v644, %v644
  %v709 = vpack.c.bf16 %v645, %v645
  %v710 = vpack.c.bf16 %v646, %v646
  %v711 = vpack.c.bf16 %v647, %v647
  %v712 = vpack.c.bf16 %v648, %v648
  %v713 = vpack.c.bf16 %v649, %v649
  %v714 = vpack.c.bf16 %v650, %v650
  %v715 = vpack.c.bf16 %v651, %v651
  %v716 = vpack.c.bf16 %v652, %v652
  %vm717 = vcmask 60416
  %718 = vst.msk [vmem:[%s3] sm:$0xf] %vm717, %v653
  %719 = vst.msk [vmem:[%s3 + $0x4] sm:$0xf] %vm717, %v654
  %720 = vst.msk [vmem:[%s3 + $0x8] sm:$0xf] %vm717, %v655
  %721 = vst.msk [vmem:[%s3 + $0xc] sm:$0xf] %vm717, %v656
  %722 = vst.msk [vmem:[%s3 + $0x10] sm:$0xf] %vm717, %v657
  %723 = vst.msk [vmem:[%s3 + $0x14] sm:$0xf] %vm717, %v658
  %724 = vst.msk [vmem:[%s3 + $0x18] sm:$0xf] %vm717, %v659
  %725 = vst.msk [vmem:[%s3 + $0x1c] sm:$0xf] %vm717, %v660
  %726 = vst.msk [vmem:[%s3 + $0x20] sm:$0xf] %vm717, %v661
  %727 = vst.msk [vmem:[%s3 + $0x24] sm:$0xf] %vm717, %v662
  %728 = vst.msk [vmem:[%s3 + $0x28] sm:$0xf] %vm717, %v663
  %729 = vst.msk [vmem:[%s3 + $0x2c] sm:$0xf] %vm717, %v664
  %730 = vst.msk [vmem:[%s3 + $0x30] sm:$0xf] %vm717, %v665
  %731 = vst.msk [vmem:[%s3 + $0x34] sm:$0xf] %vm717, %v666
  %732 = vst.msk [vmem:[%s3 + $0x38] sm:$0xf] %vm717, %v667
  %733 = vst.msk [vmem:[%s3 + $0x3c] sm:$0xf] %vm717, %v668
  %734 = vst.msk [vmem:[%s3 + $0x40] sm:$0xf] %vm717, %v669
  %735 = vst.msk [vmem:[%s3 + $0x44] sm:$0xf] %vm717, %v670
  %736 = vst.msk [vmem:[%s3 + $0x48] sm:$0xf] %vm717, %v671
  %737 = vst.msk [vmem:[%s3 + $0x4c] sm:$0xf] %vm717, %v672
  %738 = vst.msk [vmem:[%s3 + $0x50] sm:$0xf] %vm717, %v673
  %739 = vst.msk [vmem:[%s3 + $0x54] sm:$0xf] %vm717, %v674
  %740 = vst.msk [vmem:[%s3 + $0x58] sm:$0xf] %vm717, %v675
  %741 = vst.msk [vmem:[%s3 + $0x5c] sm:$0xf] %vm717, %v676
  %742 = vst.msk [vmem:[%s3 + $0x60] sm:$0xf] %vm717, %v677
  %743 = vst.msk [vmem:[%s3 + $0x64] sm:$0xf] %vm717, %v678
  %744 = vst.msk [vmem:[%s3 + $0x68] sm:$0xf] %vm717, %v679
  %745 = vst.msk [vmem:[%s3 + $0x6c] sm:$0xf] %vm717, %v680
  %746 = vst.msk [vmem:[%s3 + $0x70] sm:$0xf] %vm717, %v681
  %747 = vst.msk [vmem:[%s3 + $0x74] sm:$0xf] %vm717, %v682
  %748 = vst.msk [vmem:[%s3 + $0x78] sm:$0xf] %vm717, %v683
  %749 = vst.msk [vmem:[%s3 + $0x7c] sm:$0xf] %vm717, %v684
  %750 = vst.msk [vmem:[%s3 + $0x80] sm:$0xf] %vm717, %v685
  %751 = vst.msk [vmem:[%s3 + $0x84] sm:$0xf] %vm717, %v686
  %752 = vst.msk [vmem:[%s3 + $0x88] sm:$0xf] %vm717, %v687
  %753 = vst.msk [vmem:[%s3 + $0x8c] sm:$0xf] %vm717, %v688
  %754 = vst.msk [vmem:[%s3 + $0x90] sm:$0xf] %vm717, %v689
  %755 = vst.msk [vmem:[%s3 + $0x94] sm:$0xf] %vm717, %v690
  %756 = vst.msk [vmem:[%s3 + $0x98] sm:$0xf] %vm717, %v691
  %757 = vst.msk [vmem:[%s3 + $0x9c] sm:$0xf] %vm717, %v692
  %758 = vst.msk [vmem:[%s3 + $0xa0] sm:$0xf] %vm717, %v693
  %759 = vst.msk [vmem:[%s3 + $0xa4] sm:$0xf] %vm717, %v694
  %760 = vst.msk [vmem:[%s3 + $0xa8] sm:$0xf] %vm717, %v695
  %761 = vst.msk [vmem:[%s3 + $0xac] sm:$0xf] %vm717, %v696
  %762 = vst.msk [vmem:[%s3 + $0xb0] sm:$0xf] %vm717, %v697
  %763 = vst.msk [vmem:[%s3 + $0xb4] sm:$0xf] %vm717, %v698
  %764 = vst.msk [vmem:[%s3 + $0xb8] sm:$0xf] %vm717, %v699
  %765 = vst.msk [vmem:[%s3 + $0xbc] sm:$0xf] %vm717, %v700
  %766 = vst.msk [vmem:[%s3 + $0xc0] sm:$0xf] %vm717, %v701
  %767 = vst.msk [vmem:[%s3 + $0xc4] sm:$0xf] %vm717, %v702
  %768 = vst.msk [vmem:[%s3 + $0xc8] sm:$0xf] %vm717, %v703
  %769 = vst.msk [vmem:[%s3 + $0xcc] sm:$0xf] %vm717, %v704
  %770 = vst.msk [vmem:[%s3 + $0xd0] sm:$0xf] %vm717, %v705
  %771 = vst.msk [vmem:[%s3 + $0xd4] sm:$0xf] %vm717, %v706
  %772 = vst.msk [vmem:[%s3 + $0xd8] sm:$0xf] %vm717, %v707
  %773 = vst.msk [vmem:[%s3 + $0xdc] sm:$0xf] %vm717, %v708
  %774 = vst.msk [vmem:[%s3 + $0xe0] sm:$0xf] %vm717, %v709
  %775 = vst.msk [vmem:[%s3 + $0xe4] sm:$0xf] %vm717, %v710
  %776 = vst.msk [vmem:[%s3 + $0xe8] sm:$0xf] %vm717, %v711
  %777 = vst.msk [vmem:[%s3 + $0xec] sm:$0xf] %vm717, %v712
  %778 = vst.msk [vmem:[%s3 + $0xf0] sm:$0xf] %vm717, %v713
  %779 = vst.msk [vmem:[%s3 + $0xf4] sm:$0xf] %vm717, %v714
  %780 = vst.msk [vmem:[%s3 + $0xf8] sm:$0xf] %vm717, %v715
  %781 = vst.msk [vmem:[%s3 + $0xfc] sm:$0xf] %vm717, %v716
  // Predicated region
  $region14: #{forward.28} parent=0 // pred_check
    _
  $region15: #{forward.28} parent=0 // pred_check_branch
    %783 = sbr.rel (0) target = $region17
  $region16: #{forward.28} parent=0 // pred_region
    _
  $region17: #{forward.28} parent=0 // pred_fallthru
    _
  // Predicated region
  $region18: #{forward.28} parent=0 // pred_check
    _
  $region19: #{forward.28} parent=0 // pred_check_branch
    %785 = sbr.rel (0) target = $region21
  $region20: #{forward.28} parent=0 // pred_region
    _
  $region21: #{forward.28} parent=0 // pred_fallthru
    _

// kernel: forward.30
$region0: #{forward.30}
  #allocation0 [shape = 'u32[]', space=smem, size = 0x4, offset = 0x4, fixed_abs, tag = 'smem constant byte address 0x4 - core index']
  #allocation1 [shape = 'u32[72,128]{1,0:T(1,128)}', space=vmem, size = 0x9000, scoped, tag = 'internal scratch']
  %s0 = inlined_call_operand.vmem [shape: bf16[512,8], index: 0, kind: input, shape index: {}]
  %s1 = inlined_call_operand.vmem [shape: bf16[8,16], index: 1, kind: input, shape index: {}]
  %s2 = inlined_call_operand.vmem [shape: f32[1,16], index: 2, kind: input, shape index: {}]
  %s3 = inlined_call_operand.vmem [shape: bf16[512,16], index: 3, kind: output, shape index: {}]
  %s4 = sld [smem:[#allocation0]]
  $region22: #{forward.30} parent=0
    _
  %s6 = ssub.s32 1, %s4
  %s7 = scalar_select 0, %s6, %s4
  // Predicated region
  $region2: #{forward.30} parent=0 // pred_check
    _
  $region3: #{forward.30} parent=0 // pred_check_branch
    %9 = sbr.rel (0) target = $region5
  $region4: #{forward.30} parent=0 // pred_region
    _
  $region5: #{forward.30} parent=0 // pred_fallthru
    _
  // Predicated region
  $region6: #{forward.30} parent=0 // pred_check
    _
  $region7: #{forward.30} parent=0 // pred_check_branch
    %11 = sbr.rel (0) target = $region9
  $region8: #{forward.30} parent=0 // pred_region
    _
  $region9: #{forward.30} parent=0 // pred_fallthru
    _
  // Predicated region
  $region10: #{forward.30} parent=0 // pred_check
    _
  $region11: #{forward.30} parent=0 // pred_check_branch
    %13 = sbr.rel (0) target = $region13
  $region12: #{forward.30} parent=0 // pred_region
    _
  $region13: #{forward.30} parent=0 // pred_fallthru
    _
  %v15 = vld [vmem:[%s0] sm:$0xf]
  %v16 = vld [vmem:[%s0 + $0x4] sm:$0xf]
  %v17 = vld [vmem:[%s0 + $0x8] sm:$0xf]
  %v18 = vld [vmem:[%s0 + $0xc] sm:$0xf]
  %v19 = vld [vmem:[%s0 + $0x10] sm:$0xf]
  %v20 = vld [vmem:[%s0 + $0x14] sm:$0xf]
  %v21 = vld [vmem:[%s0 + $0x18] sm:$0xf]
  %v22 = vld [vmem:[%s0 + $0x1c] sm:$0xf]
  %v23 = vld [vmem:[%s0 + $0x20] sm:$0xf]
  %v24 = vld [vmem:[%s0 + $0x24] sm:$0xf]
  %v25 = vld [vmem:[%s0 + $0x28] sm:$0xf]
  %v26 = vld [vmem:[%s0 + $0x2c] sm:$0xf]
  %v27 = vld [vmem:[%s0 + $0x30] sm:$0xf]
  %v28 = vld [vmem:[%s0 + $0x34] sm:$0xf]
  %v29 = vld [vmem:[%s0 + $0x38] sm:$0xf]
  %v30 = vld [vmem:[%s0 + $0x3c] sm:$0xf]
  %v31 = vld [vmem:[%s0 + $0x40] sm:$0xf]
  %v32 = vld [vmem:[%s0 + $0x44] sm:$0xf]
  %v33 = vld [vmem:[%s0 + $0x48] sm:$0xf]
  %v34 = vld [vmem:[%s0 + $0x4c] sm:$0xf]
  %v35 = vld [vmem:[%s0 + $0x50] sm:$0xf]
  %v36 = vld [vmem:[%s0 + $0x54] sm:$0xf]
  %v37 = vld [vmem:[%s0 + $0x58] sm:$0xf]
  %v38 = vld [vmem:[%s0 + $0x5c] sm:$0xf]
  %v39 = vld [vmem:[%s0 + $0x60] sm:$0xf]
  %v40 = vld [vmem:[%s0 + $0x64] sm:$0xf]
  %v41 = vld [vmem:[%s0 + $0x68] sm:$0xf]
  %v42 = vld [vmem:[%s0 + $0x6c] sm:$0xf]
  %v43 = vld [vmem:[%s0 + $0x70] sm:$0xf]
  %v44 = vld [vmem:[%s0 + $0x74] sm:$0xf]
  %v45 = vld [vmem:[%s0 + $0x78] sm:$0xf]
  %v46 = vld [vmem:[%s0 + $0x7c] sm:$0xf]
  %v47 = vld [vmem:[%s0 + $0x80] sm:$0xf]
  %v48 = vld [vmem:[%s0 + $0x84] sm:$0xf]
  %v49 = vld [vmem:[%s0 + $0x88] sm:$0xf]
  %v50 = vld [vmem:[%s0 + $0x8c] sm:$0xf]
  %v51 = vld [vmem:[%s0 + $0x90] sm:$0xf]
  %v52 = vld [vmem:[%s0 + $0x94] sm:$0xf]
  %v53 = vld [vmem:[%s0 + $0x98] sm:$0xf]
  %v54 = vld [vmem:[%s0 + $0x9c] sm:$0xf]
  %v55 = vld [vmem:[%s0 + $0xa0] sm:$0xf]
  %v56 = vld [vmem:[%s0 + $0xa4] sm:$0xf]
  %v57 = vld [vmem:[%s0 + $0xa8] sm:$0xf]
  %v58 = vld [vmem:[%s0 + $0xac] sm:$0xf]
  %v59 = vld [vmem:[%s0 + $0xb0] sm:$0xf]
  %v60 = vld [vmem:[%s0 + $0xb4] sm:$0xf]
  %v61 = vld [vmem:[%s0 + $0xb8] sm:$0xf]
  %v62 = vld [vmem:[%s0 + $0xbc] sm:$0xf]
  %v63 = vld [vmem:[%s0 + $0xc0] sm:$0xf]
  %v64 = vld [vmem:[%s0 + $0xc4] sm:$0xf]
  %v65 = vld [vmem:[%s0 + $0xc8] sm:$0xf]
  %v66 = vld [vmem:[%s0 + $0xcc] sm:$0xf]
  %v67 = vld [vmem:[%s0 + $0xd0] sm:$0xf]
  %v68 = vld [vmem:[%s0 + $0xd4] sm:$0xf]
  %v69 = vld [vmem:[%s0 + $0xd8] sm:$0xf]
  %v70 = vld [vmem:[%s0 + $0xdc] sm:$0xf]
  %v71 = vld [vmem:[%s0 + $0xe0] sm:$0xf]
  %v72 = vld [vmem:[%s0 + $0xe4] sm:$0xf]
  %v73 = vld [vmem:[%s0 + $0xe8] sm:$0xf]
  %v74 = vld [vmem:[%s0 + $0xec] sm:$0xf]
  %v75 = vld [vmem:[%s0 + $0xf0] sm:$0xf]
  %v76 = vld [vmem:[%s0 + $0xf4] sm:$0xf]
  %v77 = vld [vmem:[%s0 + $0xf8] sm:$0xf]
  %v78 = vld [vmem:[%s0 + $0xfc] sm:$0xf]
  %v79 = vld [vmem:[%s1] sm:$0xf]
  %v80 = vld [vmem:[%s2] sm:$0x1]
  %v82 = vperm.slane %v80, 0
  %v148 = vunpack.c.l.b16 %v15
  %v149 = vunpack.c.l.b16 %v16
  %v150 = vunpack.c.l.b16 %v17
  %v151 = vunpack.c.l.b16 %v18
  %v152 = vunpack.c.l.b16 %v19
  %v153 = vunpack.c.l.b16 %v20
  %v154 = vunpack.c.l.b16 %v21
  %v155 = vunpack.c.l.b16 %v22
  %v156 = vunpack.c.l.b16 %v23
  %v157 = vunpack.c.l.b16 %v24
  %v158 = vunpack.c.l.b16 %v25
  %v159 = vunpack.c.l.b16 %v26
  %v160 = vunpack.c.l.b16 %v27
  %v161 = vunpack.c.l.b16 %v28
  %v162 = vunpack.c.l.b16 %v29
  %v163 = vunpack.c.l.b16 %v30
  %v164 = vunpack.c.l.b16 %v31
  %v165 = vunpack.c.l.b16 %v32
  %v166 = vunpack.c.l.b16 %v33
  %v167 = vunpack.c.l.b16 %v34
  %v168 = vunpack.c.l.b16 %v35
  %v169 = vunpack.c.l.b16 %v36
  %v170 = vunpack.c.l.b16 %v37
  %v171 = vunpack.c.l.b16 %v38
  %v172 = vunpack.c.l.b16 %v39
  %v173 = vunpack.c.l.b16 %v40
  %v174 = vunpack.c.l.b16 %v41
  %v175 = vunpack.c.l.b16 %v42
  %v176 = vunpack.c.l.b16 %v43
  %v177 = vunpack.c.l.b16 %v44
  %v178 = vunpack.c.l.b16 %v45
  %v179 = vunpack.c.l.b16 %v46
  %v180 = vunpack.c.l.b16 %v47
  %v181 = vunpack.c.l.b16 %v48
  %v182 = vunpack.c.l.b16 %v49
  %v183 = vunpack.c.l.b16 %v50
  %v184 = vunpack.c.l.b16 %v51
  %v185 = vunpack.c.l.b16 %v52
  %v186 = vunpack.c.l.b16 %v53
  %v187 = vunpack.c.l.b16 %v54
  %v188 = vunpack.c.l.b16 %v55
  %v189 = vunpack.c.l.b16 %v56
  %v190 = vunpack.c.l.b16 %v57
  %v191 = vunpack.c.l.b16 %v58
  %v192 = vunpack.c.l.b16 %v59
  %v193 = vunpack.c.l.b16 %v60
  %v194 = vunpack.c.l.b16 %v61
  %v195 = vunpack.c.l.b16 %v62
  %v196 = vunpack.c.l.b16 %v63
  %v197 = vunpack.c.l.b16 %v64
  %v198 = vunpack.c.l.b16 %v65
  %v199 = vunpack.c.l.b16 %v66
  %v200 = vunpack.c.l.b16 %v67
  %v201 = vunpack.c.l.b16 %v68
  %v202 = vunpack.c.l.b16 %v69
  %v203 = vunpack.c.l.b16 %v70
  %v204 = vunpack.c.l.b16 %v71
  %v205 = vunpack.c.l.b16 %v72
  %v206 = vunpack.c.l.b16 %v73
  %v207 = vunpack.c.l.b16 %v74
  %v208 = vunpack.c.l.b16 %v75
  %v209 = vunpack.c.l.b16 %v76
  %v210 = vunpack.c.l.b16 %v77
  %v211 = vunpack.c.l.b16 %v78
  %v212 = vpack.c.b16 %v149, %v148
  %v213 = vpack.c.b16 %v151, %v150
  %v214 = vpack.c.b16 %v153, %v152
  %v215 = vpack.c.b16 %v155, %v154
  %v216 = vpack.c.b16 %v157, %v156
  %v217 = vpack.c.b16 %v159, %v158
  %v218 = vpack.c.b16 %v161, %v160
  %v219 = vpack.c.b16 %v163, %v162
  %v220 = vpack.c.b16 %v165, %v164
  %v221 = vpack.c.b16 %v167, %v166
  %v222 = vpack.c.b16 %v169, %v168
  %v223 = vpack.c.b16 %v171, %v170
  %v224 = vpack.c.b16 %v173, %v172
  %v225 = vpack.c.b16 %v175, %v174
  %v226 = vpack.c.b16 %v177, %v176
  %v227 = vpack.c.b16 %v179, %v178
  %v228 = vpack.c.b16 %v181, %v180
  %v229 = vpack.c.b16 %v183, %v182
  %v230 = vpack.c.b16 %v185, %v184
  %v231 = vpack.c.b16 %v187, %v186
  %v232 = vpack.c.b16 %v189, %v188
  %v233 = vpack.c.b16 %v191, %v190
  %v234 = vpack.c.b16 %v193, %v192
  %v235 = vpack.c.b16 %v195, %v194
  %v236 = vpack.c.b16 %v197, %v196
  %v237 = vpack.c.b16 %v199, %v198
  %v238 = vpack.c.b16 %v201, %v200
  %v239 = vpack.c.b16 %v203, %v202
  %v240 = vpack.c.b16 %v205, %v204
  %v241 = vpack.c.b16 %v207, %v206
  %v242 = vpack.c.b16 %v209, %v208
  %v243 = vpack.c.b16 %v211, %v210
  %vm244 = vcmask 64512
  %v246 = vsel %vm244, %v212, 0
  %v249 = vsel %vm244, %v213, 0
  %v252 = vsel %vm244, %v214, 0
  %v255 = vsel %vm244, %v215, 0
  %v258 = vsel %vm244, %v216, 0
  %v261 = vsel %vm244, %v217, 0
  %v264 = vsel %vm244, %v218, 0
  %v267 = vsel %vm244, %v219, 0
  %v270 = vsel %vm244, %v220, 0
  %v273 = vsel %vm244, %v221, 0
  %v276 = vsel %vm244, %v222, 0
  %v279 = vsel %vm244, %v223, 0
  %v282 = vsel %vm244, %v224, 0
  %v285 = vsel %vm244, %v225, 0
  %v288 = vsel %vm244, %v226, 0
  %v291 = vsel %vm244, %v227, 0
  %v294 = vsel %vm244, %v228, 0
  %v297 = vsel %vm244, %v229, 0
  %v300 = vsel %vm244, %v230, 0
  %v303 = vsel %vm244, %v231, 0
  %v306 = vsel %vm244, %v232, 0
  %v309 = vsel %vm244, %v233, 0
  %v312 = vsel %vm244, %v234, 0
  %v315 = vsel %vm244, %v235, 0
  %v318 = vsel %vm244, %v236, 0
  %v321 = vsel %vm244, %v237, 0
  %v324 = vsel %vm244, %v238, 0
  %v327 = vsel %vm244, %v239, 0
  %v330 = vsel %vm244, %v240, 0
  %v333 = vsel %vm244, %v241, 0
  %v336 = vsel %vm244, %v242, 0
  %v339 = vsel %vm244, %v243, 0
  %vm341 = vcmask 1043456
  %v343 = vsel %vm341, %v79, 0
  %345 = vmatpush.bf16.msra.mxu0 0
  %346 = vmatpush.bf16.msra.mxu0 0
  %347 = vmatpush.bf16.msra.mxu0 0
  %348 = vmatpush.bf16.msra.mxu0 0
  %349 = vmatpush.bf16.msra.mxu0 0
  %350 = vmatpush.bf16.msra.mxu0 0
  %351 = vmatpush.bf16.msra.mxu0 0
  %352 = vmatpush.bf16.msra.mxu0 %v343
  %353 = vmatmul.bf16.gmra.mxu0 %v246
  %v354 = vpop.f32.mrf.mxu0
  %v355 = vadd.f32 %v82, %v354
  %v356 = vpop.f32.mrf.mxu0
  %v357 = vadd.f32 %v82, %v356
  %358 = vmatmul.bf16.gmra.mxu0 %v249
  %v359 = vpop.f32.mrf.mxu0
  %v360 = vadd.f32 %v82, %v359
  %v361 = vpop.f32.mrf.mxu0
  %v362 = vadd.f32 %v82, %v361
  %363 = vmatmul.bf16.gmra.mxu0 %v252
  %v364 = vpop.f32.mrf.mxu0
  %v365 = vadd.f32 %v82, %v364
  %v366 = vpop.f32.mrf.mxu0
  %v367 = vadd.f32 %v82, %v366
  %368 = vmatmul.bf16.gmra.mxu0 %v255
  %v369 = vpop.f32.mrf.mxu0
  %v370 = vadd.f32 %v82, %v369
  %v371 = vpop.f32.mrf.mxu0
  %v372 = vadd.f32 %v82, %v371
  %373 = vmatmul.bf16.gmra.mxu0 %v258
  %v374 = vpop.f32.mrf.mxu0
  %v375 = vadd.f32 %v82, %v374
  %v376 = vpop.f32.mrf.mxu0
  %v377 = vadd.f32 %v82, %v376
  %378 = vmatmul.bf16.gmra.mxu0 %v261
  %v379 = vpop.f32.mrf.mxu0
  %v380 = vadd.f32 %v82, %v379
  %v381 = vpop.f32.mrf.mxu0
  %v382 = vadd.f32 %v82, %v381
  %383 = vmatmul.bf16.gmra.mxu0 %v264
  %v384 = vpop.f32.mrf.mxu0
  %v385 = vadd.f32 %v82, %v384
  %v386 = vpop.f32.mrf.mxu0
  %v387 = vadd.f32 %v82, %v386
  %388 = vmatmul.bf16.gmra.mxu0 %v267
  %v389 = vpop.f32.mrf.mxu0
  %v390 = vadd.f32 %v82, %v389
  %v391 = vpop.f32.mrf.mxu0
  %v392 = vadd.f32 %v82, %v391
  %393 = vmatmul.bf16.gmra.mxu0 %v270
  %v394 = vpop.f32.mrf.mxu0
  %v395 = vadd.f32 %v82, %v394
  %v396 = vpop.f32.mrf.mxu0
  %v397 = vadd.f32 %v82, %v396
  %398 = vmatmul.bf16.gmra.mxu0 %v273
  %v399 = vpop.f32.mrf.mxu0
  %v400 = vadd.f32 %v82, %v399
  %v401 = vpop.f32.mrf.mxu0
  %v402 = vadd.f32 %v82, %v401
  %403 = vmatmul.bf16.gmra.mxu0 %v276
  %v404 = vpop.f32.mrf.mxu0
  %v405 = vadd.f32 %v82, %v404
  %v406 = vpop.f32.mrf.mxu0
  %v407 = vadd.f32 %v82, %v406
  %408 = vmatmul.bf16.gmra.mxu0 %v279
  %v409 = vpop.f32.mrf.mxu0
  %v410 = vadd.f32 %v82, %v409
  %v411 = vpop.f32.mrf.mxu0
  %v412 = vadd.f32 %v82, %v411
  %413 = vmatmul.bf16.gmra.mxu0 %v282
  %v414 = vpop.f32.mrf.mxu0
  %v415 = vadd.f32 %v82, %v414
  %v416 = vpop.f32.mrf.mxu0
  %v417 = vadd.f32 %v82, %v416
  %418 = vmatmul.bf16.gmra.mxu0 %v285
  %v419 = vpop.f32.mrf.mxu0
  %v420 = vadd.f32 %v82, %v419
  %v421 = vpop.f32.mrf.mxu0
  %v422 = vadd.f32 %v82, %v421
  %423 = vmatmul.bf16.gmra.mxu0 %v288
  %v424 = vpop.f32.mrf.mxu0
  %v425 = vadd.f32 %v82, %v424
  %v426 = vpop.f32.mrf.mxu0
  %v427 = vadd.f32 %v82, %v426
  %428 = vmatmul.bf16.gmra.mxu0 %v291
  %v429 = vpop.f32.mrf.mxu0
  %v430 = vadd.f32 %v82, %v429
  %v431 = vpop.f32.mrf.mxu0
  %v432 = vadd.f32 %v82, %v431
  %433 = vmatmul.bf16.gmra.mxu0 %v294
  %v434 = vpop.f32.mrf.mxu0
  %v435 = vadd.f32 %v82, %v434
  %v436 = vpop.f32.mrf.mxu0
  %v437 = vadd.f32 %v82, %v436
  %438 = vmatmul.bf16.gmra.mxu0 %v297
  %v439 = vpop.f32.mrf.mxu0
  %v440 = vadd.f32 %v82, %v439
  %v441 = vpop.f32.mrf.mxu0
  %v442 = vadd.f32 %v82, %v441
  %443 = vmatmul.bf16.gmra.mxu0 %v300
  %v444 = vpop.f32.mrf.mxu0
  %v445 = vadd.f32 %v82, %v444
  %v446 = vpop.f32.mrf.mxu0
  %v447 = vadd.f32 %v82, %v446
  %448 = vmatmul.bf16.gmra.mxu0 %v303
  %v449 = vpop.f32.mrf.mxu0
  %v450 = vadd.f32 %v82, %v449
  %v451 = vpop.f32.mrf.mxu0
  %v452 = vadd.f32 %v82, %v451
  %453 = vmatmul.bf16.gmra.mxu0 %v306
  %v454 = vpop.f32.mrf.mxu0
  %v455 = vadd.f32 %v82, %v454
  %v456 = vpop.f32.mrf.mxu0
  %v457 = vadd.f32 %v82, %v456
  %458 = vmatmul.bf16.gmra.mxu0 %v309
  %v459 = vpop.f32.mrf.mxu0
  %v460 = vadd.f32 %v82, %v459
  %v461 = vpop.f32.mrf.mxu0
  %v462 = vadd.f32 %v82, %v461
  %463 = vmatmul.bf16.gmra.mxu0 %v312
  %v464 = vpop.f32.mrf.mxu0
  %v465 = vadd.f32 %v82, %v464
  %v466 = vpop.f32.mrf.mxu0
  %v467 = vadd.f32 %v82, %v466
  %468 = vmatmul.bf16.gmra.mxu0 %v315
  %v469 = vpop.f32.mrf.mxu0
  %v470 = vadd.f32 %v82, %v469
  %v471 = vpop.f32.mrf.mxu0
  %v472 = vadd.f32 %v82, %v471
  %473 = vmatmul.bf16.gmra.mxu0 %v318
  %v474 = vpop.f32.mrf.mxu0
  %v475 = vadd.f32 %v82, %v474
  %v476 = vpop.f32.mrf.mxu0
  %v477 = vadd.f32 %v82, %v476
  %478 = vmatmul.bf16.gmra.mxu0 %v321
  %v479 = vpop.f32.mrf.mxu0
  %v480 = vadd.f32 %v82, %v479
  %v481 = vpop.f32.mrf.mxu0
  %v482 = vadd.f32 %v82, %v481
  %483 = vmatmul.bf16.gmra.mxu0 %v324
  %v484 = vpop.f32.mrf.mxu0
  %v485 = vadd.f32 %v82, %v484
  %v486 = vpop.f32.mrf.mxu0
  %v487 = vadd.f32 %v82, %v486
  %488 = vmatmul.bf16.gmra.mxu0 %v327
  %v489 = vpop.f32.mrf.mxu0
  %v490 = vadd.f32 %v82, %v489
  %v491 = vpop.f32.mrf.mxu0
  %v492 = vadd.f32 %v82, %v491
  %493 = vmatmul.bf16.gmra.mxu0 %v330
  %v494 = vpop.f32.mrf.mxu0
  %v495 = vadd.f32 %v82, %v494
  %v496 = vpop.f32.mrf.mxu0
  %v497 = vadd.f32 %v82, %v496
  %498 = vmatmul.bf16.gmra.mxu0 %v333
  %v499 = vpop.f32.mrf.mxu0
  %v500 = vadd.f32 %v82, %v499
  %v501 = vpop.f32.mrf.mxu0
  %v502 = vadd.f32 %v82, %v501
  %503 = vmatmul.bf16.gmra.mxu0 %v336
  %v504 = vpop.f32.mrf.mxu0
  %v505 = vadd.f32 %v82, %v504
  %v506 = vpop.f32.mrf.mxu0
  %v507 = vadd.f32 %v82, %v506
  %508 = vmatmul.bf16.gmra.mxu0 %v339
  %v509 = vpop.f32.mrf.mxu0
  %v510 = vadd.f32 %v82, %v509
  %v511 = vpop.f32.mrf.mxu0
  %v512 = vadd.f32 %v82, %v511
  %513 = vdwg.mxu0
  %v514 = vmax.f32 %v355, 0.0
  %v515 = vmax.f32 %v357, 0.0
  %v516 = vmax.f32 %v360, 0.0
  %v517 = vmax.f32 %v362, 0.0
  %v518 = vmax.f32 %v365, 0.0
  %v519 = vmax.f32 %v367, 0.0
  %v520 = vmax.f32 %v370, 0.0
  %v521 = vmax.f32 %v372, 0.0
  %v522 = vmax.f32 %v375, 0.0
  %v523 = vmax.f32 %v377, 0.0
  %v524 = vmax.f32 %v380, 0.0
  %v525 = vmax.f32 %v382, 0.0
  %v526 = vmax.f32 %v385, 0.0
  %v527 = vmax.f32 %v387, 0.0
  %v528 = vmax.f32 %v390, 0.0
  %v529 = vmax.f32 %v392, 0.0
  %v530 = vmax.f32 %v395, 0.0
  %v531 = vmax.f32 %v397, 0.0
  %v532 = vmax.f32 %v400, 0.0
  %v533 = vmax.f32 %v402, 0.0
  %v534 = vmax.f32 %v405, 0.0
  %v535 = vmax.f32 %v407, 0.0
  %v536 = vmax.f32 %v410, 0.0
  %v537 = vmax.f32 %v412, 0.0
  %v538 = vmax.f32 %v415, 0.0
  %v539 = vmax.f32 %v417, 0.0
  %v540 = vmax.f32 %v420, 0.0
  %v541 = vmax.f32 %v422, 0.0
  %v542 = vmax.f32 %v425, 0.0
  %v543 = vmax.f32 %v427, 0.0
  %v544 = vmax.f32 %v430, 0.0
  %v545 = vmax.f32 %v432, 0.0
  %v546 = vmax.f32 %v435, 0.0
  %v547 = vmax.f32 %v437, 0.0
  %v548 = vmax.f32 %v440, 0.0
  %v549 = vmax.f32 %v442, 0.0
  %v550 = vmax.f32 %v445, 0.0
  %v551 = vmax.f32 %v447, 0.0
  %v552 = vmax.f32 %v450, 0.0
  %v553 = vmax.f32 %v452, 0.0
  %v554 = vmax.f32 %v455, 0.0
  %v555 = vmax.f32 %v457, 0.0
  %v556 = vmax.f32 %v460, 0.0
  %v557 = vmax.f32 %v462, 0.0
  %v558 = vmax.f32 %v465, 0.0
  %v559 = vmax.f32 %v467, 0.0
  %v560 = vmax.f32 %v470, 0.0
  %v561 = vmax.f32 %v472, 0.0
  %v562 = vmax.f32 %v475, 0.0
  %v563 = vmax.f32 %v477, 0.0
  %v564 = vmax.f32 %v480, 0.0
  %v565 = vmax.f32 %v482, 0.0
  %v566 = vmax.f32 %v485, 0.0
  %v567 = vmax.f32 %v487, 0.0
  %v568 = vmax.f32 %v490, 0.0
  %v569 = vmax.f32 %v492, 0.0
  %v570 = vmax.f32 %v495, 0.0
  %v571 = vmax.f32 %v497, 0.0
  %v572 = vmax.f32 %v500, 0.0
  %v573 = vmax.f32 %v502, 0.0
  %v574 = vmax.f32 %v505, 0.0
  %v575 = vmax.f32 %v507, 0.0
  %v576 = vmax.f32 %v510, 0.0
  %v577 = vmax.f32 %v512, 0.0
  %v578 = vmin.f32 %v514, 6.0
  %v579 = vmin.f32 %v515, 6.0
  %v580 = vmin.f32 %v516, 6.0
  %v581 = vmin.f32 %v517, 6.0
  %v582 = vmin.f32 %v518, 6.0
  %v583 = vmin.f32 %v519, 6.0
  %v584 = vmin.f32 %v520, 6.0
  %v585 = vmin.f32 %v521, 6.0
  %v586 = vmin.f32 %v522, 6.0
  %v587 = vmin.f32 %v523, 6.0
  %v588 = vmin.f32 %v524, 6.0
  %v589 = vmin.f32 %v525, 6.0
  %v590 = vmin.f32 %v526, 6.0
  %v591 = vmin.f32 %v527, 6.0
  %v592 = vmin.f32 %v528, 6.0
  %v593 = vmin.f32 %v529, 6.0
  %v594 = vmin.f32 %v530, 6.0
  %v595 = vmin.f32 %v531, 6.0
  %v596 = vmin.f32 %v532, 6.0
  %v597 = vmin.f32 %v533, 6.0
  %v598 = vmin.f32 %v534, 6.0
  %v599 = vmin.f32 %v535, 6.0
  %v600 = vmin.f32 %v536, 6.0
  %v601 = vmin.f32 %v537, 6.0
  %v602 = vmin.f32 %v538, 6.0
  %v603 = vmin.f32 %v539, 6.0
  %v604 = vmin.f32 %v540, 6.0
  %v605 = vmin.f32 %v541, 6.0
  %v606 = vmin.f32 %v542, 6.0
  %v607 = vmin.f32 %v543, 6.0
  %v608 = vmin.f32 %v544, 6.0
  %v609 = vmin.f32 %v545, 6.0
  %v610 = vmin.f32 %v546, 6.0
  %v611 = vmin.f32 %v547, 6.0
  %v612 = vmin.f32 %v548, 6.0
  %v613 = vmin.f32 %v549, 6.0
  %v614 = vmin.f32 %v550, 6.0
  %v615 = vmin.f32 %v551, 6.0
  %v616 = vmin.f32 %v552, 6.0
  %v617 = vmin.f32 %v553, 6.0
  %v618 = vmin.f32 %v554, 6.0
  %v619 = vmin.f32 %v555, 6.0
  %v620 = vmin.f32 %v556, 6.0
  %v621 = vmin.f32 %v557, 6.0
  %v622 = vmin.f32 %v558, 6.0
  %v623 = vmin.f32 %v559, 6.0
  %v624 = vmin.f32 %v560, 6.0
  %v625 = vmin.f32 %v561, 6.0
  %v626 = vmin.f32 %v562, 6.0
  %v627 = vmin.f32 %v563, 6.0
  %v628 = vmin.f32 %v564, 6.0
  %v629 = vmin.f32 %v565, 6.0
  %v630 = vmin.f32 %v566, 6.0
  %v631 = vmin.f32 %v567, 6.0
  %v632 = vmin.f32 %v568, 6.0
  %v633 = vmin.f32 %v569, 6.0
  %v634 = vmin.f32 %v570, 6.0
  %v635 = vmin.f32 %v571, 6.0
  %v636 = vmin.f32 %v572, 6.0
  %v637 = vmin.f32 %v573, 6.0
  %v638 = vmin.f32 %v574, 6.0
  %v639 = vmin.f32 %v575, 6.0
  %v640 = vmin.f32 %v576, 6.0
  %v641 = vmin.f32 %v577, 6.0
  %v642 = vpack.c.bf16 %v578, %v578
  %v643 = vpack.c.bf16 %v579, %v579
  %v644 = vpack.c.bf16 %v580, %v580
  %v645 = vpack.c.bf16 %v581, %v581
  %v646 = vpack.c.bf16 %v582, %v582
  %v647 = vpack.c.bf16 %v583, %v583
  %v648 = vpack.c.bf16 %v584, %v584
  %v649 = vpack.c.bf16 %v585, %v585
  %v650 = vpack.c.bf16 %v586, %v586
  %v651 = vpack.c.bf16 %v587, %v587
  %v652 = vpack.c.bf16 %v588, %v588
  %v653 = vpack.c.bf16 %v589, %v589
  %v654 = vpack.c.bf16 %v590, %v590
  %v655 = vpack.c.bf16 %v591, %v591
  %v656 = vpack.c.bf16 %v592, %v592
  %v657 = vpack.c.bf16 %v593, %v593
  %v658 = vpack.c.bf16 %v594, %v594
  %v659 = vpack.c.bf16 %v595, %v595
  %v660 = vpack.c.bf16 %v596, %v596
  %v661 = vpack.c.bf16 %v597, %v597
  %v662 = vpack.c.bf16 %v598, %v598
  %v663 = vpack.c.bf16 %v599, %v599
  %v664 = vpack.c.bf16 %v600, %v600
  %v665 = vpack.c.bf16 %v601, %v601
  %v666 = vpack.c.bf16 %v602, %v602
  %v667 = vpack.c.bf16 %v603, %v603
  %v668 = vpack.c.bf16 %v604, %v604
  %v669 = vpack.c.bf16 %v605, %v605
  %v670 = vpack.c.bf16 %v606, %v606
  %v671 = vpack.c.bf16 %v607, %v607
  %v672 = vpack.c.bf16 %v608, %v608
  %v673 = vpack.c.bf16 %v609, %v609
  %v674 = vpack.c.bf16 %v610, %v610
  %v675 = vpack.c.bf16 %v611, %v611
  %v676 = vpack.c.bf16 %v612, %v612
  %v677 = vpack.c.bf16 %v613, %v613
  %v678 = vpack.c.bf16 %v614, %v614
  %v679 = vpack.c.bf16 %v615, %v615
  %v680 = vpack.c.bf16 %v616, %v616
  %v681 = vpack.c.bf16 %v617, %v617
  %v682 = vpack.c.bf16 %v618, %v618
  %v683 = vpack.c.bf16 %v619, %v619
  %v684 = vpack.c.bf16 %v620, %v620
  %v685 = vpack.c.bf16 %v621, %v621
  %v686 = vpack.c.bf16 %v622, %v622
  %v687 = vpack.c.bf16 %v623, %v623
  %v688 = vpack.c.bf16 %v624, %v624
  %v689 = vpack.c.bf16 %v625, %v625
  %v690 = vpack.c.bf16 %v626, %v626
  %v691 = vpack.c.bf16 %v627, %v627
  %v692 = vpack.c.bf16 %v628, %v628
  %v693 = vpack.c.bf16 %v629, %v629
  %v694 = vpack.c.bf16 %v630, %v630
  %v695 = vpack.c.bf16 %v631, %v631
  %v696 = vpack.c.bf16 %v632, %v632
  %v697 = vpack.c.bf16 %v633, %v633
  %v698 = vpack.c.bf16 %v634, %v634
  %v699 = vpack.c.bf16 %v635, %v635
  %v700 = vpack.c.bf16 %v636, %v636
  %v701 = vpack.c.bf16 %v637, %v637
  %v702 = vpack.c.bf16 %v638, %v638
  %v703 = vpack.c.bf16 %v639, %v639
  %v704 = vpack.c.bf16 %v640, %v640
  %v705 = vpack.c.bf16 %v641, %v641
  %vm706 = vcmask 125952
  %707 = vst.msk [vmem:[%s3] sm:$0xf] %vm706, %v642
  %708 = vst.msk [vmem:[%s3 + $0x4] sm:$0xf] %vm706, %v643
  %709 = vst.msk [vmem:[%s3 + $0x8] sm:$0xf] %vm706, %v644
  %710 = vst.msk [vmem:[%s3 + $0xc] sm:$0xf] %vm706, %v645
  %711 = vst.msk [vmem:[%s3 + $0x10] sm:$0xf] %vm706, %v646
  %712 = vst.msk [vmem:[%s3 + $0x14] sm:$0xf] %vm706, %v647
  %713 = vst.msk [vmem:[%s3 + $0x18] sm:$0xf] %vm706, %v648
  %714 = vst.msk [vmem:[%s3 + $0x1c] sm:$0xf] %vm706, %v649
  %715 = vst.msk [vmem:[%s3 + $0x20] sm:$0xf] %vm706, %v650
  %716 = vst.msk [vmem:[%s3 + $0x24] sm:$0xf] %vm706, %v651
  %717 = vst.msk [vmem:[%s3 + $0x28] sm:$0xf] %vm706, %v652
  %718 = vst.msk [vmem:[%s3 + $0x2c] sm:$0xf] %vm706, %v653
  %719 = vst.msk [vmem:[%s3 + $0x30] sm:$0xf] %vm706, %v654
  %720 = vst.msk [vmem:[%s3 + $0x34] sm:$0xf] %vm706, %v655
  %721 = vst.msk [vmem:[%s3 + $0x38] sm:$0xf] %vm706, %v656
  %722 = vst.msk [vmem:[%s3 + $0x3c] sm:$0xf] %vm706, %v657
  %723 = vst.msk [vmem:[%s3 + $0x40] sm:$0xf] %vm706, %v658
  %724 = vst.msk [vmem:[%s3 + $0x44] sm:$0xf] %vm706, %v659
  %725 = vst.msk [vmem:[%s3 + $0x48] sm:$0xf] %vm706, %v660
  %726 = vst.msk [vmem:[%s3 + $0x4c] sm:$0xf] %vm706, %v661
  %727 = vst.msk [vmem:[%s3 + $0x50] sm:$0xf] %vm706, %v662
  %728 = vst.msk [vmem:[%s3 + $0x54] sm:$0xf] %vm706, %v663
  %729 = vst.msk [vmem:[%s3 + $0x58] sm:$0xf] %vm706, %v664
  %730 = vst.msk [vmem:[%s3 + $0x5c] sm:$0xf] %vm706, %v665
  %731 = vst.msk [vmem:[%s3 + $0x60] sm:$0xf] %vm706, %v666
  %732 = vst.msk [vmem:[%s3 + $0x64] sm:$0xf] %vm706, %v667
  %733 = vst.msk [vmem:[%s3 + $0x68] sm:$0xf] %vm706, %v668
  %734 = vst.msk [vmem:[%s3 + $0x6c] sm:$0xf] %vm706, %v669
  %735 = vst.msk [vmem:[%s3 + $0x70] sm:$0xf] %vm706, %v670
  %736 = vst.msk [vmem:[%s3 + $0x74] sm:$0xf] %vm706, %v671
  %737 = vst.msk [vmem:[%s3 + $0x78] sm:$0xf] %vm706, %v672
  %738 = vst.msk [vmem:[%s3 + $0x7c] sm:$0xf] %vm706, %v673
  %739 = vst.msk [vmem:[%s3 + $0x80] sm:$0xf] %vm706, %v674
  %740 = vst.msk [vmem:[%s3 + $0x84] sm:$0xf] %vm706, %v675
  %741 = vst.msk [vmem:[%s3 + $0x88] sm:$0xf] %vm706, %v676
  %742 = vst.msk [vmem:[%s3 + $0x8c] sm:$0xf] %vm706, %v677
  %743 = vst.msk [vmem:[%s3 + $0x90] sm:$0xf] %vm706, %v678
  %744 = vst.msk [vmem:[%s3 + $0x94] sm:$0xf] %vm706, %v679
  %745 = vst.msk [vmem:[%s3 + $0x98] sm:$0xf] %vm706, %v680
  %746 = vst.msk [vmem:[%s3 + $0x9c] sm:$0xf] %vm706, %v681
  %747 = vst.msk [vmem:[%s3 + $0xa0] sm:$0xf] %vm706, %v682
  %748 = vst.msk [vmem:[%s3 + $0xa4] sm:$0xf] %vm706, %v683
  %749 = vst.msk [vmem:[%s3 + $0xa8] sm:$0xf] %vm706, %v684
  %750 = vst.msk [vmem:[%s3 + $0xac] sm:$0xf] %vm706, %v685
  %751 = vst.msk [vmem:[%s3 + $0xb0] sm:$0xf] %vm706, %v686
  %752 = vst.msk [vmem:[%s3 + $0xb4] sm:$0xf] %vm706, %v687
  %753 = vst.msk [vmem:[%s3 + $0xb8] sm:$0xf] %vm706, %v688
  %754 = vst.msk [vmem:[%s3 + $0xbc] sm:$0xf] %vm706, %v689
  %755 = vst.msk [vmem:[%s3 + $0xc0] sm:$0xf] %vm706, %v690
  %756 = vst.msk [vmem:[%s3 + $0xc4] sm:$0xf] %vm706, %v691
  %757 = vst.msk [vmem:[%s3 + $0xc8] sm:$0xf] %vm706, %v692
  %758 = vst.msk [vmem:[%s3 + $0xcc] sm:$0xf] %vm706, %v693
  %759 = vst.msk [vmem:[%s3 + $0xd0] sm:$0xf] %vm706, %v694
  %760 = vst.msk [vmem:[%s3 + $0xd4] sm:$0xf] %vm706, %v695
  %761 = vst.msk [vmem:[%s3 + $0xd8] sm:$0xf] %vm706, %v696
  %762 = vst.msk [vmem:[%s3 + $0xdc] sm:$0xf] %vm706, %v697
  %763 = vst.msk [vmem:[%s3 + $0xe0] sm:$0xf] %vm706, %v698
  %764 = vst.msk [vmem:[%s3 + $0xe4] sm:$0xf] %vm706, %v699
  %765 = vst.msk [vmem:[%s3 + $0xe8] sm:$0xf] %vm706, %v700
  %766 = vst.msk [vmem:[%s3 + $0xec] sm:$0xf] %vm706, %v701
  %767 = vst.msk [vmem:[%s3 + $0xf0] sm:$0xf] %vm706, %v702
  %768 = vst.msk [vmem:[%s3 + $0xf4] sm:$0xf] %vm706, %v703
  %769 = vst.msk [vmem:[%s3 + $0xf8] sm:$0xf] %vm706, %v704
  %770 = vst.msk [vmem:[%s3 + $0xfc] sm:$0xf] %vm706, %v705
  // Predicated region
  $region14: #{forward.30} parent=0 // pred_check
    _
  $region15: #{forward.30} parent=0 // pred_check_branch
    %772 = sbr.rel (0) target = $region17
  $region16: #{forward.30} parent=0 // pred_region
    _
  $region17: #{forward.30} parent=0 // pred_fallthru
    _
  // Predicated region
  $region18: #{forward.30} parent=0 // pred_check
    _
  $region19: #{forward.30} parent=0 // pred_check_branch
    %774 = sbr.rel (0) target = $region21
  $region20: #{forward.30} parent=0 // pred_region
    _
  $region21: #{forward.30} parent=0 // pred_fallthru
    _

// kernel: forward.29
$region0: #{forward.29}
  #allocation0 [shape = 'u32[]', space=smem, size = 0x4, offset = 0x4, fixed_abs, tag = 'smem constant byte address 0x4 - core index']
  #allocation1 [shape = 'u32[72,128]{1,0:T(1,128)}', space=vmem, size = 0x9000, scoped, tag = 'internal scratch']
  %s0 = inlined_call_operand.vmem [shape: bf16[2,18,18,8], index: 0, kind: input, shape index: {}]
  %s1 = inlined_call_operand.vmem [shape: f32[9,1,8], index: 1, kind: input, shape index: {}]
  %s2 = inlined_call_operand.vmem [shape: f32[1,8], index: 2, kind: input, shape index: {}]
  %s3 = inlined_call_operand.vmem [shape: bf16[2,16,16,8], index: 3, kind: output, shape index: {}]
  %s4 = sld [smem:[#allocation0]]
  $region45: #{forward.29} parent=0
    _
  %s6 = ssub.s32 1, %s4
  %s7 = scalar_select 0, %s6, %s4
  loop: start=0, step=1, limit=4
  $region2: #{forward.29} parent=0 // loop_pre_header
    _
  $region3: #{forward.29} parent=0 // loop_header
    %s9 = sphi 0, %s13
    %p10 = scmp.ge.s32.totalorder %s9, 4
    %s19 = sphi 0, %s21
    %s22 = sphi 0, %s19
    %s23 = sphi 0, %s22
    %s39 = sphi 0, %s23
    %s43 = sphi 0, %s43
    %s45 = sphi 0, %s43
    %s46 = sphi 0, %s45
    %s60 = sphi 0, %s46
    %s64 = sphi 0, %s64
    %s66 = sphi 0, %s64
    %s67 = sphi 0, %s66
    %s81 = sphi 0, %s67
    %s87 = sphi 0, %s89
    %s90 = sphi 0, %s87
    %s91 = sphi 0, %s90
    %s107 = sphi 0, %s91
  $region4: #{forward.29} parent=0 // loop_header_branch
    %12 = sbr.rel (%p10) target = $region8
  $region5: #{forward.29} parent=0 // loop_body
    %s14 = ssub.s32 %s9, 1
    %s15 = ssub.s32 %s9, 2
    %s16 = sadd.s32 %s9, 1
    %s17 = ssub.s32 %s9, %s16
    %p18 = scmp.eq.s32.totalorder %s17, 0
    %s20 = sadd.s32 %s19, 1
    %s21 = scalar_select %p18, %s19, %s20
    %p24 = pneg %p18
    %p25 = scmp.eq.s32.totalorder %s9, 1
    %p26 = por %p24, %p25
    %p27 = scmp.ne.s32.totalorder %s19, %s22
    %p28 = scmp.eq.s32.totalorder %s9, 0
    %p29 = por %p27, %p28
    %p30 = scmp.ne.s32.totalorder %s19, %s22
    %p31 = scmp.eq.s32.totalorder %s14, 1
    %p32 = por %p30, %p31
    %p33 = scmp.ne.s32.totalorder %s22, %s23
    %p34 = scmp.eq.s32.totalorder %s14, 0
    %p35 = por %p33, %p34
    %p36 = scmp.ne.s32.totalorder %s22, %s23
    %p37 = scmp.eq.s32.totalorder %s15, 1
    %p38 = por %p36, %p37
    %p40 = scmp.ne.s32.totalorder %s23, %s39
    %p41 = scmp.eq.s32.totalorder %s15, 0
    %p42 = por %p40, %p41
    %s44 = sadd.s32 %s43, 1
    %p47 = scmp.eq.s32.totalorder %s9, 1
    %p48 = scmp.ne.s32.totalorder %s43, %s45
    %p49 = scmp.eq.s32.totalorder %s9, 0
    %p50 = por %p48, %p49
    %p51 = scmp.ne.s32.totalorder %s43, %s45
    %p52 = scmp.eq.s32.totalorder %s14, 1
    %p53 = por %p51, %p52
    %p54 = scmp.ne.s32.totalorder %s45, %s46
    %p55 = scmp.eq.s32.totalorder %s14, 0
    %p56 = por %p54, %p55
    %p57 = scmp.ne.s32.totalorder %s45, %s46
    %p58 = scmp.eq.s32.totalorder %s15, 1
    %p59 = por %p57, %p58
    %p61 = scmp.ne.s32.totalorder %s46, %s60
    %p62 = scmp.eq.s32.totalorder %s15, 0
    %p63 = por %p61, %p62
    %s65 = sadd.s32 %s64, 1
    %p68 = scmp.eq.s32.totalorder %s9, 1
    %p69 = scmp.ne.s32.totalorder %s64, %s66
    %p70 = scmp.eq.s32.totalorder %s9, 0
    %p71 = por %p69, %p70
    %p72 = scmp.ne.s32.totalorder %s64, %s66
    %p73 = scmp.eq.s32.totalorder %s14, 1
    %p74 = por %p72, %p73
    %p75 = scmp.ne.s32.totalorder %s66, %s67
    %p76 = scmp.eq.s32.totalorder %s14, 0
    %p77 = por %p75, %p76
    %p78 = scmp.ne.s32.totalorder %s66, %s67
    %p79 = scmp.eq.s32.totalorder %s15, 1
    %p80 = por %p78, %p79
    %p82 = scmp.ne.s32.totalorder %s67, %s81
    %p83 = scmp.eq.s32.totalorder %s15, 0
    %p84 = por %p82, %p83
    %s85 = ssub.s32 %s9, %s16
    %p86 = scmp.eq.s32.totalorder %s85, 0
    %s88 = sadd.s32 %s87, 1
    %s89 = scalar_select %p86, %s87, %s88
    %p92 = pneg %p86
    %p93 = scmp.eq.s32.totalorder %s9, 1
    %p94 = por %p92, %p93
    %p95 = scmp.ne.s32.totalorder %s87, %s90
    %p96 = scmp.eq.s32.totalorder %s9, 0
    %p97 = por %p95, %p96
    %p98 = scmp.ne.s32.totalorder %s87, %s90
    %p99 = scmp.eq.s32.totalorder %s14, 1
    %p100 = por %p98, %p99
    %p101 = scmp.ne.s32.totalorder %s90, %s91
    %p102 = scmp.eq.s32.totalorder %s14, 0
    %p103 = por %p101, %p102
    %p104 = scmp.ne.s32.totalorder %s90, %s91
    %p105 = scmp.eq.s32.totalorder %s15, 1
    %p106 = por %p104, %p105
    %p108 = scmp.ne.s32.totalorder %s91, %s107
    %p109 = scmp.eq.s32.totalorder %s15, 0
    %p110 = por %p108, %p109
    %p111 = scmp.le.s32.totalorder 1, %s9
    %p112 = scmp.lt.s32.totalorder %s9, 3
    %p113 = pnand %p111, %p112
    %p114 = pneg %p113
    // Predicated region
    $region9: #{forward.29} parent=5 // pred_check
      _
    $region10: #{forward.29} parent=5 // pred_check_branch
      %116 = sbr.rel (%p113) target = $region12
    $region11: #{forward.29} parent=5 // pred_region
      %s117 = ssub.s32 %s9, 1
      // Predicated region
      $region13: #{forward.29} parent=11 // pred_check
        %p118 = pneg %p56
      $region14: #{forward.29} parent=11 // pred_check_branch
        %120 = sbr.rel (%p118) target = $region16
      $region15: #{forward.29} parent=11 // pred_region
        _
      $region16: #{forward.29} parent=11 // pred_fallthru
        _
      // Predicated region
      $region17: #{forward.29} parent=11 // pred_check
        %p121 = pneg %p77
      $region18: #{forward.29} parent=11 // pred_check_branch
        %123 = sbr.rel (%p121) target = $region20
      $region19: #{forward.29} parent=11 // pred_region
        _
      $region20: #{forward.29} parent=11 // pred_fallthru
        _
    $region12: #{forward.29} parent=5 // pred_fallthru
      _
    %p124 = scmp.lt.s32.totalorder %s9, 2
    // Predicated region
    $region21: #{forward.29} parent=5 // pred_check
      %p125 = pneg %p124
    $region22: #{forward.29} parent=5 // pred_check_branch
      %127 = sbr.rel (%p125) target = $region24
    $region23: #{forward.29} parent=5 // pred_region
      // Predicated region
      $region25: #{forward.29} parent=23 // pred_check
        %p128 = pneg %p29
      $region26: #{forward.29} parent=23 // pred_check_branch
        %130 = sbr.rel (%p128) target = $region28
      $region27: #{forward.29} parent=23 // pred_region
        %p131 = scmp.lt.s32.totalorder %s9, 1
        %s132 = scalar_select %p131, %s9, 1
        %s133 = smul.addr %s132, 54
        %s134 = smul.addr %s133, 4
        %s135 = scalar_lea.vmem %s0, %s134
      $region28: #{forward.29} parent=23 // pred_fallthru
        _
    $region24: #{forward.29} parent=5 // pred_fallthru
      _
    %p136 = scmp.le.s32.totalorder 1, %s9
    %p137 = scmp.lt.s32.totalorder %s9, 3
    %p138 = pnand %p136, %p137
    %p139 = pneg %p138
    // Predicated region
    $region29: #{forward.29} parent=5 // pred_check
      _
    $region30: #{forward.29} parent=5 // pred_check_branch
      %141 = sbr.rel (%p138) target = $region32
    $region31: #{forward.29} parent=5 // pred_region
      %s142 = ssub.s32 %s9, 1
      %p143 = scmp.lt.s32.totalorder %s14, 1
      %s144 = scalar_select %p143, %s14, 1
      %s145 = smul.addr %s144, 54
      %s146 = smul.addr %s145, 4
      %s147 = scalar_lea.vmem %s0, %s146
      %p148 = pneg %p35
      %p149 = pneg %p32
      %p150 = pneg %p56
      %p151 = pneg %p53
      %p152 = pneg %p77
      %p153 = pneg %p74
      %p154 = pneg %p103
      %p155 = pneg %p100
      %p156 = scmp.lt.s32.totalorder %s14, 1
      %s157 = scalar_select %p156, %s14, 1
      %s158 = smul.addr %s157, 32
      %s159 = smul.addr %s158, 4
      %s160 = scalar_lea.vmem %s3, %s159
      %p161 = scmp.lt.s32.totalorder %s14, 1
      %s162 = scalar_select %p161, %s14, 1
      %s163 = smul.addr %s162, 54
      %s164 = smul.addr %s163, 4
      %s165 = scalar_lea.vmem %s0, %s164
      %p166 = scmp.lt.s32.totalorder %s14, 1
      %s167 = scalar_select %p166, %s14, 1
      %s168 = smul.addr %s167, 32
      %s169 = smul.addr %s168, 4
      %s170 = scalar_lea.vmem %s3, %s169
      %v171 = vld [vmem:[%s165] sm:$0xf]
      %v172 = vld [vmem:[%s165 + $0x4] sm:$0xf]
      %v173 = vld [vmem:[%s165 + $0x8] sm:$0x1]
      %v174 = vld [vmem:[%s165 + $0xc] sm:$0xf]
      %v175 = vld [vmem:[%s165 + $0x10] sm:$0xf]
      %v176 = vld [vmem:[%s165 + $0x14] sm:$0x1]
      %v177 = vld [vmem:[%s165 + $0x18] sm:$0xf]
      %v178 = vld [vmem:[%s165 + $0x1c] sm:$0xf]
      %v179 = vld [vmem:[%s165 + $0x20] sm:$0x1]
      %v180 = vld [vmem:[%s165 + $0x24] sm:$0xf]
      %v181 = vld [vmem:[%s165 + $0x28] sm:$0xf]
      %v182 = vld [vmem:[%s165 + $0x2c] sm:$0x1]
      %v183 = vld [vmem:[%s165 + $0x30] sm:$0xf]
      %v184 = vld [vmem:[%s165 + $0x34] sm:$0xf]
      %v185 = vld [vmem:[%s165 + $0x38] sm:$0x1]
      %v186 = vld [vmem:[%s165 + $0x3c] sm:$0xf]
      %v187 = vld [vmem:[%s165 + $0x40] sm:$0xf]
      %v188 = vld [vmem:[%s165 + $0x44] sm:$0x1]
      %v189 = vld [vmem:[%s165 + $0x48] sm:$0xf]
      %v190 = vld [vmem:[%s165 + $0x4c] sm:$0xf]
      %v191 = vld [vmem:[%s165 + $0x50] sm:$0x1]
      %v192 = vld [vmem:[%s165 + $0x54] sm:$0xf]
      %v193 = vld [vmem:[%s165 + $0x58] sm:$0xf]
      %v194 = vld [vmem:[%s165 + $0x5c] sm:$0x1]
      %v195 = vld [vmem:[%s165 + $0x60] sm:$0xf]
      %v196 = vld [vmem:[%s165 + $0x64] sm:$0xf]
      %v197 = vld [vmem:[%s165 + $0x68] sm:$0x1]
      %v198 = vld [vmem:[%s165 + $0x6c] sm:$0xf]
      %v199 = vld [vmem:[%s165 + $0x70] sm:$0xf]
      %v200 = vld [vmem:[%s165 + $0x74] sm:$0x1]
      %v201 = vld [vmem:[%s165 + $0x78] sm:$0xf]
      %v202 = vld [vmem:[%s165 + $0x7c] sm:$0xf]
      %v203 = vld [vmem:[%s165 + $0x80] sm:$0x1]
      %v204 = vld [vmem:[%s165 + $0x84] sm:$0xf]
      %v205 = vld [vmem:[%s165 + $0x88] sm:$0xf]
      %v206 = vld [vmem:[%s165 + $0x8c] sm:$0x1]
      %v207 = vld [vmem:[%s165 + $0x90] sm:$0xf]
      %v208 = vld [vmem:[%s165 + $0x94] sm:$0xf]
      %v209 = vld [vmem:[%s165 + $0x98] sm:$0x1]
      %v210 = vld [vmem:[%s165 + $0x9c] sm:$0xf]
      %v211 = vld [vmem:[%s165 + $0xa0] sm:$0xf]
      %v212 = vld [vmem:[%s165 + $0xa4] sm:$0x1]
      %v213 = vld [vmem:[%s165 + $0xa8] sm:$0xf]
      %v214 = vld [vmem:[%s165 + $0xac] sm:$0xf]
      %v215 = vld [vmem:[%s165 + $0xb0] sm:$0x1]
      %v216 = vld [vmem:[%s165 + $0xb4] sm:$0xf]
      %v217 = vld [vmem:[%s165 + $0xb8] sm:$0xf]
      %v218 = vld [vmem:[%s165 + $0xbc] sm:$0x1]
      %v219 = vld [vmem:[%s165 + $0xc0] sm:$0xf]
      %v220 = vld [vmem:[%s165 + $0xc4] sm:$0xf]
      %v221 = vld [vmem:[%s165 + $0xc8] sm:$0x1]
      %v222 = vld [vmem:[%s165 + $0xcc] sm:$0xf]
      %v223 = vld [vmem:[%s165 + $0xd0] sm:$0xf]
      %v224 = vld [vmem:[%s165 + $0xd4] sm:$0x1]
      %v225 = vld [vmem:[%s1] sm:$0x1]
      %v226 = vunpack.c.l.bf16 %v171
      %v227 = vunpack.c.l.bf16 %v172
      %v228 = vunpack.c.l.bf16 %v174
      %v229 = vunpack.c.l.bf16 %v175
      %v230 = vunpack.c.l.bf16 %v177
      %v231 = vunpack.c.l.bf16 %v178
      %v232 = vunpack.c.l.bf16 %v180
      %v233 = vunpack.c.l.bf16 %v181
      %v234 = vunpack.c.l.bf16 %v183
      %v235 = vunpack.c.l.bf16 %v184
      %v236 = vunpack.c.l.bf16 %v186
      %v237 = vunpack.c.l.bf16 %v187
      %v238 = vunpack.c.l.bf16 %v189
      %v239 = vunpack.c.l.bf16 %v190
      %v240 = vunpack.c.l.bf16 %v192
      %v241 = vunpack.c.l.bf16 %v193
      %v242 = vunpack.c.l.bf16 %v195
      %v243 = vunpack.c.l.bf16 %v196
      %v244 = vunpack.c.l.bf16 %v198
      %v245 = vunpack.c.l.bf16 %v199
      %v246 = vunpack.c.l.bf16 %v201
      %v247 = vunpack.c.l.bf16 %v202
      %v248 = vunpack.c.l.bf16 %v204
      %v249 = vunpack.c.l.bf16 %v205
      %v250 = vunpack.c.l.bf16 %v207
      %v251 = vunpack.c.l.bf16 %v208
      %v252 = vunpack.c.l.bf16 %v210
      %v253 = vunpack.c.l.bf16 %v211
      %v254 = vunpack.c.l.bf16 %v213
      %v255 = vunpack.c.l.bf16 %v214
      %v256 = vunpack.c.l.bf16 %v216
      %v257 = vunpack.c.l.bf16 %v217
      %v259 = vperm.slane %v225, 0
      %v261 = vmul.f32 %v226, %v259
      %v262 = vmul.f32 %v227, %v259
      %v263 = vmul.f32 %v228, %v259
      %v264 = vmul.f32 %v229, %v259
      %v265 = vmul.f32 %v230, %v259
      %v266 = vmul.f32 %v231, %v259
      %v267 = vmul.f32 %v232, %v259
      %v268 = vmul.f32 %v233, %v259
      %v269 = vmul.f32 %v234, %v259
      %v270 = vmul.f32 %v235, %v259
      %v271 = vmul.f32 %v236, %v259
      %v272 = vmul.f32 %v237, %v259
      %v273 = vmul.f32 %v238, %v259
      %v274 = vmul.f32 %v239, %v259
      %v275 = vmul.f32 %v240, %v259
      %v276 = vmul.f32 %v241, %v259
      %v277 = vmul.f32 %v242, %v259
      %v278 = vmul.f32 %v243, %v259
      %v279 = vmul.f32 %v244, %v259
      %v280 = vmul.f32 %v245, %v259
      %v281 = vmul.f32 %v246, %v259
      %v282 = vmul.f32 %v247, %v259
      %v283 = vmul.f32 %v248, %v259
      %v284 = vmul.f32 %v249, %v259
      %v285 = vmul.f32 %v250, %v259
      %v286 = vmul.f32 %v251, %v259
      %v287 = vmul.f32 %v252, %v259
      %v288 = vmul.f32 %v253, %v259
      %v289 = vmul.f32 %v254, %v259
      %v290 = vmul.f32 %v255, %v259
      %v291 = vmul.f32 %v256, %v259
      %v292 = vmul.f32 %v257, %v259
      %s293 = scalar_lea.vmem %s1, 1
      %v294 = vld [vmem:[%s293] sm:$0x1]
      %v295 = vunpack.c.l.bf16 %v173
      %v296 = vunpack.c.l.bf16 %v176
      %v297 = vunpack.c.l.bf16 %v179
      %v298 = vunpack.c.l.bf16 %v182
      %v299 = vunpack.c.l.bf16 %v185
      %v300 = vunpack.c.l.bf16 %v188
      %v301 = vunpack.c.l.bf16 %v191
      %v302 = vunpack.c.l.bf16 %v194
      %v303 = vunpack.c.l.bf16 %v197
      %v304 = vunpack.c.l.bf16 %v200
      %v305 = vunpack.c.l.bf16 %v203
      %v306 = vunpack.c.l.bf16 %v206
      %v307 = vunpack.c.l.bf16 %v209
      %v308 = vunpack.c.l.bf16 %v212
      %v309 = vunpack.c.l.bf16 %v215
      %v310 = vunpack.c.l.bf16 %v218
      %v312 = vperm.slane %v294, 0
      %v314 = vmul.f32 %v226, %v312
      %v315 = vmul.f32 %v227, %v312
      %v316 = vmul.f32 %v295, %v312
      %v317 = vmul.f32 %v228, %v312
      %v318 = vmul.f32 %v229, %v312
      %v319 = vmul.f32 %v296, %v312
      %v320 = vmul.f32 %v230, %v312
      %v321 = vmul.f32 %v231, %v312
      %v322 = vmul.f32 %v297, %v312
      %v323 = vmul.f32 %v232, %v312
      %v324 = vmul.f32 %v233, %v312
      %v325 = vmul.f32 %v298, %v312
      %v326 = vmul.f32 %v234, %v312
      %v327 = vmul.f32 %v235, %v312
      %v328 = vmul.f32 %v299, %v312
      %v329 = vmul.f32 %v236, %v312
      %v330 = vmul.f32 %v237, %v312
      %v331 = vmul.f32 %v300, %v312
      %v332 = vmul.f32 %v238, %v312
      %v333 = vmul.f32 %v239, %v312
      %v334 = vmul.f32 %v301, %v312
      %v335 = vmul.f32 %v240, %v312
      %v336 = vmul.f32 %v241, %v312
      %v337 = vmul.f32 %v302, %v312
      %v338 = vmul.f32 %v242, %v312
      %v339 = vmul.f32 %v243, %v312
      %v340 = vmul.f32 %v303, %v312
      %v341 = vmul.f32 %v244, %v312
      %v342 = vmul.f32 %v245, %v312
      %v343 = vmul.f32 %v304, %v312
      %v344 = vmul.f32 %v246, %v312
      %v345 = vmul.f32 %v247, %v312
      %v346 = vmul.f32 %v305, %v312
      %v347 = vmul.f32 %v248, %v312
      %v348 = vmul.f32 %v249, %v312
      %v349 = vmul.f32 %v306, %v312
      %v350 = vmul.f32 %v250, %v312
      %v351 = vmul.f32 %v251, %v312
      %v352 = vmul.f32 %v307, %v312
      %v353 = vmul.f32 %v252, %v312
      %v354 = vmul.f32 %v253, %v312
      %v355 = vmul.f32 %v308, %v312
      %v356 = vmul.f32 %v254, %v312
      %v357 = vmul.f32 %v255, %v312
      %v358 = vmul.f32 %v309, %v312
      %v359 = vmul.f32 %v256, %v312
      %v360 = vmul.f32 %v257, %v312
      %v361 = vmul.f32 %v310, %v312
      %vm410 = vcmask 1046528
      %v411 = vrot.slane %v314, 1
      %v412 = vrot.slane %v315, 1
      %v413 = vsel %vm410, %v411, %v412
      %v414 = vrot.slane %v316, 1
      %v415 = vsel %vm410, %v412, %v414
      %v416 = vrot.slane %v317, 1
      %v417 = vrot.slane %v318, 1
      %v418 = vsel %vm410, %v416, %v417
      %v419 = vrot.slane %v319, 1
      %v420 = vsel %vm410, %v417, %v419
      %v421 = vrot.slane %v320, 1
      %v422 = vrot.slane %v321, 1
      %v423 = vsel %vm410, %v421, %v422
      %v424 = vrot.slane %v322, 1
      %v425 = vsel %vm410, %v422, %v424
      %v426 = vrot.slane %v323, 1
      %v427 = vrot.slane %v324, 1
      %v428 = vsel %vm410, %v426, %v427
      %v429 = vrot.slane %v325, 1
      %v430 = vsel %vm410, %v427, %v429
      %v431 = vrot.slane %v326, 1
      %v432 = vrot.slane %v327, 1
      %v433 = vsel %vm410, %v431, %v432
      %v434 = vrot.slane %v328, 1
      %v435 = vsel %vm410, %v432, %v434
      %v436 = vrot.slane %v329, 1
      %v437 = vrot.slane %v330, 1
      %v438 = vsel %vm410, %v436, %v437
      %v439 = vrot.slane %v331, 1
      %v440 = vsel %vm410, %v437, %v439
      %v441 = vrot.slane %v332, 1
      %v442 = vrot.slane %v333, 1
      %v443 = vsel %vm410, %v441, %v442
      %v444 = vrot.slane %v334, 1
      %v445 = vsel %vm410, %v442, %v444
      %v446 = vrot.slane %v335, 1
      %v447 = vrot.slane %v336, 1
      %v448 = vsel %vm410, %v446, %v447
      %v449 = vrot.slane %v337, 1
      %v450 = vsel %vm410, %v447, %v449
      %v451 = vrot.slane %v338, 1
      %v452 = vrot.slane %v339, 1
      %v453 = vsel %vm410, %v451, %v452
      %v454 = vrot.slane %v340, 1
      %v455 = vsel %vm410, %v452, %v454
      %v456 = vrot.slane %v341, 1
      %v457 = vrot.slane %v342, 1
      %v458 = vsel %vm410, %v456, %v457
      %v459 = vrot.slane %v343, 1
      %v460 = vsel %vm410, %v457, %v459
      %v461 = vrot.slane %v344, 1
      %v462 = vrot.slane %v345, 1
      %v463 = vsel %vm410, %v461, %v462
      %v464 = vrot.slane %v346, 1
      %v465 = vsel %vm410, %v462, %v464
      %v466 = vrot.slane %v347, 1
      %v467 = vrot.slane %v348, 1
      %v468 = vsel %vm410, %v466, %v467
      %v469 = vrot.slane %v349, 1
      %v470 = vsel %vm410, %v467, %v469
      %v471 = vrot.slane %v350, 1
      %v472 = vrot.slane %v351, 1
      %v473 = vsel %vm410, %v471, %v472
      %v474 = vrot.slane %v352, 1
      %v475 = vsel %vm410, %v472, %v474
      %v476 = vrot.slane %v353, 1
      %v477 = vrot.slane %v354, 1
      %v478 = vsel %vm410, %v476, %v477
      %v479 = vrot.slane %v355, 1
      %v480 = vsel %vm410, %v477, %v479
      %v481 = vrot.slane %v356, 1
      %v482 = vrot.slane %v357, 1
      %v483 = vsel %vm410, %v481, %v482
      %v484 = vrot.slane %v358, 1
      %v485 = vsel %vm410, %v482, %v484
      %v486 = vrot.slane %v359, 1
      %v487 = vrot.slane %v360, 1
      %v488 = vsel %vm410, %v486, %v487
      %v489 = vrot.slane %v361, 1
      %v490 = vsel %vm410, %v487, %v489
      %v523 = vadd.f32 %v261, %v413
      %v524 = vadd.f32 %v262, %v415
      %v525 = vadd.f32 %v263, %v418
      %v526 = vadd.f32 %v264, %v420
      %v527 = vadd.f32 %v265, %v423
      %v528 = vadd.f32 %v266, %v425
      %v529 = vadd.f32 %v267, %v428
      %v530 = vadd.f32 %v268, %v430
      %v531 = vadd.f32 %v269, %v433
      %v532 = vadd.f32 %v270, %v435
      %v533 = vadd.f32 %v271, %v438
      %v534 = vadd.f32 %v272, %v440
      %v535 = vadd.f32 %v273, %v443
      %v536 = vadd.f32 %v274, %v445
      %v537 = vadd.f32 %v275, %v448
      %v538 = vadd.f32 %v276, %v450
      %v539 = vadd.f32 %v277, %v453
      %v540 = vadd.f32 %v278, %v455
      %v541 = vadd.f32 %v279, %v458
      %v542 = vadd.f32 %v280, %v460
      %v543 = vadd.f32 %v281, %v463
      %v544 = vadd.f32 %v282, %v465
      %v545 = vadd.f32 %v283, %v468
      %v546 = vadd.f32 %v284, %v470
      %v547 = vadd.f32 %v285, %v473
      %v548 = vadd.f32 %v286, %v475
      %v549 = vadd.f32 %v287, %v478
      %v550 = vadd.f32 %v288, %v480
      %v551 = vadd.f32 %v289, %v483
      %v552 = vadd.f32 %v290, %v485
      %v553 = vadd.f32 %v291, %v488
      %v554 = vadd.f32 %v292, %v490
      %s555 = scalar_lea.vmem %s1, 2
      %v556 = vld [vmem:[%s555] sm:$0x1]
      %v558 = vperm.slane %v556, 0
      %v560 = vmul.f32 %v226, %v558
      %v561 = vmul.f32 %v227, %v558
      %v562 = vmul.f32 %v295, %v558
      %v563 = vmul.f32 %v228, %v558
      %v564 = vmul.f32 %v229, %v558
      %v565 = vmul.f32 %v296, %v558
      %v566 = vmul.f32 %v230, %v558
      %v567 = vmul.f32 %v231, %v558
      %v568 = vmul.f32 %v297, %v558
      %v569 = vmul.f32 %v232, %v558
      %v570 = vmul.f32 %v233, %v558
      %v571 = vmul.f32 %v298, %v558
      %v572 = vmul.f32 %v234, %v558
      %v573 = vmul.f32 %v235, %v558
      %v574 = vmul.f32 %v299, %v558
      %v575 = vmul.f32 %v236, %v558
      %v576 = vmul.f32 %v237, %v558
      %v577 = vmul.f32 %v300, %v558
      %v578 = vmul.f32 %v238, %v558
      %v579 = vmul.f32 %v239, %v558
      %v580 = vmul.f32 %v301, %v558
      %v581 = vmul.f32 %v240, %v558
      %v582 = vmul.f32 %v241, %v558
      %v583 = vmul.f32 %v302, %v558
      %v584 = vmul.f32 %v242, %v558
      %v585 = vmul.f32 %v243, %v558
      %v586 = vmul.f32 %v303, %v558
      %v587 = vmul.f32 %v244, %v558
      %v588 = vmul.f32 %v245, %v558
      %v589 = vmul.f32 %v304, %v558
      %v590 = vmul.f32 %v246, %v558
      %v591 = vmul.f32 %v247, %v558
      %v592 = vmul.f32 %v305, %v558
      %v593 = vmul.f32 %v248, %v558
      %v594 = vmul.f32 %v249, %v558
      %v595 = vmul.f32 %v306, %v558
      %v596 = vmul.f32 %v250, %v558
      %v597 = vmul.f32 %v251, %v558
      %v598 = vmul.f32 %v307, %v558
      %v599 = vmul.f32 %v252, %v558
      %v600 = vmul.f32 %v253, %v558
      %v601 = vmul.f32 %v308, %v558
      %v602 = vmul.f32 %v254, %v558
      %v603 = vmul.f32 %v255, %v558
      %v604 = vmul.f32 %v309, %v558
      %v605 = vmul.f32 %v256, %v558
      %v606 = vmul.f32 %v257, %v558
      %v607 = vmul.f32 %v310, %v558
      %vm656 = vcmask 1045504
      %v657 = vrot.slane %v560, 2
      %v658 = vrot.slane %v561, 2
      %v659 = vsel %vm656, %v657, %v658
      %v660 = vrot.slane %v562, 2
      %v661 = vsel %vm656, %v658, %v660
      %v662 = vrot.slane %v563, 2
      %v663 = vrot.slane %v564, 2
      %v664 = vsel %vm656, %v662, %v663
      %v665 = vrot.slane %v565, 2
      %v666 = vsel %vm656, %v663, %v665
      %v667 = vrot.slane %v566, 2
      %v668 = vrot.slane %v567, 2
      %v669 = vsel %vm656, %v667, %v668
      %v670 = vrot.slane %v568, 2
      %v671 = vsel %vm656, %v668, %v670
      %v672 = vrot.slane %v569, 2
      %v673 = vrot.slane %v570, 2
      %v674 = vsel %vm656, %v672, %v673
      %v675 = vrot.slane %v571, 2
      %v676 = vsel %vm656, %v673, %v675
      %v677 = vrot.slane %v572, 2
      %v678 = vrot.slane %v573, 2
      %v679 = vsel %vm656, %v677, %v678
      %v680 = vrot.slane %v574, 2
      %v681 = vsel %vm656, %v678, %v680
      %v682 = vrot.slane %v575, 2
      %v683 = vrot.slane %v576, 2
      %v684 = vsel %vm656, %v682, %v683
      %v685 = vrot.slane %v577, 2
      %v686 = vsel %vm656, %v683, %v685
      %v687 = vrot.slane %v578, 2
      %v688 = vrot.slane %v579, 2
      %v689 = vsel %vm656, %v687, %v688
      %v690 = vrot.slane %v580, 2
      %v691 = vsel %vm656, %v688, %v690
      %v692 = vrot.slane %v581, 2
      %v693 = vrot.slane %v582, 2
      %v694 = vsel %vm656, %v692, %v693
      %v695 = vrot.slane %v583, 2
      %v696 = vsel %vm656, %v693, %v695
      %v697 = vrot.slane %v584, 2
      %v698 = vrot.slane %v585, 2
      %v699 = vsel %vm656, %v697, %v698
      %v700 = vrot.slane %v586, 2
      %v701 = vsel %vm656, %v698, %v700
      %v702 = vrot.slane %v587, 2
      %v703 = vrot.slane %v588, 2
      %v704 = vsel %vm656, %v702, %v703
      %v705 = vrot.slane %v589, 2
      %v706 = vsel %vm656, %v703, %v705
      %v707 = vrot.slane %v590, 2
      %v708 = vrot.slane %v591, 2
      %v709 = vsel %vm656, %v707, %v708
      %v710 = vrot.slane %v592, 2
      %v711 = vsel %vm656, %v708, %v710
      %v712 = vrot.slane %v593, 2
      %v713 = vrot.slane %v594, 2
      %v714 = vsel %vm656, %v712, %v713
      %v715 = vrot.slane %v595, 2
      %v716 = vsel %vm656, %v713, %v715
      %v717 = vrot.slane %v596, 2
      %v718 = vrot.slane %v597, 2
      %v719 = vsel %vm656, %v717, %v718
      %v720 = vrot.slane %v598, 2
      %v721 = vsel %vm656, %v718, %v720
      %v722 = vrot.slane %v599, 2
      %v723 = vrot.slane %v600, 2
      %v724 = vsel %vm656, %v722, %v723
      %v725 = vrot.slane %v601, 2
      %v726 = vsel %vm656, %v723, %v725
      %v727 = vrot.slane %v602, 2
      %v728 = vrot.slane %v603, 2
      %v729 = vsel %vm656, %v727, %v728
      %v730 = vrot.slane %v604, 2
      %v731 = vsel %vm656, %v728, %v730
      %v732 = vrot.slane %v605, 2
      %v733 = vrot.slane %v606, 2
      %v734 = vsel %vm656, %v732, %v733
      %v735 = vrot.slane %v607, 2
      %v736 = vsel %vm656, %v733, %v735
      %v769 = vadd.f32 %v523, %v659
      %v770 = vadd.f32 %v524, %v661
      %v771 = vadd.f32 %v525, %v664
      %v772 = vadd.f32 %v526, %v666
      %v773 = vadd.f32 %v527, %v669
      %v774 = vadd.f32 %v528, %v671
      %v775 = vadd.f32 %v529, %v674
      %v776 = vadd.f32 %v530, %v676
      %v777 = vadd.f32 %v531, %v679
      %v778 = vadd.f32 %v532, %v681
      %v779 = vadd.f32 %v533, %v684
      %v780 = vadd.f32 %v534, %v686
      %v781 = vadd.f32 %v535, %v689
      %v782 = vadd.f32 %v536, %v691
      %v783 = vadd.f32 %v537, %v694
      %v784 = vadd.f32 %v538, %v696
      %v785 = vadd.f32 %v539, %v699
      %v786 = vadd.f32 %v540, %v701
      %v787 = vadd.f32 %v541, %v704
      %v788 = vadd.f32 %v542, %v706
      %v789 = vadd.f32 %v543, %v709
      %v790 = vadd.f32 %v544, %v711
      %v791 = vadd.f32 %v545, %v714
      %v792 = vadd.f32 %v546, %v716
      %v793 = vadd.f32 %v547, %v719
      %v794 = vadd.f32 %v548, %v721
      %v795 = vadd.f32 %v549, %v724
      %v796 = vadd.f32 %v550, %v726
      %v797 = vadd.f32 %v551, %v729
      %v798 = vadd.f32 %v552, %v731
      %v799 = vadd.f32 %v553, %v734
      %v800 = vadd.f32 %v554, %v736
      %s801 = scalar_lea.vmem %s1, 3
      %v802 = vld [vmem:[%s801] sm:$0x1]
      %v803 = vunpack.c.l.bf16 %v219
      %v804 = vunpack.c.l.bf16 %v220
      %v806 = vperm.slane %v802, 0
      %v808 = vmul.f32 %v228, %v806
      %v809 = vmul.f32 %v229, %v806
      %v810 = vmul.f32 %v230, %v806
      %v811 = vmul.f32 %v231, %v806
      %v812 = vmul.f32 %v232, %v806
      %v813 = vmul.f32 %v233, %v806
      %v814 = vmul.f32 %v234, %v806
      %v815 = vmul.f32 %v235, %v806
      %v816 = vmul.f32 %v236, %v806
      %v817 = vmul.f32 %v237, %v806
      %v818 = vmul.f32 %v238, %v806
      %v819 = vmul.f32 %v239, %v806
      %v820 = vmul.f32 %v240, %v806
      %v821 = vmul.f32 %v241, %v806
      %v822 = vmul.f32 %v242, %v806
      %v823 = vmul.f32 %v243, %v806
      %v824 = vmul.f32 %v244, %v806
      %v825 = vmul.f32 %v245, %v806
      %v826 = vmul.f32 %v246, %v806
      %v827 = vmul.f32 %v247, %v806
      %v828 = vmul.f32 %v248, %v806
      %v829 = vmul.f32 %v249, %v806
      %v830 = vmul.f32 %v250, %v806
      %v831 = vmul.f32 %v251, %v806
      %v832 = vmul.f32 %v252, %v806
      %v833 = vmul.f32 %v253, %v806
      %v834 = vmul.f32 %v254, %v806
      %v835 = vmul.f32 %v255, %v806
      %v836 = vmul.f32 %v256, %v806
      %v837 = vmul.f32 %v257, %v806
      %v838 = vmul.f32 %v803, %v806
      %v839 = vmul.f32 %v804, %v806
      %v840 = vadd.f32 %v769, %v808
      %v841 = vadd.f32 %v770, %v809
      %v842 = vadd.f32 %v771, %v810
      %v843 = vadd.f32 %v772, %v811
      %v844 = vadd.f32 %v773, %v812
      %v845 = vadd.f32 %v774, %v813
      %v846 = vadd.f32 %v775, %v814
      %v847 = vadd.f32 %v776, %v815
      %v848 = vadd.f32 %v777, %v816
      %v849 = vadd.f32 %v778, %v817
      %v850 = vadd.f32 %v779, %v818
      %v851 = vadd.f32 %v780, %v819
      %v852 = vadd.f32 %v781, %v820
      %v853 = vadd.f32 %v782, %v821
      %v854 = vadd.f32 %v783, %v822
      %v855 = vadd.f32 %v784, %v823
      %v856 = vadd.f32 %v785, %v824
      %v857 = vadd.f32 %v786, %v825
      %v858 = vadd.f32 %v787, %v826
      %v859 = vadd.f32 %v788, %v827
      %v860 = vadd.f32 %v789, %v828
      %v861 = vadd.f32 %v790, %v829
      %v862 = vadd.f32 %v791, %v830
      %v863 = vadd.f32 %v792, %v831
      %v864 = vadd.f32 %v793, %v832
      %v865 = vadd.f32 %v794, %v833
      %v866 = vadd.f32 %v795, %v834
      %v867 = vadd.f32 %v796, %v835
      %v868 = vadd.f32 %v797, %v836
      %v869 = vadd.f32 %v798, %v837
      %v870 = vadd.f32 %v799, %v838
      %v871 = vadd.f32 %v800, %v839
      %s872 = scalar_lea.vmem %s1, 4
      %v873 = vld [vmem:[%s872] sm:$0x1]
      %v874 = vunpack.c.l.bf16 %v221
      %v876 = vperm.slane %v873, 0
      %v878 = vmul.f32 %v228, %v876
      %v879 = vmul.f32 %v229, %v876
      %v880 = vmul.f32 %v296, %v876
      %v881 = vmul.f32 %v230, %v876
      %v882 = vmul.f32 %v231, %v876
      %v883 = vmul.f32 %v297, %v876
      %v884 = vmul.f32 %v232, %v876
      %v885 = vmul.f32 %v233, %v876
      %v886 = vmul.f32 %v298, %v876
      %v887 = vmul.f32 %v234, %v876
      %v888 = vmul.f32 %v235, %v876
      %v889 = vmul.f32 %v299, %v876
      %v890 = vmul.f32 %v236, %v876
      %v891 = vmul.f32 %v237, %v876
      %v892 = vmul.f32 %v300, %v876
      %v893 = vmul.f32 %v238, %v876
      %v894 = vmul.f32 %v239, %v876
      %v895 = vmul.f32 %v301, %v876
      %v896 = vmul.f32 %v240, %v876
      %v897 = vmul.f32 %v241, %v876
      %v898 = vmul.f32 %v302, %v876
      %v899 = vmul.f32 %v242, %v876
      %v900 = vmul.f32 %v243, %v876
      %v901 = vmul.f32 %v303, %v876
      %v902 = vmul.f32 %v244, %v876
      %v903 = vmul.f32 %v245, %v876
      %v904 = vmul.f32 %v304, %v876
      %v905 = vmul.f32 %v246, %v876
      %v906 = vmul.f32 %v247, %v876
      %v907 = vmul.f32 %v305, %v876
      %v908 = vmul.f32 %v248, %v876
      %v909 = vmul.f32 %v249, %v876
      %v910 = vmul.f32 %v306, %v876
      %v911 = vmul.f32 %v250, %v876
      %v912 = vmul.f32 %v251, %v876
      %v913 = vmul.f32 %v307, %v876
      %v914 = vmul.f32 %v252, %v876
      %v915 = vmul.f32 %v253, %v876
      %v916 = vmul.f32 %v308, %v876
      %v917 = vmul.f32 %v254, %v876
      %v918 = vmul.f32 %v255, %v876
      %v919 = vmul.f32 %v309, %v876
      %v920 = vmul.f32 %v256, %v876
      %v921 = vmul.f32 %v257, %v876
      %v922 = vmul.f32 %v310, %v876
      %v923 = vmul.f32 %v803, %v876
      %v924 = vmul.f32 %v804, %v876
      %v925 = vmul.f32 %v874, %v876
      %v974 = vrot.slane %v878, 1
      %v975 = vrot.slane %v879, 1
      %v976 = vsel %vm410, %v974, %v975
      %v977 = vrot.slane %v880, 1
      %v978 = vsel %vm410, %v975, %v977
      %v979 = vrot.slane %v881, 1
      %v980 = vrot.slane %v882, 1
      %v981 = vsel %vm410, %v979, %v980
      %v982 = vrot.slane %v883, 1
      %v983 = vsel %vm410, %v980, %v982
      %v984 = vrot.slane %v884, 1
      %v985 = vrot.slane %v885, 1
      %v986 = vsel %vm410, %v984, %v985
      %v987 = vrot.slane %v886, 1
      %v988 = vsel %vm410, %v985, %v987
      %v989 = vrot.slane %v887, 1
      %v990 = vrot.slane %v888, 1
      %v991 = vsel %vm410, %v989, %v990
      %v992 = vrot.slane %v889, 1
      %v993 = vsel %vm410, %v990, %v992
      %v994 = vrot.slane %v890, 1
      %v995 = vrot.slane %v891, 1
      %v996 = vsel %vm410, %v994, %v995
      %v997 = vrot.slane %v892, 1
      %v998 = vsel %vm410, %v995, %v997
      %v999 = vrot.slane %v893, 1
      %v1000 = vrot.slane %v894, 1
      %v1001 = vsel %vm410, %v999, %v1000
      %v1002 = vrot.slane %v895, 1
      %v1003 = vsel %vm410, %v1000, %v1002
      %v1004 = vrot.slane %v896, 1
      %v1005 = vrot.slane %v897, 1
      %v1006 = vsel %vm410, %v1004, %v1005
      %v1007 = vrot.slane %v898, 1
      %v1008 = vsel %vm410, %v1005, %v1007
      %v1009 = vrot.slane %v899, 1
      %v1010 = vrot.slane %v900, 1
      %v1011 = vsel %vm410, %v1009, %v1010
      %v1012 = vrot.slane %v901, 1
      %v1013 = vsel %vm410, %v1010, %v1012
      %v1014 = vrot.slane %v902, 1
      %v1015 = vrot.slane %v903, 1
      %v1016 = vsel %vm410, %v1014, %v1015
      %v1017 = vrot.slane %v904, 1
      %v1018 = vsel %vm410, %v1015, %v1017
      %v1019 = vrot.slane %v905, 1
      %v1020 = vrot.slane %v906, 1
      %v1021 = vsel %vm410, %v1019, %v1020
      %v1022 = vrot.slane %v907, 1
      %v1023 = vsel %vm410, %v1020, %v1022
      %v1024 = vrot.slane %v908, 1
      %v1025 = vrot.slane %v909, 1
      %v1026 = vsel %vm410, %v1024, %v1025
      %v1027 = vrot.slane %v910, 1
      %v1028 = vsel %vm410, %v1025, %v1027
      %v1029 = vrot.slane %v911, 1
      %v1030 = vrot.slane %v912, 1
      %v1031 = vsel %vm410, %v1029, %v1030
      %v1032 = vrot.slane %v913, 1
      %v1033 = vsel %vm410, %v1030, %v1032
      %v1034 = vrot.slane %v914, 1
      %v1035 = vrot.slane %v915, 1
      %v1036 = vsel %vm410, %v1034, %v1035
      %v1037 = vrot.slane %v916, 1
      %v1038 = vsel %vm410, %v1035, %v1037
      %v1039 = vrot.slane %v917, 1
      %v1040 = vrot.slane %v918, 1
      %v1041 = vsel %vm410, %v1039, %v1040
      %v1042 = vrot.slane %v919, 1
      %v1043 = vsel %vm410, %v1040, %v1042
      %v1044 = vrot.slane %v920, 1
      %v1045 = vrot.slane %v921, 1
      %v1046 = vsel %vm410, %v1044, %v1045
      %v1047 = vrot.slane %v922, 1
      %v1048 = vsel %vm410, %v1045, %v1047
      %v1049 = vrot.slane %v923, 1
      %v1050 = vrot.slane %v924, 1
      %v1051 = vsel %vm410, %v1049, %v1050
      %v1052 = vrot.slane %v925, 1
      %v1053 = vsel %vm410, %v1050, %v1052
      %v1086 = vadd.f32 %v840, %v976
      %v1087 = vadd.f32 %v841, %v978
      %v1088 = vadd.f32 %v842, %v981
      %v1089 = vadd.f32 %v843, %v983
      %v1090 = vadd.f32 %v844, %v986
      %v1091 = vadd.f32 %v845, %v988
      %v1092 = vadd.f32 %v846, %v991
      %v1093 = vadd.f32 %v847, %v993
      %v1094 = vadd.f32 %v848, %v996
      %v1095 = vadd.f32 %v849, %v998
      %v1096 = vadd.f32 %v850, %v1001
      %v1097 = vadd.f32 %v851, %v1003
      %v1098 = vadd.f32 %v852, %v1006
      %v1099 = vadd.f32 %v853, %v1008
      %v1100 = vadd.f32 %v854, %v1011
      %v1101 = vadd.f32 %v855, %v1013
      %v1102 = vadd.f32 %v856, %v1016
      %v1103 = vadd.f32 %v857, %v1018
      %v1104 = vadd.f32 %v858, %v1021
      %v1105 = vadd.f32 %v859, %v1023
      %v1106 = vadd.f32 %v860, %v1026
      %v1107 = vadd.f32 %v861, %v1028
      %v1108 = vadd.f32 %v862, %v1031
      %v1109 = vadd.f32 %v863, %v1033
      %v1110 = vadd.f32 %v864, %v1036
      %v1111 = vadd.f32 %v865, %v1038
      %v1112 = vadd.f32 %v866, %v1041
      %v1113 = vadd.f32 %v867, %v1043
      %v1114 = vadd.f32 %v868, %v1046
      %v1115 = vadd.f32 %v869, %v1048
      %v1116 = vadd.f32 %v870, %v1051
      %v1117 = vadd.f32 %v871, %v1053
      %s1118 = scalar_lea.vmem %s1, 5
      %v1119 = vld [vmem:[%s1118] sm:$0x1]
      %v1121 = vperm.slane %v1119, 0
      %v1123 = vmul.f32 %v228, %v1121
      %v1124 = vmul.f32 %v229, %v1121
      %v1125 = vmul.f32 %v296, %v1121
      %v1126 = vmul.f32 %v230, %v1121
      %v1127 = vmul.f32 %v231, %v1121
      %v1128 = vmul.f32 %v297, %v1121
      %v1129 = vmul.f32 %v232, %v1121
      %v1130 = vmul.f32 %v233, %v1121
      %v1131 = vmul.f32 %v298, %v1121
      %v1132 = vmul.f32 %v234, %v1121
      %v1133 = vmul.f32 %v235, %v1121
      %v1134 = vmul.f32 %v299, %v1121
      %v1135 = vmul.f32 %v236, %v1121
      %v1136 = vmul.f32 %v237, %v1121
      %v1137 = vmul.f32 %v300, %v1121
      %v1138 = vmul.f32 %v238, %v1121
      %v1139 = vmul.f32 %v239, %v1121
      %v1140 = vmul.f32 %v301, %v1121
      %v1141 = vmul.f32 %v240, %v1121
      %v1142 = vmul.f32 %v241, %v1121
      %v1143 = vmul.f32 %v302, %v1121
      %v1144 = vmul.f32 %v242, %v1121
      %v1145 = vmul.f32 %v243, %v1121
      %v1146 = vmul.f32 %v303, %v1121
      %v1147 = vmul.f32 %v244, %v1121
      %v1148 = vmul.f32 %v245, %v1121
      %v1149 = vmul.f32 %v304, %v1121
      %v1150 = vmul.f32 %v246, %v1121
      %v1151 = vmul.f32 %v247, %v1121
      %v1152 = vmul.f32 %v305, %v1121
      %v1153 = vmul.f32 %v248, %v1121
      %v1154 = vmul.f32 %v249, %v1121
      %v1155 = vmul.f32 %v306, %v1121
      %v1156 = vmul.f32 %v250, %v1121
      %v1157 = vmul.f32 %v251, %v1121
      %v1158 = vmul.f32 %v307, %v1121
      %v1159 = vmul.f32 %v252, %v1121
      %v1160 = vmul.f32 %v253, %v1121
      %v1161 = vmul.f32 %v308, %v1121
      %v1162 = vmul.f32 %v254, %v1121
      %v1163 = vmul.f32 %v255, %v1121
      %v1164 = vmul.f32 %v309, %v1121
      %v1165 = vmul.f32 %v256, %v1121
      %v1166 = vmul.f32 %v257, %v1121
      %v1167 = vmul.f32 %v310, %v1121
      %v1168 = vmul.f32 %v803, %v1121
      %v1169 = vmul.f32 %v804, %v1121
      %v1170 = vmul.f32 %v874, %v1121
      %v1219 = vrot.slane %v1123, 2
      %v1220 = vrot.slane %v1124, 2
      %v1221 = vsel %vm656, %v1219, %v1220
      %v1222 = vrot.slane %v1125, 2
      %v1223 = vsel %vm656, %v1220, %v1222
      %v1224 = vrot.slane %v1126, 2
      %v1225 = vrot.slane %v1127, 2
      %v1226 = vsel %vm656, %v1224, %v1225
      %v1227 = vrot.slane %v1128, 2
      %v1228 = vsel %vm656, %v1225, %v1227
      %v1229 = vrot.slane %v1129, 2
      %v1230 = vrot.slane %v1130, 2
      %v1231 = vsel %vm656, %v1229, %v1230
      %v1232 = vrot.slane %v1131, 2
      %v1233 = vsel %vm656, %v1230, %v1232
      %v1234 = vrot.slane %v1132, 2
      %v1235 = vrot.slane %v1133, 2
      %v1236 = vsel %vm656, %v1234, %v1235
      %v1237 = vrot.slane %v1134, 2
      %v1238 = vsel %vm656, %v1235, %v1237
      %v1239 = vrot.slane %v1135, 2
      %v1240 = vrot.slane %v1136, 2
      %v1241 = vsel %vm656, %v1239, %v1240
      %v1242 = vrot.slane %v1137, 2
      %v1243 = vsel %vm656, %v1240, %v1242
      %v1244 = vrot.slane %v1138, 2
      %v1245 = vrot.slane %v1139, 2
      %v1246 = vsel %vm656, %v1244, %v1245
      %v1247 = vrot.slane %v1140, 2
      %v1248 = vsel %vm656, %v1245, %v1247
      %v1249 = vrot.slane %v1141, 2
      %v1250 = vrot.slane %v1142, 2
      %v1251 = vsel %vm656, %v1249, %v1250
      %v1252 = vrot.slane %v1143, 2
      %v1253 = vsel %vm656, %v1250, %v1252
      %v1254 = vrot.slane %v1144, 2
      %v1255 = vrot.slane %v1145, 2
      %v1256 = vsel %vm656, %v1254, %v1255
      %v1257 = vrot.slane %v1146, 2
      %v1258 = vsel %vm656, %v1255, %v1257
      %v1259 = vrot.slane %v1147, 2
      %v1260 = vrot.slane %v1148, 2
      %v1261 = vsel %vm656, %v1259, %v1260
      %v1262 = vrot.slane %v1149, 2
      %v1263 = vsel %vm656, %v1260, %v1262
      %v1264 = vrot.slane %v1150, 2
      %v1265 = vrot.slane %v1151, 2
      %v1266 = vsel %vm656, %v1264, %v1265
      %v1267 = vrot.slane %v1152, 2
      %v1268 = vsel %vm656, %v1265, %v1267
      %v1269 = vrot.slane %v1153, 2
      %v1270 = vrot.slane %v1154, 2
      %v1271 = vsel %vm656, %v1269, %v1270
      %v1272 = vrot.slane %v1155, 2
      %v1273 = vsel %vm656, %v1270, %v1272
      %v1274 = vrot.slane %v1156, 2
      %v1275 = vrot.slane %v1157, 2
      %v1276 = vsel %vm656, %v1274, %v1275
      %v1277 = vrot.slane %v1158, 2
      %v1278 = vsel %vm656, %v1275, %v1277
      %v1279 = vrot.slane %v1159, 2
      %v1280 = vrot.slane %v1160, 2
      %v1281 = vsel %vm656, %v1279, %v1280
      %v1282 = vrot.slane %v1161, 2
      %v1283 = vsel %vm656, %v1280, %v1282
      %v1284 = vrot.slane %v1162, 2
      %v1285 = vrot.slane %v1163, 2
      %v1286 = vsel %vm656, %v1284, %v1285
      %v1287 = vrot.slane %v1164, 2
      %v1288 = vsel %vm656, %v1285, %v1287
      %v1289 = vrot.slane %v1165, 2
      %v1290 = vrot.slane %v1166, 2
      %v1291 = vsel %vm656, %v1289, %v1290
      %v1292 = vrot.slane %v1167, 2
      %v1293 = vsel %vm656, %v1290, %v1292
      %v1294 = vrot.slane %v1168, 2
      %v1295 = vrot.slane %v1169, 2
      %v1296 = vsel %vm656, %v1294, %v1295
      %v1297 = vrot.slane %v1170, 2
      %v1298 = vsel %vm656, %v1295, %v1297
      %v1331 = vadd.f32 %v1086, %v1221
      %v1332 = vadd.f32 %v1087, %v1223
      %v1333 = vadd.f32 %v1088, %v1226
      %v1334 = vadd.f32 %v1089, %v1228
      %v1335 = vadd.f32 %v1090, %v1231
      %v1336 = vadd.f32 %v1091, %v1233
      %v1337 = vadd.f32 %v1092, %v1236
      %v1338 = vadd.f32 %v1093, %v1238
      %v1339 = vadd.f32 %v1094, %v1241
      %v1340 = vadd.f32 %v1095, %v1243
      %v1341 = vadd.f32 %v1096, %v1246
      %v1342 = vadd.f32 %v1097, %v1248
      %v1343 = vadd.f32 %v1098, %v1251
      %v1344 = vadd.f32 %v1099, %v1253
      %v1345 = vadd.f32 %v1100, %v1256
      %v1346 = vadd.f32 %v1101, %v1258
      %v1347 = vadd.f32 %v1102, %v1261
      %v1348 = vadd.f32 %v1103, %v1263
      %v1349 = vadd.f32 %v1104, %v1266
      %v1350 = vadd.f32 %v1105, %v1268
      %v1351 = vadd.f32 %v1106, %v1271
      %v1352 = vadd.f32 %v1107, %v1273
      %v1353 = vadd.f32 %v1108, %v1276
      %v1354 = vadd.f32 %v1109, %v1278
      %v1355 = vadd.f32 %v1110, %v1281
      %v1356 = vadd.f32 %v1111, %v1283
      %v1357 = vadd.f32 %v1112, %v1286
      %v1358 = vadd.f32 %v1113, %v1288
      %v1359 = vadd.f32 %v1114, %v1291
      %v1360 = vadd.f32 %v1115, %v1293
      %v1361 = vadd.f32 %v1116, %v1296
      %v1362 = vadd.f32 %v1117, %v1298
      %s1363 = scalar_lea.vmem %s1, 6
      %v1364 = vld [vmem:[%s1363] sm:$0x1]
      %v1365 = vunpack.c.l.bf16 %v222
      %v1366 = vunpack.c.l.bf16 %v223
      %v1368 = vperm.slane %v1364, 0
      %v1370 = vmul.f32 %v230, %v1368
      %v1371 = vmul.f32 %v231, %v1368
      %v1372 = vmul.f32 %v232, %v1368
      %v1373 = vmul.f32 %v233, %v1368
      %v1374 = vmul.f32 %v234, %v1368
      %v1375 = vmul.f32 %v235, %v1368
      %v1376 = vmul.f32 %v236, %v1368
      %v1377 = vmul.f32 %v237, %v1368
      %v1378 = vmul.f32 %v238, %v1368
      %v1379 = vmul.f32 %v239, %v1368
      %v1380 = vmul.f32 %v240, %v1368
      %v1381 = vmul.f32 %v241, %v1368
      %v1382 = vmul.f32 %v242, %v1368
      %v1383 = vmul.f32 %v243, %v1368
      %v1384 = vmul.f32 %v244, %v1368
      %v1385 = vmul.f32 %v245, %v1368
      %v1386 = vmul.f32 %v246, %v1368
      %v1387 = vmul.f32 %v247, %v1368
      %v1388 = vmul.f32 %v248, %v1368
      %v1389 = vmul.f32 %v249, %v1368
      %v1390 = vmul.f32 %v250, %v1368
      %v1391 = vmul.f32 %v251, %v1368
      %v1392 = vmul.f32 %v252, %v1368
      %v1393 = vmul.f32 %v253, %v1368
      %v1394 = vmul.f32 %v254, %v1368
      %v1395 = vmul.f32 %v255, %v1368
      %v1396 = vmul.f32 %v256, %v1368
      %v1397 = vmul.f32 %v257, %v1368
      %v1398 = vmul.f32 %v803, %v1368
      %v1399 = vmul.f32 %v804, %v1368
      %v1400 = vmul.f32 %v1365, %v1368
      %v1401 = vmul.f32 %v1366, %v1368
      %v1402 = vadd.f32 %v1331, %v1370
      %v1403 = vadd.f32 %v1332, %v1371
      %v1404 = vadd.f32 %v1333, %v1372
      %v1405 = vadd.f32 %v1334, %v1373
      %v1406 = vadd.f32 %v1335, %v1374
      %v1407 = vadd.f32 %v1336, %v1375
      %v1408 = vadd.f32 %v1337, %v1376
      %v1409 = vadd.f32 %v1338, %v1377
      %v1410 = vadd.f32 %v1339, %v1378
      %v1411 = vadd.f32 %v1340, %v1379
      %v1412 = vadd.f32 %v1341, %v1380
      %v1413 = vadd.f32 %v1342, %v1381
      %v1414 = vadd.f32 %v1343, %v1382
      %v1415 = vadd.f32 %v1344, %v1383
      %v1416 = vadd.f32 %v1345, %v1384
      %v1417 = vadd.f32 %v1346, %v1385
      %v1418 = vadd.f32 %v1347, %v1386
      %v1419 = vadd.f32 %v1348, %v1387
      %v1420 = vadd.f32 %v1349, %v1388
      %v1421 = vadd.f32 %v1350, %v1389
      %v1422 = vadd.f32 %v1351, %v1390
      %v1423 = vadd.f32 %v1352, %v1391
      %v1424 = vadd.f32 %v1353, %v1392
      %v1425 = vadd.f32 %v1354, %v1393
      %v1426 = vadd.f32 %v1355, %v1394
      %v1427 = vadd.f32 %v1356, %v1395
      %v1428 = vadd.f32 %v1357, %v1396
      %v1429 = vadd.f32 %v1358, %v1397
      %v1430 = vadd.f32 %v1359, %v1398
      %v1431 = vadd.f32 %v1360, %v1399
      %v1432 = vadd.f32 %v1361, %v1400
      %v1433 = vadd.f32 %v1362, %v1401
      %s1434 = scalar_lea.vmem %s1, 7
      %v1435 = vld [vmem:[%s1434] sm:$0x1]
      %v1436 = vunpack.c.l.bf16 %v224
      %v1438 = vperm.slane %v1435, 0
      %v1440 = vmul.f32 %v230, %v1438
      %v1441 = vmul.f32 %v231, %v1438
      %v1442 = vmul.f32 %v297, %v1438
      %v1443 = vmul.f32 %v232, %v1438
      %v1444 = vmul.f32 %v233, %v1438
      %v1445 = vmul.f32 %v298, %v1438
      %v1446 = vmul.f32 %v234, %v1438
      %v1447 = vmul.f32 %v235, %v1438
      %v1448 = vmul.f32 %v299, %v1438
      %v1449 = vmul.f32 %v236, %v1438
      %v1450 = vmul.f32 %v237, %v1438
      %v1451 = vmul.f32 %v300, %v1438
      %v1452 = vmul.f32 %v238, %v1438
      %v1453 = vmul.f32 %v239, %v1438
      %v1454 = vmul.f32 %v301, %v1438
      %v1455 = vmul.f32 %v240, %v1438
      %v1456 = vmul.f32 %v241, %v1438
      %v1457 = vmul.f32 %v302, %v1438
      %v1458 = vmul.f32 %v242, %v1438
      %v1459 = vmul.f32 %v243, %v1438
      %v1460 = vmul.f32 %v303, %v1438
      %v1461 = vmul.f32 %v244, %v1438
      %v1462 = vmul.f32 %v245, %v1438
      %v1463 = vmul.f32 %v304, %v1438
      %v1464 = vmul.f32 %v246, %v1438
      %v1465 = vmul.f32 %v247, %v1438
      %v1466 = vmul.f32 %v305, %v1438
      %v1467 = vmul.f32 %v248, %v1438
      %v1468 = vmul.f32 %v249, %v1438
      %v1469 = vmul.f32 %v306, %v1438
      %v1470 = vmul.f32 %v250, %v1438
      %v1471 = vmul.f32 %v251, %v1438
      %v1472 = vmul.f32 %v307, %v1438
      %v1473 = vmul.f32 %v252, %v1438
      %v1474 = vmul.f32 %v253, %v1438
      %v1475 = vmul.f32 %v308, %v1438
      %v1476 = vmul.f32 %v254, %v1438
      %v1477 = vmul.f32 %v255, %v1438
      %v1478 = vmul.f32 %v309, %v1438
      %v1479 = vmul.f32 %v256, %v1438
      %v1480 = vmul.f32 %v257, %v1438
      %v1481 = vmul.f32 %v310, %v1438
      %v1482 = vmul.f32 %v803, %v1438
      %v1483 = vmul.f32 %v804, %v1438
      %v1484 = vmul.f32 %v874, %v1438
      %v1485 = vmul.f32 %v1365, %v1438
      %v1486 = vmul.f32 %v1366, %v1438
      %v1487 = vmul.f32 %v1436, %v1438
      %v1536 = vrot.slane %v1440, 1
      %v1537 = vrot.slane %v1441, 1
      %v1538 = vsel %vm410, %v1536, %v1537
      %v1539 = vrot.slane %v1442, 1
      %v1540 = vsel %vm410, %v1537, %v1539
      %v1541 = vrot.slane %v1443, 1
      %v1542 = vrot.slane %v1444, 1
      %v1543 = vsel %vm410, %v1541, %v1542
      %v1544 = vrot.slane %v1445, 1
      %v1545 = vsel %vm410, %v1542, %v1544
      %v1546 = vrot.slane %v1446, 1
      %v1547 = vrot.slane %v1447, 1
      %v1548 = vsel %vm410, %v1546, %v1547
      %v1549 = vrot.slane %v1448, 1
      %v1550 = vsel %vm410, %v1547, %v1549
      %v1551 = vrot.slane %v1449, 1
      %v1552 = vrot.slane %v1450, 1
      %v1553 = vsel %vm410, %v1551, %v1552
      %v1554 = vrot.slane %v1451, 1
      %v1555 = vsel %vm410, %v1552, %v1554
      %v1556 = vrot.slane %v1452, 1
      %v1557 = vrot.slane %v1453, 1
      %v1558 = vsel %vm410, %v1556, %v1557
      %v1559 = vrot.slane %v1454, 1
      %v1560 = vsel %vm410, %v1557, %v1559
      %v1561 = vrot.slane %v1455, 1
      %v1562 = vrot.slane %v1456, 1
      %v1563 = vsel %vm410, %v1561, %v1562
      %v1564 = vrot.slane %v1457, 1
      %v1565 = vsel %vm410, %v1562, %v1564
      %v1566 = vrot.slane %v1458, 1
      %v1567 = vrot.slane %v1459, 1
      %v1568 = vsel %vm410, %v1566, %v1567
      %v1569 = vrot.slane %v1460, 1
      %v1570 = vsel %vm410, %v1567, %v1569
      %v1571 = vrot.slane %v1461, 1
      %v1572 = vrot.slane %v1462, 1
      %v1573 = vsel %vm410, %v1571, %v1572
      %v1574 = vrot.slane %v1463, 1
      %v1575 = vsel %vm410, %v1572, %v1574
      %v1576 = vrot.slane %v1464, 1
      %v1577 = vrot.slane %v1465, 1
      %v1578 = vsel %vm410, %v1576, %v1577
      %v1579 = vrot.slane %v1466, 1
      %v1580 = vsel %vm410, %v1577, %v1579
      %v1581 = vrot.slane %v1467, 1
      %v1582 = vrot.slane %v1468, 1
      %v1583 = vsel %vm410, %v1581, %v1582
      %v1584 = vrot.slane %v1469, 1
      %v1585 = vsel %vm410, %v1582, %v1584
      %v1586 = vrot.slane %v1470, 1
      %v1587 = vrot.slane %v1471, 1
      %v1588 = vsel %vm410, %v1586, %v1587
      %v1589 = vrot.slane %v1472, 1
      %v1590 = vsel %vm410, %v1587, %v1589
      %v1591 = vrot.slane %v1473, 1
      %v1592 = vrot.slane %v1474, 1
      %v1593 = vsel %vm410, %v1591, %v1592
      %v1594 = vrot.slane %v1475, 1
      %v1595 = vsel %vm410, %v1592, %v1594
      %v1596 = vrot.slane %v1476, 1
      %v1597 = vrot.slane %v1477, 1
      %v1598 = vsel %vm410, %v1596, %v1597
      %v1599 = vrot.slane %v1478, 1
      %v1600 = vsel %vm410, %v1597, %v1599
      %v1601 = vrot.slane %v1479, 1
      %v1602 = vrot.slane %v1480, 1
      %v1603 = vsel %vm410, %v1601, %v1602
      %v1604 = vrot.slane %v1481, 1
      %v1605 = vsel %vm410, %v1602, %v1604
      %v1606 = vrot.slane %v1482, 1
      %v1607 = vrot.slane %v1483, 1
      %v1608 = vsel %vm410, %v1606, %v1607
      %v1609 = vrot.slane %v1484, 1
      %v1610 = vsel %vm410, %v1607, %v1609
      %v1611 = vrot.slane %v1485, 1
      %v1612 = vrot.slane %v1486, 1
      %v1613 = vsel %vm410, %v1611, %v1612
      %v1614 = vrot.slane %v1487, 1
      %v1615 = vsel %vm410, %v1612, %v1614
      %v1648 = vadd.f32 %v1402, %v1538
      %v1649 = vadd.f32 %v1403, %v1540
      %v1650 = vadd.f32 %v1404, %v1543
      %v1651 = vadd.f32 %v1405, %v1545
      %v1652 = vadd.f32 %v1406, %v1548
      %v1653 = vadd.f32 %v1407, %v1550
      %v1654 = vadd.f32 %v1408, %v1553
      %v1655 = vadd.f32 %v1409, %v1555
      %v1656 = vadd.f32 %v1410, %v1558
      %v1657 = vadd.f32 %v1411, %v1560
      %v1658 = vadd.f32 %v1412, %v1563
      %v1659 = vadd.f32 %v1413, %v1565
      %v1660 = vadd.f32 %v1414, %v1568
      %v1661 = vadd.f32 %v1415, %v1570
      %v1662 = vadd.f32 %v1416, %v1573
      %v1663 = vadd.f32 %v1417, %v1575
      %v1664 = vadd.f32 %v1418, %v1578
      %v1665 = vadd.f32 %v1419, %v1580
      %v1666 = vadd.f32 %v1420, %v1583
      %v1667 = vadd.f32 %v1421, %v1585
      %v1668 = vadd.f32 %v1422, %v1588
      %v1669 = vadd.f32 %v1423, %v1590
      %v1670 = vadd.f32 %v1424, %v1593
      %v1671 = vadd.f32 %v1425, %v1595
      %v1672 = vadd.f32 %v1426, %v1598
      %v1673 = vadd.f32 %v1427, %v1600
      %v1674 = vadd.f32 %v1428, %v1603
      %v1675 = vadd.f32 %v1429, %v1605
      %v1676 = vadd.f32 %v1430, %v1608
      %v1677 = vadd.f32 %v1431, %v1610
      %v1678 = vadd.f32 %v1432, %v1613
      %v1679 = vadd.f32 %v1433, %v1615
      %s1680 = scalar_lea.vmem %s1, 8
      %v1681 = vld [vmem:[%s1680] sm:$0x1]
      %v1683 = vperm.slane %v1681, 0
      %v1685 = vmul.f32 %v230, %v1683
      %v1686 = vmul.f32 %v231, %v1683
      %v1687 = vmul.f32 %v297, %v1683
      %v1688 = vmul.f32 %v232, %v1683
      %v1689 = vmul.f32 %v233, %v1683
      %v1690 = vmul.f32 %v298, %v1683
      %v1691 = vmul.f32 %v234, %v1683
      %v1692 = vmul.f32 %v235, %v1683
      %v1693 = vmul.f32 %v299, %v1683
      %v1694 = vmul.f32 %v236, %v1683
      %v1695 = vmul.f32 %v237, %v1683
      %v1696 = vmul.f32 %v300, %v1683
      %v1697 = vmul.f32 %v238, %v1683
      %v1698 = vmul.f32 %v239, %v1683
      %v1699 = vmul.f32 %v301, %v1683
      %v1700 = vmul.f32 %v240, %v1683
      %v1701 = vmul.f32 %v241, %v1683
      %v1702 = vmul.f32 %v302, %v1683
      %v1703 = vmul.f32 %v242, %v1683
      %v1704 = vmul.f32 %v243, %v1683
      %v1705 = vmul.f32 %v303, %v1683
      %v1706 = vmul.f32 %v244, %v1683
      %v1707 = vmul.f32 %v245, %v1683
      %v1708 = vmul.f32 %v304, %v1683
      %v1709 = vmul.f32 %v246, %v1683
      %v1710 = vmul.f32 %v247, %v1683
      %v1711 = vmul.f32 %v305, %v1683
      %v1712 = vmul.f32 %v248, %v1683
      %v1713 = vmul.f32 %v249, %v1683
      %v1714 = vmul.f32 %v306, %v1683
      %v1715 = vmul.f32 %v250, %v1683
      %v1716 = vmul.f32 %v251, %v1683
      %v1717 = vmul.f32 %v307, %v1683
      %v1718 = vmul.f32 %v252, %v1683
      %v1719 = vmul.f32 %v253, %v1683
      %v1720 = vmul.f32 %v308, %v1683
      %v1721 = vmul.f32 %v254, %v1683
      %v1722 = vmul.f32 %v255, %v1683
      %v1723 = vmul.f32 %v309, %v1683
      %v1724 = vmul.f32 %v256, %v1683
      %v1725 = vmul.f32 %v257, %v1683
      %v1726 = vmul.f32 %v310, %v1683
      %v1727 = vmul.f32 %v803, %v1683
      %v1728 = vmul.f32 %v804, %v1683
      %v1729 = vmul.f32 %v874, %v1683
      %v1730 = vmul.f32 %v1365, %v1683
      %v1731 = vmul.f32 %v1366, %v1683
      %v1732 = vmul.f32 %v1436, %v1683
      %v1781 = vrot.slane %v1685, 2
      %v1782 = vrot.slane %v1686, 2
      %v1783 = vsel %vm656, %v1781, %v1782
      %v1784 = vrot.slane %v1687, 2
      %v1785 = vsel %vm656, %v1782, %v1784
      %v1786 = vrot.slane %v1688, 2
      %v1787 = vrot.slane %v1689, 2
      %v1788 = vsel %vm656, %v1786, %v1787
      %v1789 = vrot.slane %v1690, 2
      %v1790 = vsel %vm656, %v1787, %v1789
      %v1791 = vrot.slane %v1691, 2
      %v1792 = vrot.slane %v1692, 2
      %v1793 = vsel %vm656, %v1791, %v1792
      %v1794 = vrot.slane %v1693, 2
      %v1795 = vsel %vm656, %v1792, %v1794
      %v1796 = vrot.slane %v1694, 2
      %v1797 = vrot.slane %v1695, 2
      %v1798 = vsel %vm656, %v1796, %v1797
      %v1799 = vrot.slane %v1696, 2
      %v1800 = vsel %vm656, %v1797, %v1799
      %v1801 = vrot.slane %v1697, 2
      %v1802 = vrot.slane %v1698, 2
      %v1803 = vsel %vm656, %v1801, %v1802
      %v1804 = vrot.slane %v1699, 2
      %v1805 = vsel %vm656, %v1802, %v1804
      %v1806 = vrot.slane %v1700, 2
      %v1807 = vrot.slane %v1701, 2
      %v1808 = vsel %vm656, %v1806, %v1807
      %v1809 = vrot.slane %v1702, 2
      %v1810 = vsel %vm656, %v1807, %v1809
      %v1811 = vrot.slane %v1703, 2
      %v1812 = vrot.slane %v1704, 2
      %v1813 = vsel %vm656, %v1811, %v1812
      %v1814 = vrot.slane %v1705, 2
      %v1815 = vsel %vm656, %v1812, %v1814
      %v1816 = vrot.slane %v1706, 2
      %v1817 = vrot.slane %v1707, 2
      %v1818 = vsel %vm656, %v1816, %v1817
      %v1819 = vrot.slane %v1708, 2
      %v1820 = vsel %vm656, %v1817, %v1819
      %v1821 = vrot.slane %v1709, 2
      %v1822 = vrot.slane %v1710, 2
      %v1823 = vsel %vm656, %v1821, %v1822
      %v1824 = vrot.slane %v1711, 2
      %v1825 = vsel %vm656, %v1822, %v1824
      %v1826 = vrot.slane %v1712, 2
      %v1827 = vrot.slane %v1713, 2
      %v1828 = vsel %vm656, %v1826, %v1827
      %v1829 = vrot.slane %v1714, 2
      %v1830 = vsel %vm656, %v1827, %v1829
      %v1831 = vrot.slane %v1715, 2
      %v1832 = vrot.slane %v1716, 2
      %v1833 = vsel %vm656, %v1831, %v1832
      %v1834 = vrot.slane %v1717, 2
      %v1835 = vsel %vm656, %v1832, %v1834
      %v1836 = vrot.slane %v1718, 2
      %v1837 = vrot.slane %v1719, 2
      %v1838 = vsel %vm656, %v1836, %v1837
      %v1839 = vrot.slane %v1720, 2
      %v1840 = vsel %vm656, %v1837, %v1839
      %v1841 = vrot.slane %v1721, 2
      %v1842 = vrot.slane %v1722, 2
      %v1843 = vsel %vm656, %v1841, %v1842
      %v1844 = vrot.slane %v1723, 2
      %v1845 = vsel %vm656, %v1842, %v1844
      %v1846 = vrot.slane %v1724, 2
      %v1847 = vrot.slane %v1725, 2
      %v1848 = vsel %vm656, %v1846, %v1847
      %v1849 = vrot.slane %v1726, 2
      %v1850 = vsel %vm656, %v1847, %v1849
      %v1851 = vrot.slane %v1727, 2
      %v1852 = vrot.slane %v1728, 2
      %v1853 = vsel %vm656, %v1851, %v1852
      %v1854 = vrot.slane %v1729, 2
      %v1855 = vsel %vm656, %v1852, %v1854
      %v1856 = vrot.slane %v1730, 2
      %v1857 = vrot.slane %v1731, 2
      %v1858 = vsel %vm656, %v1856, %v1857
      %v1859 = vrot.slane %v1732, 2
      %v1860 = vsel %vm656, %v1857, %v1859
      %v1893 = vadd.f32 %v1648, %v1783
      %v1894 = vadd.f32 %v1649, %v1785
      %v1895 = vadd.f32 %v1650, %v1788
      %v1896 = vadd.f32 %v1651, %v1790
      %v1897 = vadd.f32 %v1652, %v1793
      %v1898 = vadd.f32 %v1653, %v1795
      %v1899 = vadd.f32 %v1654, %v1798
      %v1900 = vadd.f32 %v1655, %v1800
      %v1901 = vadd.f32 %v1656, %v1803
      %v1902 = vadd.f32 %v1657, %v1805
      %v1903 = vadd.f32 %v1658, %v1808
      %v1904 = vadd.f32 %v1659, %v1810
      %v1905 = vadd.f32 %v1660, %v1813
      %v1906 = vadd.f32 %v1661, %v1815
      %v1907 = vadd.f32 %v1662, %v1818
      %v1908 = vadd.f32 %v1663, %v1820
      %v1909 = vadd.f32 %v1664, %v1823
      %v1910 = vadd.f32 %v1665, %v1825
      %v1911 = vadd.f32 %v1666, %v1828
      %v1912 = vadd.f32 %v1667, %v1830
      %v1913 = vadd.f32 %v1668, %v1833
      %v1914 = vadd.f32 %v1669, %v1835
      %v1915 = vadd.f32 %v1670, %v1838
      %v1916 = vadd.f32 %v1671, %v1840
      %v1917 = vadd.f32 %v1672, %v1843
      %v1918 = vadd.f32 %v1673, %v1845
      %v1919 = vadd.f32 %v1674, %v1848
      %v1920 = vadd.f32 %v1675, %v1850
      %v1921 = vadd.f32 %v1676, %v1853
      %v1922 = vadd.f32 %v1677, %v1855
      %v1923 = vadd.f32 %v1678, %v1858
      %v1924 = vadd.f32 %v1679, %v1860
      %v1925 = vld [vmem:[%s2] sm:$0x1]
      %v1927 = vperm.slane %v1925, 0
      %v1929 = vadd.f32 %v1893, %v1927
      %v1930 = vadd.f32 %v1894, %v1927
      %v1931 = vadd.f32 %v1895, %v1927
      %v1932 = vadd.f32 %v1896, %v1927
      %v1933 = vadd.f32 %v1897, %v1927
      %v1934 = vadd.f32 %v1898, %v1927
      %v1935 = vadd.f32 %v1899, %v1927
      %v1936 = vadd.f32 %v1900, %v1927
      %v1937 = vadd.f32 %v1901, %v1927
      %v1938 = vadd.f32 %v1902, %v1927
      %v1939 = vadd.f32 %v1903, %v1927
      %v1940 = vadd.f32 %v1904, %v1927
      %v1941 = vadd.f32 %v1905, %v1927
      %v1942 = vadd.f32 %v1906, %v1927
      %v1943 = vadd.f32 %v1907, %v1927
      %v1944 = vadd.f32 %v1908, %v1927
      %v1945 = vadd.f32 %v1909, %v1927
      %v1946 = vadd.f32 %v1910, %v1927
      %v1947 = vadd.f32 %v1911, %v1927
      %v1948 = vadd.f32 %v1912, %v1927
      %v1949 = vadd.f32 %v1913, %v1927
      %v1950 = vadd.f32 %v1914, %v1927
      %v1951 = vadd.f32 %v1915, %v1927
      %v1952 = vadd.f32 %v1916, %v1927
      %v1953 = vadd.f32 %v1917, %v1927
      %v1954 = vadd.f32 %v1918, %v1927
      %v1955 = vadd.f32 %v1919, %v1927
      %v1956 = vadd.f32 %v1920, %v1927
      %v1957 = vadd.f32 %v1921, %v1927
      %v1958 = vadd.f32 %v1922, %v1927
      %v1959 = vadd.f32 %v1923, %v1927
      %v1960 = vadd.f32 %v1924, %v1927
      %v1961 = vmax.f32 %v1929, 0.0
      %v1962 = vmax.f32 %v1930, 0.0
      %v1963 = vmax.f32 %v1931, 0.0
      %v1964 = vmax.f32 %v1932, 0.0
      %v1965 = vmax.f32 %v1933, 0.0
      %v1966 = vmax.f32 %v1934, 0.0
      %v1967 = vmax.f32 %v1935, 0.0
      %v1968 = vmax.f32 %v1936, 0.0
      %v1969 = vmax.f32 %v1937, 0.0
      %v1970 = vmax.f32 %v1938, 0.0
      %v1971 = vmax.f32 %v1939, 0.0
      %v1972 = vmax.f32 %v1940, 0.0
      %v1973 = vmax.f32 %v1941, 0.0
      %v1974 = vmax.f32 %v1942, 0.0
      %v1975 = vmax.f32 %v1943, 0.0
      %v1976 = vmax.f32 %v1944, 0.0
      %v1977 = vmax.f32 %v1945, 0.0
      %v1978 = vmax.f32 %v1946, 0.0
      %v1979 = vmax.f32 %v1947, 0.0
      %v1980 = vmax.f32 %v1948, 0.0
      %v1981 = vmax.f32 %v1949, 0.0
      %v1982 = vmax.f32 %v1950, 0.0
      %v1983 = vmax.f32 %v1951, 0.0
      %v1984 = vmax.f32 %v1952, 0.0
      %v1985 = vmax.f32 %v1953, 0.0
      %v1986 = vmax.f32 %v1954, 0.0
      %v1987 = vmax.f32 %v1955, 0.0
      %v1988 = vmax.f32 %v1956, 0.0
      %v1989 = vmax.f32 %v1957, 0.0
      %v1990 = vmax.f32 %v1958, 0.0
      %v1991 = vmax.f32 %v1959, 0.0
      %v1992 = vmax.f32 %v1960, 0.0
      %v1993 = vmin.f32 %v1961, 6.0
      %v1994 = vmin.f32 %v1962, 6.0
      %v1995 = vmin.f32 %v1963, 6.0
      %v1996 = vmin.f32 %v1964, 6.0
      %v1997 = vmin.f32 %v1965, 6.0
      %v1998 = vmin.f32 %v1966, 6.0
      %v1999 = vmin.f32 %v1967, 6.0
      %v2000 = vmin.f32 %v1968, 6.0
      %v2001 = vmin.f32 %v1969, 6.0
      %v2002 = vmin.f32 %v1970, 6.0
      %v2003 = vmin.f32 %v1971, 6.0
      %v2004 = vmin.f32 %v1972, 6.0
      %v2005 = vmin.f32 %v1973, 6.0
      %v2006 = vmin.f32 %v1974, 6.0
      %v2007 = vmin.f32 %v1975, 6.0
      %v2008 = vmin.f32 %v1976, 6.0
      %v2009 = vmin.f32 %v1977, 6.0
      %v2010 = vmin.f32 %v1978, 6.0
      %v2011 = vmin.f32 %v1979, 6.0
      %v2012 = vmin.f32 %v1980, 6.0
      %v2013 = vmin.f32 %v1981, 6.0
      %v2014 = vmin.f32 %v1982, 6.0
      %v2015 = vmin.f32 %v1983, 6.0
      %v2016 = vmin.f32 %v1984, 6.0
      %v2017 = vmin.f32 %v1985, 6.0
      %v2018 = vmin.f32 %v1986, 6.0
      %v2019 = vmin.f32 %v1987, 6.0
      %v2020 = vmin.f32 %v1988, 6.0
      %v2021 = vmin.f32 %v1989, 6.0
      %v2022 = vmin.f32 %v1990, 6.0
      %v2023 = vmin.f32 %v1991, 6.0
      %v2024 = vmin.f32 %v1992, 6.0
      %v2025 = vpack.c.bf16 %v1993, %v1993
      %v2026 = vpack.c.bf16 %v1994, %v1994
      %v2027 = vpack.c.bf16 %v1995, %v1995
      %v2028 = vpack.c.bf16 %v1996, %v1996
      %v2029 = vpack.c.bf16 %v1997, %v1997
      %v2030 = vpack.c.bf16 %v1998, %v1998
      %v2031 = vpack.c.bf16 %v1999, %v1999
      %v2032 = vpack.c.bf16 %v2000, %v2000
      %v2033 = vpack.c.bf16 %v2001, %v2001
      %v2034 = vpack.c.bf16 %v2002, %v2002
      %v2035 = vpack.c.bf16 %v2003, %v2003
      %v2036 = vpack.c.bf16 %v2004, %v2004
      %v2037 = vpack.c.bf16 %v2005, %v2005
      %v2038 = vpack.c.bf16 %v2006, %v2006
      %v2039 = vpack.c.bf16 %v2007, %v2007
      %v2040 = vpack.c.bf16 %v2008, %v2008
      %v2041 = vpack.c.bf16 %v2009, %v2009
      %v2042 = vpack.c.bf16 %v2010, %v2010
      %v2043 = vpack.c.bf16 %v2011, %v2011
      %v2044 = vpack.c.bf16 %v2012, %v2012
      %v2045 = vpack.c.bf16 %v2013, %v2013
      %v2046 = vpack.c.bf16 %v2014, %v2014
      %v2047 = vpack.c.bf16 %v2015, %v2015
      %v2048 = vpack.c.bf16 %v2016, %v2016
      %v2049 = vpack.c.bf16 %v2017, %v2017
      %v2050 = vpack.c.bf16 %v2018, %v2018
      %v2051 = vpack.c.bf16 %v2019, %v2019
      %v2052 = vpack.c.bf16 %v2020, %v2020
      %v2053 = vpack.c.bf16 %v2021, %v2021
      %v2054 = vpack.c.bf16 %v2022, %v2022
      %v2055 = vpack.c.bf16 %v2023, %v2023
      %v2056 = vpack.c.bf16 %v2024, %v2024
      %vm2057 = vcmask 60416
      %2058 = vst.msk [vmem:[%s170] sm:$0xf] %vm2057, %v2025
      %2059 = vst.msk [vmem:[%s170 + $0x4] sm:$0xf] %vm2057, %v2026
      %2060 = vst.msk [vmem:[%s170 + $0x8] sm:$0xf] %vm2057, %v2027
      %2061 = vst.msk [vmem:[%s170 + $0xc] sm:$0xf] %vm2057, %v2028
      %2062 = vst.msk [vmem:[%s170 + $0x10] sm:$0xf] %vm2057, %v2029
      %2063 = vst.msk [vmem:[%s170 + $0x14] sm:$0xf] %vm2057, %v2030
      %2064 = vst.msk [vmem:[%s170 + $0x18] sm:$0xf] %vm2057, %v2031
      %2065 = vst.msk [vmem:[%s170 + $0x1c] sm:$0xf] %vm2057, %v2032
      %2066 = vst.msk [vmem:[%s170 + $0x20] sm:$0xf] %vm2057, %v2033
      %2067 = vst.msk [vmem:[%s170 + $0x24] sm:$0xf] %vm2057, %v2034
      %2068 = vst.msk [vmem:[%s170 + $0x28] sm:$0xf] %vm2057, %v2035
      %2069 = vst.msk [vmem:[%s170 + $0x2c] sm:$0xf] %vm2057, %v2036
      %2070 = vst.msk [vmem:[%s170 + $0x30] sm:$0xf] %vm2057, %v2037
      %2071 = vst.msk [vmem:[%s170 + $0x34] sm:$0xf] %vm2057, %v2038
      %2072 = vst.msk [vmem:[%s170 + $0x38] sm:$0xf] %vm2057, %v2039
      %2073 = vst.msk [vmem:[%s170 + $0x3c] sm:$0xf] %vm2057, %v2040
      %2074 = vst.msk [vmem:[%s170 + $0x40] sm:$0xf] %vm2057, %v2041
      %2075 = vst.msk [vmem:[%s170 + $0x44] sm:$0xf] %vm2057, %v2042
      %2076 = vst.msk [vmem:[%s170 + $0x48] sm:$0xf] %vm2057, %v2043
      %2077 = vst.msk [vmem:[%s170 + $0x4c] sm:$0xf] %vm2057, %v2044
      %2078 = vst.msk [vmem:[%s170 + $0x50] sm:$0xf] %vm2057, %v2045
      %2079 = vst.msk [vmem:[%s170 + $0x54] sm:$0xf] %vm2057, %v2046
      %2080 = vst.msk [vmem:[%s170 + $0x58] sm:$0xf] %vm2057, %v2047
      %2081 = vst.msk [vmem:[%s170 + $0x5c] sm:$0xf] %vm2057, %v2048
      %2082 = vst.msk [vmem:[%s170 + $0x60] sm:$0xf] %vm2057, %v2049
      %2083 = vst.msk [vmem:[%s170 + $0x64] sm:$0xf] %vm2057, %v2050
      %2084 = vst.msk [vmem:[%s170 + $0x68] sm:$0xf] %vm2057, %v2051
      %2085 = vst.msk [vmem:[%s170 + $0x6c] sm:$0xf] %vm2057, %v2052
      %2086 = vst.msk [vmem:[%s170 + $0x70] sm:$0xf] %vm2057, %v2053
      %2087 = vst.msk [vmem:[%s170 + $0x74] sm:$0xf] %vm2057, %v2054
      %2088 = vst.msk [vmem:[%s170 + $0x78] sm:$0xf] %vm2057, %v2055
      %2089 = vst.msk [vmem:[%s170 + $0x7c] sm:$0xf] %vm2057, %v2056
      %p2090 = scmp.lt.s32.totalorder %s14, 1
      %s2091 = scalar_select %p2090, %s14, 1
      %s2092 = smul.addr %s2091, 32
      %s2093 = smul.addr %s2092, 4
      %s2094 = scalar_lea.vmem %s3, %s2093
      // Predicated region
      $region33: #{forward.29} parent=31 // pred_check
        %p2095 = pneg %p100
      $region34: #{forward.29} parent=31 // pred_check_branch
        %2097 = sbr.rel (%p2095) target = $region36
      $region35: #{forward.29} parent=31 // pred_region
        _
      $region36: #{forward.29} parent=31 // pred_fallthru
        _
    $region32: #{forward.29} parent=5 // pred_fallthru
      _
    %p2098 = scmp.le.s32.totalorder 2, %s9
    // Predicated region
    $region37: #{forward.29} parent=5 // pred_check
      %p2099 = pneg %p2098
    $region38: #{forward.29} parent=5 // pred_check_branch
      %2101 = sbr.rel (%p2099) target = $region40
    $region39: #{forward.29} parent=5 // pred_region
      %s2102 = ssub.s32 %s9, 2
      // Predicated region
      $region41: #{forward.29} parent=39 // pred_check
        %p2103 = pneg %p106
      $region42: #{forward.29} parent=39 // pred_check_branch
        %2105 = sbr.rel (%p2103) target = $region44
      $region43: #{forward.29} parent=39 // pred_region
        %p2106 = scmp.lt.s32.totalorder %s15, 1
        %s2107 = scalar_select %p2106, %s15, 1
        %s2108 = smul.addr %s2107, 32
        %s2109 = smul.addr %s2108, 4
        %s2110 = scalar_lea.vmem %s3, %s2109
      $region44: #{forward.29} parent=39 // pred_fallthru
        _
    $region40: #{forward.29} parent=5 // pred_fallthru
      _
  $region6: #{forward.29} parent=0 // loop_footer
    %s13 = sadd.s32 1, %s9
  $region7: #{forward.29} parent=0 // loop_footer_branch
    %8 = sbr.rel target = $region3
  $region8: #{forward.29} parent=0 // loop_exit
    _

// kernel: forward.32
$region0: #{forward.32}
  #allocation0 [shape = 'u32[]', space=smem, size = 0x4, offset = 0x4, fixed_abs, tag = 'smem constant byte address 0x4 - core index']
  #allocation1 [shape = 'u32[72,128]{1,0:T(1,128)}', space=vmem, size = 0x9000, scoped, tag = 'internal scratch']
  %s0 = inlined_call_operand.vmem [shape: bf16[128,16], index: 0, kind: input, shape index: {}]
  %s1 = inlined_call_operand.vmem [shape: bf16[16,32], index: 1, kind: input, shape index: {}]
  %s2 = inlined_call_operand.vmem [shape: f32[1,32], index: 2, kind: input, shape index: {}]
  %s3 = inlined_call_operand.vmem [shape: bf16[128,32], index: 3, kind: output, shape index: {}]
  %s4 = sld [smem:[#allocation0]]
  $region22: #{forward.32} parent=0
    _
  %s6 = ssub.s32 1, %s4
  %s7 = scalar_select 0, %s6, %s4
  // Predicated region
  $region2: #{forward.32} parent=0 // pred_check
    _
  $region3: #{forward.32} parent=0 // pred_check_branch
    %9 = sbr.rel (0) target = $region5
  $region4: #{forward.32} parent=0 // pred_region
    _
  $region5: #{forward.32} parent=0 // pred_fallthru
    _
  // Predicated region
  $region6: #{forward.32} parent=0 // pred_check
    _
  $region7: #{forward.32} parent=0 // pred_check_branch
    %11 = sbr.rel (0) target = $region9
  $region8: #{forward.32} parent=0 // pred_region
    _
  $region9: #{forward.32} parent=0 // pred_fallthru
    _
  // Predicated region
  $region10: #{forward.32} parent=0 // pred_check
    _
  $region11: #{forward.32} parent=0 // pred_check_branch
    %13 = sbr.rel (0) target = $region13
  $region12: #{forward.32} parent=0 // pred_region
    _
  $region13: #{forward.32} parent=0 // pred_fallthru
    _
  %v15 = vld [vmem:[%s0] sm:$0xf]
  %v16 = vld [vmem:[%s0 + $0x4] sm:$0xf]
  %v17 = vld [vmem:[%s0 + $0x8] sm:$0xf]
  %v18 = vld [vmem:[%s0 + $0xc] sm:$0xf]
  %v19 = vld [vmem:[%s0 + $0x10] sm:$0xf]
  %v20 = vld [vmem:[%s0 + $0x14] sm:$0xf]
  %v21 = vld [vmem:[%s0 + $0x18] sm:$0xf]
  %v22 = vld [vmem:[%s0 + $0x1c] sm:$0xf]
  %v23 = vld [vmem:[%s0 + $0x20] sm:$0xf]
  %v24 = vld [vmem:[%s0 + $0x24] sm:$0xf]
  %v25 = vld [vmem:[%s0 + $0x28] sm:$0xf]
  %v26 = vld [vmem:[%s0 + $0x2c] sm:$0xf]
  %v27 = vld [vmem:[%s0 + $0x30] sm:$0xf]
  %v28 = vld [vmem:[%s0 + $0x34] sm:$0xf]
  %v29 = vld [vmem:[%s0 + $0x38] sm:$0xf]
  %v30 = vld [vmem:[%s0 + $0x3c] sm:$0xf]
  %v31 = vld [vmem:[%s1] sm:$0xf]
  %v32 = vld [vmem:[%s1 + $0x4] sm:$0xf]
  %v33 = vld [vmem:[%s2] sm:$0x1]
  %v35 = vperm.slane %v33, 0
  %v53 = vunpack.c.l.b16 %v15
  %v54 = vunpack.c.l.b16 %v16
  %v55 = vunpack.c.l.b16 %v17
  %v56 = vunpack.c.l.b16 %v18
  %v57 = vunpack.c.l.b16 %v19
  %v58 = vunpack.c.l.b16 %v20
  %v59 = vunpack.c.l.b16 %v21
  %v60 = vunpack.c.l.b16 %v22
  %v61 = vunpack.c.l.b16 %v23
  %v62 = vunpack.c.l.b16 %v24
  %v63 = vunpack.c.l.b16 %v25
  %v64 = vunpack.c.l.b16 %v26
  %v65 = vunpack.c.l.b16 %v27
  %v66 = vunpack.c.l.b16 %v28
  %v67 = vunpack.c.l.b16 %v29
  %v68 = vunpack.c.l.b16 %v30
  %v69 = vpack.c.b16 %v54, %v53
  %v70 = vpack.c.b16 %v56, %v55
  %v71 = vpack.c.b16 %v58, %v57
  %v72 = vpack.c.b16 %v60, %v59
  %v73 = vpack.c.b16 %v62, %v61
  %v74 = vpack.c.b16 %v64, %v63
  %v75 = vpack.c.b16 %v66, %v65
  %v76 = vpack.c.b16 %v68, %v67
  %v79 = vunpack.c.l.b16 %v31
  %v80 = vunpack.c.l.b16 %v32
  %v81 = vpack.c.b16 %v80, %v79
  %vm83 = vcmask 130048
  %v85 = vsel %vm83, %v69, 0
  %v88 = vsel %vm83, %v70, 0
  %v91 = vsel %vm83, %v71, 0
  %v94 = vsel %vm83, %v72, 0
  %v97 = vsel %vm83, %v73, 0
  %v100 = vsel %vm83, %v74, 0
  %v103 = vsel %vm83, %v75, 0
  %v106 = vsel %vm83, %v76, 0
  %108 = vmatpush.bf16.msra.mxu0 0
  %109 = vmatpush.bf16.msra.mxu0 0
  %110 = vmatpush.bf16.msra.mxu0 0
  %111 = vmatpush.bf16.msra.mxu0 0
  %112 = vmatpush.bf16.msra.mxu0 0
  %113 = vmatpush.bf16.msra.mxu0 0
  %114 = vmatpush.bf16.msra.mxu0 0
  %115 = vmatpush.bf16.msra.mxu0 %v81
  %116 = vmatmul.bf16.gmra.mxu0 %v85
  %v117 = vpop.f32.mrf.mxu0
  %v118 = vadd.f32 %v35, %v117
  %v119 = vpop.f32.mrf.mxu0
  %v120 = vadd.f32 %v35, %v119
  %121 = vmatmul.bf16.gmra.mxu0 %v88
  %v122 = vpop.f32.mrf.mxu0
  %v123 = vadd.f32 %v35, %v122
  %v124 = vpop.f32.mrf.mxu0
  %v125 = vadd.f32 %v35, %v124
  %126 = vmatmul.bf16.gmra.mxu0 %v91
  %v127 = vpop.f32.mrf.mxu0
  %v128 = vadd.f32 %v35, %v127
  %v129 = vpop.f32.mrf.mxu0
  %v130 = vadd.f32 %v35, %v129
  %131 = vmatmul.bf16.gmra.mxu0 %v94
  %v132 = vpop.f32.mrf.mxu0
  %v133 = vadd.f32 %v35, %v132
  %v134 = vpop.f32.mrf.mxu0
  %v135 = vadd.f32 %v35, %v134
  %136 = vmatmul.bf16.gmra.mxu0 %v97
  %v137 = vpop.f32.mrf.mxu0
  %v138 = vadd.f32 %v35, %v137
  %v139 = vpop.f32.mrf.mxu0
  %v140 = vadd.f32 %v35, %v139
  %141 = vmatmul.bf16.gmra.mxu0 %v100
  %v142 = vpop.f32.mrf.mxu0
  %v143 = vadd.f32 %v35, %v142
  %v144 = vpop.f32.mrf.mxu0
  %v145 = vadd.f32 %v35, %v144
  %146 = vmatmul.bf16.gmra.mxu0 %v103
  %v147 = vpop.f32.mrf.mxu0
  %v148 = vadd.f32 %v35, %v147
  %v149 = vpop.f32.mrf.mxu0
  %v150 = vadd.f32 %v35, %v149
  %151 = vmatmul.bf16.gmra.mxu0 %v106
  %v152 = vpop.f32.mrf.mxu0
  %v153 = vadd.f32 %v35, %v152
  %v154 = vpop.f32.mrf.mxu0
  %v155 = vadd.f32 %v35, %v154
  %156 = vdwg.mxu0
  %v157 = vmax.f32 %v118, 0.0
  %v158 = vmax.f32 %v120, 0.0
  %v159 = vmax.f32 %v123, 0.0
  %v160 = vmax.f32 %v125, 0.0
  %v161 = vmax.f32 %v128, 0.0
  %v162 = vmax.f32 %v130, 0.0
  %v163 = vmax.f32 %v133, 0.0
  %v164 = vmax.f32 %v135, 0.0
  %v165 = vmax.f32 %v138, 0.0
  %v166 = vmax.f32 %v140, 0.0
  %v167 = vmax.f32 %v143, 0.0
  %v168 = vmax.f32 %v145, 0.0
  %v169 = vmax.f32 %v148, 0.0
  %v170 = vmax.f32 %v150, 0.0
  %v171 = vmax.f32 %v153, 0.0
  %v172 = vmax.f32 %v155, 0.0
  %v173 = vmin.f32 %v157, 6.0
  %v174 = vmin.f32 %v158, 6.0
  %v175 = vmin.f32 %v159, 6.0
  %v176 = vmin.f32 %v160, 6.0
  %v177 = vmin.f32 %v161, 6.0
  %v178 = vmin.f32 %v162, 6.0
  %v179 = vmin.f32 %v163, 6.0
  %v180 = vmin.f32 %v164, 6.0
  %v181 = vmin.f32 %v165, 6.0
  %v182 = vmin.f32 %v166, 6.0
  %v183 = vmin.f32 %v167, 6.0
  %v184 = vmin.f32 %v168, 6.0
  %v185 = vmin.f32 %v169, 6.0
  %v186 = vmin.f32 %v170, 6.0
  %v187 = vmin.f32 %v171, 6.0
  %v188 = vmin.f32 %v172, 6.0
  %v189 = vpack.c.bf16 %v173, %v173
  %v190 = vpack.c.bf16 %v174, %v174
  %v191 = vpack.c.bf16 %v175, %v175
  %v192 = vpack.c.bf16 %v176, %v176
  %v193 = vpack.c.bf16 %v177, %v177
  %v194 = vpack.c.bf16 %v178, %v178
  %v195 = vpack.c.bf16 %v179, %v179
  %v196 = vpack.c.bf16 %v180, %v180
  %v197 = vpack.c.bf16 %v181, %v181
  %v198 = vpack.c.bf16 %v182, %v182
  %v199 = vpack.c.bf16 %v183, %v183
  %v200 = vpack.c.bf16 %v184, %v184
  %v201 = vpack.c.bf16 %v185, %v185
  %v202 = vpack.c.bf16 %v186, %v186
  %v203 = vpack.c.bf16 %v187, %v187
  %v204 = vpack.c.bf16 %v188, %v188
  %vm205 = vcmask 257024
  %206 = vst.msk [vmem:[%s3] sm:$0xf] %vm205, %v189
  %207 = vst.msk [vmem:[%s3 + $0x4] sm:$0xf] %vm205, %v190
  %208 = vst.msk [vmem:[%s3 + $0x8] sm:$0xf] %vm205, %v191
  %209 = vst.msk [vmem:[%s3 + $0xc] sm:$0xf] %vm205, %v192
  %210 = vst.msk [vmem:[%s3 + $0x10] sm:$0xf] %vm205, %v193
  %211 = vst.msk [vmem:[%s3 + $0x14] sm:$0xf] %vm205, %v194
  %212 = vst.msk [vmem:[%s3 + $0x18] sm:$0xf] %vm205, %v195
  %213 = vst.msk [vmem:[%s3 + $0x1c] sm:$0xf] %vm205, %v196
  %214 = vst.msk [vmem:[%s3 + $0x20] sm:$0xf] %vm205, %v197
  %215 = vst.msk [vmem:[%s3 + $0x24] sm:$0xf] %vm205, %v198
  %216 = vst.msk [vmem:[%s3 + $0x28] sm:$0xf] %vm205, %v199
  %217 = vst.msk [vmem:[%s3 + $0x2c] sm:$0xf] %vm205, %v200
  %218 = vst.msk [vmem:[%s3 + $0x30] sm:$0xf] %vm205, %v201
  %219 = vst.msk [vmem:[%s3 + $0x34] sm:$0xf] %vm205, %v202
  %220 = vst.msk [vmem:[%s3 + $0x38] sm:$0xf] %vm205, %v203
  %221 = vst.msk [vmem:[%s3 + $0x3c] sm:$0xf] %vm205, %v204
  // Predicated region
  $region14: #{forward.32} parent=0 // pred_check
    _
  $region15: #{forward.32} parent=0 // pred_check_branch
    %223 = sbr.rel (0) target = $region17
  $region16: #{forward.32} parent=0 // pred_region
    _
  $region17: #{forward.32} parent=0 // pred_fallthru
    _
  // Predicated region
  $region18: #{forward.32} parent=0 // pred_check
    _
  $region19: #{forward.32} parent=0 // pred_check_branch
    %225 = sbr.rel (0) target = $region21
  $region20: #{forward.32} parent=0 // pred_region
    _
  $region21: #{forward.32} parent=0 // pred_fallthru
    _

// kernel: forward.31
$region0: #{forward.31}
  #allocation0 [shape = 'u32[]', space=smem, size = 0x4, offset = 0x4, fixed_abs, tag = 'smem constant byte address 0x4 - core index']
  #allocation1 [shape = 'u32[72,128]{1,0:T(1,128)}', space=vmem, size = 0x9000, scoped, tag = 'internal scratch']
  %s0 = inlined_call_operand.vmem [shape: bf16[2,9,9,16], index: 0, kind: input, shape index: {}]
  %s1 = inlined_call_operand.vmem [shape: bf16[2,9,8,16], index: 1, kind: input, shape index: {}]
  %s2 = inlined_call_operand.vmem [shape: bf16[2,8,9,16], index: 2, kind: input, shape index: {}]
  %s3 = inlined_call_operand.vmem [shape: bf16[2,8,8,16], index: 3, kind: input, shape index: {}]
  %s4 = inlined_call_operand.vmem [shape: f32[9,1,16], index: 4, kind: input, shape index: {}]
  %s5 = inlined_call_operand.vmem [shape: f32[1,16], index: 5, kind: input, shape index: {}]
  %s6 = inlined_call_operand.vmem [shape: bf16[2,8,8,16], index: 6, kind: output, shape index: {}]
  %s7 = sld [smem:[#allocation0]]
  $region57: #{forward.31} parent=0
    _
  %s9 = ssub.s32 1, %s7
  %s10 = scalar_select 0, %s9, %s7
  loop: start=0, step=1, limit=4
  $region2: #{forward.31} parent=0 // loop_pre_header
    _
  $region3: #{forward.31} parent=0 // loop_header
    %s12 = sphi 0, %s16
    %p13 = scmp.ge.s32.totalorder %s12, 4
    %s22 = sphi 0, %s24
    %s25 = sphi 0, %s22
    %s26 = sphi 0, %s25
    %s42 = sphi 0, %s26
    %s48 = sphi 0, %s50
    %s51 = sphi 0, %s48
    %s52 = sphi 0, %s51
    %s68 = sphi 0, %s52
    %s74 = sphi 0, %s76
    %s77 = sphi 0, %s74
    %s78 = sphi 0, %s77
    %s94 = sphi 0, %s78
    %s100 = sphi 0, %s102
    %s103 = sphi 0, %s100
    %s104 = sphi 0, %s103
    %s120 = sphi 0, %s104
    %s124 = sphi 0, %s124
    %s126 = sphi 0, %s124
    %s127 = sphi 0, %s126
    %s141 = sphi 0, %s127
    %s145 = sphi 0, %s145
    %s147 = sphi 0, %s145
    %s148 = sphi 0, %s147
    %s162 = sphi 0, %s148
    %s168 = sphi 0, %s170
    %s171 = sphi 0, %s168
    %s172 = sphi 0, %s171
    %s188 = sphi 0, %s172
  $region4: #{forward.31} parent=0 // loop_header_branch
    %15 = sbr.rel (%p13) target = $region8
  $region5: #{forward.31} parent=0 // loop_body
    %s17 = ssub.s32 %s12, 1
    %s18 = ssub.s32 %s12, 2
    %s19 = sadd.s32 %s12, 1
    %s20 = ssub.s32 %s12, %s19
    %p21 = scmp.eq.s32.totalorder %s20, 0
    %s23 = sadd.s32 %s22, 1
    %s24 = scalar_select %p21, %s22, %s23
    %p27 = pneg %p21
    %p28 = scmp.eq.s32.totalorder %s12, 1
    %p29 = por %p27, %p28
    %p30 = scmp.ne.s32.totalorder %s22, %s25
    %p31 = scmp.eq.s32.totalorder %s12, 0
    %p32 = por %p30, %p31
    %p33 = scmp.ne.s32.totalorder %s22, %s25
    %p34 = scmp.eq.s32.totalorder %s17, 1
    %p35 = por %p33, %p34
    %p36 = scmp.ne.s32.totalorder %s25, %s26
    %p37 = scmp.eq.s32.totalorder %s17, 0
    %p38 = por %p36, %p37
    %p39 = scmp.ne.s32.totalorder %s25, %s26
    %p40 = scmp.eq.s32.totalorder %s18, 1
    %p41 = por %p39, %p40
    %p43 = scmp.ne.s32.totalorder %s26, %s42
    %p44 = scmp.eq.s32.totalorder %s18, 0
    %p45 = por %p43, %p44
    %s46 = ssub.s32 %s12, %s19
    %p47 = scmp.eq.s32.totalorder %s46, 0
    %s49 = sadd.s32 %s48, 1
    %s50 = scalar_select %p47, %s48, %s49
    %p53 = pneg %p47
    %p54 = scmp.eq.s32.totalorder %s12, 1
    %p55 = por %p53, %p54
    %p56 = scmp.ne.s32.totalorder %s48, %s51
    %p57 = scmp.eq.s32.totalorder %s12, 0
    %p58 = por %p56, %p57
    %p59 = scmp.ne.s32.totalorder %s48, %s51
    %p60 = scmp.eq.s32.totalorder %s17, 1
    %p61 = por %p59, %p60
    %p62 = scmp.ne.s32.totalorder %s51, %s52
    %p63 = scmp.eq.s32.totalorder %s17, 0
    %p64 = por %p62, %p63
    %p65 = scmp.ne.s32.totalorder %s51, %s52
    %p66 = scmp.eq.s32.totalorder %s18, 1
    %p67 = por %p65, %p66
    %p69 = scmp.ne.s32.totalorder %s52, %s68
    %p70 = scmp.eq.s32.totalorder %s18, 0
    %p71 = por %p69, %p70
    %s72 = ssub.s32 %s12, %s19
    %p73 = scmp.eq.s32.totalorder %s72, 0
    %s75 = sadd.s32 %s74, 1
    %s76 = scalar_select %p73, %s74, %s75
    %p79 = pneg %p73
    %p80 = scmp.eq.s32.totalorder %s12, 1
    %p81 = por %p79, %p80
    %p82 = scmp.ne.s32.totalorder %s74, %s77
    %p83 = scmp.eq.s32.totalorder %s12, 0
    %p84 = por %p82, %p83
    %p85 = scmp.ne.s32.totalorder %s74, %s77
    %p86 = scmp.eq.s32.totalorder %s17, 1
    %p87 = por %p85, %p86
    %p88 = scmp.ne.s32.totalorder %s77, %s78
    %p89 = scmp.eq.s32.totalorder %s17, 0
    %p90 = por %p88, %p89
    %p91 = scmp.ne.s32.totalorder %s77, %s78
    %p92 = scmp.eq.s32.totalorder %s18, 1
    %p93 = por %p91, %p92
    %p95 = scmp.ne.s32.totalorder %s78, %s94
    %p96 = scmp.eq.s32.totalorder %s18, 0
    %p97 = por %p95, %p96
    %s98 = ssub.s32 %s12, %s19
    %p99 = scmp.eq.s32.totalorder %s98, 0
    %s101 = sadd.s32 %s100, 1
    %s102 = scalar_select %p99, %s100, %s101
    %p105 = pneg %p99
    %p106 = scmp.eq.s32.totalorder %s12, 1
    %p107 = por %p105, %p106
    %p108 = scmp.ne.s32.totalorder %s100, %s103
    %p109 = scmp.eq.s32.totalorder %s12, 0
    %p110 = por %p108, %p109
    %p111 = scmp.ne.s32.totalorder %s100, %s103
    %p112 = scmp.eq.s32.totalorder %s17, 1
    %p113 = por %p111, %p112
    %p114 = scmp.ne.s32.totalorder %s103, %s104
    %p115 = scmp.eq.s32.totalorder %s17, 0
    %p116 = por %p114, %p115
    %p117 = scmp.ne.s32.totalorder %s103, %s104
    %p118 = scmp.eq.s32.totalorder %s18, 1
    %p119 = por %p117, %p118
    %p121 = scmp.ne.s32.totalorder %s104, %s120
    %p122 = scmp.eq.s32.totalorder %s18, 0
    %p123 = por %p121, %p122
    %s125 = sadd.s32 %s124, 1
    %p128 = scmp.eq.s32.totalorder %s12, 1
    %p129 = scmp.ne.s32.totalorder %s124, %s126
    %p130 = scmp.eq.s32.totalorder %s12, 0
    %p131 = por %p129, %p130
    %p132 = scmp.ne.s32.totalorder %s124, %s126
    %p133 = scmp.eq.s32.totalorder %s17, 1
    %p134 = por %p132, %p133
    %p135 = scmp.ne.s32.totalorder %s126, %s127
    %p136 = scmp.eq.s32.totalorder %s17, 0
    %p137 = por %p135, %p136
    %p138 = scmp.ne.s32.totalorder %s126, %s127
    %p139 = scmp.eq.s32.totalorder %s18, 1
    %p140 = por %p138, %p139
    %p142 = scmp.ne.s32.totalorder %s127, %s141
    %p143 = scmp.eq.s32.totalorder %s18, 0
    %p144 = por %p142, %p143
    %s146 = sadd.s32 %s145, 1
    %p149 = scmp.eq.s32.totalorder %s12, 1
    %p150 = scmp.ne.s32.totalorder %s145, %s147
    %p151 = scmp.eq.s32.totalorder %s12, 0
    %p152 = por %p150, %p151
    %p153 = scmp.ne.s32.totalorder %s145, %s147
    %p154 = scmp.eq.s32.totalorder %s17, 1
    %p155 = por %p153, %p154
    %p156 = scmp.ne.s32.totalorder %s147, %s148
    %p157 = scmp.eq.s32.totalorder %s17, 0
    %p158 = por %p156, %p157
    %p159 = scmp.ne.s32.totalorder %s147, %s148
    %p160 = scmp.eq.s32.totalorder %s18, 1
    %p161 = por %p159, %p160
    %p163 = scmp.ne.s32.totalorder %s148, %s162
    %p164 = scmp.eq.s32.totalorder %s18, 0
    %p165 = por %p163, %p164
    %s166 = ssub.s32 %s12, %s19
    %p167 = scmp.eq.s32.totalorder %s166, 0
    %s169 = sadd.s32 %s168, 1
    %s170 = scalar_select %p167, %s168, %s169
    %p173 = pneg %p167
    %p174 = scmp.eq.s32.totalorder %s12, 1
    %p175 = por %p173, %p174
    %p176 = scmp.ne.s32.totalorder %s168, %s171
    %p177 = scmp.eq.s32.totalorder %s12, 0
    %p178 = por %p176, %p177
    %p179 = scmp.ne.s32.totalorder %s168, %s171
    %p180 = scmp.eq.s32.totalorder %s17, 1
    %p181 = por %p179, %p180
    %p182 = scmp.ne.s32.totalorder %s171, %s172
    %p183 = scmp.eq.s32.totalorder %s17, 0
    %p184 = por %p182, %p183
    %p185 = scmp.ne.s32.totalorder %s171, %s172
    %p186 = scmp.eq.s32.totalorder %s18, 1
    %p187 = por %p185, %p186
    %p189 = scmp.ne.s32.totalorder %s172, %s188
    %p190 = scmp.eq.s32.totalorder %s18, 0
    %p191 = por %p189, %p190
    %p192 = scmp.le.s32.totalorder 1, %s12
    %p193 = scmp.lt.s32.totalorder %s12, 3
    %p194 = pnand %p192, %p193
    %p195 = pneg %p194
    // Predicated region
    $region9: #{forward.31} parent=5 // pred_check
      _
    $region10: #{forward.31} parent=5 // pred_check_branch
      %197 = sbr.rel (%p194) target = $region12
    $region11: #{forward.31} parent=5 // pred_region
      %s198 = ssub.s32 %s12, 1
      // Predicated region
      $region13: #{forward.31} parent=11 // pred_check
        %p199 = pneg %p137
      $region14: #{forward.31} parent=11 // pred_check_branch
        %201 = sbr.rel (%p199) target = $region16
      $region15: #{forward.31} parent=11 // pred_region
        _
      $region16: #{forward.31} parent=11 // pred_fallthru
        _
      // Predicated region
      $region17: #{forward.31} parent=11 // pred_check
        %p202 = pneg %p158
      $region18: #{forward.31} parent=11 // pred_check_branch
        %204 = sbr.rel (%p202) target = $region20
      $region19: #{forward.31} parent=11 // pred_region
        _
      $region20: #{forward.31} parent=11 // pred_fallthru
        _
    $region12: #{forward.31} parent=5 // pred_fallthru
      _
    %p205 = scmp.lt.s32.totalorder %s12, 2
    // Predicated region
    $region21: #{forward.31} parent=5 // pred_check
      %p206 = pneg %p205
    $region22: #{forward.31} parent=5 // pred_check_branch
      %208 = sbr.rel (%p206) target = $region24
    $region23: #{forward.31} parent=5 // pred_region
      // Predicated region
      $region25: #{forward.31} parent=23 // pred_check
        %p209 = pneg %p32
      $region26: #{forward.31} parent=23 // pred_check_branch
        %211 = sbr.rel (%p209) target = $region28
      $region27: #{forward.31} parent=23 // pred_region
        %p212 = scmp.lt.s32.totalorder %s12, 1
        %s213 = scalar_select %p212, %s12, 1
        %s214 = smul.addr %s213, 18
        %s215 = smul.addr %s214, 4
        %s216 = scalar_lea.vmem %s0, %s215
      $region28: #{forward.31} parent=23 // pred_fallthru
        _
      // Predicated region
      $region29: #{forward.31} parent=23 // pred_check
        %p217 = pneg %p58
      $region30: #{forward.31} parent=23 // pred_check_branch
        %219 = sbr.rel (%p217) target = $region32
      $region31: #{forward.31} parent=23 // pred_region
        %p220 = scmp.lt.s32.totalorder %s12, 1
        %s221 = scalar_select %p220, %s12, 1
        %s222 = smul.addr %s221, 9
        %s223 = smul.addr %s222, 4
        %s224 = scalar_lea.vmem %s1, %s223
      $region32: #{forward.31} parent=23 // pred_fallthru
        _
      // Predicated region
      $region33: #{forward.31} parent=23 // pred_check
        %p225 = pneg %p84
      $region34: #{forward.31} parent=23 // pred_check_branch
        %227 = sbr.rel (%p225) target = $region36
      $region35: #{forward.31} parent=23 // pred_region
        %p228 = scmp.lt.s32.totalorder %s12, 1
        %s229 = scalar_select %p228, %s12, 1
        %s230 = smul.addr %s229, 16
        %s231 = smul.addr %s230, 4
        %s232 = scalar_lea.vmem %s2, %s231
      $region36: #{forward.31} parent=23 // pred_fallthru
        _
      // Predicated region
      $region37: #{forward.31} parent=23 // pred_check
        %p233 = pneg %p110
      $region38: #{forward.31} parent=23 // pred_check_branch
        %235 = sbr.rel (%p233) target = $region40
      $region39: #{forward.31} parent=23 // pred_region
        %p236 = scmp.lt.s32.totalorder %s12, 1
        %s237 = scalar_select %p236, %s12, 1
        %s238 = smul.addr %s237, 8
        %s239 = smul.addr %s238, 4
        %s240 = scalar_lea.vmem %s3, %s239
      $region40: #{forward.31} parent=23 // pred_fallthru
        _
    $region24: #{forward.31} parent=5 // pred_fallthru
      _
    %p241 = scmp.le.s32.totalorder 1, %s12
    %p242 = scmp.lt.s32.totalorder %s12, 3
    %p243 = pnand %p241, %p242
    %p244 = pneg %p243
    // Predicated region
    $region41: #{forward.31} parent=5 // pred_check
      _
    $region42: #{forward.31} parent=5 // pred_check_branch
      %246 = sbr.rel (%p243) target = $region44
    $region43: #{forward.31} parent=5 // pred_region
      %s247 = ssub.s32 %s12, 1
      %p248 = scmp.lt.s32.totalorder %s17, 1
      %s249 = scalar_select %p248, %s17, 1
      %s250 = smul.addr %s249, 18
      %s251 = smul.addr %s250, 4
      %s252 = scalar_lea.vmem %s0, %s251
      %p253 = pneg %p38
      %p254 = pneg %p35
      %p255 = scmp.lt.s32.totalorder %s17, 1
      %s256 = scalar_select %p255, %s17, 1
      %s257 = smul.addr %s256, 9
      %s258 = smul.addr %s257, 4
      %s259 = scalar_lea.vmem %s1, %s258
      %p260 = pneg %p64
      %p261 = pneg %p61
      %p262 = scmp.lt.s32.totalorder %s17, 1
      %s263 = scalar_select %p262, %s17, 1
      %s264 = smul.addr %s263, 16
      %s265 = smul.addr %s264, 4
      %s266 = scalar_lea.vmem %s2, %s265
      %p267 = pneg %p90
      %p268 = pneg %p87
      %p269 = scmp.lt.s32.totalorder %s17, 1
      %s270 = scalar_select %p269, %s17, 1
      %s271 = smul.addr %s270, 8
      %s272 = smul.addr %s271, 4
      %s273 = scalar_lea.vmem %s3, %s272
      %p274 = pneg %p116
      %p275 = pneg %p113
      %p276 = pneg %p137
      %p277 = pneg %p134
      %p278 = pneg %p158
      %p279 = pneg %p155
      %p280 = pneg %p184
      %p281 = pneg %p181
      %p282 = scmp.lt.s32.totalorder %s17, 1
      %s283 = scalar_select %p282, %s17, 1
      %s284 = smul.addr %s283, 8
      %s285 = smul.addr %s284, 4
      %s286 = scalar_lea.vmem %s6, %s285
      %p287 = scmp.lt.s32.totalorder %s17, 1
      %s288 = scalar_select %p287, %s17, 1
      %s289 = smul.addr %s288, 18
      %s290 = smul.addr %s289, 4
      %s291 = scalar_lea.vmem %s0, %s290
      %p292 = scmp.lt.s32.totalorder %s17, 1
      %s293 = scalar_select %p292, %s17, 1
      %s294 = smul.addr %s293, 9
      %s295 = smul.addr %s294, 4
      %s296 = scalar_lea.vmem %s1, %s295
      %p297 = scmp.lt.s32.totalorder %s17, 1
      %s298 = scalar_select %p297, %s17, 1
      %s299 = smul.addr %s298, 16
      %s300 = smul.addr %s299, 4
      %s301 = scalar_lea.vmem %s2, %s300
      %p302 = scmp.lt.s32.totalorder %s17, 1
      %s303 = scalar_select %p302, %s17, 1
      %s304 = smul.addr %s303, 8
      %s305 = smul.addr %s304, 4
      %s306 = scalar_lea.vmem %s3, %s305
      %p307 = scmp.lt.s32.totalorder %s17, 1
      %s308 = scalar_select %p307, %s17, 1
      %s309 = smul.addr %s308, 8
      %s310 = smul.addr %s309, 4
      %s311 = scalar_lea.vmem %s6, %s310
      %v312 = vld [vmem:[%s291] sm:$0xf]
      %v313 = vld [vmem:[%s291 + $0x4] sm:$0x1]
      %v314 = vld [vmem:[%s291 + $0x8] sm:$0xf]
      %v315 = vld [vmem:[%s291 + $0xc] sm:$0x1]
      %v316 = vld [vmem:[%s291 + $0x10] sm:$0xf]
      %v317 = vld [vmem:[%s291 + $0x14] sm:$0x1]
      %v318 = vld [vmem:[%s291 + $0x18] sm:$0xf]
      %v319 = vld [vmem:[%s291 + $0x1c] sm:$0x1]
      %v320 = vld [vmem:[%s291 + $0x20] sm:$0xf]
      %v321 = vld [vmem:[%s291 + $0x24] sm:$0x1]
      %v322 = vld [vmem:[%s291 + $0x28] sm:$0xf]
      %v323 = vld [vmem:[%s291 + $0x2c] sm:$0x1]
      %v324 = vld [vmem:[%s291 + $0x30] sm:$0xf]
      %v325 = vld [vmem:[%s291 + $0x34] sm:$0x1]
      %v326 = vld [vmem:[%s291 + $0x38] sm:$0xf]
      %v327 = vld [vmem:[%s291 + $0x3c] sm:$0x1]
      %v328 = vld [vmem:[%s291 + $0x40] sm:$0xf]
      %v329 = vld [vmem:[%s291 + $0x44] sm:$0x1]
      %v330 = vld [vmem:[%s296] sm:$0xf]
      %v331 = vld [vmem:[%s296 + $0x4] sm:$0xf]
      %v332 = vld [vmem:[%s296 + $0x8] sm:$0xf]
      %v333 = vld [vmem:[%s296 + $0xc] sm:$0xf]
      %v334 = vld [vmem:[%s296 + $0x10] sm:$0xf]
      %v335 = vld [vmem:[%s296 + $0x14] sm:$0xf]
      %v336 = vld [vmem:[%s296 + $0x18] sm:$0xf]
      %v337 = vld [vmem:[%s296 + $0x1c] sm:$0xf]
      %v338 = vld [vmem:[%s296 + $0x20] sm:$0xf]
      %v339 = vld [vmem:[%s301] sm:$0xf]
      %v340 = vld [vmem:[%s301 + $0x4] sm:$0x1]
      %v341 = vld [vmem:[%s301 + $0x8] sm:$0xf]
      %v342 = vld [vmem:[%s301 + $0xc] sm:$0x1]
      %v343 = vld [vmem:[%s301 + $0x10] sm:$0xf]
      %v344 = vld [vmem:[%s301 + $0x14] sm:$0x1]
      %v345 = vld [vmem:[%s301 + $0x18] sm:$0xf]
      %v346 = vld [vmem:[%s301 + $0x1c] sm:$0x1]
      %v347 = vld [vmem:[%s301 + $0x20] sm:$0xf]
      %v348 = vld [vmem:[%s301 + $0x24] sm:$0x1]
      %v349 = vld [vmem:[%s301 + $0x28] sm:$0xf]
      %v350 = vld [vmem:[%s301 + $0x2c] sm:$0x1]
      %v351 = vld [vmem:[%s301 + $0x30] sm:$0xf]
      %v352 = vld [vmem:[%s301 + $0x34] sm:$0x1]
      %v353 = vld [vmem:[%s301 + $0x38] sm:$0xf]
      %v354 = vld [vmem:[%s301 + $0x3c] sm:$0x1]
      %v355 = vld [vmem:[%s306] sm:$0xf]
      %v356 = vld [vmem:[%s306 + $0x4] sm:$0xf]
      %v357 = vld [vmem:[%s306 + $0x8] sm:$0xf]
      %v358 = vld [vmem:[%s306 + $0xc] sm:$0xf]
      %v359 = vld [vmem:[%s306 + $0x10] sm:$0xf]
      %v360 = vld [vmem:[%s306 + $0x14] sm:$0xf]
      %v361 = vld [vmem:[%s306 + $0x18] sm:$0xf]
      %v362 = vld [vmem:[%s306 + $0x1c] sm:$0xf]
      %v363 = vld [vmem:[%s4] sm:$0x1]
      %v364 = vunpack.c.l.bf16 %v312
      %v365 = vunpack.c.l.bf16 %v314
      %v366 = vunpack.c.l.bf16 %v316
      %v367 = vunpack.c.l.bf16 %v318
      %v368 = vunpack.c.l.bf16 %v320
      %v369 = vunpack.c.l.bf16 %v322
      %v370 = vunpack.c.l.bf16 %v324
      %v371 = vunpack.c.l.bf16 %v326
      %v373 = vperm.slane %v363, 0
      %v375 = vmul.f32 %v364, %v373
      %v376 = vmul.f32 %v365, %v373
      %v377 = vmul.f32 %v366, %v373
      %v378 = vmul.f32 %v367, %v373
      %v379 = vmul.f32 %v368, %v373
      %v380 = vmul.f32 %v369, %v373
      %v381 = vmul.f32 %v370, %v373
      %v382 = vmul.f32 %v371, %v373
      %s383 = scalar_lea.vmem %s4, 1
      %v384 = vld [vmem:[%s383] sm:$0x1]
      %v385 = vunpack.c.l.bf16 %v330
      %v386 = vunpack.c.l.bf16 %v331
      %v387 = vunpack.c.l.bf16 %v332
      %v388 = vunpack.c.l.bf16 %v333
      %v389 = vunpack.c.l.bf16 %v334
      %v390 = vunpack.c.l.bf16 %v335
      %v391 = vunpack.c.l.bf16 %v336
      %v392 = vunpack.c.l.bf16 %v337
      %v394 = vperm.slane %v384, 0
      %v396 = vmul.f32 %v385, %v394
      %v397 = vmul.f32 %v386, %v394
      %v398 = vmul.f32 %v387, %v394
      %v399 = vmul.f32 %v388, %v394
      %v400 = vmul.f32 %v389, %v394
      %v401 = vmul.f32 %v390, %v394
      %v402 = vmul.f32 %v391, %v394
      %v403 = vmul.f32 %v392, %v394
      %v404 = vadd.f32 %v375, %v396
      %v405 = vadd.f32 %v376, %v397
      %v406 = vadd.f32 %v377, %v398
      %v407 = vadd.f32 %v378, %v399
      %v408 = vadd.f32 %v379, %v400
      %v409 = vadd.f32 %v380, %v401
      %v410 = vadd.f32 %v381, %v402
      %v411 = vadd.f32 %v382, %v403
      %s412 = scalar_lea.vmem %s4, 2
      %v413 = vld [vmem:[%s412] sm:$0x1]
      %v414 = vunpack.c.l.bf16 %v313
      %v415 = vunpack.c.l.bf16 %v315
      %v416 = vunpack.c.l.bf16 %v317
      %v417 = vunpack.c.l.bf16 %v319
      %v418 = vunpack.c.l.bf16 %v321
      %v419 = vunpack.c.l.bf16 %v323
      %v420 = vunpack.c.l.bf16 %v325
      %v421 = vunpack.c.l.bf16 %v327
      %v423 = vperm.slane %v413, 0
      %v425 = vmul.f32 %v364, %v423
      %v426 = vmul.f32 %v414, %v423
      %v427 = vmul.f32 %v365, %v423
      %v428 = vmul.f32 %v415, %v423
      %v429 = vmul.f32 %v366, %v423
      %v430 = vmul.f32 %v416, %v423
      %v431 = vmul.f32 %v367, %v423
      %v432 = vmul.f32 %v417, %v423
      %v433 = vmul.f32 %v368, %v423
      %v434 = vmul.f32 %v418, %v423
      %v435 = vmul.f32 %v369, %v423
      %v436 = vmul.f32 %v419, %v423
      %v437 = vmul.f32 %v370, %v423
      %v438 = vmul.f32 %v420, %v423
      %v439 = vmul.f32 %v371, %v423
      %v440 = vmul.f32 %v421, %v423
      %vm457 = vcmask 1046528
      %v458 = vrot.slane %v425, 1
      %v459 = vrot.slane %v426, 1
      %v460 = vsel %vm457, %v458, %v459
      %v461 = vrot.slane %v427, 1
      %v462 = vrot.slane %v428, 1
      %v463 = vsel %vm457, %v461, %v462
      %v464 = vrot.slane %v429, 1
      %v465 = vrot.slane %v430, 1
      %v466 = vsel %vm457, %v464, %v465
      %v467 = vrot.slane %v431, 1
      %v468 = vrot.slane %v432, 1
      %v469 = vsel %vm457, %v467, %v468
      %v470 = vrot.slane %v433, 1
      %v471 = vrot.slane %v434, 1
      %v472 = vsel %vm457, %v470, %v471
      %v473 = vrot.slane %v435, 1
      %v474 = vrot.slane %v436, 1
      %v475 = vsel %vm457, %v473, %v474
      %v476 = vrot.slane %v437, 1
      %v477 = vrot.slane %v438, 1
      %v478 = vsel %vm457, %v476, %v477
      %v479 = vrot.slane %v439, 1
      %v480 = vrot.slane %v440, 1
      %v481 = vsel %vm457, %v479, %v480
      %v490 = vadd.f32 %v404, %v460
      %v491 = vadd.f32 %v405, %v463
      %v492 = vadd.f32 %v406, %v466
      %v493 = vadd.f32 %v407, %v469
      %v494 = vadd.f32 %v408, %v472
      %v495 = vadd.f32 %v409, %v475
      %v496 = vadd.f32 %v410, %v478
      %v497 = vadd.f32 %v411, %v481
      %s498 = scalar_lea.vmem %s4, 3
      %v499 = vld [vmem:[%s498] sm:$0x1]
      %v500 = vunpack.c.l.bf16 %v339
      %v501 = vunpack.c.l.bf16 %v341
      %v502 = vunpack.c.l.bf16 %v343
      %v503 = vunpack.c.l.bf16 %v345
      %v504 = vunpack.c.l.bf16 %v347
      %v505 = vunpack.c.l.bf16 %v349
      %v506 = vunpack.c.l.bf16 %v351
      %v507 = vunpack.c.l.bf16 %v353
      %v509 = vperm.slane %v499, 0
      %v511 = vmul.f32 %v500, %v509
      %v512 = vmul.f32 %v501, %v509
      %v513 = vmul.f32 %v502, %v509
      %v514 = vmul.f32 %v503, %v509
      %v515 = vmul.f32 %v504, %v509
      %v516 = vmul.f32 %v505, %v509
      %v517 = vmul.f32 %v506, %v509
      %v518 = vmul.f32 %v507, %v509
      %v519 = vadd.f32 %v490, %v511
      %v520 = vadd.f32 %v491, %v512
      %v521 = vadd.f32 %v492, %v513
      %v522 = vadd.f32 %v493, %v514
      %v523 = vadd.f32 %v494, %v515
      %v524 = vadd.f32 %v495, %v516
      %v525 = vadd.f32 %v496, %v517
      %v526 = vadd.f32 %v497, %v518
      %s527 = scalar_lea.vmem %s4, 4
      %v528 = vld [vmem:[%s527] sm:$0x1]
      %v529 = vunpack.c.l.bf16 %v355
      %v530 = vunpack.c.l.bf16 %v356
      %v531 = vunpack.c.l.bf16 %v357
      %v532 = vunpack.c.l.bf16 %v358
      %v533 = vunpack.c.l.bf16 %v359
      %v534 = vunpack.c.l.bf16 %v360
      %v535 = vunpack.c.l.bf16 %v361
      %v536 = vunpack.c.l.bf16 %v362
      %v538 = vperm.slane %v528, 0
      %v540 = vmul.f32 %v529, %v538
      %v541 = vmul.f32 %v530, %v538
      %v542 = vmul.f32 %v531, %v538
      %v543 = vmul.f32 %v532, %v538
      %v544 = vmul.f32 %v533, %v538
      %v545 = vmul.f32 %v534, %v538
      %v546 = vmul.f32 %v535, %v538
      %v547 = vmul.f32 %v536, %v538
      %v548 = vadd.f32 %v519, %v540
      %v549 = vadd.f32 %v520, %v541
      %v550 = vadd.f32 %v521, %v542
      %v551 = vadd.f32 %v522, %v543
      %v552 = vadd.f32 %v523, %v544
      %v553 = vadd.f32 %v524, %v545
      %v554 = vadd.f32 %v525, %v546
      %v555 = vadd.f32 %v526, %v547
      %s556 = scalar_lea.vmem %s4, 5
      %v557 = vld [vmem:[%s556] sm:$0x1]
      %v558 = vunpack.c.l.bf16 %v340
      %v559 = vunpack.c.l.bf16 %v342
      %v560 = vunpack.c.l.bf16 %v344
      %v561 = vunpack.c.l.bf16 %v346
      %v562 = vunpack.c.l.bf16 %v348
      %v563 = vunpack.c.l.bf16 %v350
      %v564 = vunpack.c.l.bf16 %v352
      %v565 = vunpack.c.l.bf16 %v354
      %v567 = vperm.slane %v557, 0
      %v569 = vmul.f32 %v500, %v567
      %v570 = vmul.f32 %v558, %v567
      %v571 = vmul.f32 %v501, %v567
      %v572 = vmul.f32 %v559, %v567
      %v573 = vmul.f32 %v502, %v567
      %v574 = vmul.f32 %v560, %v567
      %v575 = vmul.f32 %v503, %v567
      %v576 = vmul.f32 %v561, %v567
      %v577 = vmul.f32 %v504, %v567
      %v578 = vmul.f32 %v562, %v567
      %v579 = vmul.f32 %v505, %v567
      %v580 = vmul.f32 %v563, %v567
      %v581 = vmul.f32 %v506, %v567
      %v582 = vmul.f32 %v564, %v567
      %v583 = vmul.f32 %v507, %v567
      %v584 = vmul.f32 %v565, %v567
      %v601 = vrot.slane %v569, 1
      %v602 = vrot.slane %v570, 1
      %v603 = vsel %vm457, %v601, %v602
      %v604 = vrot.slane %v571, 1
      %v605 = vrot.slane %v572, 1
      %v606 = vsel %vm457, %v604, %v605
      %v607 = vrot.slane %v573, 1
      %v608 = vrot.slane %v574, 1
      %v609 = vsel %vm457, %v607, %v608
      %v610 = vrot.slane %v575, 1
      %v611 = vrot.slane %v576, 1
      %v612 = vsel %vm457, %v610, %v611
      %v613 = vrot.slane %v577, 1
      %v614 = vrot.slane %v578, 1
      %v615 = vsel %vm457, %v613, %v614
      %v616 = vrot.slane %v579, 1
      %v617 = vrot.slane %v580, 1
      %v618 = vsel %vm457, %v616, %v617
      %v619 = vrot.slane %v581, 1
      %v620 = vrot.slane %v582, 1
      %v621 = vsel %vm457, %v619, %v620
      %v622 = vrot.slane %v583, 1
      %v623 = vrot.slane %v584, 1
      %v624 = vsel %vm457, %v622, %v623
      %v633 = vadd.f32 %v548, %v603
      %v634 = vadd.f32 %v549, %v606
      %v635 = vadd.f32 %v550, %v609
      %v636 = vadd.f32 %v551, %v612
      %v637 = vadd.f32 %v552, %v615
      %v638 = vadd.f32 %v553, %v618
      %v639 = vadd.f32 %v554, %v621
      %v640 = vadd.f32 %v555, %v624
      %s641 = scalar_lea.vmem %s4, 6
      %v642 = vld [vmem:[%s641] sm:$0x1]
      %v643 = vunpack.c.l.bf16 %v328
      %v645 = vperm.slane %v642, 0
      %v647 = vmul.f32 %v365, %v645
      %v648 = vmul.f32 %v366, %v645
      %v649 = vmul.f32 %v367, %v645
      %v650 = vmul.f32 %v368, %v645
      %v651 = vmul.f32 %v369, %v645
      %v652 = vmul.f32 %v370, %v645
      %v653 = vmul.f32 %v371, %v645
      %v654 = vmul.f32 %v643, %v645
      %v655 = vadd.f32 %v633, %v647
      %v656 = vadd.f32 %v634, %v648
      %v657 = vadd.f32 %v635, %v649
      %v658 = vadd.f32 %v636, %v650
      %v659 = vadd.f32 %v637, %v651
      %v660 = vadd.f32 %v638, %v652
      %v661 = vadd.f32 %v639, %v653
      %v662 = vadd.f32 %v640, %v654
      %s663 = scalar_lea.vmem %s4, 7
      %v664 = vld [vmem:[%s663] sm:$0x1]
      %v665 = vunpack.c.l.bf16 %v338
      %v667 = vperm.slane %v664, 0
      %v669 = vmul.f32 %v386, %v667
      %v670 = vmul.f32 %v387, %v667
      %v671 = vmul.f32 %v388, %v667
      %v672 = vmul.f32 %v389, %v667
      %v673 = vmul.f32 %v390, %v667
      %v674 = vmul.f32 %v391, %v667
      %v675 = vmul.f32 %v392, %v667
      %v676 = vmul.f32 %v665, %v667
      %v677 = vadd.f32 %v655, %v669
      %v678 = vadd.f32 %v656, %v670
      %v679 = vadd.f32 %v657, %v671
      %v680 = vadd.f32 %v658, %v672
      %v681 = vadd.f32 %v659, %v673
      %v682 = vadd.f32 %v660, %v674
      %v683 = vadd.f32 %v661, %v675
      %v684 = vadd.f32 %v662, %v676
      %s685 = scalar_lea.vmem %s4, 8
      %v686 = vld [vmem:[%s685] sm:$0x1]
      %v687 = vunpack.c.l.bf16 %v329
      %v689 = vperm.slane %v686, 0
      %v691 = vmul.f32 %v365, %v689
      %v692 = vmul.f32 %v415, %v689
      %v693 = vmul.f32 %v366, %v689
      %v694 = vmul.f32 %v416, %v689
      %v695 = vmul.f32 %v367, %v689
      %v696 = vmul.f32 %v417, %v689
      %v697 = vmul.f32 %v368, %v689
      %v698 = vmul.f32 %v418, %v689
      %v699 = vmul.f32 %v369, %v689
      %v700 = vmul.f32 %v419, %v689
      %v701 = vmul.f32 %v370, %v689
      %v702 = vmul.f32 %v420, %v689
      %v703 = vmul.f32 %v371, %v689
      %v704 = vmul.f32 %v421, %v689
      %v705 = vmul.f32 %v643, %v689
      %v706 = vmul.f32 %v687, %v689
      %v723 = vrot.slane %v691, 1
      %v724 = vrot.slane %v692, 1
      %v725 = vsel %vm457, %v723, %v724
      %v726 = vrot.slane %v693, 1
      %v727 = vrot.slane %v694, 1
      %v728 = vsel %vm457, %v726, %v727
      %v729 = vrot.slane %v695, 1
      %v730 = vrot.slane %v696, 1
      %v731 = vsel %vm457, %v729, %v730
      %v732 = vrot.slane %v697, 1
      %v733 = vrot.slane %v698, 1
      %v734 = vsel %vm457, %v732, %v733
      %v735 = vrot.slane %v699, 1
      %v736 = vrot.slane %v700, 1
      %v737 = vsel %vm457, %v735, %v736
      %v738 = vrot.slane %v701, 1
      %v739 = vrot.slane %v702, 1
      %v740 = vsel %vm457, %v738, %v739
      %v741 = vrot.slane %v703, 1
      %v742 = vrot.slane %v704, 1
      %v743 = vsel %vm457, %v741, %v742
      %v744 = vrot.slane %v705, 1
      %v745 = vrot.slane %v706, 1
      %v746 = vsel %vm457, %v744, %v745
      %v755 = vadd.f32 %v677, %v725
      %v756 = vadd.f32 %v678, %v728
      %v757 = vadd.f32 %v679, %v731
      %v758 = vadd.f32 %v680, %v734
      %v759 = vadd.f32 %v681, %v737
      %v760 = vadd.f32 %v682, %v740
      %v761 = vadd.f32 %v683, %v743
      %v762 = vadd.f32 %v684, %v746
      %v763 = vld [vmem:[%s5] sm:$0x1]
      %v765 = vperm.slane %v763, 0
      %v767 = vadd.f32 %v755, %v765
      %v768 = vadd.f32 %v756, %v765
      %v769 = vadd.f32 %v757, %v765
      %v770 = vadd.f32 %v758, %v765
      %v771 = vadd.f32 %v759, %v765
      %v772 = vadd.f32 %v760, %v765
      %v773 = vadd.f32 %v761, %v765
      %v774 = vadd.f32 %v762, %v765
      %v775 = vmax.f32 %v767, 0.0
      %v776 = vmax.f32 %v768, 0.0
      %v777 = vmax.f32 %v769, 0.0
      %v778 = vmax.f32 %v770, 0.0
      %v779 = vmax.f32 %v771, 0.0
      %v780 = vmax.f32 %v772, 0.0
      %v781 = vmax.f32 %v773, 0.0
      %v782 = vmax.f32 %v774, 0.0
      %v783 = vmin.f32 %v775, 6.0
      %v784 = vmin.f32 %v776, 6.0
      %v785 = vmin.f32 %v777, 6.0
      %v786 = vmin.f32 %v778, 6.0
      %v787 = vmin.f32 %v779, 6.0
      %v788 = vmin.f32 %v780, 6.0
      %v789 = vmin.f32 %v781, 6.0
      %v790 = vmin.f32 %v782, 6.0
      %v791 = vpack.c.bf16 %v783, %v783
      %v792 = vpack.c.bf16 %v784, %v784
      %v793 = vpack.c.bf16 %v785, %v785
      %v794 = vpack.c.bf16 %v786, %v786
      %v795 = vpack.c.bf16 %v787, %v787
      %v796 = vpack.c.bf16 %v788, %v788
      %v797 = vpack.c.bf16 %v789, %v789
      %v798 = vpack.c.bf16 %v790, %v790
      %vm799 = vcmask 125952
      %800 = vst.msk [vmem:[%s311] sm:$0xf] %vm799, %v791
      %801 = vst.msk [vmem:[%s311 + $0x4] sm:$0xf] %vm799, %v792
      %802 = vst.msk [vmem:[%s311 + $0x8] sm:$0xf] %vm799, %v793
      %803 = vst.msk [vmem:[%s311 + $0xc] sm:$0xf] %vm799, %v794
      %804 = vst.msk [vmem:[%s311 + $0x10] sm:$0xf] %vm799, %v795
      %805 = vst.msk [vmem:[%s311 + $0x14] sm:$0xf] %vm799, %v796
      %806 = vst.msk [vmem:[%s311 + $0x18] sm:$0xf] %vm799, %v797
      %807 = vst.msk [vmem:[%s311 + $0x1c] sm:$0xf] %vm799, %v798
      %p808 = scmp.lt.s32.totalorder %s17, 1
      %s809 = scalar_select %p808, %s17, 1
      %s810 = smul.addr %s809, 8
      %s811 = smul.addr %s810, 4
      %s812 = scalar_lea.vmem %s6, %s811
      // Predicated region
      $region45: #{forward.31} parent=43 // pred_check
        %p813 = pneg %p181
      $region46: #{forward.31} parent=43 // pred_check_branch
        %815 = sbr.rel (%p813) target = $region48
      $region47: #{forward.31} parent=43 // pred_region
        _
      $region48: #{forward.31} parent=43 // pred_fallthru
        _
    $region44: #{forward.31} parent=5 // pred_fallthru
      _
    %p816 = scmp.le.s32.totalorder 2, %s12
    // Predicated region
    $region49: #{forward.31} parent=5 // pred_check
      %p817 = pneg %p816
    $region50: #{forward.31} parent=5 // pred_check_branch
      %819 = sbr.rel (%p817) target = $region52
    $region51: #{forward.31} parent=5 // pred_region
      %s820 = ssub.s32 %s12, 2
      // Predicated region
      $region53: #{forward.31} parent=51 // pred_check
        %p821 = pneg %p187
      $region54: #{forward.31} parent=51 // pred_check_branch
        %823 = sbr.rel (%p821) target = $region56
      $region55: #{forward.31} parent=51 // pred_region
        %p824 = scmp.lt.s32.totalorder %s18, 1
        %s825 = scalar_select %p824, %s18, 1
        %s826 = smul.addr %s825, 8
        %s827 = smul.addr %s826, 4
        %s828 = scalar_lea.vmem %s6, %s827
      $region56: #{forward.31} parent=51 // pred_fallthru
        _
    $region52: #{forward.31} parent=5 // pred_fallthru
      _
  $region6: #{forward.31} parent=0 // loop_footer
    %s16 = sadd.s32 1, %s12
  $region7: #{forward.31} parent=0 // loop_footer_branch
    %11 = sbr.rel target = $region3
  $region8: #{forward.31} parent=0 // loop_exit
    _

// kernel: forward.33
$region0: #{forward.33}
  #allocation0 [shape = 'u32[]', space=smem, size = 0x4, offset = 0x4, fixed_abs, tag = 'smem constant byte address 0x4 - core index']
  #allocation1 [shape = 'u32[72,128]{1,0:T(1,128)}', space=vmem, size = 0x9000, scoped, tag = 'internal scratch']
  %s0 = inlined_call_operand.vmem [shape: bf16[2,10,10,32], index: 0, kind: input, shape index: {}]
  %s1 = inlined_call_operand.vmem [shape: f32[9,1,32], index: 1, kind: input, shape index: {}]
  %s2 = inlined_call_operand.vmem [shape: f32[1,32], index: 2, kind: input, shape index: {}]
  %s3 = inlined_call_operand.vmem [shape: bf16[2,8,8,32], index: 3, kind: output, shape index: {}]
  %s4 = sld [smem:[#allocation0]]
  $region45: #{forward.33} parent=0
    _
  %s6 = ssub.s32 1, %s4
  %s7 = scalar_select 0, %s6, %s4
  loop: start=0, step=1, limit=4
  $region2: #{forward.33} parent=0 // loop_pre_header
    _
  $region3: #{forward.33} parent=0 // loop_header
    %s9 = sphi 0, %s13
    %p10 = scmp.ge.s32.totalorder %s9, 4
    %s19 = sphi 0, %s21
    %s22 = sphi 0, %s19
    %s23 = sphi 0, %s22
    %s39 = sphi 0, %s23
    %s43 = sphi 0, %s43
    %s45 = sphi 0, %s43
    %s46 = sphi 0, %s45
    %s60 = sphi 0, %s46
    %s64 = sphi 0, %s64
    %s66 = sphi 0, %s64
    %s67 = sphi 0, %s66
    %s81 = sphi 0, %s67
    %s87 = sphi 0, %s89
    %s90 = sphi 0, %s87
    %s91 = sphi 0, %s90
    %s107 = sphi 0, %s91
  $region4: #{forward.33} parent=0 // loop_header_branch
    %12 = sbr.rel (%p10) target = $region8
  $region5: #{forward.33} parent=0 // loop_body
    %s14 = ssub.s32 %s9, 1
    %s15 = ssub.s32 %s9, 2
    %s16 = sadd.s32 %s9, 1
    %s17 = ssub.s32 %s9, %s16
    %p18 = scmp.eq.s32.totalorder %s17, 0
    %s20 = sadd.s32 %s19, 1
    %s21 = scalar_select %p18, %s19, %s20
    %p24 = pneg %p18
    %p25 = scmp.eq.s32.totalorder %s9, 1
    %p26 = por %p24, %p25
    %p27 = scmp.ne.s32.totalorder %s19, %s22
    %p28 = scmp.eq.s32.totalorder %s9, 0
    %p29 = por %p27, %p28
    %p30 = scmp.ne.s32.totalorder %s19, %s22
    %p31 = scmp.eq.s32.totalorder %s14, 1
    %p32 = por %p30, %p31
    %p33 = scmp.ne.s32.totalorder %s22, %s23
    %p34 = scmp.eq.s32.totalorder %s14, 0
    %p35 = por %p33, %p34
    %p36 = scmp.ne.s32.totalorder %s22, %s23
    %p37 = scmp.eq.s32.totalorder %s15, 1
    %p38 = por %p36, %p37
    %p40 = scmp.ne.s32.totalorder %s23, %s39
    %p41 = scmp.eq.s32.totalorder %s15, 0
    %p42 = por %p40, %p41
    %s44 = sadd.s32 %s43, 1
    %p47 = scmp.eq.s32.totalorder %s9, 1
    %p48 = scmp.ne.s32.totalorder %s43, %s45
    %p49 = scmp.eq.s32.totalorder %s9, 0
    %p50 = por %p48, %p49
    %p51 = scmp.ne.s32.totalorder %s43, %s45
    %p52 = scmp.eq.s32.totalorder %s14, 1
    %p53 = por %p51, %p52
    %p54 = scmp.ne.s32.totalorder %s45, %s46
    %p55 = scmp.eq.s32.totalorder %s14, 0
    %p56 = por %p54, %p55
    %p57 = scmp.ne.s32.totalorder %s45, %s46
    %p58 = scmp.eq.s32.totalorder %s15, 1
    %p59 = por %p57, %p58
    %p61 = scmp.ne.s32.totalorder %s46, %s60
    %p62 = scmp.eq.s32.totalorder %s15, 0
    %p63 = por %p61, %p62
    %s65 = sadd.s32 %s64, 1
    %p68 = scmp.eq.s32.totalorder %s9, 1
    %p69 = scmp.ne.s32.totalorder %s64, %s66
    %p70 = scmp.eq.s32.totalorder %s9, 0
    %p71 = por %p69, %p70
    %p72 = scmp.ne.s32.totalorder %s64, %s66
    %p73 = scmp.eq.s32.totalorder %s14, 1
    %p74 = por %p72, %p73
    %p75 = scmp.ne.s32.totalorder %s66, %s67
    %p76 = scmp.eq.s32.totalorder %s14, 0
    %p77 = por %p75, %p76
    %p78 = scmp.ne.s32.totalorder %s66, %s67
    %p79 = scmp.eq.s32.totalorder %s15, 1
    %p80 = por %p78, %p79
    %p82 = scmp.ne.s32.totalorder %s67, %s81
    %p83 = scmp.eq.s32.totalorder %s15, 0
    %p84 = por %p82, %p83
    %s85 = ssub.s32 %s9, %s16
    %p86 = scmp.eq.s32.totalorder %s85, 0
    %s88 = sadd.s32 %s87, 1
    %s89 = scalar_select %p86, %s87, %s88
    %p92 = pneg %p86
    %p93 = scmp.eq.s32.totalorder %s9, 1
    %p94 = por %p92, %p93
    %p95 = scmp.ne.s32.totalorder %s87, %s90
    %p96 = scmp.eq.s32.totalorder %s9, 0
    %p97 = por %p95, %p96
    %p98 = scmp.ne.s32.totalorder %s87, %s90
    %p99 = scmp.eq.s32.totalorder %s14, 1
    %p100 = por %p98, %p99
    %p101 = scmp.ne.s32.totalorder %s90, %s91
    %p102 = scmp.eq.s32.totalorder %s14, 0
    %p103 = por %p101, %p102
    %p104 = scmp.ne.s32.totalorder %s90, %s91
    %p105 = scmp.eq.s32.totalorder %s15, 1
    %p106 = por %p104, %p105
    %p108 = scmp.ne.s32.totalorder %s91, %s107
    %p109 = scmp.eq.s32.totalorder %s15, 0
    %p110 = por %p108, %p109
    %p111 = scmp.le.s32.totalorder 1, %s9
    %p112 = scmp.lt.s32.totalorder %s9, 3
    %p113 = pnand %p111, %p112
    %p114 = pneg %p113
    // Predicated region
    $region9: #{forward.33} parent=5 // pred_check
      _
    $region10: #{forward.33} parent=5 // pred_check_branch
      %116 = sbr.rel (%p113) target = $region12
    $region11: #{forward.33} parent=5 // pred_region
      %s117 = ssub.s32 %s9, 1
      // Predicated region
      $region13: #{forward.33} parent=11 // pred_check
        %p118 = pneg %p56
      $region14: #{forward.33} parent=11 // pred_check_branch
        %120 = sbr.rel (%p118) target = $region16
      $region15: #{forward.33} parent=11 // pred_region
        _
      $region16: #{forward.33} parent=11 // pred_fallthru
        _
      // Predicated region
      $region17: #{forward.33} parent=11 // pred_check
        %p121 = pneg %p77
      $region18: #{forward.33} parent=11 // pred_check_branch
        %123 = sbr.rel (%p121) target = $region20
      $region19: #{forward.33} parent=11 // pred_region
        _
      $region20: #{forward.33} parent=11 // pred_fallthru
        _
    $region12: #{forward.33} parent=5 // pred_fallthru
      _
    %p124 = scmp.lt.s32.totalorder %s9, 2
    // Predicated region
    $region21: #{forward.33} parent=5 // pred_check
      %p125 = pneg %p124
    $region22: #{forward.33} parent=5 // pred_check_branch
      %127 = sbr.rel (%p125) target = $region24
    $region23: #{forward.33} parent=5 // pred_region
      // Predicated region
      $region25: #{forward.33} parent=23 // pred_check
        %p128 = pneg %p29
      $region26: #{forward.33} parent=23 // pred_check_branch
        %130 = sbr.rel (%p128) target = $region28
      $region27: #{forward.33} parent=23 // pred_region
        %p131 = scmp.lt.s32.totalorder %s9, 1
        %s132 = scalar_select %p131, %s9, 1
        %s133 = smul.addr %s132, 20
        %s134 = smul.addr %s133, 4
        %s135 = scalar_lea.vmem %s0, %s134
      $region28: #{forward.33} parent=23 // pred_fallthru
        _
    $region24: #{forward.33} parent=5 // pred_fallthru
      _
    %p136 = scmp.le.s32.totalorder 1, %s9
    %p137 = scmp.lt.s32.totalorder %s9, 3
    %p138 = pnand %p136, %p137
    %p139 = pneg %p138
    // Predicated region
    $region29: #{forward.33} parent=5 // pred_check
      _
    $region30: #{forward.33} parent=5 // pred_check_branch
      %141 = sbr.rel (%p138) target = $region32
    $region31: #{forward.33} parent=5 // pred_region
      %s142 = ssub.s32 %s9, 1
      %p143 = scmp.lt.s32.totalorder %s14, 1
      %s144 = scalar_select %p143, %s14, 1
      %s145 = smul.addr %s144, 20
      %s146 = smul.addr %s145, 4
      %s147 = scalar_lea.vmem %s0, %s146
      %p148 = pneg %p35
      %p149 = pneg %p32
      %p150 = pneg %p56
      %p151 = pneg %p53
      %p152 = pneg %p77
      %p153 = pneg %p74
      %p154 = pneg %p103
      %p155 = pneg %p100
      %p156 = scmp.lt.s32.totalorder %s14, 1
      %s157 = scalar_select %p156, %s14, 1
      %s158 = smul.addr %s157, 8
      %s159 = smul.addr %s158, 4
      %s160 = scalar_lea.vmem %s3, %s159
      %p161 = scmp.lt.s32.totalorder %s14, 1
      %s162 = scalar_select %p161, %s14, 1
      %s163 = smul.addr %s162, 20
      %s164 = smul.addr %s163, 4
      %s165 = scalar_lea.vmem %s0, %s164
      %p166 = scmp.lt.s32.totalorder %s14, 1
      %s167 = scalar_select %p166, %s14, 1
      %s168 = smul.addr %s167, 8
      %s169 = smul.addr %s168, 4
      %s170 = scalar_lea.vmem %s3, %s169
      %v171 = vld [vmem:[%s165] sm:$0xf]
      %v172 = vld [vmem:[%s165 + $0x4] sm:$0x1]
      %v173 = vld [vmem:[%s165 + $0x8] sm:$0xf]
      %v174 = vld [vmem:[%s165 + $0xc] sm:$0x1]
      %v175 = vld [vmem:[%s165 + $0x10] sm:$0xf]
      %v176 = vld [vmem:[%s165 + $0x14] sm:$0x1]
      %v177 = vld [vmem:[%s165 + $0x18] sm:$0xf]
      %v178 = vld [vmem:[%s165 + $0x1c] sm:$0x1]
      %v179 = vld [vmem:[%s165 + $0x20] sm:$0xf]
      %v180 = vld [vmem:[%s165 + $0x24] sm:$0x1]
      %v181 = vld [vmem:[%s165 + $0x28] sm:$0xf]
      %v182 = vld [vmem:[%s165 + $0x2c] sm:$0x1]
      %v183 = vld [vmem:[%s165 + $0x30] sm:$0xf]
      %v184 = vld [vmem:[%s165 + $0x34] sm:$0x1]
      %v185 = vld [vmem:[%s165 + $0x38] sm:$0xf]
      %v186 = vld [vmem:[%s165 + $0x3c] sm:$0x1]
      %v187 = vld [vmem:[%s165 + $0x40] sm:$0xf]
      %v188 = vld [vmem:[%s165 + $0x44] sm:$0x1]
      %v189 = vld [vmem:[%s165 + $0x48] sm:$0xf]
      %v190 = vld [vmem:[%s165 + $0x4c] sm:$0x1]
      %v191 = vld [vmem:[%s1] sm:$0x1]
      %v192 = vunpack.c.l.bf16 %v171
      %v193 = vunpack.c.l.bf16 %v173
      %v194 = vunpack.c.l.bf16 %v175
      %v195 = vunpack.c.l.bf16 %v177
      %v196 = vunpack.c.l.bf16 %v179
      %v197 = vunpack.c.l.bf16 %v181
      %v198 = vunpack.c.l.bf16 %v183
      %v199 = vunpack.c.l.bf16 %v185
      %v201 = vperm.slane %v191, 0
      %v203 = vmul.f32 %v192, %v201
      %v204 = vmul.f32 %v193, %v201
      %v205 = vmul.f32 %v194, %v201
      %v206 = vmul.f32 %v195, %v201
      %v207 = vmul.f32 %v196, %v201
      %v208 = vmul.f32 %v197, %v201
      %v209 = vmul.f32 %v198, %v201
      %v210 = vmul.f32 %v199, %v201
      %s211 = scalar_lea.vmem %s1, 1
      %v212 = vld [vmem:[%s211] sm:$0x1]
      %v213 = vunpack.c.l.bf16 %v172
      %v214 = vunpack.c.l.bf16 %v174
      %v215 = vunpack.c.l.bf16 %v176
      %v216 = vunpack.c.l.bf16 %v178
      %v217 = vunpack.c.l.bf16 %v180
      %v218 = vunpack.c.l.bf16 %v182
      %v219 = vunpack.c.l.bf16 %v184
      %v220 = vunpack.c.l.bf16 %v186
      %v222 = vperm.slane %v212, 0
      %v224 = vmul.f32 %v192, %v222
      %v225 = vmul.f32 %v213, %v222
      %v226 = vmul.f32 %v193, %v222
      %v227 = vmul.f32 %v214, %v222
      %v228 = vmul.f32 %v194, %v222
      %v229 = vmul.f32 %v215, %v222
      %v230 = vmul.f32 %v195, %v222
      %v231 = vmul.f32 %v216, %v222
      %v232 = vmul.f32 %v196, %v222
      %v233 = vmul.f32 %v217, %v222
      %v234 = vmul.f32 %v197, %v222
      %v235 = vmul.f32 %v218, %v222
      %v236 = vmul.f32 %v198, %v222
      %v237 = vmul.f32 %v219, %v222
      %v238 = vmul.f32 %v199, %v222
      %v239 = vmul.f32 %v220, %v222
      %vm256 = vcmask 1046528
      %v257 = vrot.slane %v224, 1
      %v258 = vrot.slane %v225, 1
      %v259 = vsel %vm256, %v257, %v258
      %v260 = vrot.slane %v226, 1
      %v261 = vrot.slane %v227, 1
      %v262 = vsel %vm256, %v260, %v261
      %v263 = vrot.slane %v228, 1
      %v264 = vrot.slane %v229, 1
      %v265 = vsel %vm256, %v263, %v264
      %v266 = vrot.slane %v230, 1
      %v267 = vrot.slane %v231, 1
      %v268 = vsel %vm256, %v266, %v267
      %v269 = vrot.slane %v232, 1
      %v270 = vrot.slane %v233, 1
      %v271 = vsel %vm256, %v269, %v270
      %v272 = vrot.slane %v234, 1
      %v273 = vrot.slane %v235, 1
      %v274 = vsel %vm256, %v272, %v273
      %v275 = vrot.slane %v236, 1
      %v276 = vrot.slane %v237, 1
      %v277 = vsel %vm256, %v275, %v276
      %v278 = vrot.slane %v238, 1
      %v279 = vrot.slane %v239, 1
      %v280 = vsel %vm256, %v278, %v279
      %v289 = vadd.f32 %v203, %v259
      %v290 = vadd.f32 %v204, %v262
      %v291 = vadd.f32 %v205, %v265
      %v292 = vadd.f32 %v206, %v268
      %v293 = vadd.f32 %v207, %v271
      %v294 = vadd.f32 %v208, %v274
      %v295 = vadd.f32 %v209, %v277
      %v296 = vadd.f32 %v210, %v280
      %s297 = scalar_lea.vmem %s1, 2
      %v298 = vld [vmem:[%s297] sm:$0x1]
      %v300 = vperm.slane %v298, 0
      %v302 = vmul.f32 %v192, %v300
      %v303 = vmul.f32 %v213, %v300
      %v304 = vmul.f32 %v193, %v300
      %v305 = vmul.f32 %v214, %v300
      %v306 = vmul.f32 %v194, %v300
      %v307 = vmul.f32 %v215, %v300
      %v308 = vmul.f32 %v195, %v300
      %v309 = vmul.f32 %v216, %v300
      %v310 = vmul.f32 %v196, %v300
      %v311 = vmul.f32 %v217, %v300
      %v312 = vmul.f32 %v197, %v300
      %v313 = vmul.f32 %v218, %v300
      %v314 = vmul.f32 %v198, %v300
      %v315 = vmul.f32 %v219, %v300
      %v316 = vmul.f32 %v199, %v300
      %v317 = vmul.f32 %v220, %v300
      %vm334 = vcmask 1045504
      %v335 = vrot.slane %v302, 2
      %v336 = vrot.slane %v303, 2
      %v337 = vsel %vm334, %v335, %v336
      %v338 = vrot.slane %v304, 2
      %v339 = vrot.slane %v305, 2
      %v340 = vsel %vm334, %v338, %v339
      %v341 = vrot.slane %v306, 2
      %v342 = vrot.slane %v307, 2
      %v343 = vsel %vm334, %v341, %v342
      %v344 = vrot.slane %v308, 2
      %v345 = vrot.slane %v309, 2
      %v346 = vsel %vm334, %v344, %v345
      %v347 = vrot.slane %v310, 2
      %v348 = vrot.slane %v311, 2
      %v349 = vsel %vm334, %v347, %v348
      %v350 = vrot.slane %v312, 2
      %v351 = vrot.slane %v313, 2
      %v352 = vsel %vm334, %v350, %v351
      %v353 = vrot.slane %v314, 2
      %v354 = vrot.slane %v315, 2
      %v355 = vsel %vm334, %v353, %v354
      %v356 = vrot.slane %v316, 2
      %v357 = vrot.slane %v317, 2
      %v358 = vsel %vm334, %v356, %v357
      %v367 = vadd.f32 %v289, %v337
      %v368 = vadd.f32 %v290, %v340
      %v369 = vadd.f32 %v291, %v343
      %v370 = vadd.f32 %v292, %v346
      %v371 = vadd.f32 %v293, %v349
      %v372 = vadd.f32 %v294, %v352
      %v373 = vadd.f32 %v295, %v355
      %v374 = vadd.f32 %v296, %v358
      %s375 = scalar_lea.vmem %s1, 3
      %v376 = vld [vmem:[%s375] sm:$0x1]
      %v377 = vunpack.c.l.bf16 %v187
      %v379 = vperm.slane %v376, 0
      %v381 = vmul.f32 %v193, %v379
      %v382 = vmul.f32 %v194, %v379
      %v383 = vmul.f32 %v195, %v379
      %v384 = vmul.f32 %v196, %v379
      %v385 = vmul.f32 %v197, %v379
      %v386 = vmul.f32 %v198, %v379
      %v387 = vmul.f32 %v199, %v379
      %v388 = vmul.f32 %v377, %v379
      %v389 = vadd.f32 %v367, %v381
      %v390 = vadd.f32 %v368, %v382
      %v391 = vadd.f32 %v369, %v383
      %v392 = vadd.f32 %v370, %v384
      %v393 = vadd.f32 %v371, %v385
      %v394 = vadd.f32 %v372, %v386
      %v395 = vadd.f32 %v373, %v387
      %v396 = vadd.f32 %v374, %v388
      %s397 = scalar_lea.vmem %s1, 4
      %v398 = vld [vmem:[%s397] sm:$0x1]
      %v399 = vunpack.c.l.bf16 %v188
      %v401 = vperm.slane %v398, 0
      %v403 = vmul.f32 %v193, %v401
      %v404 = vmul.f32 %v214, %v401
      %v405 = vmul.f32 %v194, %v401
      %v406 = vmul.f32 %v215, %v401
      %v407 = vmul.f32 %v195, %v401
      %v408 = vmul.f32 %v216, %v401
      %v409 = vmul.f32 %v196, %v401
      %v410 = vmul.f32 %v217, %v401
      %v411 = vmul.f32 %v197, %v401
      %v412 = vmul.f32 %v218, %v401
      %v413 = vmul.f32 %v198, %v401
      %v414 = vmul.f32 %v219, %v401
      %v415 = vmul.f32 %v199, %v401
      %v416 = vmul.f32 %v220, %v401
      %v417 = vmul.f32 %v377, %v401
      %v418 = vmul.f32 %v399, %v401
      %v435 = vrot.slane %v403, 1
      %v436 = vrot.slane %v404, 1
      %v437 = vsel %vm256, %v435, %v436
      %v438 = vrot.slane %v405, 1
      %v439 = vrot.slane %v406, 1
      %v440 = vsel %vm256, %v438, %v439
      %v441 = vrot.slane %v407, 1
      %v442 = vrot.slane %v408, 1
      %v443 = vsel %vm256, %v441, %v442
      %v444 = vrot.slane %v409, 1
      %v445 = vrot.slane %v410, 1
      %v446 = vsel %vm256, %v444, %v445
      %v447 = vrot.slane %v411, 1
      %v448 = vrot.slane %v412, 1
      %v449 = vsel %vm256, %v447, %v448
      %v450 = vrot.slane %v413, 1
      %v451 = vrot.slane %v414, 1
      %v452 = vsel %vm256, %v450, %v451
      %v453 = vrot.slane %v415, 1
      %v454 = vrot.slane %v416, 1
      %v455 = vsel %vm256, %v453, %v454
      %v456 = vrot.slane %v417, 1
      %v457 = vrot.slane %v418, 1
      %v458 = vsel %vm256, %v456, %v457
      %v467 = vadd.f32 %v389, %v437
      %v468 = vadd.f32 %v390, %v440
      %v469 = vadd.f32 %v391, %v443
      %v470 = vadd.f32 %v392, %v446
      %v471 = vadd.f32 %v393, %v449
      %v472 = vadd.f32 %v394, %v452
      %v473 = vadd.f32 %v395, %v455
      %v474 = vadd.f32 %v396, %v458
      %s475 = scalar_lea.vmem %s1, 5
      %v476 = vld [vmem:[%s475] sm:$0x1]
      %v478 = vperm.slane %v476, 0
      %v480 = vmul.f32 %v193, %v478
      %v481 = vmul.f32 %v214, %v478
      %v482 = vmul.f32 %v194, %v478
      %v483 = vmul.f32 %v215, %v478
      %v484 = vmul.f32 %v195, %v478
      %v485 = vmul.f32 %v216, %v478
      %v486 = vmul.f32 %v196, %v478
      %v487 = vmul.f32 %v217, %v478
      %v488 = vmul.f32 %v197, %v478
      %v489 = vmul.f32 %v218, %v478
      %v490 = vmul.f32 %v198, %v478
      %v491 = vmul.f32 %v219, %v478
      %v492 = vmul.f32 %v199, %v478
      %v493 = vmul.f32 %v220, %v478
      %v494 = vmul.f32 %v377, %v478
      %v495 = vmul.f32 %v399, %v478
      %v512 = vrot.slane %v480, 2
      %v513 = vrot.slane %v481, 2
      %v514 = vsel %vm334, %v512, %v513
      %v515 = vrot.slane %v482, 2
      %v516 = vrot.slane %v483, 2
      %v517 = vsel %vm334, %v515, %v516
      %v518 = vrot.slane %v484, 2
      %v519 = vrot.slane %v485, 2
      %v520 = vsel %vm334, %v518, %v519
      %v521 = vrot.slane %v486, 2
      %v522 = vrot.slane %v487, 2
      %v523 = vsel %vm334, %v521, %v522
      %v524 = vrot.slane %v488, 2
      %v525 = vrot.slane %v489, 2
      %v526 = vsel %vm334, %v524, %v525
      %v527 = vrot.slane %v490, 2
      %v528 = vrot.slane %v491, 2
      %v529 = vsel %vm334, %v527, %v528
      %v530 = vrot.slane %v492, 2
      %v531 = vrot.slane %v493, 2
      %v532 = vsel %vm334, %v530, %v531
      %v533 = vrot.slane %v494, 2
      %v534 = vrot.slane %v495, 2
      %v535 = vsel %vm334, %v533, %v534
      %v544 = vadd.f32 %v467, %v514
      %v545 = vadd.f32 %v468, %v517
      %v546 = vadd.f32 %v469, %v520
      %v547 = vadd.f32 %v470, %v523
      %v548 = vadd.f32 %v471, %v526
      %v549 = vadd.f32 %v472, %v529
      %v550 = vadd.f32 %v473, %v532
      %v551 = vadd.f32 %v474, %v535
      %s552 = scalar_lea.vmem %s1, 6
      %v553 = vld [vmem:[%s552] sm:$0x1]
      %v554 = vunpack.c.l.bf16 %v189
      %v556 = vperm.slane %v553, 0
      %v558 = vmul.f32 %v194, %v556
      %v559 = vmul.f32 %v195, %v556
      %v560 = vmul.f32 %v196, %v556
      %v561 = vmul.f32 %v197, %v556
      %v562 = vmul.f32 %v198, %v556
      %v563 = vmul.f32 %v199, %v556
      %v564 = vmul.f32 %v377, %v556
      %v565 = vmul.f32 %v554, %v556
      %v566 = vadd.f32 %v544, %v558
      %v567 = vadd.f32 %v545, %v559
      %v568 = vadd.f32 %v546, %v560
      %v569 = vadd.f32 %v547, %v561
      %v570 = vadd.f32 %v548, %v562
      %v571 = vadd.f32 %v549, %v563
      %v572 = vadd.f32 %v550, %v564
      %v573 = vadd.f32 %v551, %v565
      %s574 = scalar_lea.vmem %s1, 7
      %v575 = vld [vmem:[%s574] sm:$0x1]
      %v576 = vunpack.c.l.bf16 %v190
      %v578 = vperm.slane %v575, 0
      %v580 = vmul.f32 %v194, %v578
      %v581 = vmul.f32 %v215, %v578
      %v582 = vmul.f32 %v195, %v578
      %v583 = vmul.f32 %v216, %v578
      %v584 = vmul.f32 %v196, %v578
      %v585 = vmul.f32 %v217, %v578
      %v586 = vmul.f32 %v197, %v578
      %v587 = vmul.f32 %v218, %v578
      %v588 = vmul.f32 %v198, %v578
      %v589 = vmul.f32 %v219, %v578
      %v590 = vmul.f32 %v199, %v578
      %v591 = vmul.f32 %v220, %v578
      %v592 = vmul.f32 %v377, %v578
      %v593 = vmul.f32 %v399, %v578
      %v594 = vmul.f32 %v554, %v578
      %v595 = vmul.f32 %v576, %v578
      %v612 = vrot.slane %v580, 1
      %v613 = vrot.slane %v581, 1
      %v614 = vsel %vm256, %v612, %v613
      %v615 = vrot.slane %v582, 1
      %v616 = vrot.slane %v583, 1
      %v617 = vsel %vm256, %v615, %v616
      %v618 = vrot.slane %v584, 1
      %v619 = vrot.slane %v585, 1
      %v620 = vsel %vm256, %v618, %v619
      %v621 = vrot.slane %v586, 1
      %v622 = vrot.slane %v587, 1
      %v623 = vsel %vm256, %v621, %v622
      %v624 = vrot.slane %v588, 1
      %v625 = vrot.slane %v589, 1
      %v626 = vsel %vm256, %v624, %v625
      %v627 = vrot.slane %v590, 1
      %v628 = vrot.slane %v591, 1
      %v629 = vsel %vm256, %v627, %v628
      %v630 = vrot.slane %v592, 1
      %v631 = vrot.slane %v593, 1
      %v632 = vsel %vm256, %v630, %v631
      %v633 = vrot.slane %v594, 1
      %v634 = vrot.slane %v595, 1
      %v635 = vsel %vm256, %v633, %v634
      %v644 = vadd.f32 %v566, %v614
      %v645 = vadd.f32 %v567, %v617
      %v646 = vadd.f32 %v568, %v620
      %v647 = vadd.f32 %v569, %v623
      %v648 = vadd.f32 %v570, %v626
      %v649 = vadd.f32 %v571, %v629
      %v650 = vadd.f32 %v572, %v632
      %v651 = vadd.f32 %v573, %v635
      %s652 = scalar_lea.vmem %s1, 8
      %v653 = vld [vmem:[%s652] sm:$0x1]
      %v655 = vperm.slane %v653, 0
      %v657 = vmul.f32 %v194, %v655
      %v658 = vmul.f32 %v215, %v655
      %v659 = vmul.f32 %v195, %v655
      %v660 = vmul.f32 %v216, %v655
      %v661 = vmul.f32 %v196, %v655
      %v662 = vmul.f32 %v217, %v655
      %v663 = vmul.f32 %v197, %v655
      %v664 = vmul.f32 %v218, %v655
      %v665 = vmul.f32 %v198, %v655
      %v666 = vmul.f32 %v219, %v655
      %v667 = vmul.f32 %v199, %v655
      %v668 = vmul.f32 %v220, %v655
      %v669 = vmul.f32 %v377, %v655
      %v670 = vmul.f32 %v399, %v655
      %v671 = vmul.f32 %v554, %v655
      %v672 = vmul.f32 %v576, %v655
      %v689 = vrot.slane %v657, 2
      %v690 = vrot.slane %v658, 2
      %v691 = vsel %vm334, %v689, %v690
      %v692 = vrot.slane %v659, 2
      %v693 = vrot.slane %v660, 2
      %v694 = vsel %vm334, %v692, %v693
      %v695 = vrot.slane %v661, 2
      %v696 = vrot.slane %v662, 2
      %v697 = vsel %vm334, %v695, %v696
      %v698 = vrot.slane %v663, 2
      %v699 = vrot.slane %v664, 2
      %v700 = vsel %vm334, %v698, %v699
      %v701 = vrot.slane %v665, 2
      %v702 = vrot.slane %v666, 2
      %v703 = vsel %vm334, %v701, %v702
      %v704 = vrot.slane %v667, 2
      %v705 = vrot.slane %v668, 2
      %v706 = vsel %vm334, %v704, %v705
      %v707 = vrot.slane %v669, 2
      %v708 = vrot.slane %v670, 2
      %v709 = vsel %vm334, %v707, %v708
      %v710 = vrot.slane %v671, 2
      %v711 = vrot.slane %v672, 2
      %v712 = vsel %vm334, %v710, %v711
      %v721 = vadd.f32 %v644, %v691
      %v722 = vadd.f32 %v645, %v694
      %v723 = vadd.f32 %v646, %v697
      %v724 = vadd.f32 %v647, %v700
      %v725 = vadd.f32 %v648, %v703
      %v726 = vadd.f32 %v649, %v706
      %v727 = vadd.f32 %v650, %v709
      %v728 = vadd.f32 %v651, %v712
      %v729 = vld [vmem:[%s2] sm:$0x1]
      %v731 = vperm.slane %v729, 0
      %v733 = vadd.f32 %v721, %v731
      %v734 = vadd.f32 %v722, %v731
      %v735 = vadd.f32 %v723, %v731
      %v736 = vadd.f32 %v724, %v731
      %v737 = vadd.f32 %v725, %v731
      %v738 = vadd.f32 %v726, %v731
      %v739 = vadd.f32 %v727, %v731
      %v740 = vadd.f32 %v728, %v731
      %v741 = vmax.f32 %v733, 0.0
      %v742 = vmax.f32 %v734, 0.0
      %v743 = vmax.f32 %v735, 0.0
      %v744 = vmax.f32 %v736, 0.0
      %v745 = vmax.f32 %v737, 0.0
      %v746 = vmax.f32 %v738, 0.0
      %v747 = vmax.f32 %v739, 0.0
      %v748 = vmax.f32 %v740, 0.0
      %v749 = vmin.f32 %v741, 6.0
      %v750 = vmin.f32 %v742, 6.0
      %v751 = vmin.f32 %v743, 6.0
      %v752 = vmin.f32 %v744, 6.0
      %v753 = vmin.f32 %v745, 6.0
      %v754 = vmin.f32 %v746, 6.0
      %v755 = vmin.f32 %v747, 6.0
      %v756 = vmin.f32 %v748, 6.0
      %v757 = vpack.c.bf16 %v749, %v749
      %v758 = vpack.c.bf16 %v750, %v750
      %v759 = vpack.c.bf16 %v751, %v751
      %v760 = vpack.c.bf16 %v752, %v752
      %v761 = vpack.c.bf16 %v753, %v753
      %v762 = vpack.c.bf16 %v754, %v754
      %v763 = vpack.c.bf16 %v755, %v755
      %v764 = vpack.c.bf16 %v756, %v756
      %vm765 = vcmask 257024
      %766 = vst.msk [vmem:[%s170] sm:$0xf] %vm765, %v757
      %767 = vst.msk [vmem:[%s170 + $0x4] sm:$0xf] %vm765, %v758
      %768 = vst.msk [vmem:[%s170 + $0x8] sm:$0xf] %vm765, %v759
      %769 = vst.msk [vmem:[%s170 + $0xc] sm:$0xf] %vm765, %v760
      %770 = vst.msk [vmem:[%s170 + $0x10] sm:$0xf] %vm765, %v761
      %771 = vst.msk [vmem:[%s170 + $0x14] sm:$0xf] %vm765, %v762
      %772 = vst.msk [vmem:[%s170 + $0x18] sm:$0xf] %vm765, %v763
      %773 = vst.msk [vmem:[%s170 + $0x1c] sm:$0xf] %vm765, %v764
      %p774 = scmp.lt.s32.totalorder %s14, 1
      %s775 = scalar_select %p774, %s14, 1
      %s776 = smul.addr %s775, 8
      %s777 = smul.addr %s776, 4
      %s778 = scalar_lea.vmem %s3, %s777
      // Predicated region
      $region33: #{forward.33} parent=31 // pred_check
        %p779 = pneg %p100
      $region34: #{forward.33} parent=31 // pred_check_branch
        %781 = sbr.rel (%p779) target = $region36
      $region35: #{forward.33} parent=31 // pred_region
        _
      $region36: #{forward.33} parent=31 // pred_fallthru
        _
    $region32: #{forward.33} parent=5 // pred_fallthru
      _
    %p782 = scmp.le.s32.totalorder 2, %s9
    // Predicated region
    $region37: #{forward.33} parent=5 // pred_check
      %p783 = pneg %p782
    $region38: #{forward.33} parent=5 // pred_check_branch
      %785 = sbr.rel (%p783) target = $region40
    $region39: #{forward.33} parent=5 // pred_region
      %s786 = ssub.s32 %s9, 2
      // Predicated region
      $region41: #{forward.33} parent=39 // pred_check
        %p787 = pneg %p106
      $region42: #{forward.33} parent=39 // pred_check_branch
        %789 = sbr.rel (%p787) target = $region44
      $region43: #{forward.33} parent=39 // pred_region
        %p790 = scmp.lt.s32.totalorder %s15, 1
        %s791 = scalar_select %p790, %s15, 1
        %s792 = smul.addr %s791, 8
        %s793 = smul.addr %s792, 4
        %s794 = scalar_lea.vmem %s3, %s793
      $region44: #{forward.33} parent=39 // pred_fallthru
        _
    $region40: #{forward.33} parent=5 // pred_fallthru
      _
  $region6: #{forward.33} parent=0 // loop_footer
    %s13 = sadd.s32 1, %s9
  $region7: #{forward.33} parent=0 // loop_footer_branch
    %8 = sbr.rel target = $region3
  $region8: #{forward.33} parent=0 // loop_exit
    _

// kernel: forward.34
$region0: #{forward.34}
  #allocation0 [shape = 'u32[]', space=smem, size = 0x4, offset = 0x4, fixed_abs, tag = 'smem constant byte address 0x4 - core index']
  #allocation1 [shape = 'u32[72,128]{1,0:T(1,128)}', space=vmem, size = 0x9000, scoped, tag = 'internal scratch']
  %s0 = inlined_call_operand.vmem [shape: bf16[128,32], index: 0, kind: input, shape index: {}]
  %s1 = inlined_call_operand.vmem [shape: bf16[32,32], index: 1, kind: input, shape index: {}]
  %s2 = inlined_call_operand.vmem [shape: f32[1,32], index: 2, kind: input, shape index: {}]
  %s3 = inlined_call_operand.vmem [shape: bf16[128,32], index: 3, kind: output, shape index: {}]
  %s4 = sld [smem:[#allocation0]]
  $region22: #{forward.34} parent=0
    _
  %s6 = ssub.s32 1, %s4
  %s7 = scalar_select 0, %s6, %s4
  // Predicated region
  $region2: #{forward.34} parent=0 // pred_check
    _
  $region3: #{forward.34} parent=0 // pred_check_branch
    %9 = sbr.rel (0) target = $region5
  $region4: #{forward.34} parent=0 // pred_region
    _
  $region5: #{forward.34} parent=0 // pred_fallthru
    _
  // Predicated region
  $region6: #{forward.34} parent=0 // pred_check
    _
  $region7: #{forward.34} parent=0 // pred_check_branch
    %11 = sbr.rel (0) target = $region9
  $region8: #{forward.34} parent=0 // pred_region
    _
  $region9: #{forward.34} parent=0 // pred_fallthru
    _
  // Predicated region
  $region10: #{forward.34} parent=0 // pred_check
    _
  $region11: #{forward.34} parent=0 // pred_check_branch
    %13 = sbr.rel (0) target = $region13
  $region12: #{forward.34} parent=0 // pred_region
    _
  $region13: #{forward.34} parent=0 // pred_fallthru
    _
  %v15 = vld [vmem:[%s0] sm:$0xf]
  %v16 = vld [vmem:[%s0 + $0x4] sm:$0xf]
  %v17 = vld [vmem:[%s0 + $0x8] sm:$0xf]
  %v18 = vld [vmem:[%s0 + $0xc] sm:$0xf]
  %v19 = vld [vmem:[%s0 + $0x10] sm:$0xf]
  %v20 = vld [vmem:[%s0 + $0x14] sm:$0xf]
  %v21 = vld [vmem:[%s0 + $0x18] sm:$0xf]
  %v22 = vld [vmem:[%s0 + $0x1c] sm:$0xf]
  %v23 = vld [vmem:[%s0 + $0x20] sm:$0xf]
  %v24 = vld [vmem:[%s0 + $0x24] sm:$0xf]
  %v25 = vld [vmem:[%s0 + $0x28] sm:$0xf]
  %v26 = vld [vmem:[%s0 + $0x2c] sm:$0xf]
  %v27 = vld [vmem:[%s0 + $0x30] sm:$0xf]
  %v28 = vld [vmem:[%s0 + $0x34] sm:$0xf]
  %v29 = vld [vmem:[%s0 + $0x38] sm:$0xf]
  %v30 = vld [vmem:[%s0 + $0x3c] sm:$0xf]
  %v31 = vld [vmem:[%s1] sm:$0xf]
  %v32 = vld [vmem:[%s1 + $0x4] sm:$0xf]
  %v33 = vld [vmem:[%s1 + $0x8] sm:$0xf]
  %v34 = vld [vmem:[%s1 + $0xc] sm:$0xf]
  %v35 = vld [vmem:[%s2] sm:$0x1]
  %v37 = vperm.slane %v35, 0
  %v55 = vunpack.c.l.b16 %v15
  %v56 = vunpack.c.l.b16 %v16
  %v57 = vunpack.c.l.b16 %v17
  %v58 = vunpack.c.l.b16 %v18
  %v59 = vunpack.c.l.b16 %v19
  %v60 = vunpack.c.l.b16 %v20
  %v61 = vunpack.c.l.b16 %v21
  %v62 = vunpack.c.l.b16 %v22
  %v63 = vunpack.c.l.b16 %v23
  %v64 = vunpack.c.l.b16 %v24
  %v65 = vunpack.c.l.b16 %v25
  %v66 = vunpack.c.l.b16 %v26
  %v67 = vunpack.c.l.b16 %v27
  %v68 = vunpack.c.l.b16 %v28
  %v69 = vunpack.c.l.b16 %v29
  %v70 = vunpack.c.l.b16 %v30
  %v71 = vpack.c.b16 %v56, %v55
  %v72 = vpack.c.b16 %v58, %v57
  %v73 = vpack.c.b16 %v60, %v59
  %v74 = vpack.c.b16 %v62, %v61
  %v75 = vpack.c.b16 %v64, %v63
  %v76 = vpack.c.b16 %v66, %v65
  %v77 = vpack.c.b16 %v68, %v67
  %v78 = vpack.c.b16 %v70, %v69
  %v83 = vunpack.c.l.b16 %v31
  %v84 = vunpack.c.l.b16 %v32
  %v85 = vunpack.c.l.b16 %v33
  %v86 = vunpack.c.l.b16 %v34
  %v87 = vpack.c.b16 %v84, %v83
  %v88 = vpack.c.b16 %v86, %v85
  %vm91 = vcmask 261120
  %v93 = vsel %vm91, %v71, 0
  %v96 = vsel %vm91, %v72, 0
  %v99 = vsel %vm91, %v73, 0
  %v102 = vsel %vm91, %v74, 0
  %v105 = vsel %vm91, %v75, 0
  %v108 = vsel %vm91, %v76, 0
  %v111 = vsel %vm91, %v77, 0
  %v114 = vsel %vm91, %v78, 0
  %116 = vmatpush.bf16.msra.mxu0 0
  %117 = vmatpush.bf16.msra.mxu0 0
  %118 = vmatpush.bf16.msra.mxu0 0
  %119 = vmatpush.bf16.msra.mxu0 0
  %120 = vmatpush.bf16.msra.mxu0 0
  %121 = vmatpush.bf16.msra.mxu0 0
  %122 = vmatpush.bf16.msra.mxu0 %v88
  %123 = vmatpush.bf16.msra.mxu0 %v87
  %124 = vmatmul.bf16.gmra.mxu0 %v93
  %v125 = vpop.f32.mrf.mxu0
  %v126 = vadd.f32 %v37, %v125
  %v127 = vpop.f32.mrf.mxu0
  %v128 = vadd.f32 %v37, %v127
  %129 = vmatmul.bf16.gmra.mxu0 %v96
  %v130 = vpop.f32.mrf.mxu0
  %v131 = vadd.f32 %v37, %v130
  %v132 = vpop.f32.mrf.mxu0
  %v133 = vadd.f32 %v37, %v132
  %134 = vmatmul.bf16.gmra.mxu0 %v99
  %v135 = vpop.f32.mrf.mxu0
  %v136 = vadd.f32 %v37, %v135
  %v137 = vpop.f32.mrf.mxu0
  %v138 = vadd.f32 %v37, %v137
  %139 = vmatmul.bf16.gmra.mxu0 %v102
  %v140 = vpop.f32.mrf.mxu0
  %v141 = vadd.f32 %v37, %v140
  %v142 = vpop.f32.mrf.mxu0
  %v143 = vadd.f32 %v37, %v142
  %144 = vmatmul.bf16.gmra.mxu0 %v105
  %v145 = vpop.f32.mrf.mxu0
  %v146 = vadd.f32 %v37, %v145
  %v147 = vpop.f32.mrf.mxu0
  %v148 = vadd.f32 %v37, %v147
  %149 = vmatmul.bf16.gmra.mxu0 %v108
  %v150 = vpop.f32.mrf.mxu0
  %v151 = vadd.f32 %v37, %v150
  %v152 = vpop.f32.mrf.mxu0
  %v153 = vadd.f32 %v37, %v152
  %154 = vmatmul.bf16.gmra.mxu0 %v111
  %v155 = vpop.f32.mrf.mxu0
  %v156 = vadd.f32 %v37, %v155
  %v157 = vpop.f32.mrf.mxu0
  %v158 = vadd.f32 %v37, %v157
  %159 = vmatmul.bf16.gmra.mxu0 %v114
  %v160 = vpop.f32.mrf.mxu0
  %v161 = vadd.f32 %v37, %v160
  %v162 = vpop.f32.mrf.mxu0
  %v163 = vadd.f32 %v37, %v162
  %164 = vdwg.mxu0
  %v165 = vmax.f32 %v126, 0.0
  %v166 = vmax.f32 %v128, 0.0
  %v167 = vmax.f32 %v131, 0.0
  %v168 = vmax.f32 %v133, 0.0
  %v169 = vmax.f32 %v136, 0.0
  %v170 = vmax.f32 %v138, 0.0
  %v171 = vmax.f32 %v141, 0.0
  %v172 = vmax.f32 %v143, 0.0
  %v173 = vmax.f32 %v146, 0.0
  %v174 = vmax.f32 %v148, 0.0
  %v175 = vmax.f32 %v151, 0.0
  %v176 = vmax.f32 %v153, 0.0
  %v177 = vmax.f32 %v156, 0.0
  %v178 = vmax.f32 %v158, 0.0
  %v179 = vmax.f32 %v161, 0.0
  %v180 = vmax.f32 %v163, 0.0
  %v181 = vmin.f32 %v165, 6.0
  %v182 = vmin.f32 %v166, 6.0
  %v183 = vmin.f32 %v167, 6.0
  %v184 = vmin.f32 %v168, 6.0
  %v185 = vmin.f32 %v169, 6.0
  %v186 = vmin.f32 %v170, 6.0
  %v187 = vmin.f32 %v171, 6.0
  %v188 = vmin.f32 %v172, 6.0
  %v189 = vmin.f32 %v173, 6.0
  %v190 = vmin.f32 %v174, 6.0
  %v191 = vmin.f32 %v175, 6.0
  %v192 = vmin.f32 %v176, 6.0
  %v193 = vmin.f32 %v177, 6.0
  %v194 = vmin.f32 %v178, 6.0
  %v195 = vmin.f32 %v179, 6.0
  %v196 = vmin.f32 %v180, 6.0
  %v197 = vpack.c.bf16 %v181, %v181
  %v198 = vpack.c.bf16 %v182, %v182
  %v199 = vpack.c.bf16 %v183, %v183
  %v200 = vpack.c.bf16 %v184, %v184
  %v201 = vpack.c.bf16 %v185, %v185
  %v202 = vpack.c.bf16 %v186, %v186
  %v203 = vpack.c.bf16 %v187, %v187
  %v204 = vpack.c.bf16 %v188, %v188
  %v205 = vpack.c.bf16 %v189, %v189
  %v206 = vpack.c.bf16 %v190, %v190
  %v207 = vpack.c.bf16 %v191, %v191
  %v208 = vpack.c.bf16 %v192, %v192
  %v209 = vpack.c.bf16 %v193, %v193
  %v210 = vpack.c.bf16 %v194, %v194
  %v211 = vpack.c.bf16 %v195, %v195
  %v212 = vpack.c.bf16 %v196, %v196
  %vm213 = vcmask 257024
  %214 = vst.msk [vmem:[%s3] sm:$0xf] %vm213, %v197
  %215 = vst.msk [vmem:[%s3 + $0x4] sm:$0xf] %vm213, %v198
  %216 = vst.msk [vmem:[%s3 + $0x8] sm:$0xf] %vm213, %v199
  %217 = vst.msk [vmem:[%s3 + $0xc] sm:$0xf] %vm213, %v200
  %218 = vst.msk [vmem:[%s3 + $0x10] sm:$0xf] %vm213, %v201
  %219 = vst.msk [vmem:[%s3 + $0x14] sm:$0xf] %vm213, %v202
  %220 = vst.msk [vmem:[%s3 + $0x18] sm:$0xf] %vm213, %v203
  %221 = vst.msk [vmem:[%s3 + $0x1c] sm:$0xf] %vm213, %v204
  %222 = vst.msk [vmem:[%s3 + $0x20] sm:$0xf] %vm213, %v205
  %223 = vst.msk [vmem:[%s3 + $0x24] sm:$0xf] %vm213, %v206
  %224 = vst.msk [vmem:[%s3 + $0x28] sm:$0xf] %vm213, %v207
  %225 = vst.msk [vmem:[%s3 + $0x2c] sm:$0xf] %vm213, %v208
  %226 = vst.msk [vmem:[%s3 + $0x30] sm:$0xf] %vm213, %v209
  %227 = vst.msk [vmem:[%s3 + $0x34] sm:$0xf] %vm213, %v210
  %228 = vst.msk [vmem:[%s3 + $0x38] sm:$0xf] %vm213, %v211
  %229 = vst.msk [vmem:[%s3 + $0x3c] sm:$0xf] %vm213, %v212
  // Predicated region
  $region14: #{forward.34} parent=0 // pred_check
    _
  $region15: #{forward.34} parent=0 // pred_check_branch
    %231 = sbr.rel (0) target = $region17
  $region16: #{forward.34} parent=0 // pred_region
    _
  $region17: #{forward.34} parent=0 // pred_fallthru
    _
  // Predicated region
  $region18: #{forward.34} parent=0 // pred_check
    _
  $region19: #{forward.34} parent=0 // pred_check_branch
    %233 = sbr.rel (0) target = $region21
  $region20: #{forward.34} parent=0 // pred_region
    _
  $region21: #{forward.34} parent=0 // pred_fallthru
    _

// kernel: forward.36
$region0: #{forward.36}
  #allocation0 [shape = 'u32[]', space=smem, size = 0x4, offset = 0x4, fixed_abs, tag = 'smem constant byte address 0x4 - core index']
  #allocation1 [shape = 'u32[72,128]{1,0:T(1,128)}', space=vmem, size = 0x9000, scoped, tag = 'internal scratch']
  %s0 = inlined_call_operand.vmem [shape: bf16[32,32], index: 0, kind: input, shape index: {}]
  %s1 = inlined_call_operand.vmem [shape: bf16[32,64], index: 1, kind: input, shape index: {}]
  %s2 = inlined_call_operand.vmem [shape: f32[1,64], index: 2, kind: input, shape index: {}]
  %s3 = inlined_call_operand.vmem [shape: bf16[32,64], index: 3, kind: output, shape index: {}]
  %s4 = sld [smem:[#allocation0]]
  $region22: #{forward.36} parent=0
    _
  %s6 = ssub.s32 1, %s4
  %s7 = scalar_select 0, %s6, %s4
  // Predicated region
  $region2: #{forward.36} parent=0 // pred_check
    _
  $region3: #{forward.36} parent=0 // pred_check_branch
    %9 = sbr.rel (0) target = $region5
  $region4: #{forward.36} parent=0 // pred_region
    _
  $region5: #{forward.36} parent=0 // pred_fallthru
    _
  // Predicated region
  $region6: #{forward.36} parent=0 // pred_check
    _
  $region7: #{forward.36} parent=0 // pred_check_branch
    %11 = sbr.rel (0) target = $region9
  $region8: #{forward.36} parent=0 // pred_region
    _
  $region9: #{forward.36} parent=0 // pred_fallthru
    _
  // Predicated region
  $region10: #{forward.36} parent=0 // pred_check
    _
  $region11: #{forward.36} parent=0 // pred_check_branch
    %13 = sbr.rel (0) target = $region13
  $region12: #{forward.36} parent=0 // pred_region
    _
  $region13: #{forward.36} parent=0 // pred_fallthru
    _
  %v15 = vld [vmem:[%s0] sm:$0xf]
  %v16 = vld [vmem:[%s0 + $0x4] sm:$0xf]
  %v17 = vld [vmem:[%s0 + $0x8] sm:$0xf]
  %v18 = vld [vmem:[%s0 + $0xc] sm:$0xf]
  %v19 = vld [vmem:[%s1] sm:$0xf]
  %v20 = vld [vmem:[%s1 + $0x4] sm:$0xf]
  %v21 = vld [vmem:[%s1 + $0x8] sm:$0xf]
  %v22 = vld [vmem:[%s1 + $0xc] sm:$0xf]
  %v23 = vld [vmem:[%s2] sm:$0x1]
  %v25 = vperm.slane %v23, 0
  %v31 = vunpack.c.l.b16 %v15
  %v32 = vunpack.c.l.b16 %v16
  %v33 = vunpack.c.l.b16 %v17
  %v34 = vunpack.c.l.b16 %v18
  %v35 = vpack.c.b16 %v32, %v31
  %v36 = vpack.c.b16 %v34, %v33
  %v41 = vunpack.c.l.b16 %v19
  %v42 = vunpack.c.l.b16 %v20
  %v43 = vunpack.c.l.b16 %v21
  %v44 = vunpack.c.l.b16 %v22
  %v45 = vpack.c.b16 %v42, %v41
  %v46 = vpack.c.b16 %v44, %v43
  %vm49 = vcmask 261120
  %v51 = vsel %vm49, %v35, 0
  %v54 = vsel %vm49, %v36, 0
  %56 = vmatpush.bf16.msra.mxu0 0
  %57 = vmatpush.bf16.msra.mxu0 0
  %58 = vmatpush.bf16.msra.mxu0 0
  %59 = vmatpush.bf16.msra.mxu0 0
  %60 = vmatpush.bf16.msra.mxu0 0
  %61 = vmatpush.bf16.msra.mxu0 0
  %62 = vmatpush.bf16.msra.mxu0 %v46
  %63 = vmatpush.bf16.msra.mxu0 %v45
  %64 = vmatmul.bf16.gmra.mxu0 %v51
  %v65 = vpop.f32.mrf.mxu0
  %v66 = vadd.f32 %v25, %v65
  %v67 = vpop.f32.mrf.mxu0
  %v68 = vadd.f32 %v25, %v67
  %69 = vmatmul.bf16.gmra.mxu0 %v54
  %v70 = vpop.f32.mrf.mxu0
  %v71 = vadd.f32 %v25, %v70
  %v72 = vpop.f32.mrf.mxu0
  %v73 = vadd.f32 %v25, %v72
  %74 = vdwg.mxu0
  %v75 = vmax.f32 %v66, 0.0
  %v76 = vmax.f32 %v68, 0.0
  %v77 = vmax.f32 %v71, 0.0
  %v78 = vmax.f32 %v73, 0.0
  %v79 = vmin.f32 %v75, 6.0
  %v80 = vmin.f32 %v76, 6.0
  %v81 = vmin.f32 %v77, 6.0
  %v82 = vmin.f32 %v78, 6.0
  %v83 = vpack.c.bf16 %v79, %v79
  %v84 = vpack.c.bf16 %v80, %v80
  %v85 = vpack.c.bf16 %v81, %v81
  %v86 = vpack.c.bf16 %v82, %v82
  %vm87 = vcmask 519168
  %88 = vst.msk [vmem:[%s3] sm:$0xf] %vm87, %v83
  %89 = vst.msk [vmem:[%s3 + $0x4] sm:$0xf] %vm87, %v84
  %90 = vst.msk [vmem:[%s3 + $0x8] sm:$0xf] %vm87, %v85
  %91 = vst.msk [vmem:[%s3 + $0xc] sm:$0xf] %vm87, %v86
  // Predicated region
  $region14: #{forward.36} parent=0 // pred_check
    _
  $region15: #{forward.36} parent=0 // pred_check_branch
    %93 = sbr.rel (0) target = $region17
  $region16: #{forward.36} parent=0 // pred_region
    _
  $region17: #{forward.36} parent=0 // pred_fallthru
    _
  // Predicated region
  $region18: #{forward.36} parent=0 // pred_check
    _
  $region19: #{forward.36} parent=0 // pred_check_branch
    %95 = sbr.rel (0) target = $region21
  $region20: #{forward.36} parent=0 // pred_region
    _
  $region21: #{forward.36} parent=0 // pred_fallthru
    _

// kernel: forward.38
$region0: #{forward.38}
  #allocation0 [shape = 'u32[]', space=smem, size = 0x4, offset = 0x4, fixed_abs, tag = 'smem constant byte address 0x4 - core index']
  #allocation1 [shape = 'u32[72,128]{1,0:T(1,128)}', space=vmem, size = 0x9000, scoped, tag = 'internal scratch']
  %s0 = inlined_call_operand.vmem [shape: bf16[32,64], index: 0, kind: input, shape index: {}]
  %s1 = inlined_call_operand.vmem [shape: bf16[64,64], index: 1, kind: input, shape index: {}]
  %s2 = inlined_call_operand.vmem [shape: f32[1,64], index: 2, kind: input, shape index: {}]
  %s3 = inlined_call_operand.vmem [shape: bf16[32,64], index: 3, kind: output, shape index: {}]
  %s4 = sld [smem:[#allocation0]]
  $region22: #{forward.38} parent=0
    _
  %s6 = ssub.s32 1, %s4
  %s7 = scalar_select 0, %s6, %s4
  // Predicated region
  $region2: #{forward.38} parent=0 // pred_check
    _
  $region3: #{forward.38} parent=0 // pred_check_branch
    %9 = sbr.rel (0) target = $region5
  $region4: #{forward.38} parent=0 // pred_region
    _
  $region5: #{forward.38} parent=0 // pred_fallthru
    _
  // Predicated region
  $region6: #{forward.38} parent=0 // pred_check
    _
  $region7: #{forward.38} parent=0 // pred_check_branch
    %11 = sbr.rel (0) target = $region9
  $region8: #{forward.38} parent=0 // pred_region
    _
  $region9: #{forward.38} parent=0 // pred_fallthru
    _
  // Predicated region
  $region10: #{forward.38} parent=0 // pred_check
    _
  $region11: #{forward.38} parent=0 // pred_check_branch
    %13 = sbr.rel (0) target = $region13
  $region12: #{forward.38} parent=0 // pred_region
    _
  $region13: #{forward.38} parent=0 // pred_fallthru
    _
  %v15 = vld [vmem:[%s0] sm:$0xf]
  %v16 = vld [vmem:[%s0 + $0x4] sm:$0xf]
  %v17 = vld [vmem:[%s0 + $0x8] sm:$0xf]
  %v18 = vld [vmem:[%s0 + $0xc] sm:$0xf]
  %v19 = vld [vmem:[%s1] sm:$0xf]
  %v20 = vld [vmem:[%s1 + $0x4] sm:$0xf]
  %v21 = vld [vmem:[%s1 + $0x8] sm:$0xf]
  %v22 = vld [vmem:[%s1 + $0xc] sm:$0xf]
  %v23 = vld [vmem:[%s1 + $0x10] sm:$0xf]
  %v24 = vld [vmem:[%s1 + $0x14] sm:$0xf]
  %v25 = vld [vmem:[%s1 + $0x18] sm:$0xf]
  %v26 = vld [vmem:[%s1 + $0x1c] sm:$0xf]
  %v27 = vld [vmem:[%s2] sm:$0x1]
  %v29 = vperm.slane %v27, 0
  %v35 = vunpack.c.l.b16 %v15
  %v36 = vunpack.c.l.b16 %v16
  %v37 = vunpack.c.l.b16 %v17
  %v38 = vunpack.c.l.b16 %v18
  %v39 = vpack.c.b16 %v36, %v35
  %v40 = vpack.c.b16 %v38, %v37
  %v49 = vunpack.c.l.b16 %v19
  %v50 = vunpack.c.l.b16 %v20
  %v51 = vunpack.c.l.b16 %v21
  %v52 = vunpack.c.l.b16 %v22
  %v53 = vunpack.c.l.b16 %v23
  %v54 = vunpack.c.l.b16 %v24
  %v55 = vunpack.c.l.b16 %v25
  %v56 = vunpack.c.l.b16 %v26
  %v57 = vpack.c.b16 %v50, %v49
  %v58 = vpack.c.b16 %v52, %v51
  %v59 = vpack.c.b16 %v54, %v53
  %v60 = vpack.c.b16 %v56, %v55
  %vm65 = vcmask 523264
  %v67 = vsel %vm65, %v39, 0
  %v70 = vsel %vm65, %v40, 0
  %72 = vmatpush.bf16.msra.mxu0 0
  %73 = vmatpush.bf16.msra.mxu0 0
  %74 = vmatpush.bf16.msra.mxu0 0
  %75 = vmatpush.bf16.msra.mxu0 0
  %76 = vmatpush.bf16.msra.mxu0 %v60
  %77 = vmatpush.bf16.msra.mxu0 %v59
  %78 = vmatpush.bf16.msra.mxu0 %v58
  %79 = vmatpush.bf16.msra.mxu0 %v57
  %80 = vmatmul.bf16.gmra.mxu0 %v67
  %v81 = vpop.f32.mrf.mxu0
  %v82 = vadd.f32 %v29, %v81
  %v83 = vpop.f32.mrf.mxu0
  %v84 = vadd.f32 %v29, %v83
  %85 = vmatmul.bf16.gmra.mxu0 %v70
  %v86 = vpop.f32.mrf.mxu0
  %v87 = vadd.f32 %v29, %v86
  %v88 = vpop.f32.mrf.mxu0
  %v89 = vadd.f32 %v29, %v88
  %90 = vdwg.mxu0
  %v91 = vmax.f32 %v82, 0.0
  %v92 = vmax.f32 %v84, 0.0
  %v93 = vmax.f32 %v87, 0.0
  %v94 = vmax.f32 %v89, 0.0
  %v95 = vmin.f32 %v91, 6.0
  %v96 = vmin.f32 %v92, 6.0
  %v97 = vmin.f32 %v93, 6.0
  %v98 = vmin.f32 %v94, 6.0
  %v99 = vpack.c.bf16 %v95, %v95
  %v100 = vpack.c.bf16 %v96, %v96
  %v101 = vpack.c.bf16 %v97, %v97
  %v102 = vpack.c.bf16 %v98, %v98
  %vm103 = vcmask 519168
  %104 = vst.msk [vmem:[%s3] sm:$0xf] %vm103, %v99
  %105 = vst.msk [vmem:[%s3 + $0x4] sm:$0xf] %vm103, %v100
  %106 = vst.msk [vmem:[%s3 + $0x8] sm:$0xf] %vm103, %v101
  %107 = vst.msk [vmem:[%s3 + $0xc] sm:$0xf] %vm103, %v102
  // Predicated region
  $region14: #{forward.38} parent=0 // pred_check
    _
  $region15: #{forward.38} parent=0 // pred_check_branch
    %109 = sbr.rel (0) target = $region17
  $region16: #{forward.38} parent=0 // pred_region
    _
  $region17: #{forward.38} parent=0 // pred_fallthru
    _
  // Predicated region
  $region18: #{forward.38} parent=0 // pred_check
    _
  $region19: #{forward.38} parent=0 // pred_check_branch
    %111 = sbr.rel (0) target = $region21
  $region20: #{forward.38} parent=0 // pred_region
    _
  $region21: #{forward.38} parent=0 // pred_fallthru
    _

// kernel: forward.35
$region0: #{forward.35}
  #allocation0 [shape = 'u32[]', space=smem, size = 0x4, offset = 0x4, fixed_abs, tag = 'smem constant byte address 0x4 - core index']
  #allocation1 [shape = 'u32[72,128]{1,0:T(1,128)}', space=vmem, size = 0x9000, scoped, tag = 'internal scratch']
  %s0 = inlined_call_operand.vmem [shape: bf16[2,5,5,32], index: 0, kind: input, shape index: {}]
  %s1 = inlined_call_operand.vmem [shape: bf16[2,5,4,32], index: 1, kind: input, shape index: {}]
  %s2 = inlined_call_operand.vmem [shape: bf16[2,4,5,32], index: 2, kind: input, shape index: {}]
  %s3 = inlined_call_operand.vmem [shape: bf16[2,4,4,32], index: 3, kind: input, shape index: {}]
  %s4 = inlined_call_operand.vmem [shape: f32[9,1,32], index: 4, kind: input, shape index: {}]
  %s5 = inlined_call_operand.vmem [shape: f32[1,32], index: 5, kind: input, shape index: {}]
  %s6 = inlined_call_operand.vmem [shape: bf16[2,4,4,32], index: 6, kind: output, shape index: {}]
  %s7 = sld [smem:[#allocation0]]
  $region57: #{forward.35} parent=0
    _
  %s9 = ssub.s32 1, %s7
  %s10 = scalar_select 0, %s9, %s7
  loop: start=0, step=1, limit=4
  $region2: #{forward.35} parent=0 // loop_pre_header
    _
  $region3: #{forward.35} parent=0 // loop_header
    %s12 = sphi 0, %s16
    %p13 = scmp.ge.s32.totalorder %s12, 4
    %s22 = sphi 0, %s24
    %s25 = sphi 0, %s22
    %s26 = sphi 0, %s25
    %s42 = sphi 0, %s26
    %s48 = sphi 0, %s50
    %s51 = sphi 0, %s48
    %s52 = sphi 0, %s51
    %s68 = sphi 0, %s52
    %s74 = sphi 0, %s76
    %s77 = sphi 0, %s74
    %s78 = sphi 0, %s77
    %s94 = sphi 0, %s78
    %s100 = sphi 0, %s102
    %s103 = sphi 0, %s100
    %s104 = sphi 0, %s103
    %s120 = sphi 0, %s104
    %s124 = sphi 0, %s124
    %s126 = sphi 0, %s124
    %s127 = sphi 0, %s126
    %s141 = sphi 0, %s127
    %s145 = sphi 0, %s145
    %s147 = sphi 0, %s145
    %s148 = sphi 0, %s147
    %s162 = sphi 0, %s148
    %s168 = sphi 0, %s170
    %s171 = sphi 0, %s168
    %s172 = sphi 0, %s171
    %s188 = sphi 0, %s172
  $region4: #{forward.35} parent=0 // loop_header_branch
    %15 = sbr.rel (%p13) target = $region8
  $region5: #{forward.35} parent=0 // loop_body
    %s17 = ssub.s32 %s12, 1
    %s18 = ssub.s32 %s12, 2
    %s19 = sadd.s32 %s12, 1
    %s20 = ssub.s32 %s12, %s19
    %p21 = scmp.eq.s32.totalorder %s20, 0
    %s23 = sadd.s32 %s22, 1
    %s24 = scalar_select %p21, %s22, %s23
    %p27 = pneg %p21
    %p28 = scmp.eq.s32.totalorder %s12, 1
    %p29 = por %p27, %p28
    %p30 = scmp.ne.s32.totalorder %s22, %s25
    %p31 = scmp.eq.s32.totalorder %s12, 0
    %p32 = por %p30, %p31
    %p33 = scmp.ne.s32.totalorder %s22, %s25
    %p34 = scmp.eq.s32.totalorder %s17, 1
    %p35 = por %p33, %p34
    %p36 = scmp.ne.s32.totalorder %s25, %s26
    %p37 = scmp.eq.s32.totalorder %s17, 0
    %p38 = por %p36, %p37
    %p39 = scmp.ne.s32.totalorder %s25, %s26
    %p40 = scmp.eq.s32.totalorder %s18, 1
    %p41 = por %p39, %p40
    %p43 = scmp.ne.s32.totalorder %s26, %s42
    %p44 = scmp.eq.s32.totalorder %s18, 0
    %p45 = por %p43, %p44
    %s46 = ssub.s32 %s12, %s19
    %p47 = scmp.eq.s32.totalorder %s46, 0
    %s49 = sadd.s32 %s48, 1
    %s50 = scalar_select %p47, %s48, %s49
    %p53 = pneg %p47
    %p54 = scmp.eq.s32.totalorder %s12, 1
    %p55 = por %p53, %p54
    %p56 = scmp.ne.s32.totalorder %s48, %s51
    %p57 = scmp.eq.s32.totalorder %s12, 0
    %p58 = por %p56, %p57
    %p59 = scmp.ne.s32.totalorder %s48, %s51
    %p60 = scmp.eq.s32.totalorder %s17, 1
    %p61 = por %p59, %p60
    %p62 = scmp.ne.s32.totalorder %s51, %s52
    %p63 = scmp.eq.s32.totalorder %s17, 0
    %p64 = por %p62, %p63
    %p65 = scmp.ne.s32.totalorder %s51, %s52
    %p66 = scmp.eq.s32.totalorder %s18, 1
    %p67 = por %p65, %p66
    %p69 = scmp.ne.s32.totalorder %s52, %s68
    %p70 = scmp.eq.s32.totalorder %s18, 0
    %p71 = por %p69, %p70
    %s72 = ssub.s32 %s12, %s19
    %p73 = scmp.eq.s32.totalorder %s72, 0
    %s75 = sadd.s32 %s74, 1
    %s76 = scalar_select %p73, %s74, %s75
    %p79 = pneg %p73
    %p80 = scmp.eq.s32.totalorder %s12, 1
    %p81 = por %p79, %p80
    %p82 = scmp.ne.s32.totalorder %s74, %s77
    %p83 = scmp.eq.s32.totalorder %s12, 0
    %p84 = por %p82, %p83
    %p85 = scmp.ne.s32.totalorder %s74, %s77
    %p86 = scmp.eq.s32.totalorder %s17, 1
    %p87 = por %p85, %p86
    %p88 = scmp.ne.s32.totalorder %s77, %s78
    %p89 = scmp.eq.s32.totalorder %s17, 0
    %p90 = por %p88, %p89
    %p91 = scmp.ne.s32.totalorder %s77, %s78
    %p92 = scmp.eq.s32.totalorder %s18, 1
    %p93 = por %p91, %p92
    %p95 = scmp.ne.s32.totalorder %s78, %s94
    %p96 = scmp.eq.s32.totalorder %s18, 0
    %p97 = por %p95, %p96
    %s98 = ssub.s32 %s12, %s19
    %p99 = scmp.eq.s32.totalorder %s98, 0
    %s101 = sadd.s32 %s100, 1
    %s102 = scalar_select %p99, %s100, %s101
    %p105 = pneg %p99
    %p106 = scmp.eq.s32.totalorder %s12, 1
    %p107 = por %p105, %p106
    %p108 = scmp.ne.s32.totalorder %s100, %s103
    %p109 = scmp.eq.s32.totalorder %s12, 0
    %p110 = por %p108, %p109
    %p111 = scmp.ne.s32.totalorder %s100, %s103
    %p112 = scmp.eq.s32.totalorder %s17, 1
    %p113 = por %p111, %p112
    %p114 = scmp.ne.s32.totalorder %s103, %s104
    %p115 = scmp.eq.s32.totalorder %s17, 0
    %p116 = por %p114, %p115
    %p117 = scmp.ne.s32.totalorder %s103, %s104
    %p118 = scmp.eq.s32.totalorder %s18, 1
    %p119 = por %p117, %p118
    %p121 = scmp.ne.s32.totalorder %s104, %s120
    %p122 = scmp.eq.s32.totalorder %s18, 0
    %p123 = por %p121, %p122
    %s125 = sadd.s32 %s124, 1
    %p128 = scmp.eq.s32.totalorder %s12, 1
    %p129 = scmp.ne.s32.totalorder %s124, %s126
    %p130 = scmp.eq.s32.totalorder %s12, 0
    %p131 = por %p129, %p130
    %p132 = scmp.ne.s32.totalorder %s124, %s126
    %p133 = scmp.eq.s32.totalorder %s17, 1
    %p134 = por %p132, %p133
    %p135 = scmp.ne.s32.totalorder %s126, %s127
    %p136 = scmp.eq.s32.totalorder %s17, 0
    %p137 = por %p135, %p136
    %p138 = scmp.ne.s32.totalorder %s126, %s127
    %p139 = scmp.eq.s32.totalorder %s18, 1
    %p140 = por %p138, %p139
    %p142 = scmp.ne.s32.totalorder %s127, %s141
    %p143 = scmp.eq.s32.totalorder %s18, 0
    %p144 = por %p142, %p143
    %s146 = sadd.s32 %s145, 1
    %p149 = scmp.eq.s32.totalorder %s12, 1
    %p150 = scmp.ne.s32.totalorder %s145, %s147
    %p151 = scmp.eq.s32.totalorder %s12, 0
    %p152 = por %p150, %p151
    %p153 = scmp.ne.s32.totalorder %s145, %s147
    %p154 = scmp.eq.s32.totalorder %s17, 1
    %p155 = por %p153, %p154
    %p156 = scmp.ne.s32.totalorder %s147, %s148
    %p157 = scmp.eq.s32.totalorder %s17, 0
    %p158 = por %p156, %p157
    %p159 = scmp.ne.s32.totalorder %s147, %s148
    %p160 = scmp.eq.s32.totalorder %s18, 1
    %p161 = por %p159, %p160
    %p163 = scmp.ne.s32.totalorder %s148, %s162
    %p164 = scmp.eq.s32.totalorder %s18, 0
    %p165 = por %p163, %p164
    %s166 = ssub.s32 %s12, %s19
    %p167 = scmp.eq.s32.totalorder %s166, 0
    %s169 = sadd.s32 %s168, 1
    %s170 = scalar_select %p167, %s168, %s169
    %p173 = pneg %p167
    %p174 = scmp.eq.s32.totalorder %s12, 1
    %p175 = por %p173, %p174
    %p176 = scmp.ne.s32.totalorder %s168, %s171
    %p177 = scmp.eq.s32.totalorder %s12, 0
    %p178 = por %p176, %p177
    %p179 = scmp.ne.s32.totalorder %s168, %s171
    %p180 = scmp.eq.s32.totalorder %s17, 1
    %p181 = por %p179, %p180
    %p182 = scmp.ne.s32.totalorder %s171, %s172
    %p183 = scmp.eq.s32.totalorder %s17, 0
    %p184 = por %p182, %p183
    %p185 = scmp.ne.s32.totalorder %s171, %s172
    %p186 = scmp.eq.s32.totalorder %s18, 1
    %p187 = por %p185, %p186
    %p189 = scmp.ne.s32.totalorder %s172, %s188
    %p190 = scmp.eq.s32.totalorder %s18, 0
    %p191 = por %p189, %p190
    %p192 = scmp.le.s32.totalorder 1, %s12
    %p193 = scmp.lt.s32.totalorder %s12, 3
    %p194 = pnand %p192, %p193
    %p195 = pneg %p194
    // Predicated region
    $region9: #{forward.35} parent=5 // pred_check
      _
    $region10: #{forward.35} parent=5 // pred_check_branch
      %197 = sbr.rel (%p194) target = $region12
    $region11: #{forward.35} parent=5 // pred_region
      %s198 = ssub.s32 %s12, 1
      // Predicated region
      $region13: #{forward.35} parent=11 // pred_check
        %p199 = pneg %p137
      $region14: #{forward.35} parent=11 // pred_check_branch
        %201 = sbr.rel (%p199) target = $region16
      $region15: #{forward.35} parent=11 // pred_region
        _
      $region16: #{forward.35} parent=11 // pred_fallthru
        _
      // Predicated region
      $region17: #{forward.35} parent=11 // pred_check
        %p202 = pneg %p158
      $region18: #{forward.35} parent=11 // pred_check_branch
        %204 = sbr.rel (%p202) target = $region20
      $region19: #{forward.35} parent=11 // pred_region
        _
      $region20: #{forward.35} parent=11 // pred_fallthru
        _
    $region12: #{forward.35} parent=5 // pred_fallthru
      _
    %p205 = scmp.lt.s32.totalorder %s12, 2
    // Predicated region
    $region21: #{forward.35} parent=5 // pred_check
      %p206 = pneg %p205
    $region22: #{forward.35} parent=5 // pred_check_branch
      %208 = sbr.rel (%p206) target = $region24
    $region23: #{forward.35} parent=5 // pred_region
      // Predicated region
      $region25: #{forward.35} parent=23 // pred_check
        %p209 = pneg %p32
      $region26: #{forward.35} parent=23 // pred_check_branch
        %211 = sbr.rel (%p209) target = $region28
      $region27: #{forward.35} parent=23 // pred_region
        %p212 = scmp.lt.s32.totalorder %s12, 1
        %s213 = scalar_select %p212, %s12, 1
        %s214 = smul.addr %s213, 5
        %s215 = smul.addr %s214, 4
        %s216 = scalar_lea.vmem %s0, %s215
      $region28: #{forward.35} parent=23 // pred_fallthru
        _
      // Predicated region
      $region29: #{forward.35} parent=23 // pred_check
        %p217 = pneg %p58
      $region30: #{forward.35} parent=23 // pred_check_branch
        %219 = sbr.rel (%p217) target = $region32
      $region31: #{forward.35} parent=23 // pred_region
        %p220 = scmp.lt.s32.totalorder %s12, 1
        %s221 = scalar_select %p220, %s12, 1
        %s222 = smul.addr %s221, 5
        %s223 = smul.addr %s222, 2
        %s224 = scalar_lea.vmem %s1, %s223
      $region32: #{forward.35} parent=23 // pred_fallthru
        _
      // Predicated region
      $region33: #{forward.35} parent=23 // pred_check
        %p225 = pneg %p84
      $region34: #{forward.35} parent=23 // pred_check_branch
        %227 = sbr.rel (%p225) target = $region36
      $region35: #{forward.35} parent=23 // pred_region
        %p228 = scmp.lt.s32.totalorder %s12, 1
        %s229 = scalar_select %p228, %s12, 1
        %s230 = smul.addr %s229, 4
        %s231 = smul.addr %s230, 4
        %s232 = scalar_lea.vmem %s2, %s231
      $region36: #{forward.35} parent=23 // pred_fallthru
        _
      // Predicated region
      $region37: #{forward.35} parent=23 // pred_check
        %p233 = pneg %p110
      $region38: #{forward.35} parent=23 // pred_check_branch
        %235 = sbr.rel (%p233) target = $region40
      $region39: #{forward.35} parent=23 // pred_region
        %p236 = scmp.lt.s32.totalorder %s12, 1
        %s237 = scalar_select %p236, %s12, 1
        %s238 = smul.addr %s237, 4
        %s239 = smul.addr %s238, 2
        %s240 = scalar_lea.vmem %s3, %s239
      $region40: #{forward.35} parent=23 // pred_fallthru
        _
    $region24: #{forward.35} parent=5 // pred_fallthru
      _
    %p241 = scmp.le.s32.totalorder 1, %s12
    %p242 = scmp.lt.s32.totalorder %s12, 3
    %p243 = pnand %p241, %p242
    %p244 = pneg %p243
    // Predicated region
    $region41: #{forward.35} parent=5 // pred_check
      _
    $region42: #{forward.35} parent=5 // pred_check_branch
      %246 = sbr.rel (%p243) target = $region44
    $region43: #{forward.35} parent=5 // pred_region
      %s247 = ssub.s32 %s12, 1
      %p248 = scmp.lt.s32.totalorder %s17, 1
      %s249 = scalar_select %p248, %s17, 1
      %s250 = smul.addr %s249, 5
      %s251 = smul.addr %s250, 4
      %s252 = scalar_lea.vmem %s0, %s251
      %p253 = pneg %p38
      %p254 = pneg %p35
      %p255 = scmp.lt.s32.totalorder %s17, 1
      %s256 = scalar_select %p255, %s17, 1
      %s257 = smul.addr %s256, 5
      %s258 = smul.addr %s257, 2
      %s259 = scalar_lea.vmem %s1, %s258
      %p260 = pneg %p64
      %p261 = pneg %p61
      %p262 = scmp.lt.s32.totalorder %s17, 1
      %s263 = scalar_select %p262, %s17, 1
      %s264 = smul.addr %s263, 4
      %s265 = smul.addr %s264, 4
      %s266 = scalar_lea.vmem %s2, %s265
      %p267 = pneg %p90
      %p268 = pneg %p87
      %p269 = scmp.lt.s32.totalorder %s17, 1
      %s270 = scalar_select %p269, %s17, 1
      %s271 = smul.addr %s270, 4
      %s272 = smul.addr %s271, 2
      %s273 = scalar_lea.vmem %s3, %s272
      %p274 = pneg %p116
      %p275 = pneg %p113
      %p276 = pneg %p137
      %p277 = pneg %p134
      %p278 = pneg %p158
      %p279 = pneg %p155
      %p280 = pneg %p184
      %p281 = pneg %p181
      %p282 = scmp.lt.s32.totalorder %s17, 1
      %s283 = scalar_select %p282, %s17, 1
      %s284 = smul.addr %s283, 4
      %s285 = smul.addr %s284, 2
      %s286 = scalar_lea.vmem %s6, %s285
      %p287 = scmp.lt.s32.totalorder %s17, 1
      %s288 = scalar_select %p287, %s17, 1
      %s289 = smul.addr %s288, 5
      %s290 = smul.addr %s289, 4
      %s291 = scalar_lea.vmem %s0, %s290
      %p292 = scmp.lt.s32.totalorder %s17, 1
      %s293 = scalar_select %p292, %s17, 1
      %s294 = smul.addr %s293, 5
      %s295 = smul.addr %s294, 2
      %s296 = scalar_lea.vmem %s1, %s295
      %p297 = scmp.lt.s32.totalorder %s17, 1
      %s298 = scalar_select %p297, %s17, 1
      %s299 = smul.addr %s298, 4
      %s300 = smul.addr %s299, 4
      %s301 = scalar_lea.vmem %s2, %s300
      %p302 = scmp.lt.s32.totalorder %s17, 1
      %s303 = scalar_select %p302, %s17, 1
      %s304 = smul.addr %s303, 4
      %s305 = smul.addr %s304, 2
      %s306 = scalar_lea.vmem %s3, %s305
      %p307 = scmp.lt.s32.totalorder %s17, 1
      %s308 = scalar_select %p307, %s17, 1
      %s309 = smul.addr %s308, 4
      %s310 = smul.addr %s309, 2
      %s311 = scalar_lea.vmem %s6, %s310
      %v312 = vld [vmem:[%s291] sm:$0x7]
      %v313 = vld [vmem:[%s291 + $0x4] sm:$0x7]
      %v314 = vld [vmem:[%s291 + $0x8] sm:$0x7]
      %v315 = vld [vmem:[%s291 + $0xc] sm:$0x7]
      %v316 = vld [vmem:[%s291 + $0x10] sm:$0x7]
      %v317 = vld [vmem:[%s296] sm:$0x3]
      %v318 = vld [vmem:[%s296 + $0x2] sm:$0x3]
      %v319 = vld [vmem:[%s296 + $0x4] sm:$0x3]
      %v320 = vld [vmem:[%s296 + $0x6] sm:$0x3]
      %v321 = vld [vmem:[%s296 + $0x8] sm:$0x3]
      %v322 = vld [vmem:[%s301] sm:$0x7]
      %v323 = vld [vmem:[%s301 + $0x4] sm:$0x7]
      %v324 = vld [vmem:[%s301 + $0x8] sm:$0x7]
      %v325 = vld [vmem:[%s301 + $0xc] sm:$0x7]
      %v326 = vld [vmem:[%s306] sm:$0x3]
      %v327 = vld [vmem:[%s306 + $0x2] sm:$0x3]
      %v328 = vld [vmem:[%s306 + $0x4] sm:$0x3]
      %v329 = vld [vmem:[%s306 + $0x6] sm:$0x3]
      %v330 = vld [vmem:[%s4] sm:$0x1]
      %v331 = vunpack.c.l.bf16 %v312
      %v332 = vunpack.c.l.bf16 %v313
      %v333 = vunpack.c.l.bf16 %v314
      %v334 = vunpack.c.l.bf16 %v315
      %v336 = vperm.slane %v330, 0
      %v338 = vmul.f32 %v331, %v336
      %v339 = vmul.f32 %v332, %v336
      %v340 = vmul.f32 %v333, %v336
      %v341 = vmul.f32 %v334, %v336
      %s342 = scalar_lea.vmem %s4, 1
      %v343 = vld [vmem:[%s342] sm:$0x1]
      %v344 = vunpack.c.l.bf16 %v317
      %v345 = vunpack.c.l.bf16 %v318
      %v346 = vunpack.c.l.bf16 %v319
      %v347 = vunpack.c.l.bf16 %v320
      %v349 = vperm.slane %v343, 0
      %v351 = vmul.f32 %v344, %v349
      %v352 = vmul.f32 %v345, %v349
      %v353 = vmul.f32 %v346, %v349
      %v354 = vmul.f32 %v347, %v349
      %v355 = vadd.f32 %v338, %v351
      %v356 = vadd.f32 %v339, %v352
      %v357 = vadd.f32 %v340, %v353
      %v358 = vadd.f32 %v341, %v354
      %s359 = scalar_lea.vmem %s4, 2
      %v360 = vld [vmem:[%s359] sm:$0x1]
      %v362 = vperm.slane %v360, 0
      %v364 = vmul.f32 %v331, %v362
      %v365 = vmul.f32 %v332, %v362
      %v366 = vmul.f32 %v333, %v362
      %v367 = vmul.f32 %v334, %v362
      %v372 = vrot.slane %v364, 1
      %v373 = vrot.slane %v365, 1
      %v374 = vrot.slane %v366, 1
      %v375 = vrot.slane %v367, 1
      %v380 = vadd.f32 %v355, %v372
      %v381 = vadd.f32 %v356, %v373
      %v382 = vadd.f32 %v357, %v374
      %v383 = vadd.f32 %v358, %v375
      %s384 = scalar_lea.vmem %s4, 3
      %v385 = vld [vmem:[%s384] sm:$0x1]
      %v386 = vunpack.c.l.bf16 %v322
      %v387 = vunpack.c.l.bf16 %v323
      %v388 = vunpack.c.l.bf16 %v324
      %v389 = vunpack.c.l.bf16 %v325
      %v391 = vperm.slane %v385, 0
      %v393 = vmul.f32 %v386, %v391
      %v394 = vmul.f32 %v387, %v391
      %v395 = vmul.f32 %v388, %v391
      %v396 = vmul.f32 %v389, %v391
      %v397 = vadd.f32 %v380, %v393
      %v398 = vadd.f32 %v381, %v394
      %v399 = vadd.f32 %v382, %v395
      %v400 = vadd.f32 %v383, %v396
      %s401 = scalar_lea.vmem %s4, 4
      %v402 = vld [vmem:[%s401] sm:$0x1]
      %v403 = vunpack.c.l.bf16 %v326
      %v404 = vunpack.c.l.bf16 %v327
      %v405 = vunpack.c.l.bf16 %v328
      %v406 = vunpack.c.l.bf16 %v329
      %v408 = vperm.slane %v402, 0
      %v410 = vmul.f32 %v403, %v408
      %v411 = vmul.f32 %v404, %v408
      %v412 = vmul.f32 %v405, %v408
      %v413 = vmul.f32 %v406, %v408
      %v414 = vadd.f32 %v397, %v410
      %v415 = vadd.f32 %v398, %v411
      %v416 = vadd.f32 %v399, %v412
      %v417 = vadd.f32 %v400, %v413
      %s418 = scalar_lea.vmem %s4, 5
      %v419 = vld [vmem:[%s418] sm:$0x1]
      %v421 = vperm.slane %v419, 0
      %v423 = vmul.f32 %v386, %v421
      %v424 = vmul.f32 %v387, %v421
      %v425 = vmul.f32 %v388, %v421
      %v426 = vmul.f32 %v389, %v421
      %v431 = vrot.slane %v423, 1
      %v432 = vrot.slane %v424, 1
      %v433 = vrot.slane %v425, 1
      %v434 = vrot.slane %v426, 1
      %v439 = vadd.f32 %v414, %v431
      %v440 = vadd.f32 %v415, %v432
      %v441 = vadd.f32 %v416, %v433
      %v442 = vadd.f32 %v417, %v434
      %s443 = scalar_lea.vmem %s4, 6
      %v444 = vld [vmem:[%s443] sm:$0x1]
      %v445 = vunpack.c.l.bf16 %v316
      %v447 = vperm.slane %v444, 0
      %v449 = vmul.f32 %v332, %v447
      %v450 = vmul.f32 %v333, %v447
      %v451 = vmul.f32 %v334, %v447
      %v452 = vmul.f32 %v445, %v447
      %v453 = vadd.f32 %v439, %v449
      %v454 = vadd.f32 %v440, %v450
      %v455 = vadd.f32 %v441, %v451
      %v456 = vadd.f32 %v442, %v452
      %s457 = scalar_lea.vmem %s4, 7
      %v458 = vld [vmem:[%s457] sm:$0x1]
      %v459 = vunpack.c.l.bf16 %v321
      %v461 = vperm.slane %v458, 0
      %v463 = vmul.f32 %v345, %v461
      %v464 = vmul.f32 %v346, %v461
      %v465 = vmul.f32 %v347, %v461
      %v466 = vmul.f32 %v459, %v461
      %v467 = vadd.f32 %v453, %v463
      %v468 = vadd.f32 %v454, %v464
      %v469 = vadd.f32 %v455, %v465
      %v470 = vadd.f32 %v456, %v466
      %s471 = scalar_lea.vmem %s4, 8
      %v472 = vld [vmem:[%s471] sm:$0x1]
      %v474 = vperm.slane %v472, 0
      %v476 = vmul.f32 %v332, %v474
      %v477 = vmul.f32 %v333, %v474
      %v478 = vmul.f32 %v334, %v474
      %v479 = vmul.f32 %v445, %v474
      %v484 = vrot.slane %v476, 1
      %v485 = vrot.slane %v477, 1
      %v486 = vrot.slane %v478, 1
      %v487 = vrot.slane %v479, 1
      %v492 = vadd.f32 %v467, %v484
      %v493 = vadd.f32 %v468, %v485
      %v494 = vadd.f32 %v469, %v486
      %v495 = vadd.f32 %v470, %v487
      %v496 = vld [vmem:[%s5] sm:$0x1]
      %v498 = vperm.slane %v496, 0
      %v500 = vadd.f32 %v492, %v498
      %v501 = vadd.f32 %v493, %v498
      %v502 = vadd.f32 %v494, %v498
      %v503 = vadd.f32 %v495, %v498
      %v504 = vmax.f32 %v500, 0.0
      %v505 = vmax.f32 %v501, 0.0
      %v506 = vmax.f32 %v502, 0.0
      %v507 = vmax.f32 %v503, 0.0
      %v508 = vmin.f32 %v504, 6.0
      %v509 = vmin.f32 %v505, 6.0
      %v510 = vmin.f32 %v506, 6.0
      %v511 = vmin.f32 %v507, 6.0
      %v512 = vpack.c.bf16 %v508, %v508
      %v513 = vpack.c.bf16 %v509, %v509
      %v514 = vpack.c.bf16 %v510, %v510
      %v515 = vpack.c.bf16 %v511, %v511
      %vm516 = vcmask 254976
      %517 = vst.msk [vmem:[%s311] sm:$0x3] %vm516, %v512
      %518 = vst.msk [vmem:[%s311 + $0x2] sm:$0x3] %vm516, %v513
      %519 = vst.msk [vmem:[%s311 + $0x4] sm:$0x3] %vm516, %v514
      %520 = vst.msk [vmem:[%s311 + $0x6] sm:$0x3] %vm516, %v515
      %p521 = scmp.lt.s32.totalorder %s17, 1
      %s522 = scalar_select %p521, %s17, 1
      %s523 = smul.addr %s522, 4
      %s524 = smul.addr %s523, 2
      %s525 = scalar_lea.vmem %s6, %s524
      // Predicated region
      $region45: #{forward.35} parent=43 // pred_check
        %p526 = pneg %p181
      $region46: #{forward.35} parent=43 // pred_check_branch
        %528 = sbr.rel (%p526) target = $region48
      $region47: #{forward.35} parent=43 // pred_region
        _
      $region48: #{forward.35} parent=43 // pred_fallthru
        _
    $region44: #{forward.35} parent=5 // pred_fallthru
      _
    %p529 = scmp.le.s32.totalorder 2, %s12
    // Predicated region
    $region49: #{forward.35} parent=5 // pred_check
      %p530 = pneg %p529
    $region50: #{forward.35} parent=5 // pred_check_branch
      %532 = sbr.rel (%p530) target = $region52
    $region51: #{forward.35} parent=5 // pred_region
      %s533 = ssub.s32 %s12, 2
      // Predicated region
      $region53: #{forward.35} parent=51 // pred_check
        %p534 = pneg %p187
      $region54: #{forward.35} parent=51 // pred_check_branch
        %536 = sbr.rel (%p534) target = $region56
      $region55: #{forward.35} parent=51 // pred_region
        %p537 = scmp.lt.s32.totalorder %s18, 1
        %s538 = scalar_select %p537, %s18, 1
        %s539 = smul.addr %s538, 4
        %s540 = smul.addr %s539, 2
        %s541 = scalar_lea.vmem %s6, %s540
      $region56: #{forward.35} parent=51 // pred_fallthru
        _
    $region52: #{forward.35} parent=5 // pred_fallthru
      _
  $region6: #{forward.35} parent=0 // loop_footer
    %s16 = sadd.s32 1, %s12
  $region7: #{forward.35} parent=0 // loop_footer_branch
    %11 = sbr.rel target = $region3
  $region8: #{forward.35} parent=0 // loop_exit
    _

// kernel: forward.37
$region0: #{forward.37}
  #allocation0 [shape = 'u32[]', space=smem, size = 0x4, offset = 0x4, fixed_abs, tag = 'smem constant byte address 0x4 - core index']
  #allocation1 [shape = 'u32[72,128]{1,0:T(1,128)}', space=vmem, size = 0x9000, scoped, tag = 'internal scratch']
  %s0 = inlined_call_operand.vmem [shape: bf16[2,6,6,64], index: 0, kind: input, shape index: {}]
  %s1 = inlined_call_operand.vmem [shape: f32[9,1,64], index: 1, kind: input, shape index: {}]
  %s2 = inlined_call_operand.vmem [shape: f32[1,64], index: 2, kind: input, shape index: {}]
  %s3 = inlined_call_operand.vmem [shape: bf16[2,4,4,64], index: 3, kind: output, shape index: {}]
  %s4 = sld [smem:[#allocation0]]
  $region45: #{forward.37} parent=0
    _
  %s6 = ssub.s32 1, %s4
  %s7 = scalar_select 0, %s6, %s4
  loop: start=0, step=1, limit=4
  $region2: #{forward.37} parent=0 // loop_pre_header
    _
  $region3: #{forward.37} parent=0 // loop_header
    %s9 = sphi 0, %s13
    %p10 = scmp.ge.s32.totalorder %s9, 4
    %s19 = sphi 0, %s21
    %s22 = sphi 0, %s19
    %s23 = sphi 0, %s22
    %s39 = sphi 0, %s23
    %s43 = sphi 0, %s43
    %s45 = sphi 0, %s43
    %s46 = sphi 0, %s45
    %s60 = sphi 0, %s46
    %s64 = sphi 0, %s64
    %s66 = sphi 0, %s64
    %s67 = sphi 0, %s66
    %s81 = sphi 0, %s67
    %s87 = sphi 0, %s89
    %s90 = sphi 0, %s87
    %s91 = sphi 0, %s90
    %s107 = sphi 0, %s91
  $region4: #{forward.37} parent=0 // loop_header_branch
    %12 = sbr.rel (%p10) target = $region8
  $region5: #{forward.37} parent=0 // loop_body
    %s14 = ssub.s32 %s9, 1
    %s15 = ssub.s32 %s9, 2
    %s16 = sadd.s32 %s9, 1
    %s17 = ssub.s32 %s9, %s16
    %p18 = scmp.eq.s32.totalorder %s17, 0
    %s20 = sadd.s32 %s19, 1
    %s21 = scalar_select %p18, %s19, %s20
    %p24 = pneg %p18
    %p25 = scmp.eq.s32.totalorder %s9, 1
    %p26 = por %p24, %p25
    %p27 = scmp.ne.s32.totalorder %s19, %s22
    %p28 = scmp.eq.s32.totalorder %s9, 0
    %p29 = por %p27, %p28
    %p30 = scmp.ne.s32.totalorder %s19, %s22
    %p31 = scmp.eq.s32.totalorder %s14, 1
    %p32 = por %p30, %p31
    %p33 = scmp.ne.s32.totalorder %s22, %s23
    %p34 = scmp.eq.s32.totalorder %s14, 0
    %p35 = por %p33, %p34
    %p36 = scmp.ne.s32.totalorder %s22, %s23
    %p37 = scmp.eq.s32.totalorder %s15, 1
    %p38 = por %p36, %p37
    %p40 = scmp.ne.s32.totalorder %s23, %s39
    %p41 = scmp.eq.s32.totalorder %s15, 0
    %p42 = por %p40, %p41
    %s44 = sadd.s32 %s43, 1
    %p47 = scmp.eq.s32.totalorder %s9, 1
    %p48 = scmp.ne.s32.totalorder %s43, %s45
    %p49 = scmp.eq.s32.totalorder %s9, 0
    %p50 = por %p48, %p49
    %p51 = scmp.ne.s32.totalorder %s43, %s45
    %p52 = scmp.eq.s32.totalorder %s14, 1
    %p53 = por %p51, %p52
    %p54 = scmp.ne.s32.totalorder %s45, %s46
    %p55 = scmp.eq.s32.totalorder %s14, 0
    %p56 = por %p54, %p55
    %p57 = scmp.ne.s32.totalorder %s45, %s46
    %p58 = scmp.eq.s32.totalorder %s15, 1
    %p59 = por %p57, %p58
    %p61 = scmp.ne.s32.totalorder %s46, %s60
    %p62 = scmp.eq.s32.totalorder %s15, 0
    %p63 = por %p61, %p62
    %s65 = sadd.s32 %s64, 1
    %p68 = scmp.eq.s32.totalorder %s9, 1
    %p69 = scmp.ne.s32.totalorder %s64, %s66
    %p70 = scmp.eq.s32.totalorder %s9, 0
    %p71 = por %p69, %p70
    %p72 = scmp.ne.s32.totalorder %s64, %s66
    %p73 = scmp.eq.s32.totalorder %s14, 1
    %p74 = por %p72, %p73
    %p75 = scmp.ne.s32.totalorder %s66, %s67
    %p76 = scmp.eq.s32.totalorder %s14, 0
    %p77 = por %p75, %p76
    %p78 = scmp.ne.s32.totalorder %s66, %s67
    %p79 = scmp.eq.s32.totalorder %s15, 1
    %p80 = por %p78, %p79
    %p82 = scmp.ne.s32.totalorder %s67, %s81
    %p83 = scmp.eq.s32.totalorder %s15, 0
    %p84 = por %p82, %p83
    %s85 = ssub.s32 %s9, %s16
    %p86 = scmp.eq.s32.totalorder %s85, 0
    %s88 = sadd.s32 %s87, 1
    %s89 = scalar_select %p86, %s87, %s88
    %p92 = pneg %p86
    %p93 = scmp.eq.s32.totalorder %s9, 1
    %p94 = por %p92, %p93
    %p95 = scmp.ne.s32.totalorder %s87, %s90
    %p96 = scmp.eq.s32.totalorder %s9, 0
    %p97 = por %p95, %p96
    %p98 = scmp.ne.s32.totalorder %s87, %s90
    %p99 = scmp.eq.s32.totalorder %s14, 1
    %p100 = por %p98, %p99
    %p101 = scmp.ne.s32.totalorder %s90, %s91
    %p102 = scmp.eq.s32.totalorder %s14, 0
    %p103 = por %p101, %p102
    %p104 = scmp.ne.s32.totalorder %s90, %s91
    %p105 = scmp.eq.s32.totalorder %s15, 1
    %p106 = por %p104, %p105
    %p108 = scmp.ne.s32.totalorder %s91, %s107
    %p109 = scmp.eq.s32.totalorder %s15, 0
    %p110 = por %p108, %p109
    %p111 = scmp.le.s32.totalorder 1, %s9
    %p112 = scmp.lt.s32.totalorder %s9, 3
    %p113 = pnand %p111, %p112
    %p114 = pneg %p113
    // Predicated region
    $region9: #{forward.37} parent=5 // pred_check
      _
    $region10: #{forward.37} parent=5 // pred_check_branch
      %116 = sbr.rel (%p113) target = $region12
    $region11: #{forward.37} parent=5 // pred_region
      %s117 = ssub.s32 %s9, 1
      // Predicated region
      $region13: #{forward.37} parent=11 // pred_check
        %p118 = pneg %p56
      $region14: #{forward.37} parent=11 // pred_check_branch
        %120 = sbr.rel (%p118) target = $region16
      $region15: #{forward.37} parent=11 // pred_region
        _
      $region16: #{forward.37} parent=11 // pred_fallthru
        _
      // Predicated region
      $region17: #{forward.37} parent=11 // pred_check
        %p121 = pneg %p77
      $region18: #{forward.37} parent=11 // pred_check_branch
        %123 = sbr.rel (%p121) target = $region20
      $region19: #{forward.37} parent=11 // pred_region
        _
      $region20: #{forward.37} parent=11 // pred_fallthru
        _
    $region12: #{forward.37} parent=5 // pred_fallthru
      _
    %p124 = scmp.lt.s32.totalorder %s9, 2
    // Predicated region
    $region21: #{forward.37} parent=5 // pred_check
      %p125 = pneg %p124
    $region22: #{forward.37} parent=5 // pred_check_branch
      %127 = sbr.rel (%p125) target = $region24
    $region23: #{forward.37} parent=5 // pred_region
      // Predicated region
      $region25: #{forward.37} parent=23 // pred_check
        %p128 = pneg %p29
      $region26: #{forward.37} parent=23 // pred_check_branch
        %130 = sbr.rel (%p128) target = $region28
      $region27: #{forward.37} parent=23 // pred_region
        %p131 = scmp.lt.s32.totalorder %s9, 1
        %s132 = scalar_select %p131, %s9, 1
        %s133 = smul.addr %s132, 6
        %s134 = smul.addr %s133, 4
        %s135 = scalar_lea.vmem %s0, %s134
      $region28: #{forward.37} parent=23 // pred_fallthru
        _
    $region24: #{forward.37} parent=5 // pred_fallthru
      _
    %p136 = scmp.le.s32.totalorder 1, %s9
    %p137 = scmp.lt.s32.totalorder %s9, 3
    %p138 = pnand %p136, %p137
    %p139 = pneg %p138
    // Predicated region
    $region29: #{forward.37} parent=5 // pred_check
      _
    $region30: #{forward.37} parent=5 // pred_check_branch
      %141 = sbr.rel (%p138) target = $region32
    $region31: #{forward.37} parent=5 // pred_region
      %s142 = ssub.s32 %s9, 1
      %p143 = scmp.lt.s32.totalorder %s14, 1
      %s144 = scalar_select %p143, %s14, 1
      %s145 = smul.addr %s144, 6
      %s146 = smul.addr %s145, 4
      %s147 = scalar_lea.vmem %s0, %s146
      %p148 = pneg %p35
      %p149 = pneg %p32
      %p150 = pneg %p56
      %p151 = pneg %p53
      %p152 = pneg %p77
      %p153 = pneg %p74
      %p154 = pneg %p103
      %p155 = pneg %p100
      %p156 = scmp.lt.s32.totalorder %s14, 1
      %s157 = scalar_select %p156, %s14, 1
      %s158 = smul.addr %s157, 4
      %s159 = smul.addr %s158, 2
      %s160 = scalar_lea.vmem %s3, %s159
      %p161 = scmp.lt.s32.totalorder %s14, 1
      %s162 = scalar_select %p161, %s14, 1
      %s163 = smul.addr %s162, 6
      %s164 = smul.addr %s163, 4
      %s165 = scalar_lea.vmem %s0, %s164
      %p166 = scmp.lt.s32.totalorder %s14, 1
      %s167 = scalar_select %p166, %s14, 1
      %s168 = smul.addr %s167, 4
      %s169 = smul.addr %s168, 2
      %s170 = scalar_lea.vmem %s3, %s169
      %v171 = vld [vmem:[%s165] sm:$0x7]
      %v172 = vld [vmem:[%s165 + $0x4] sm:$0x7]
      %v173 = vld [vmem:[%s165 + $0x8] sm:$0x7]
      %v174 = vld [vmem:[%s165 + $0xc] sm:$0x7]
      %v175 = vld [vmem:[%s165 + $0x10] sm:$0x7]
      %v176 = vld [vmem:[%s165 + $0x14] sm:$0x7]
      %v177 = vld [vmem:[%s1] sm:$0x1]
      %v178 = vunpack.c.l.bf16 %v171
      %v179 = vunpack.c.l.bf16 %v172
      %v180 = vunpack.c.l.bf16 %v173
      %v181 = vunpack.c.l.bf16 %v174
      %v183 = vperm.slane %v177, 0
      %v185 = vmul.f32 %v178, %v183
      %v186 = vmul.f32 %v179, %v183
      %v187 = vmul.f32 %v180, %v183
      %v188 = vmul.f32 %v181, %v183
      %s189 = scalar_lea.vmem %s1, 1
      %v190 = vld [vmem:[%s189] sm:$0x1]
      %v192 = vperm.slane %v190, 0
      %v194 = vmul.f32 %v178, %v192
      %v195 = vmul.f32 %v179, %v192
      %v196 = vmul.f32 %v180, %v192
      %v197 = vmul.f32 %v181, %v192
      %v202 = vrot.slane %v194, 1
      %v203 = vrot.slane %v195, 1
      %v204 = vrot.slane %v196, 1
      %v205 = vrot.slane %v197, 1
      %v210 = vadd.f32 %v185, %v202
      %v211 = vadd.f32 %v186, %v203
      %v212 = vadd.f32 %v187, %v204
      %v213 = vadd.f32 %v188, %v205
      %s214 = scalar_lea.vmem %s1, 2
      %v215 = vld [vmem:[%s214] sm:$0x1]
      %v217 = vperm.slane %v215, 0
      %v219 = vmul.f32 %v178, %v217
      %v220 = vmul.f32 %v179, %v217
      %v221 = vmul.f32 %v180, %v217
      %v222 = vmul.f32 %v181, %v217
      %v227 = vrot.slane %v219, 2
      %v228 = vrot.slane %v220, 2
      %v229 = vrot.slane %v221, 2
      %v230 = vrot.slane %v222, 2
      %v235 = vadd.f32 %v210, %v227
      %v236 = vadd.f32 %v211, %v228
      %v237 = vadd.f32 %v212, %v229
      %v238 = vadd.f32 %v213, %v230
      %s239 = scalar_lea.vmem %s1, 3
      %v240 = vld [vmem:[%s239] sm:$0x1]
      %v241 = vunpack.c.l.bf16 %v175
      %v243 = vperm.slane %v240, 0
      %v245 = vmul.f32 %v179, %v243
      %v246 = vmul.f32 %v180, %v243
      %v247 = vmul.f32 %v181, %v243
      %v248 = vmul.f32 %v241, %v243
      %v249 = vadd.f32 %v235, %v245
      %v250 = vadd.f32 %v236, %v246
      %v251 = vadd.f32 %v237, %v247
      %v252 = vadd.f32 %v238, %v248
      %s253 = scalar_lea.vmem %s1, 4
      %v254 = vld [vmem:[%s253] sm:$0x1]
      %v256 = vperm.slane %v254, 0
      %v258 = vmul.f32 %v179, %v256
      %v259 = vmul.f32 %v180, %v256
      %v260 = vmul.f32 %v181, %v256
      %v261 = vmul.f32 %v241, %v256
      %v266 = vrot.slane %v258, 1
      %v267 = vrot.slane %v259, 1
      %v268 = vrot.slane %v260, 1
      %v269 = vrot.slane %v261, 1
      %v274 = vadd.f32 %v249, %v266
      %v275 = vadd.f32 %v250, %v267
      %v276 = vadd.f32 %v251, %v268
      %v277 = vadd.f32 %v252, %v269
      %s278 = scalar_lea.vmem %s1, 5
      %v279 = vld [vmem:[%s278] sm:$0x1]
      %v281 = vperm.slane %v279, 0
      %v283 = vmul.f32 %v179, %v281
      %v284 = vmul.f32 %v180, %v281
      %v285 = vmul.f32 %v181, %v281
      %v286 = vmul.f32 %v241, %v281
      %v291 = vrot.slane %v283, 2
      %v292 = vrot.slane %v284, 2
      %v293 = vrot.slane %v285, 2
      %v294 = vrot.slane %v286, 2
      %v299 = vadd.f32 %v274, %v291
      %v300 = vadd.f32 %v275, %v292
      %v301 = vadd.f32 %v276, %v293
      %v302 = vadd.f32 %v277, %v294
      %s303 = scalar_lea.vmem %s1, 6
      %v304 = vld [vmem:[%s303] sm:$0x1]
      %v305 = vunpack.c.l.bf16 %v176
      %v307 = vperm.slane %v304, 0
      %v309 = vmul.f32 %v180, %v307
      %v310 = vmul.f32 %v181, %v307
      %v311 = vmul.f32 %v241, %v307
      %v312 = vmul.f32 %v305, %v307
      %v313 = vadd.f32 %v299, %v309
      %v314 = vadd.f32 %v300, %v310
      %v315 = vadd.f32 %v301, %v311
      %v316 = vadd.f32 %v302, %v312
      %s317 = scalar_lea.vmem %s1, 7
      %v318 = vld [vmem:[%s317] sm:$0x1]
      %v320 = vperm.slane %v318, 0
      %v322 = vmul.f32 %v180, %v320
      %v323 = vmul.f32 %v181, %v320
      %v324 = vmul.f32 %v241, %v320
      %v325 = vmul.f32 %v305, %v320
      %v330 = vrot.slane %v322, 1
      %v331 = vrot.slane %v323, 1
      %v332 = vrot.slane %v324, 1
      %v333 = vrot.slane %v325, 1
      %v338 = vadd.f32 %v313, %v330
      %v339 = vadd.f32 %v314, %v331
      %v340 = vadd.f32 %v315, %v332
      %v341 = vadd.f32 %v316, %v333
      %s342 = scalar_lea.vmem %s1, 8
      %v343 = vld [vmem:[%s342] sm:$0x1]
      %v345 = vperm.slane %v343, 0
      %v347 = vmul.f32 %v180, %v345
      %v348 = vmul.f32 %v181, %v345
      %v349 = vmul.f32 %v241, %v345
      %v350 = vmul.f32 %v305, %v345
      %v355 = vrot.slane %v347, 2
      %v356 = vrot.slane %v348, 2
      %v357 = vrot.slane %v349, 2
      %v358 = vrot.slane %v350, 2
      %v363 = vadd.f32 %v338, %v355
      %v364 = vadd.f32 %v339, %v356
      %v365 = vadd.f32 %v340, %v357
      %v366 = vadd.f32 %v341, %v358
      %v367 = vld [vmem:[%s2] sm:$0x1]
      %v369 = vperm.slane %v367, 0
      %v371 = vadd.f32 %v363, %v369
      %v372 = vadd.f32 %v364, %v369
      %v373 = vadd.f32 %v365, %v369
      %v374 = vadd.f32 %v366, %v369
      %v375 = vmax.f32 %v371, 0.0
      %v376 = vmax.f32 %v372, 0.0
      %v377 = vmax.f32 %v373, 0.0
      %v378 = vmax.f32 %v374, 0.0
      %v379 = vmin.f32 %v375, 6.0
      %v380 = vmin.f32 %v376, 6.0
      %v381 = vmin.f32 %v377, 6.0
      %v382 = vmin.f32 %v378, 6.0
      %v383 = vpack.c.bf16 %v379, %v379
      %v384 = vpack.c.bf16 %v380, %v380
      %v385 = vpack.c.bf16 %v381, %v381
      %v386 = vpack.c.bf16 %v382, %v382
      %vm387 = vcmask 517120
      %388 = vst.msk [vmem:[%s170] sm:$0x3] %vm387, %v383
      %389 = vst.msk [vmem:[%s170 + $0x2] sm:$0x3] %vm387, %v384
      %390 = vst.msk [vmem:[%s170 + $0x4] sm:$0x3] %vm387, %v385
      %391 = vst.msk [vmem:[%s170 + $0x6] sm:$0x3] %vm387, %v386
      %p392 = scmp.lt.s32.totalorder %s14, 1
      %s393 = scalar_select %p392, %s14, 1
      %s394 = smul.addr %s393, 4
      %s395 = smul.addr %s394, 2
      %s396 = scalar_lea.vmem %s3, %s395
      // Predicated region
      $region33: #{forward.37} parent=31 // pred_check
        %p397 = pneg %p100
      $region34: #{forward.37} parent=31 // pred_check_branch
        %399 = sbr.rel (%p397) target = $region36
      $region35: #{forward.37} parent=31 // pred_region
        _
      $region36: #{forward.37} parent=31 // pred_fallthru
        _
    $region32: #{forward.37} parent=5 // pred_fallthru
      _
    %p400 = scmp.le.s32.totalorder 2, %s9
    // Predicated region
    $region37: #{forward.37} parent=5 // pred_check
      %p401 = pneg %p400
    $region38: #{forward.37} parent=5 // pred_check_branch
      %403 = sbr.rel (%p401) target = $region40
    $region39: #{forward.37} parent=5 // pred_region
      %s404 = ssub.s32 %s9, 2
      // Predicated region
      $region41: #{forward.37} parent=39 // pred_check
        %p405 = pneg %p106
      $region42: #{forward.37} parent=39 // pred_check_branch
        %407 = sbr.rel (%p405) target = $region44
      $region43: #{forward.37} parent=39 // pred_region
        %p408 = scmp.lt.s32.totalorder %s15, 1
        %s409 = scalar_select %p408, %s15, 1
        %s410 = smul.addr %s409, 4
        %s411 = smul.addr %s410, 2
        %s412 = scalar_lea.vmem %s3, %s411
      $region44: #{forward.37} parent=39 // pred_fallthru
        _
    $region40: #{forward.37} parent=5 // pred_fallthru
      _
  $region6: #{forward.37} parent=0 // loop_footer
    %s13 = sadd.s32 1, %s9
  $region7: #{forward.37} parent=0 // loop_footer_branch
    %8 = sbr.rel target = $region3
  $region8: #{forward.37} parent=0 // loop_exit
    _

// kernel: forward.40
$region0: #{forward.40}
  #allocation0 [shape = 'u32[]', space=smem, size = 0x4, offset = 0x4, fixed_abs, tag = 'smem constant byte address 0x4 - core index']
  #allocation1 [shape = 'u32[72,128]{1,0:T(1,128)}', space=vmem, size = 0x9000, scoped, tag = 'internal scratch']
  %s0 = inlined_call_operand.vmem [shape: bf16[8,64], index: 0, kind: input, shape index: {}]
  %s1 = inlined_call_operand.vmem [shape: bf16[64,128], index: 1, kind: input, shape index: {}]
  %s2 = inlined_call_operand.vmem [shape: f32[1,128], index: 2, kind: input, shape index: {}]
  %s3 = inlined_call_operand.vmem [shape: bf16[8,128], index: 3, kind: output, shape index: {}]
  %s4 = sld [smem:[#allocation0]]
  $region22: #{forward.40} parent=0
    _
  %s6 = ssub.s32 1, %s4
  %s7 = scalar_select 0, %s6, %s4
  // Predicated region
  $region2: #{forward.40} parent=0 // pred_check
    _
  $region3: #{forward.40} parent=0 // pred_check_branch
    %9 = sbr.rel (0) target = $region5
  $region4: #{forward.40} parent=0 // pred_region
    _
  $region5: #{forward.40} parent=0 // pred_fallthru
    _
  // Predicated region
  $region6: #{forward.40} parent=0 // pred_check
    _
  $region7: #{forward.40} parent=0 // pred_check_branch
    %11 = sbr.rel (0) target = $region9
  $region8: #{forward.40} parent=0 // pred_region
    _
  $region9: #{forward.40} parent=0 // pred_fallthru
    _
  // Predicated region
  $region10: #{forward.40} parent=0 // pred_check
    _
  $region11: #{forward.40} parent=0 // pred_check_branch
    %13 = sbr.rel (0) target = $region13
  $region12: #{forward.40} parent=0 // pred_region
    _
  $region13: #{forward.40} parent=0 // pred_fallthru
    _
  %v15 = vld [vmem:[%s0] sm:$0xf]
  %v16 = vld [vmem:[%s1] sm:$0xf]
  %v17 = vld [vmem:[%s1 + $0x4] sm:$0xf]
  %v18 = vld [vmem:[%s1 + $0x8] sm:$0xf]
  %v19 = vld [vmem:[%s1 + $0xc] sm:$0xf]
  %v20 = vld [vmem:[%s1 + $0x10] sm:$0xf]
  %v21 = vld [vmem:[%s1 + $0x14] sm:$0xf]
  %v22 = vld [vmem:[%s1 + $0x18] sm:$0xf]
  %v23 = vld [vmem:[%s1 + $0x1c] sm:$0xf]
  %v24 = vld [vmem:[%s2] sm:$0x1]
  %v26 = vperm.slane %v24, 0
  %v36 = vunpack.c.l.b16 %v16
  %v37 = vunpack.c.l.b16 %v17
  %v38 = vunpack.c.l.b16 %v18
  %v39 = vunpack.c.l.b16 %v19
  %v40 = vunpack.c.l.b16 %v20
  %v41 = vunpack.c.l.b16 %v21
  %v42 = vunpack.c.l.b16 %v22
  %v43 = vunpack.c.l.b16 %v23
  %v44 = vpack.c.b16 %v37, %v36
  %v45 = vpack.c.b16 %v39, %v38
  %v46 = vpack.c.b16 %v41, %v40
  %v47 = vpack.c.b16 %v43, %v42
  %vm52 = vcmask 523264
  %v54 = vsel %vm52, %v15, 0
  %56 = vmatpush.bf16.msra.mxu0 0
  %57 = vmatpush.bf16.msra.mxu0 0
  %58 = vmatpush.bf16.msra.mxu0 0
  %59 = vmatpush.bf16.msra.mxu0 0
  %60 = vmatpush.bf16.msra.mxu0 %v47
  %61 = vmatpush.bf16.msra.mxu0 %v46
  %62 = vmatpush.bf16.msra.mxu0 %v45
  %63 = vmatpush.bf16.msra.mxu0 %v44
  %64 = vmatmul.bf16.gmra.mxu0 %v54
  %v65 = vpop.f32.mrf.mxu0
  %v66 = vadd.f32 %v26, %v65
  %v67 = vpop.f32.mrf.mxu0
  %68 = vdwg.mxu0
  %v69 = vmax.f32 %v66, 0.0
  %v70 = vmin.f32 %v69, 6.0
  %v71 = vpack.c.bf16 %v70, %v70
  %72 = vst [vmem:[%s3] sm:$0xf] %v71
  // Predicated region
  $region14: #{forward.40} parent=0 // pred_check
    _
  $region15: #{forward.40} parent=0 // pred_check_branch
    %74 = sbr.rel (0) target = $region17
  $region16: #{forward.40} parent=0 // pred_region
    _
  $region17: #{forward.40} parent=0 // pred_fallthru
    _
  // Predicated region
  $region18: #{forward.40} parent=0 // pred_check
    _
  $region19: #{forward.40} parent=0 // pred_check_branch
    %76 = sbr.rel (0) target = $region21
  $region20: #{forward.40} parent=0 // pred_region
    _
  $region21: #{forward.40} parent=0 // pred_fallthru
    _

// kernel: forward.39
$region0: #{forward.39}
  #allocation0 [shape = 'u32[]', space=smem, size = 0x4, offset = 0x4, fixed_abs, tag = 'smem constant byte address 0x4 - core index']
  #allocation1 [shape = 'u32[72,128]{1,0:T(1,128)}', space=vmem, size = 0x9000, scoped, tag = 'internal scratch']
  %s0 = inlined_call_operand.vmem [shape: bf16[2,3,3,64], index: 0, kind: input, shape index: {}]
  %s1 = inlined_call_operand.vmem [shape: bf16[2,3,2,64], index: 1, kind: input, shape index: {}]
  %s2 = inlined_call_operand.vmem [shape: bf16[2,2,3,64], index: 2, kind: input, shape index: {}]
  %s3 = inlined_call_operand.vmem [shape: bf16[2,2,2,64], index: 3, kind: input, shape index: {}]
  %s4 = inlined_call_operand.vmem [shape: f32[9,1,64], index: 4, kind: input, shape index: {}]
  %s5 = inlined_call_operand.vmem [shape: f32[1,64], index: 5, kind: input, shape index: {}]
  %s6 = inlined_call_operand.vmem [shape: bf16[2,2,2,64], index: 6, kind: output, shape index: {}]
  %s7 = sld [smem:[#allocation0]]
  $region57: #{forward.39} parent=0
    _
  %s9 = ssub.s32 1, %s7
  %s10 = scalar_select 0, %s9, %s7
  loop: start=0, step=1, limit=4
  $region2: #{forward.39} parent=0 // loop_pre_header
    _
  $region3: #{forward.39} parent=0 // loop_header
    %s12 = sphi 0, %s16
    %p13 = scmp.ge.s32.totalorder %s12, 4
    %s22 = sphi 0, %s24
    %s25 = sphi 0, %s22
    %s26 = sphi 0, %s25
    %s42 = sphi 0, %s26
    %s48 = sphi 0, %s50
    %s51 = sphi 0, %s48
    %s52 = sphi 0, %s51
    %s68 = sphi 0, %s52
    %s74 = sphi 0, %s76
    %s77 = sphi 0, %s74
    %s78 = sphi 0, %s77
    %s94 = sphi 0, %s78
    %s100 = sphi 0, %s102
    %s103 = sphi 0, %s100
    %s104 = sphi 0, %s103
    %s120 = sphi 0, %s104
    %s124 = sphi 0, %s124
    %s126 = sphi 0, %s124
    %s127 = sphi 0, %s126
    %s141 = sphi 0, %s127
    %s145 = sphi 0, %s145
    %s147 = sphi 0, %s145
    %s148 = sphi 0, %s147
    %s162 = sphi 0, %s148
    %s168 = sphi 0, %s170
    %s171 = sphi 0, %s168
    %s172 = sphi 0, %s171
    %s188 = sphi 0, %s172
  $region4: #{forward.39} parent=0 // loop_header_branch
    %15 = sbr.rel (%p13) target = $region8
  $region5: #{forward.39} parent=0 // loop_body
    %s17 = ssub.s32 %s12, 1
    %s18 = ssub.s32 %s12, 2
    %s19 = sadd.s32 %s12, 1
    %s20 = ssub.s32 %s12, %s19
    %p21 = scmp.eq.s32.totalorder %s20, 0
    %s23 = sadd.s32 %s22, 1
    %s24 = scalar_select %p21, %s22, %s23
    %p27 = pneg %p21
    %p28 = scmp.eq.s32.totalorder %s12, 1
    %p29 = por %p27, %p28
    %p30 = scmp.ne.s32.totalorder %s22, %s25
    %p31 = scmp.eq.s32.totalorder %s12, 0
    %p32 = por %p30, %p31
    %p33 = scmp.ne.s32.totalorder %s22, %s25
    %p34 = scmp.eq.s32.totalorder %s17, 1
    %p35 = por %p33, %p34
    %p36 = scmp.ne.s32.totalorder %s25, %s26
    %p37 = scmp.eq.s32.totalorder %s17, 0
    %p38 = por %p36, %p37
    %p39 = scmp.ne.s32.totalorder %s25, %s26
    %p40 = scmp.eq.s32.totalorder %s18, 1
    %p41 = por %p39, %p40
    %p43 = scmp.ne.s32.totalorder %s26, %s42
    %p44 = scmp.eq.s32.totalorder %s18, 0
    %p45 = por %p43, %p44
    %s46 = ssub.s32 %s12, %s19
    %p47 = scmp.eq.s32.totalorder %s46, 0
    %s49 = sadd.s32 %s48, 1
    %s50 = scalar_select %p47, %s48, %s49
    %p53 = pneg %p47
    %p54 = scmp.eq.s32.totalorder %s12, 1
    %p55 = por %p53, %p54
    %p56 = scmp.ne.s32.totalorder %s48, %s51
    %p57 = scmp.eq.s32.totalorder %s12, 0
    %p58 = por %p56, %p57
    %p59 = scmp.ne.s32.totalorder %s48, %s51
    %p60 = scmp.eq.s32.totalorder %s17, 1
    %p61 = por %p59, %p60
    %p62 = scmp.ne.s32.totalorder %s51, %s52
    %p63 = scmp.eq.s32.totalorder %s17, 0
    %p64 = por %p62, %p63
    %p65 = scmp.ne.s32.totalorder %s51, %s52
    %p66 = scmp.eq.s32.totalorder %s18, 1
    %p67 = por %p65, %p66
    %p69 = scmp.ne.s32.totalorder %s52, %s68
    %p70 = scmp.eq.s32.totalorder %s18, 0
    %p71 = por %p69, %p70
    %s72 = ssub.s32 %s12, %s19
    %p73 = scmp.eq.s32.totalorder %s72, 0
    %s75 = sadd.s32 %s74, 1
    %s76 = scalar_select %p73, %s74, %s75
    %p79 = pneg %p73
    %p80 = scmp.eq.s32.totalorder %s12, 1
    %p81 = por %p79, %p80
    %p82 = scmp.ne.s32.totalorder %s74, %s77
    %p83 = scmp.eq.s32.totalorder %s12, 0
    %p84 = por %p82, %p83
    %p85 = scmp.ne.s32.totalorder %s74, %s77
    %p86 = scmp.eq.s32.totalorder %s17, 1
    %p87 = por %p85, %p86
    %p88 = scmp.ne.s32.totalorder %s77, %s78
    %p89 = scmp.eq.s32.totalorder %s17, 0
    %p90 = por %p88, %p89
    %p91 = scmp.ne.s32.totalorder %s77, %s78
    %p92 = scmp.eq.s32.totalorder %s18, 1
    %p93 = por %p91, %p92
    %p95 = scmp.ne.s32.totalorder %s78, %s94
    %p96 = scmp.eq.s32.totalorder %s18, 0
    %p97 = por %p95, %p96
    %s98 = ssub.s32 %s12, %s19
    %p99 = scmp.eq.s32.totalorder %s98, 0
    %s101 = sadd.s32 %s100, 1
    %s102 = scalar_select %p99, %s100, %s101
    %p105 = pneg %p99
    %p106 = scmp.eq.s32.totalorder %s12, 1
    %p107 = por %p105, %p106
    %p108 = scmp.ne.s32.totalorder %s100, %s103
    %p109 = scmp.eq.s32.totalorder %s12, 0
    %p110 = por %p108, %p109
    %p111 = scmp.ne.s32.totalorder %s100, %s103
    %p112 = scmp.eq.s32.totalorder %s17, 1
    %p113 = por %p111, %p112
    %p114 = scmp.ne.s32.totalorder %s103, %s104
    %p115 = scmp.eq.s32.totalorder %s17, 0
    %p116 = por %p114, %p115
    %p117 = scmp.ne.s32.totalorder %s103, %s104
    %p118 = scmp.eq.s32.totalorder %s18, 1
    %p119 = por %p117, %p118
    %p121 = scmp.ne.s32.totalorder %s104, %s120
    %p122 = scmp.eq.s32.totalorder %s18, 0
    %p123 = por %p121, %p122
    %s125 = sadd.s32 %s124, 1
    %p128 = scmp.eq.s32.totalorder %s12, 1
    %p129 = scmp.ne.s32.totalorder %s124, %s126
    %p130 = scmp.eq.s32.totalorder %s12, 0
    %p131 = por %p129, %p130
    %p132 = scmp.ne.s32.totalorder %s124, %s126
    %p133 = scmp.eq.s32.totalorder %s17, 1
    %p134 = por %p132, %p133
    %p135 = scmp.ne.s32.totalorder %s126, %s127
    %p136 = scmp.eq.s32.totalorder %s17, 0
    %p137 = por %p135, %p136
    %p138 = scmp.ne.s32.totalorder %s126, %s127
    %p139 = scmp.eq.s32.totalorder %s18, 1
    %p140 = por %p138, %p139
    %p142 = scmp.ne.s32.totalorder %s127, %s141
    %p143 = scmp.eq.s32.totalorder %s18, 0
    %p144 = por %p142, %p143
    %s146 = sadd.s32 %s145, 1
    %p149 = scmp.eq.s32.totalorder %s12, 1
    %p150 = scmp.ne.s32.totalorder %s145, %s147
    %p151 = scmp.eq.s32.totalorder %s12, 0
    %p152 = por %p150, %p151
    %p153 = scmp.ne.s32.totalorder %s145, %s147
    %p154 = scmp.eq.s32.totalorder %s17, 1
    %p155 = por %p153, %p154
    %p156 = scmp.ne.s32.totalorder %s147, %s148
    %p157 = scmp.eq.s32.totalorder %s17, 0
    %p158 = por %p156, %p157
    %p159 = scmp.ne.s32.totalorder %s147, %s148
    %p160 = scmp.eq.s32.totalorder %s18, 1
    %p161 = por %p159, %p160
    %p163 = scmp.ne.s32.totalorder %s148, %s162
    %p164 = scmp.eq.s32.totalorder %s18, 0
    %p165 = por %p163, %p164
    %s166 = ssub.s32 %s12, %s19
    %p167 = scmp.eq.s32.totalorder %s166, 0
    %s169 = sadd.s32 %s168, 1
    %s170 = scalar_select %p167, %s168, %s169
    %p173 = pneg %p167
    %p174 = scmp.eq.s32.totalorder %s12, 1
    %p175 = por %p173, %p174
    %p176 = scmp.ne.s32.totalorder %s168, %s171
    %p177 = scmp.eq.s32.totalorder %s12, 0
    %p178 = por %p176, %p177
    %p179 = scmp.ne.s32.totalorder %s168, %s171
    %p180 = scmp.eq.s32.totalorder %s17, 1
    %p181 = por %p179, %p180
    %p182 = scmp.ne.s32.totalorder %s171, %s172
    %p183 = scmp.eq.s32.totalorder %s17, 0
    %p184 = por %p182, %p183
    %p185 = scmp.ne.s32.totalorder %s171, %s172
    %p186 = scmp.eq.s32.totalorder %s18, 1
    %p187 = por %p185, %p186
    %p189 = scmp.ne.s32.totalorder %s172, %s188
    %p190 = scmp.eq.s32.totalorder %s18, 0
    %p191 = por %p189, %p190
    %p192 = scmp.le.s32.totalorder 1, %s12
    %p193 = scmp.lt.s32.totalorder %s12, 3
    %p194 = pnand %p192, %p193
    %p195 = pneg %p194
    // Predicated region
    $region9: #{forward.39} parent=5 // pred_check
      _
    $region10: #{forward.39} parent=5 // pred_check_branch
      %197 = sbr.rel (%p194) target = $region12
    $region11: #{forward.39} parent=5 // pred_region
      %s198 = ssub.s32 %s12, 1
      // Predicated region
      $region13: #{forward.39} parent=11 // pred_check
        %p199 = pneg %p137
      $region14: #{forward.39} parent=11 // pred_check_branch
        %201 = sbr.rel (%p199) target = $region16
      $region15: #{forward.39} parent=11 // pred_region
        _
      $region16: #{forward.39} parent=11 // pred_fallthru
        _
      // Predicated region
      $region17: #{forward.39} parent=11 // pred_check
        %p202 = pneg %p158
      $region18: #{forward.39} parent=11 // pred_check_branch
        %204 = sbr.rel (%p202) target = $region20
      $region19: #{forward.39} parent=11 // pred_region
        _
      $region20: #{forward.39} parent=11 // pred_fallthru
        _
    $region12: #{forward.39} parent=5 // pred_fallthru
      _
    %p205 = scmp.lt.s32.totalorder %s12, 2
    // Predicated region
    $region21: #{forward.39} parent=5 // pred_check
      %p206 = pneg %p205
    $region22: #{forward.39} parent=5 // pred_check_branch
      %208 = sbr.rel (%p206) target = $region24
    $region23: #{forward.39} parent=5 // pred_region
      // Predicated region
      $region25: #{forward.39} parent=23 // pred_check
        %p209 = pneg %p32
      $region26: #{forward.39} parent=23 // pred_check_branch
        %211 = sbr.rel (%p209) target = $region28
      $region27: #{forward.39} parent=23 // pred_region
        %p212 = scmp.lt.s32.totalorder %s12, 1
        %s213 = scalar_select %p212, %s12, 1
        %s214 = smul.addr %s213, 3
        %s215 = smul.addr %s214, 2
        %s216 = scalar_lea.vmem %s0, %s215
      $region28: #{forward.39} parent=23 // pred_fallthru
        _
      // Predicated region
      $region29: #{forward.39} parent=23 // pred_check
        %p217 = pneg %p58
      $region30: #{forward.39} parent=23 // pred_check_branch
        %219 = sbr.rel (%p217) target = $region32
      $region31: #{forward.39} parent=23 // pred_region
        %p220 = scmp.lt.s32.totalorder %s12, 1
        %s221 = scalar_select %p220, %s12, 1
        %s222 = smul.addr %s221, 3
        %s223 = scalar_lea.vmem %s1, %s222
      $region32: #{forward.39} parent=23 // pred_fallthru
        _
      // Predicated region
      $region33: #{forward.39} parent=23 // pred_check
        %p224 = pneg %p84
      $region34: #{forward.39} parent=23 // pred_check_branch
        %226 = sbr.rel (%p224) target = $region36
      $region35: #{forward.39} parent=23 // pred_region
        %p227 = scmp.lt.s32.totalorder %s12, 1
        %s228 = scalar_select %p227, %s12, 1
        %s229 = smul.addr %s228, 2
        %s230 = smul.addr %s229, 2
        %s231 = scalar_lea.vmem %s2, %s230
      $region36: #{forward.39} parent=23 // pred_fallthru
        _
      // Predicated region
      $region37: #{forward.39} parent=23 // pred_check
        %p232 = pneg %p110
      $region38: #{forward.39} parent=23 // pred_check_branch
        %234 = sbr.rel (%p232) target = $region40
      $region39: #{forward.39} parent=23 // pred_region
        %p235 = scmp.lt.s32.totalorder %s12, 1
        %s236 = scalar_select %p235, %s12, 1
        %s237 = smul.addr %s236, 2
        %s238 = scalar_lea.vmem %s3, %s237
      $region40: #{forward.39} parent=23 // pred_fallthru
        _
    $region24: #{forward.39} parent=5 // pred_fallthru
      _
    %p239 = scmp.le.s32.totalorder 1, %s12
    %p240 = scmp.lt.s32.totalorder %s12, 3
    %p241 = pnand %p239, %p240
    %p242 = pneg %p241
    // Predicated region
    $region41: #{forward.39} parent=5 // pred_check
      _
    $region42: #{forward.39} parent=5 // pred_check_branch
      %244 = sbr.rel (%p241) target = $region44
    $region43: #{forward.39} parent=5 // pred_region
      %s245 = ssub.s32 %s12, 1
      %p246 = scmp.lt.s32.totalorder %s17, 1
      %s247 = scalar_select %p246, %s17, 1
      %s248 = smul.addr %s247, 3
      %s249 = smul.addr %s248, 2
      %s250 = scalar_lea.vmem %s0, %s249
      %p251 = pneg %p38
      %p252 = pneg %p35
      %p253 = scmp.lt.s32.totalorder %s17, 1
      %s254 = scalar_select %p253, %s17, 1
      %s255 = smul.addr %s254, 3
      %s256 = scalar_lea.vmem %s1, %s255
      %p257 = pneg %p64
      %p258 = pneg %p61
      %p259 = scmp.lt.s32.totalorder %s17, 1
      %s260 = scalar_select %p259, %s17, 1
      %s261 = smul.addr %s260, 2
      %s262 = smul.addr %s261, 2
      %s263 = scalar_lea.vmem %s2, %s262
      %p264 = pneg %p90
      %p265 = pneg %p87
      %p266 = scmp.lt.s32.totalorder %s17, 1
      %s267 = scalar_select %p266, %s17, 1
      %s268 = smul.addr %s267, 2
      %s269 = scalar_lea.vmem %s3, %s268
      %p270 = pneg %p116
      %p271 = pneg %p113
      %p272 = pneg %p137
      %p273 = pneg %p134
      %p274 = pneg %p158
      %p275 = pneg %p155
      %p276 = pneg %p184
      %p277 = pneg %p181
      %p278 = scmp.lt.s32.totalorder %s17, 1
      %s279 = scalar_select %p278, %s17, 1
      %s280 = smul.addr %s279, 2
      %s281 = scalar_lea.vmem %s6, %s280
      %p282 = scmp.lt.s32.totalorder %s17, 1
      %s283 = scalar_select %p282, %s17, 1
      %s284 = smul.addr %s283, 3
      %s285 = smul.addr %s284, 2
      %s286 = scalar_lea.vmem %s0, %s285
      %p287 = scmp.lt.s32.totalorder %s17, 1
      %s288 = scalar_select %p287, %s17, 1
      %s289 = smul.addr %s288, 3
      %s290 = scalar_lea.vmem %s1, %s289
      %p291 = scmp.lt.s32.totalorder %s17, 1
      %s292 = scalar_select %p291, %s17, 1
      %s293 = smul.addr %s292, 2
      %s294 = smul.addr %s293, 2
      %s295 = scalar_lea.vmem %s2, %s294
      %p296 = scmp.lt.s32.totalorder %s17, 1
      %s297 = scalar_select %p296, %s17, 1
      %s298 = smul.addr %s297, 2
      %s299 = scalar_lea.vmem %s3, %s298
      %p300 = scmp.lt.s32.totalorder %s17, 1
      %s301 = scalar_select %p300, %s17, 1
      %s302 = smul.addr %s301, 2
      %s303 = scalar_lea.vmem %s6, %s302
      %v304 = vld [vmem:[%s286] sm:$0x3]
      %v305 = vld [vmem:[%s286 + $0x2] sm:$0x3]
      %v306 = vld [vmem:[%s286 + $0x4] sm:$0x3]
      %v307 = vld [vmem:[%s290] sm:$0x1]
      %v308 = vld [vmem:[%s290 + $0x1] sm:$0x1]
      %v309 = vld [vmem:[%s290 + $0x2] sm:$0x1]
      %v310 = vld [vmem:[%s295] sm:$0x3]
      %v311 = vld [vmem:[%s295 + $0x2] sm:$0x3]
      %v312 = vld [vmem:[%s299] sm:$0x1]
      %v313 = vld [vmem:[%s299 + $0x1] sm:$0x1]
      %v314 = vld [vmem:[%s4] sm:$0x1]
      %v315 = vunpack.c.l.bf16 %v304
      %v316 = vunpack.c.l.bf16 %v305
      %v318 = vperm.slane %v314, 0
      %v320 = vmul.f32 %v315, %v318
      %v321 = vmul.f32 %v316, %v318
      %s322 = scalar_lea.vmem %s4, 1
      %v323 = vld [vmem:[%s322] sm:$0x1]
      %v324 = vunpack.c.l.bf16 %v307
      %v325 = vunpack.c.l.bf16 %v308
      %v327 = vperm.slane %v323, 0
      %v329 = vmul.f32 %v324, %v327
      %v330 = vmul.f32 %v325, %v327
      %v331 = vadd.f32 %v320, %v329
      %v332 = vadd.f32 %v321, %v330
      %s333 = scalar_lea.vmem %s4, 2
      %v334 = vld [vmem:[%s333] sm:$0x1]
      %v336 = vperm.slane %v334, 0
      %v338 = vmul.f32 %v315, %v336
      %v339 = vmul.f32 %v316, %v336
      %v342 = vrot.slane %v338, 5
      %v343 = vrot.slane %v342, 4
      %v344 = vrot.slane %v339, 5
      %v345 = vrot.slane %v344, 4
      %v348 = vadd.f32 %v331, %v343
      %v349 = vadd.f32 %v332, %v345
      %s350 = scalar_lea.vmem %s4, 3
      %v351 = vld [vmem:[%s350] sm:$0x1]
      %v352 = vunpack.c.l.bf16 %v310
      %v353 = vunpack.c.l.bf16 %v311
      %v355 = vperm.slane %v351, 0
      %v357 = vmul.f32 %v352, %v355
      %v358 = vmul.f32 %v353, %v355
      %v359 = vadd.f32 %v348, %v357
      %v360 = vadd.f32 %v349, %v358
      %s361 = scalar_lea.vmem %s4, 4
      %v362 = vld [vmem:[%s361] sm:$0x1]
      %v363 = vunpack.c.l.bf16 %v312
      %v364 = vunpack.c.l.bf16 %v313
      %v366 = vperm.slane %v362, 0
      %v368 = vmul.f32 %v363, %v366
      %v369 = vmul.f32 %v364, %v366
      %v370 = vadd.f32 %v359, %v368
      %v371 = vadd.f32 %v360, %v369
      %s372 = scalar_lea.vmem %s4, 5
      %v373 = vld [vmem:[%s372] sm:$0x1]
      %v375 = vperm.slane %v373, 0
      %v377 = vmul.f32 %v352, %v375
      %v378 = vmul.f32 %v353, %v375
      %v381 = vrot.slane %v377, 5
      %v382 = vrot.slane %v381, 4
      %v383 = vrot.slane %v378, 5
      %v384 = vrot.slane %v383, 4
      %v387 = vadd.f32 %v370, %v382
      %v388 = vadd.f32 %v371, %v384
      %s389 = scalar_lea.vmem %s4, 6
      %v390 = vld [vmem:[%s389] sm:$0x1]
      %v391 = vunpack.c.l.bf16 %v306
      %v393 = vperm.slane %v390, 0
      %v395 = vmul.f32 %v316, %v393
      %v396 = vmul.f32 %v391, %v393
      %v397 = vadd.f32 %v387, %v395
      %v398 = vadd.f32 %v388, %v396
      %s399 = scalar_lea.vmem %s4, 7
      %v400 = vld [vmem:[%s399] sm:$0x1]
      %v401 = vunpack.c.l.bf16 %v309
      %v403 = vperm.slane %v400, 0
      %v405 = vmul.f32 %v325, %v403
      %v406 = vmul.f32 %v401, %v403
      %v407 = vadd.f32 %v397, %v405
      %v408 = vadd.f32 %v398, %v406
      %s409 = scalar_lea.vmem %s4, 8
      %v410 = vld [vmem:[%s409] sm:$0x1]
      %v412 = vperm.slane %v410, 0
      %v414 = vmul.f32 %v316, %v412
      %v415 = vmul.f32 %v391, %v412
      %v418 = vrot.slane %v414, 5
      %v419 = vrot.slane %v418, 4
      %v420 = vrot.slane %v415, 5
      %v421 = vrot.slane %v420, 4
      %v424 = vadd.f32 %v407, %v419
      %v425 = vadd.f32 %v408, %v421
      %v426 = vld [vmem:[%s5] sm:$0x1]
      %v428 = vperm.slane %v426, 0
      %v430 = vadd.f32 %v424, %v428
      %v431 = vadd.f32 %v425, %v428
      %v432 = vmax.f32 %v430, 0.0
      %v433 = vmax.f32 %v431, 0.0
      %v434 = vmin.f32 %v432, 6.0
      %v435 = vmin.f32 %v433, 6.0
      %v436 = vpack.c.bf16 %v434, %v434
      %v437 = vpack.c.bf16 %v435, %v435
      %vm438 = vcmask 516096
      %439 = vst.msk [vmem:[%s303] sm:$0x1] %vm438, %v436
      %440 = vst.msk [vmem:[%s303 + $0x1] sm:$0x1] %vm438, %v437
      %p441 = scmp.lt.s32.totalorder %s17, 1
      %s442 = scalar_select %p441, %s17, 1
      %s443 = smul.addr %s442, 2
      %s444 = scalar_lea.vmem %s6, %s443
      // Predicated region
      $region45: #{forward.39} parent=43 // pred_check
        %p445 = pneg %p181
      $region46: #{forward.39} parent=43 // pred_check_branch
        %447 = sbr.rel (%p445) target = $region48
      $region47: #{forward.39} parent=43 // pred_region
        _
      $region48: #{forward.39} parent=43 // pred_fallthru
        _
    $region44: #{forward.39} parent=5 // pred_fallthru
      _
    %p448 = scmp.le.s32.totalorder 2, %s12
    // Predicated region
    $region49: #{forward.39} parent=5 // pred_check
      %p449 = pneg %p448
    $region50: #{forward.39} parent=5 // pred_check_branch
      %451 = sbr.rel (%p449) target = $region52
    $region51: #{forward.39} parent=5 // pred_region
      %s452 = ssub.s32 %s12, 2
      // Predicated region
      $region53: #{forward.39} parent=51 // pred_check
        %p453 = pneg %p187
      $region54: #{forward.39} parent=51 // pred_check_branch
        %455 = sbr.rel (%p453) target = $region56
      $region55: #{forward.39} parent=51 // pred_region
        %p456 = scmp.lt.s32.totalorder %s18, 1
        %s457 = scalar_select %p456, %s18, 1
        %s458 = smul.addr %s457, 2
        %s459 = scalar_lea.vmem %s6, %s458
      $region56: #{forward.39} parent=51 // pred_fallthru
        _
    $region52: #{forward.39} parent=5 // pred_fallthru
      _
  $region6: #{forward.39} parent=0 // loop_footer
    %s16 = sadd.s32 1, %s12
  $region7: #{forward.39} parent=0 // loop_footer_branch
    %11 = sbr.rel target = $region3
  $region8: #{forward.39} parent=0 // loop_exit
    _

// kernel: forward.42
$region0: #{forward.42}
  #allocation0 [shape = 'u32[]', space=smem, size = 0x4, offset = 0x4, fixed_abs, tag = 'smem constant byte address 0x4 - core index']
  #allocation1 [shape = 'u32[72,128]{1,0:T(1,128)}', space=vmem, size = 0x9000, scoped, tag = 'internal scratch']
  %s0 = inlined_call_operand.vmem [shape: bf16[8,128], index: 0, kind: input, shape index: {}]
  %s1 = inlined_call_operand.vmem [shape: bf16[128,128], index: 1, kind: input, shape index: {}]
  %s2 = inlined_call_operand.vmem [shape: f32[1,128], index: 2, kind: input, shape index: {}]
  %s3 = inlined_call_operand.vmem [shape: bf16[8,128], index: 3, kind: output, shape index: {}]
  %s4 = sld [smem:[#allocation0]]
  $region22: #{forward.42} parent=0
    _
  %s6 = ssub.s32 1, %s4
  %s7 = scalar_select 0, %s6, %s4
  // Predicated region
  $region2: #{forward.42} parent=0 // pred_check
    _
  $region3: #{forward.42} parent=0 // pred_check_branch
    %9 = sbr.rel (0) target = $region5
  $region4: #{forward.42} parent=0 // pred_region
    _
  $region5: #{forward.42} parent=0 // pred_fallthru
    _
  // Predicated region
  $region6: #{forward.42} parent=0 // pred_check
    _
  $region7: #{forward.42} parent=0 // pred_check_branch
    %11 = sbr.rel (0) target = $region9
  $region8: #{forward.42} parent=0 // pred_region
    _
  $region9: #{forward.42} parent=0 // pred_fallthru
    _
  // Predicated region
  $region10: #{forward.42} parent=0 // pred_check
    _
  $region11: #{forward.42} parent=0 // pred_check_branch
    %13 = sbr.rel (0) target = $region13
  $region12: #{forward.42} parent=0 // pred_region
    _
  $region13: #{forward.42} parent=0 // pred_fallthru
    _
  %v14 = vld [vmem:[%s0] sm:$0xf]
  %v15 = vld [vmem:[%s1] sm:$0xf]
  %v16 = vld [vmem:[%s1 + $0x4] sm:$0xf]
  %v17 = vld [vmem:[%s1 + $0x8] sm:$0xf]
  %v18 = vld [vmem:[%s1 + $0xc] sm:$0xf]
  %v19 = vld [vmem:[%s1 + $0x10] sm:$0xf]
  %v20 = vld [vmem:[%s1 + $0x14] sm:$0xf]
  %v21 = vld [vmem:[%s1 + $0x18] sm:$0xf]
  %v22 = vld [vmem:[%s1 + $0x1c] sm:$0xf]
  %v23 = vld [vmem:[%s1 + $0x20] sm:$0xf]
  %v24 = vld [vmem:[%s1 + $0x24] sm:$0xf]
  %v25 = vld [vmem:[%s1 + $0x28] sm:$0xf]
  %v26 = vld [vmem:[%s1 + $0x2c] sm:$0xf]
  %v27 = vld [vmem:[%s1 + $0x30] sm:$0xf]
  %v28 = vld [vmem:[%s1 + $0x34] sm:$0xf]
  %v29 = vld [vmem:[%s1 + $0x38] sm:$0xf]
  %v30 = vld [vmem:[%s1 + $0x3c] sm:$0xf]
  %v31 = vld [vmem:[%s2] sm:$0x1]
  %v33 = vperm.slane %v31, 0
  %v51 = vunpack.c.l.b16 %v15
  %v52 = vunpack.c.l.b16 %v16
  %v53 = vunpack.c.l.b16 %v17
  %v54 = vunpack.c.l.b16 %v18
  %v55 = vunpack.c.l.b16 %v19
  %v56 = vunpack.c.l.b16 %v20
  %v57 = vunpack.c.l.b16 %v21
  %v58 = vunpack.c.l.b16 %v22
  %v59 = vunpack.c.l.b16 %v23
  %v60 = vunpack.c.l.b16 %v24
  %v61 = vunpack.c.l.b16 %v25
  %v62 = vunpack.c.l.b16 %v26
  %v63 = vunpack.c.l.b16 %v27
  %v64 = vunpack.c.l.b16 %v28
  %v65 = vunpack.c.l.b16 %v29
  %v66 = vunpack.c.l.b16 %v30
  %v67 = vpack.c.b16 %v52, %v51
  %v68 = vpack.c.b16 %v54, %v53
  %v69 = vpack.c.b16 %v56, %v55
  %v70 = vpack.c.b16 %v58, %v57
  %v71 = vpack.c.b16 %v60, %v59
  %v72 = vpack.c.b16 %v62, %v61
  %v73 = vpack.c.b16 %v64, %v63
  %v74 = vpack.c.b16 %v66, %v65
  %83 = vmatpush.bf16.msra.mxu0 %v74
  %84 = vmatpush.bf16.msra.mxu0 %v73
  %85 = vmatpush.bf16.msra.mxu0 %v72
  %86 = vmatpush.bf16.msra.mxu0 %v71
  %87 = vmatpush.bf16.msra.mxu0 %v70
  %88 = vmatpush.bf16.msra.mxu0 %v69
  %89 = vmatpush.bf16.msra.mxu0 %v68
  %90 = vmatpush.bf16.msra.mxu0 %v67
  %91 = vmatmul.bf16.gmra.mxu0 %v14
  %v92 = vpop.f32.mrf.mxu0
  %v93 = vadd.f32 %v33, %v92
  %v94 = vpop.f32.mrf.mxu0
  %95 = vdwg.mxu0
  %v96 = vmax.f32 %v93, 0.0
  %v97 = vmin.f32 %v96, 6.0
  %v98 = vpack.c.bf16 %v97, %v97
  %99 = vst [vmem:[%s3] sm:$0xf] %v98
  // Predicated region
  $region14: #{forward.42} parent=0 // pred_check
    _
  $region15: #{forward.42} parent=0 // pred_check_branch
    %101 = sbr.rel (0) target = $region17
  $region16: #{forward.42} parent=0 // pred_region
    _
  $region17: #{forward.42} parent=0 // pred_fallthru
    _
  // Predicated region
  $region18: #{forward.42} parent=0 // pred_check
    _
  $region19: #{forward.42} parent=0 // pred_check_branch
    %103 = sbr.rel (0) target = $region21
  $region20: #{forward.42} parent=0 // pred_region
    _
  $region21: #{forward.42} parent=0 // pred_fallthru
    _

// kernel: forward.41
$region0: #{forward.41}
  #allocation0 [shape = 'u32[]', space=smem, size = 0x4, offset = 0x4, fixed_abs, tag = 'smem constant byte address 0x4 - core index']
  #allocation1 [shape = 'u32[72,128]{1,0:T(1,128)}', space=vmem, size = 0x9000, scoped, tag = 'internal scratch']
  %s0 = inlined_call_operand.vmem [shape: bf16[2,4,4,128], index: 0, kind: input, shape index: {}]
  %s1 = inlined_call_operand.vmem [shape: f32[9,1,128], index: 1, kind: input, shape index: {}]
  %s2 = inlined_call_operand.vmem [shape: f32[1,128], index: 2, kind: input, shape index: {}]
  %s3 = inlined_call_operand.vmem [shape: bf16[2,2,2,128], index: 3, kind: output, shape index: {}]
  %s4 = sld [smem:[#allocation0]]
  $region45: #{forward.41} parent=0
    _
  %s6 = ssub.s32 1, %s4
  %s7 = scalar_select 0, %s6, %s4
  loop: start=0, step=1, limit=4
  $region2: #{forward.41} parent=0 // loop_pre_header
    _
  $region3: #{forward.41} parent=0 // loop_header
    %s9 = sphi 0, %s13
    %p10 = scmp.ge.s32.totalorder %s9, 4
    %s19 = sphi 0, %s21
    %s22 = sphi 0, %s19
    %s23 = sphi 0, %s22
    %s39 = sphi 0, %s23
    %s43 = sphi 0, %s43
    %s45 = sphi 0, %s43
    %s46 = sphi 0, %s45
    %s60 = sphi 0, %s46
    %s64 = sphi 0, %s64
    %s66 = sphi 0, %s64
    %s67 = sphi 0, %s66
    %s81 = sphi 0, %s67
    %s87 = sphi 0, %s89
    %s90 = sphi 0, %s87
    %s91 = sphi 0, %s90
    %s107 = sphi 0, %s91
  $region4: #{forward.41} parent=0 // loop_header_branch
    %12 = sbr.rel (%p10) target = $region8
  $region5: #{forward.41} parent=0 // loop_body
    %s14 = ssub.s32 %s9, 1
    %s15 = ssub.s32 %s9, 2
    %s16 = sadd.s32 %s9, 1
    %s17 = ssub.s32 %s9, %s16
    %p18 = scmp.eq.s32.totalorder %s17, 0
    %s20 = sadd.s32 %s19, 1
    %s21 = scalar_select %p18, %s19, %s20
    %p24 = pneg %p18
    %p25 = scmp.eq.s32.totalorder %s9, 1
    %p26 = por %p24, %p25
    %p27 = scmp.ne.s32.totalorder %s19, %s22
    %p28 = scmp.eq.s32.totalorder %s9, 0
    %p29 = por %p27, %p28
    %p30 = scmp.ne.s32.totalorder %s19, %s22
    %p31 = scmp.eq.s32.totalorder %s14, 1
    %p32 = por %p30, %p31
    %p33 = scmp.ne.s32.totalorder %s22, %s23
    %p34 = scmp.eq.s32.totalorder %s14, 0
    %p35 = por %p33, %p34
    %p36 = scmp.ne.s32.totalorder %s22, %s23
    %p37 = scmp.eq.s32.totalorder %s15, 1
    %p38 = por %p36, %p37
    %p40 = scmp.ne.s32.totalorder %s23, %s39
    %p41 = scmp.eq.s32.totalorder %s15, 0
    %p42 = por %p40, %p41
    %s44 = sadd.s32 %s43, 1
    %p47 = scmp.eq.s32.totalorder %s9, 1
    %p48 = scmp.ne.s32.totalorder %s43, %s45
    %p49 = scmp.eq.s32.totalorder %s9, 0
    %p50 = por %p48, %p49
    %p51 = scmp.ne.s32.totalorder %s43, %s45
    %p52 = scmp.eq.s32.totalorder %s14, 1
    %p53 = por %p51, %p52
    %p54 = scmp.ne.s32.totalorder %s45, %s46
    %p55 = scmp.eq.s32.totalorder %s14, 0
    %p56 = por %p54, %p55
    %p57 = scmp.ne.s32.totalorder %s45, %s46
    %p58 = scmp.eq.s32.totalorder %s15, 1
    %p59 = por %p57, %p58
    %p61 = scmp.ne.s32.totalorder %s46, %s60
    %p62 = scmp.eq.s32.totalorder %s15, 0
    %p63 = por %p61, %p62
    %s65 = sadd.s32 %s64, 1
    %p68 = scmp.eq.s32.totalorder %s9, 1
    %p69 = scmp.ne.s32.totalorder %s64, %s66
    %p70 = scmp.eq.s32.totalorder %s9, 0
    %p71 = por %p69, %p70
    %p72 = scmp.ne.s32.totalorder %s64, %s66
    %p73 = scmp.eq.s32.totalorder %s14, 1
    %p74 = por %p72, %p73
    %p75 = scmp.ne.s32.totalorder %s66, %s67
    %p76 = scmp.eq.s32.totalorder %s14, 0
    %p77 = por %p75, %p76
    %p78 = scmp.ne.s32.totalorder %s66, %s67
    %p79 = scmp.eq.s32.totalorder %s15, 1
    %p80 = por %p78, %p79
    %p82 = scmp.ne.s32.totalorder %s67, %s81
    %p83 = scmp.eq.s32.totalorder %s15, 0
    %p84 = por %p82, %p83
    %s85 = ssub.s32 %s9, %s16
    %p86 = scmp.eq.s32.totalorder %s85, 0
    %s88 = sadd.s32 %s87, 1
    %s89 = scalar_select %p86, %s87, %s88
    %p92 = pneg %p86
    %p93 = scmp.eq.s32.totalorder %s9, 1
    %p94 = por %p92, %p93
    %p95 = scmp.ne.s32.totalorder %s87, %s90
    %p96 = scmp.eq.s32.totalorder %s9, 0
    %p97 = por %p95, %p96
    %p98 = scmp.ne.s32.totalorder %s87, %s90
    %p99 = scmp.eq.s32.totalorder %s14, 1
    %p100 = por %p98, %p99
    %p101 = scmp.ne.s32.totalorder %s90, %s91
    %p102 = scmp.eq.s32.totalorder %s14, 0
    %p103 = por %p101, %p102
    %p104 = scmp.ne.s32.totalorder %s90, %s91
    %p105 = scmp.eq.s32.totalorder %s15, 1
    %p106 = por %p104, %p105
    %p108 = scmp.ne.s32.totalorder %s91, %s107
    %p109 = scmp.eq.s32.totalorder %s15, 0
    %p110 = por %p108, %p109
    %p111 = scmp.le.s32.totalorder 1, %s9
    %p112 = scmp.lt.s32.totalorder %s9, 3
    %p113 = pnand %p111, %p112
    %p114 = pneg %p113
    // Predicated region
    $region9: #{forward.41} parent=5 // pred_check
      _
    $region10: #{forward.41} parent=5 // pred_check_branch
      %116 = sbr.rel (%p113) target = $region12
    $region11: #{forward.41} parent=5 // pred_region
      %s117 = ssub.s32 %s9, 1
      // Predicated region
      $region13: #{forward.41} parent=11 // pred_check
        %p118 = pneg %p56
      $region14: #{forward.41} parent=11 // pred_check_branch
        %120 = sbr.rel (%p118) target = $region16
      $region15: #{forward.41} parent=11 // pred_region
        _
      $region16: #{forward.41} parent=11 // pred_fallthru
        _
      // Predicated region
      $region17: #{forward.41} parent=11 // pred_check
        %p121 = pneg %p77
      $region18: #{forward.41} parent=11 // pred_check_branch
        %123 = sbr.rel (%p121) target = $region20
      $region19: #{forward.41} parent=11 // pred_region
        _
      $region20: #{forward.41} parent=11 // pred_fallthru
        _
    $region12: #{forward.41} parent=5 // pred_fallthru
      _
    %p124 = scmp.lt.s32.totalorder %s9, 2
    // Predicated region
    $region21: #{forward.41} parent=5 // pred_check
      %p125 = pneg %p124
    $region22: #{forward.41} parent=5 // pred_check_branch
      %127 = sbr.rel (%p125) target = $region24
    $region23: #{forward.41} parent=5 // pred_region
      // Predicated region
      $region25: #{forward.41} parent=23 // pred_check
        %p128 = pneg %p29
      $region26: #{forward.41} parent=23 // pred_check_branch
        %130 = sbr.rel (%p128) target = $region28
      $region27: #{forward.41} parent=23 // pred_region
        %p131 = scmp.lt.s32.totalorder %s9, 1
        %s132 = scalar_select %p131, %s9, 1
        %s133 = smul.addr %s132, 4
        %s134 = smul.addr %s133, 2
        %s135 = scalar_lea.vmem %s0, %s134
      $region28: #{forward.41} parent=23 // pred_fallthru
        _
    $region24: #{forward.41} parent=5 // pred_fallthru
      _
    %p136 = scmp.le.s32.totalorder 1, %s9
    %p137 = scmp.lt.s32.totalorder %s9, 3
    %p138 = pnand %p136, %p137
    %p139 = pneg %p138
    // Predicated region
    $region29: #{forward.41} parent=5 // pred_check
      _
    $region30: #{forward.41} parent=5 // pred_check_branch
      %141 = sbr.rel (%p138) target = $region32
    $region31: #{forward.41} parent=5 // pred_region
      %s142 = ssub.s32 %s9, 1
      %p143 = scmp.lt.s32.totalorder %s14, 1
      %s144 = scalar_select %p143, %s14, 1
      %s145 = smul.addr %s144, 4
      %s146 = smul.addr %s145, 2
      %s147 = scalar_lea.vmem %s0, %s146
      %p148 = pneg %p35
      %p149 = pneg %p32
      %p150 = pneg %p56
      %p151 = pneg %p53
      %p152 = pneg %p77
      %p153 = pneg %p74
      %p154 = pneg %p103
      %p155 = pneg %p100
      %p156 = scmp.lt.s32.totalorder %s14, 1
      %s157 = scalar_select %p156, %s14, 1
      %s158 = smul.addr %s157, 2
      %s159 = scalar_lea.vmem %s3, %s158
      %p160 = scmp.lt.s32.totalorder %s14, 1
      %s161 = scalar_select %p160, %s14, 1
      %s162 = smul.addr %s161, 4
      %s163 = smul.addr %s162, 2
      %s164 = scalar_lea.vmem %s0, %s163
      %p165 = scmp.lt.s32.totalorder %s14, 1
      %s166 = scalar_select %p165, %s14, 1
      %s167 = smul.addr %s166, 2
      %s168 = scalar_lea.vmem %s3, %s167
      %v169 = vld [vmem:[%s164] sm:$0x3]
      %v170 = vld [vmem:[%s164 + $0x2] sm:$0x3]
      %v171 = vld [vmem:[%s164 + $0x4] sm:$0x3]
      %v172 = vld [vmem:[%s164 + $0x6] sm:$0x3]
      %v173 = vld [vmem:[%s1] sm:$0x1]
      %v174 = vunpack.c.l.bf16 %v169
      %v175 = vunpack.c.l.bf16 %v170
      %v177 = vperm.slane %v173, 0
      %v179 = vmul.f32 %v174, %v177
      %v180 = vmul.f32 %v175, %v177
      %s181 = scalar_lea.vmem %s1, 1
      %v182 = vld [vmem:[%s181] sm:$0x1]
      %v184 = vperm.slane %v182, 0
      %v186 = vmul.f32 %v174, %v184
      %v187 = vmul.f32 %v175, %v184
      %v190 = vrot.slane %v186, 5
      %v191 = vrot.slane %v190, 4
      %v192 = vrot.slane %v187, 5
      %v193 = vrot.slane %v192, 4
      %v196 = vadd.f32 %v179, %v191
      %v197 = vadd.f32 %v180, %v193
      %s198 = scalar_lea.vmem %s1, 2
      %v199 = vld [vmem:[%s198] sm:$0x1]
      %v201 = vperm.slane %v199, 0
      %v203 = vmul.f32 %v174, %v201
      %v204 = vmul.f32 %v175, %v201
      %v207 = vrot.slane %v203, 6
      %v208 = vrot.slane %v207, 4
      %v209 = vrot.slane %v204, 6
      %v210 = vrot.slane %v209, 4
      %v213 = vadd.f32 %v196, %v208
      %v214 = vadd.f32 %v197, %v210
      %s215 = scalar_lea.vmem %s1, 3
      %v216 = vld [vmem:[%s215] sm:$0x1]
      %v217 = vunpack.c.l.bf16 %v171
      %v219 = vperm.slane %v216, 0
      %v221 = vmul.f32 %v175, %v219
      %v222 = vmul.f32 %v217, %v219
      %v223 = vadd.f32 %v213, %v221
      %v224 = vadd.f32 %v214, %v222
      %s225 = scalar_lea.vmem %s1, 4
      %v226 = vld [vmem:[%s225] sm:$0x1]
      %v228 = vperm.slane %v226, 0
      %v230 = vmul.f32 %v175, %v228
      %v231 = vmul.f32 %v217, %v228
      %v234 = vrot.slane %v230, 5
      %v235 = vrot.slane %v234, 4
      %v236 = vrot.slane %v231, 5
      %v237 = vrot.slane %v236, 4
      %v240 = vadd.f32 %v223, %v235
      %v241 = vadd.f32 %v224, %v237
      %s242 = scalar_lea.vmem %s1, 5
      %v243 = vld [vmem:[%s242] sm:$0x1]
      %v245 = vperm.slane %v243, 0
      %v247 = vmul.f32 %v175, %v245
      %v248 = vmul.f32 %v217, %v245
      %v251 = vrot.slane %v247, 6
      %v252 = vrot.slane %v251, 4
      %v253 = vrot.slane %v248, 6
      %v254 = vrot.slane %v253, 4
      %v257 = vadd.f32 %v240, %v252
      %v258 = vadd.f32 %v241, %v254
      %s259 = scalar_lea.vmem %s1, 6
      %v260 = vld [vmem:[%s259] sm:$0x1]
      %v261 = vunpack.c.l.bf16 %v172
      %v263 = vperm.slane %v260, 0
      %v265 = vmul.f32 %v217, %v263
      %v266 = vmul.f32 %v261, %v263
      %v267 = vadd.f32 %v257, %v265
      %v268 = vadd.f32 %v258, %v266
      %s269 = scalar_lea.vmem %s1, 7
      %v270 = vld [vmem:[%s269] sm:$0x1]
      %v272 = vperm.slane %v270, 0
      %v274 = vmul.f32 %v217, %v272
      %v275 = vmul.f32 %v261, %v272
      %v278 = vrot.slane %v274, 5
      %v279 = vrot.slane %v278, 4
      %v280 = vrot.slane %v275, 5
      %v281 = vrot.slane %v280, 4
      %v284 = vadd.f32 %v267, %v279
      %v285 = vadd.f32 %v268, %v281
      %s286 = scalar_lea.vmem %s1, 8
      %v287 = vld [vmem:[%s286] sm:$0x1]
      %v289 = vperm.slane %v287, 0
      %v291 = vmul.f32 %v217, %v289
      %v292 = vmul.f32 %v261, %v289
      %v295 = vrot.slane %v291, 6
      %v296 = vrot.slane %v295, 4
      %v297 = vrot.slane %v292, 6
      %v298 = vrot.slane %v297, 4
      %v301 = vadd.f32 %v284, %v296
      %v302 = vadd.f32 %v285, %v298
      %v303 = vld [vmem:[%s2] sm:$0x1]
      %v305 = vperm.slane %v303, 0
      %v307 = vadd.f32 %v301, %v305
      %v308 = vadd.f32 %v302, %v305
      %v309 = vmax.f32 %v307, 0.0
      %v310 = vmax.f32 %v308, 0.0
      %v311 = vmin.f32 %v309, 6.0
      %v312 = vmin.f32 %v310, 6.0
      %v313 = vpack.c.bf16 %v311, %v311
      %v314 = vpack.c.bf16 %v312, %v312
      %315 = vst [vmem:[%s168] sm:$0x1] %v313
      %316 = vst [vmem:[%s168 + $0x1] sm:$0x1] %v314
      %p317 = scmp.lt.s32.totalorder %s14, 1
      %s318 = scalar_select %p317, %s14, 1
      %s319 = smul.addr %s318, 2
      %s320 = scalar_lea.vmem %s3, %s319
      // Predicated region
      $region33: #{forward.41} parent=31 // pred_check
        %p321 = pneg %p100
      $region34: #{forward.41} parent=31 // pred_check_branch
        %323 = sbr.rel (%p321) target = $region36
      $region35: #{forward.41} parent=31 // pred_region
        _
      $region36: #{forward.41} parent=31 // pred_fallthru
        _
    $region32: #{forward.41} parent=5 // pred_fallthru
      _
    %p324 = scmp.le.s32.totalorder 2, %s9
    // Predicated region
    $region37: #{forward.41} parent=5 // pred_check
      %p325 = pneg %p324
    $region38: #{forward.41} parent=5 // pred_check_branch
      %327 = sbr.rel (%p325) target = $region40
    $region39: #{forward.41} parent=5 // pred_region
      %s328 = ssub.s32 %s9, 2
      // Predicated region
      $region41: #{forward.41} parent=39 // pred_check
        %p329 = pneg %p106
      $region42: #{forward.41} parent=39 // pred_check_branch
        %331 = sbr.rel (%p329) target = $region44
      $region43: #{forward.41} parent=39 // pred_region
        %p332 = scmp.lt.s32.totalorder %s15, 1
        %s333 = scalar_select %p332, %s15, 1
        %s334 = smul.addr %s333, 2
        %s335 = scalar_lea.vmem %s3, %s334
      $region44: #{forward.41} parent=39 // pred_fallthru
        _
    $region40: #{forward.41} parent=5 // pred_fallthru
      _
  $region6: #{forward.41} parent=0 // loop_footer
    %s13 = sadd.s32 1, %s9
  $region7: #{forward.41} parent=0 // loop_footer_branch
    %8 = sbr.rel target = $region3
  $region8: #{forward.41} parent=0 // loop_exit
    _

// kernel: forward.52
$region0: #{forward.52}
  #allocation0 [shape = 'u32[]', space=smem, size = 0x4, offset = 0x4, fixed_abs, tag = 'smem constant byte address 0x4 - core index']
  #allocation1 [shape = 'u32[72,128]{1,0:T(1,128)}', space=vmem, size = 0x9000, scoped, tag = 'internal scratch']
  %s0 = inlined_call_operand.vmem [shape: bf16[2,128], index: 0, kind: input, shape index: {}]
  %s1 = inlined_call_operand.vmem [shape: bf16[128,256], index: 1, kind: input, shape index: {}]
  %s2 = inlined_call_operand.vmem [shape: f32[1,256], index: 2, kind: input, shape index: {}]
  %s3 = inlined_call_operand.vmem [shape: bf16[2,256], index: 3, kind: output, shape index: {}]
  %s4 = sld [smem:[#allocation0]]
  $region22: #{forward.52} parent=0
    _
  %s6 = ssub.s32 1, %s4
  %s7 = scalar_select 0, %s6, %s4
  // Predicated region
  $region2: #{forward.52} parent=0 // pred_check
    _
  $region3: #{forward.52} parent=0 // pred_check_branch
    %9 = sbr.rel (0) target = $region5
  $region4: #{forward.52} parent=0 // pred_region
    _
  $region5: #{forward.52} parent=0 // pred_fallthru
    _
  // Predicated region
  $region6: #{forward.52} parent=0 // pred_check
    _
  $region7: #{forward.52} parent=0 // pred_check_branch
    %11 = sbr.rel (0) target = $region9
  $region8: #{forward.52} parent=0 // pred_region
    _
  $region9: #{forward.52} parent=0 // pred_fallthru
    _
  // Predicated region
  $region10: #{forward.52} parent=0 // pred_check
    _
  $region11: #{forward.52} parent=0 // pred_check_branch
    %13 = sbr.rel (0) target = $region13
  $region12: #{forward.52} parent=0 // pred_region
    _
  $region13: #{forward.52} parent=0 // pred_fallthru
    _
  %v14 = vld [vmem:[%s0] sm:$0x1]
  %v15 = vld [vmem:[%s1] sm:$0xff]
  %v16 = vld [vmem:[%s1 + $0x8] sm:$0xff]
  %v17 = vld [vmem:[%s1 + $0x10] sm:$0xff]
  %v18 = vld [vmem:[%s1 + $0x18] sm:$0xff]
  %v19 = vld [vmem:[%s1 + $0x20] sm:$0xff]
  %v20 = vld [vmem:[%s1 + $0x28] sm:$0xff]
  %v21 = vld [vmem:[%s1 + $0x30] sm:$0xff]
  %v22 = vld [vmem:[%s1 + $0x38] sm:$0xff]
  %v23 = vld [vmem:[%s1 + $0x40] sm:$0xff]
  %v24 = vld [vmem:[%s1 + $0x48] sm:$0xff]
  %v25 = vld [vmem:[%s1 + $0x50] sm:$0xff]
  %v26 = vld [vmem:[%s1 + $0x58] sm:$0xff]
  %v27 = vld [vmem:[%s1 + $0x60] sm:$0xff]
  %v28 = vld [vmem:[%s1 + $0x68] sm:$0xff]
  %v29 = vld [vmem:[%s1 + $0x70] sm:$0xff]
  %v30 = vld [vmem:[%s1 + $0x78] sm:$0xff]
  %v31 = vld [vmem:[%s2] sm:$0x3]
  %v33 = vperm.slane %v31, 0
  %v34 = vperm.slane %v31, 1
  %v53 = vunpack.c.l.b16 %v15
  %v54 = vunpack.c.h.b16 %v15
  %v55 = vunpack.c.l.b16 %v16
  %v56 = vunpack.c.h.b16 %v16
  %v57 = vunpack.c.l.b16 %v17
  %v58 = vunpack.c.h.b16 %v17
  %v59 = vunpack.c.l.b16 %v18
  %v60 = vunpack.c.h.b16 %v18
  %v61 = vunpack.c.l.b16 %v19
  %v62 = vunpack.c.h.b16 %v19
  %v63 = vunpack.c.l.b16 %v20
  %v64 = vunpack.c.h.b16 %v20
  %v65 = vunpack.c.l.b16 %v21
  %v66 = vunpack.c.h.b16 %v21
  %v67 = vunpack.c.l.b16 %v22
  %v68 = vunpack.c.h.b16 %v22
  %v69 = vunpack.c.l.b16 %v23
  %v70 = vunpack.c.h.b16 %v23
  %v71 = vunpack.c.l.b16 %v24
  %v72 = vunpack.c.h.b16 %v24
  %v73 = vunpack.c.l.b16 %v25
  %v74 = vunpack.c.h.b16 %v25
  %v75 = vunpack.c.l.b16 %v26
  %v76 = vunpack.c.h.b16 %v26
  %v77 = vunpack.c.l.b16 %v27
  %v78 = vunpack.c.h.b16 %v27
  %v79 = vunpack.c.l.b16 %v28
  %v80 = vunpack.c.h.b16 %v28
  %v81 = vunpack.c.l.b16 %v29
  %v82 = vunpack.c.h.b16 %v29
  %v83 = vunpack.c.l.b16 %v30
  %v84 = vunpack.c.h.b16 %v30
  %v85 = vpack.c.b16 %v55, %v53
  %v86 = vpack.c.b16 %v56, %v54
  %v87 = vpack.c.b16 %v59, %v57
  %v88 = vpack.c.b16 %v60, %v58
  %v89 = vpack.c.b16 %v63, %v61
  %v90 = vpack.c.b16 %v64, %v62
  %v91 = vpack.c.b16 %v67, %v65
  %v92 = vpack.c.b16 %v68, %v66
  %v93 = vpack.c.b16 %v71, %v69
  %v94 = vpack.c.b16 %v72, %v70
  %v95 = vpack.c.b16 %v75, %v73
  %v96 = vpack.c.b16 %v76, %v74
  %v97 = vpack.c.b16 %v79, %v77
  %v98 = vpack.c.b16 %v80, %v78
  %v99 = vpack.c.b16 %v83, %v81
  %v100 = vpack.c.b16 %v84, %v82
  %117 = vmatpush.bf16.msra.mxu0 %v99
  %118 = vmatpush.bf16.msra.mxu0 %v97
  %119 = vmatpush.bf16.msra.mxu0 %v95
  %120 = vmatpush.bf16.msra.mxu0 %v93
  %121 = vmatpush.bf16.msra.mxu0 %v91
  %122 = vmatpush.bf16.msra.mxu0 %v89
  %123 = vmatpush.bf16.msra.mxu0 %v87
  %124 = vmatpush.bf16.msra.mxu0 %v85
  %125 = vmatmul.bf16.gmra.mxu0 %v14
  %v126 = vpop.f32.mrf.mxu0
  %v127 = vadd.f32 %v33, %v126
  %v128 = vpop.f32.mrf.mxu0
  %129 = vdwg.mxu0
  %130 = vmatpush.bf16.msra.mxu0 %v100
  %131 = vmatpush.bf16.msra.mxu0 %v98
  %132 = vmatpush.bf16.msra.mxu0 %v96
  %133 = vmatpush.bf16.msra.mxu0 %v94
  %134 = vmatpush.bf16.msra.mxu0 %v92
  %135 = vmatpush.bf16.msra.mxu0 %v90
  %136 = vmatpush.bf16.msra.mxu0 %v88
  %137 = vmatpush.bf16.msra.mxu0 %v86
  %138 = vmatmul.bf16.gmra.mxu0 %v14
  %v139 = vpop.f32.mrf.mxu0
  %v140 = vadd.f32 %v34, %v139
  %v141 = vpop.f32.mrf.mxu0
  %142 = vdwg.mxu0
  %v143 = vmax.f32 %v127, 0.0
  %v144 = vmax.f32 %v140, 0.0
  %v145 = vmin.f32 %v143, 6.0
  %v146 = vmin.f32 %v144, 6.0
  %v147 = vpack.c.bf16 %v146, %v145
  %v149 = vrot.slane %v147, 3
  %vm150 = vcmask 1040384
  %v153 = vsel %vm150, %v147, %v149
  %155 = vst [vmem:[%s3] sm:$0x3] %v153
  // Predicated region
  $region14: #{forward.52} parent=0 // pred_check
    _
  $region15: #{forward.52} parent=0 // pred_check_branch
    %157 = sbr.rel (0) target = $region17
  $region16: #{forward.52} parent=0 // pred_region
    _
  $region17: #{forward.52} parent=0 // pred_fallthru
    _
  // Predicated region
  $region18: #{forward.52} parent=0 // pred_check
    _
  $region19: #{forward.52} parent=0 // pred_check_branch
    %159 = sbr.rel (0) target = $region21
  $region20: #{forward.52} parent=0 // pred_region
    _
  $region21: #{forward.52} parent=0 // pred_fallthru
    _

// kernel: forward.51
$region0: #{forward.51}
  #allocation0 [shape = 'u32[]', space=smem, size = 0x4, offset = 0x4, fixed_abs, tag = 'smem constant byte address 0x4 - core index']
  #allocation1 [shape = 'u32[72,128]{1,0:T(1,128)}', space=vmem, size = 0x9000, scoped, tag = 'internal scratch']
  %s0 = inlined_call_operand.vmem [shape: bf16[2,2,2,128], index: 0, kind: input, shape index: {}]
  %s1 = inlined_call_operand.vmem [shape: bf16[2,2,1,128], index: 1, kind: input, shape index: {}]
  %s2 = inlined_call_operand.vmem [shape: bf16[2,1,2,128], index: 2, kind: input, shape index: {}]
  %s3 = inlined_call_operand.vmem [shape: bf16[2,1,1,128], index: 3, kind: input, shape index: {}]
  %s4 = inlined_call_operand.vmem [shape: f32[9,1,128], index: 4, kind: input, shape index: {}]
  %s5 = inlined_call_operand.vmem [shape: f32[1,128], index: 5, kind: input, shape index: {}]
  %s6 = inlined_call_operand.vmem [shape: bf16[2,1,1,128], index: 6, kind: output, shape index: {}]
  %s7 = sld [smem:[#allocation0]]
  $region57: #{forward.51} parent=0
    _
  %s9 = ssub.s32 1, %s7
  %s10 = scalar_select 0, %s9, %s7
  loop: start=0, step=1, limit=4
  $region2: #{forward.51} parent=0 // loop_pre_header
    _
  $region3: #{forward.51} parent=0 // loop_header
    %s12 = sphi 0, %s16
    %p13 = scmp.ge.s32.totalorder %s12, 4
    %s22 = sphi 0, %s24
    %s25 = sphi 0, %s22
    %s26 = sphi 0, %s25
    %s42 = sphi 0, %s26
    %s48 = sphi 0, %s50
    %s51 = sphi 0, %s48
    %s52 = sphi 0, %s51
    %s68 = sphi 0, %s52
    %s74 = sphi 0, %s76
    %s77 = sphi 0, %s74
    %s78 = sphi 0, %s77
    %s94 = sphi 0, %s78
    %s100 = sphi 0, %s102
    %s103 = sphi 0, %s100
    %s104 = sphi 0, %s103
    %s120 = sphi 0, %s104
    %s124 = sphi 0, %s124
    %s126 = sphi 0, %s124
    %s127 = sphi 0, %s126
    %s141 = sphi 0, %s127
    %s145 = sphi 0, %s145
    %s147 = sphi 0, %s145
    %s148 = sphi 0, %s147
    %s162 = sphi 0, %s148
    %s168 = sphi 0, %s170
    %s171 = sphi 0, %s168
    %s172 = sphi 0, %s171
    %s188 = sphi 0, %s172
  $region4: #{forward.51} parent=0 // loop_header_branch
    %15 = sbr.rel (%p13) target = $region8
  $region5: #{forward.51} parent=0 // loop_body
    %s17 = ssub.s32 %s12, 1
    %s18 = ssub.s32 %s12, 2
    %s19 = sadd.s32 %s12, 1
    %s20 = ssub.s32 %s12, %s19
    %p21 = scmp.eq.s32.totalorder %s20, 0
    %s23 = sadd.s32 %s22, 1
    %s24 = scalar_select %p21, %s22, %s23
    %p27 = pneg %p21
    %p28 = scmp.eq.s32.totalorder %s12, 1
    %p29 = por %p27, %p28
    %p30 = scmp.ne.s32.totalorder %s22, %s25
    %p31 = scmp.eq.s32.totalorder %s12, 0
    %p32 = por %p30, %p31
    %p33 = scmp.ne.s32.totalorder %s22, %s25
    %p34 = scmp.eq.s32.totalorder %s17, 1
    %p35 = por %p33, %p34
    %p36 = scmp.ne.s32.totalorder %s25, %s26
    %p37 = scmp.eq.s32.totalorder %s17, 0
    %p38 = por %p36, %p37
    %p39 = scmp.ne.s32.totalorder %s25, %s26
    %p40 = scmp.eq.s32.totalorder %s18, 1
    %p41 = por %p39, %p40
    %p43 = scmp.ne.s32.totalorder %s26, %s42
    %p44 = scmp.eq.s32.totalorder %s18, 0
    %p45 = por %p43, %p44
    %s46 = ssub.s32 %s12, %s19
    %p47 = scmp.eq.s32.totalorder %s46, 0
    %s49 = sadd.s32 %s48, 1
    %s50 = scalar_select %p47, %s48, %s49
    %p53 = pneg %p47
    %p54 = scmp.eq.s32.totalorder %s12, 1
    %p55 = por %p53, %p54
    %p56 = scmp.ne.s32.totalorder %s48, %s51
    %p57 = scmp.eq.s32.totalorder %s12, 0
    %p58 = por %p56, %p57
    %p59 = scmp.ne.s32.totalorder %s48, %s51
    %p60 = scmp.eq.s32.totalorder %s17, 1
    %p61 = por %p59, %p60
    %p62 = scmp.ne.s32.totalorder %s51, %s52
    %p63 = scmp.eq.s32.totalorder %s17, 0
    %p64 = por %p62, %p63
    %p65 = scmp.ne.s32.totalorder %s51, %s52
    %p66 = scmp.eq.s32.totalorder %s18, 1
    %p67 = por %p65, %p66
    %p69 = scmp.ne.s32.totalorder %s52, %s68
    %p70 = scmp.eq.s32.totalorder %s18, 0
    %p71 = por %p69, %p70
    %s72 = ssub.s32 %s12, %s19
    %p73 = scmp.eq.s32.totalorder %s72, 0
    %s75 = sadd.s32 %s74, 1
    %s76 = scalar_select %p73, %s74, %s75
    %p79 = pneg %p73
    %p80 = scmp.eq.s32.totalorder %s12, 1
    %p81 = por %p79, %p80
    %p82 = scmp.ne.s32.totalorder %s74, %s77
    %p83 = scmp.eq.s32.totalorder %s12, 0
    %p84 = por %p82, %p83
    %p85 = scmp.ne.s32.totalorder %s74, %s77
    %p86 = scmp.eq.s32.totalorder %s17, 1
    %p87 = por %p85, %p86
    %p88 = scmp.ne.s32.totalorder %s77, %s78
    %p89 = scmp.eq.s32.totalorder %s17, 0
    %p90 = por %p88, %p89
    %p91 = scmp.ne.s32.totalorder %s77, %s78
    %p92 = scmp.eq.s32.totalorder %s18, 1
    %p93 = por %p91, %p92
    %p95 = scmp.ne.s32.totalorder %s78, %s94
    %p96 = scmp.eq.s32.totalorder %s18, 0
    %p97 = por %p95, %p96
    %s98 = ssub.s32 %s12, %s19
    %p99 = scmp.eq.s32.totalorder %s98, 0
    %s101 = sadd.s32 %s100, 1
    %s102 = scalar_select %p99, %s100, %s101
    %p105 = pneg %p99
    %p106 = scmp.eq.s32.totalorder %s12, 1
    %p107 = por %p105, %p106
    %p108 = scmp.ne.s32.totalorder %s100, %s103
    %p109 = scmp.eq.s32.totalorder %s12, 0
    %p110 = por %p108, %p109
    %p111 = scmp.ne.s32.totalorder %s100, %s103
    %p112 = scmp.eq.s32.totalorder %s17, 1
    %p113 = por %p111, %p112
    %p114 = scmp.ne.s32.totalorder %s103, %s104
    %p115 = scmp.eq.s32.totalorder %s17, 0
    %p116 = por %p114, %p115
    %p117 = scmp.ne.s32.totalorder %s103, %s104
    %p118 = scmp.eq.s32.totalorder %s18, 1
    %p119 = por %p117, %p118
    %p121 = scmp.ne.s32.totalorder %s104, %s120
    %p122 = scmp.eq.s32.totalorder %s18, 0
    %p123 = por %p121, %p122
    %s125 = sadd.s32 %s124, 1
    %p128 = scmp.eq.s32.totalorder %s12, 1
    %p129 = scmp.ne.s32.totalorder %s124, %s126
    %p130 = scmp.eq.s32.totalorder %s12, 0
    %p131 = por %p129, %p130
    %p132 = scmp.ne.s32.totalorder %s124, %s126
    %p133 = scmp.eq.s32.totalorder %s17, 1
    %p134 = por %p132, %p133
    %p135 = scmp.ne.s32.totalorder %s126, %s127
    %p136 = scmp.eq.s32.totalorder %s17, 0
    %p137 = por %p135, %p136
    %p138 = scmp.ne.s32.totalorder %s126, %s127
    %p139 = scmp.eq.s32.totalorder %s18, 1
    %p140 = por %p138, %p139
    %p142 = scmp.ne.s32.totalorder %s127, %s141
    %p143 = scmp.eq.s32.totalorder %s18, 0
    %p144 = por %p142, %p143
    %s146 = sadd.s32 %s145, 1
    %p149 = scmp.eq.s32.totalorder %s12, 1
    %p150 = scmp.ne.s32.totalorder %s145, %s147
    %p151 = scmp.eq.s32.totalorder %s12, 0
    %p152 = por %p150, %p151
    %p153 = scmp.ne.s32.totalorder %s145, %s147
    %p154 = scmp.eq.s32.totalorder %s17, 1
    %p155 = por %p153, %p154
    %p156 = scmp.ne.s32.totalorder %s147, %s148
    %p157 = scmp.eq.s32.totalorder %s17, 0
    %p158 = por %p156, %p157
    %p159 = scmp.ne.s32.totalorder %s147, %s148
    %p160 = scmp.eq.s32.totalorder %s18, 1
    %p161 = por %p159, %p160
    %p163 = scmp.ne.s32.totalorder %s148, %s162
    %p164 = scmp.eq.s32.totalorder %s18, 0
    %p165 = por %p163, %p164
    %s166 = ssub.s32 %s12, %s19
    %p167 = scmp.eq.s32.totalorder %s166, 0
    %s169 = sadd.s32 %s168, 1
    %s170 = scalar_select %p167, %s168, %s169
    %p173 = pneg %p167
    %p174 = scmp.eq.s32.totalorder %s12, 1
    %p175 = por %p173, %p174
    %p176 = scmp.ne.s32.totalorder %s168, %s171
    %p177 = scmp.eq.s32.totalorder %s12, 0
    %p178 = por %p176, %p177
    %p179 = scmp.ne.s32.totalorder %s168, %s171
    %p180 = scmp.eq.s32.totalorder %s17, 1
    %p181 = por %p179, %p180
    %p182 = scmp.ne.s32.totalorder %s171, %s172
    %p183 = scmp.eq.s32.totalorder %s17, 0
    %p184 = por %p182, %p183
    %p185 = scmp.ne.s32.totalorder %s171, %s172
    %p186 = scmp.eq.s32.totalorder %s18, 1
    %p187 = por %p185, %p186
    %p189 = scmp.ne.s32.totalorder %s172, %s188
    %p190 = scmp.eq.s32.totalorder %s18, 0
    %p191 = por %p189, %p190
    %p192 = scmp.le.s32.totalorder 1, %s12
    %p193 = scmp.lt.s32.totalorder %s12, 3
    %p194 = pnand %p192, %p193
    %p195 = pneg %p194
    // Predicated region
    $region9: #{forward.51} parent=5 // pred_check
      _
    $region10: #{forward.51} parent=5 // pred_check_branch
      %197 = sbr.rel (%p194) target = $region12
    $region11: #{forward.51} parent=5 // pred_region
      %s198 = ssub.s32 %s12, 1
      // Predicated region
      $region13: #{forward.51} parent=11 // pred_check
        %p199 = pneg %p137
      $region14: #{forward.51} parent=11 // pred_check_branch
        %201 = sbr.rel (%p199) target = $region16
      $region15: #{forward.51} parent=11 // pred_region
        _
      $region16: #{forward.51} parent=11 // pred_fallthru
        _
      // Predicated region
      $region17: #{forward.51} parent=11 // pred_check
        %p202 = pneg %p158
      $region18: #{forward.51} parent=11 // pred_check_branch
        %204 = sbr.rel (%p202) target = $region20
      $region19: #{forward.51} parent=11 // pred_region
        _
      $region20: #{forward.51} parent=11 // pred_fallthru
        _
    $region12: #{forward.51} parent=5 // pred_fallthru
      _
    %p205 = scmp.lt.s32.totalorder %s12, 2
    // Predicated region
    $region21: #{forward.51} parent=5 // pred_check
      %p206 = pneg %p205
    $region22: #{forward.51} parent=5 // pred_check_branch
      %208 = sbr.rel (%p206) target = $region24
    $region23: #{forward.51} parent=5 // pred_region
      // Predicated region
      $region25: #{forward.51} parent=23 // pred_check
        %p209 = pneg %p32
      $region26: #{forward.51} parent=23 // pred_check_branch
        %211 = sbr.rel (%p209) target = $region28
      $region27: #{forward.51} parent=23 // pred_region
        %p212 = scmp.lt.s32.totalorder %s12, 1
        %s213 = scalar_select %p212, %s12, 1
        %s214 = smul.addr %s213, 2
        %s215 = scalar_lea.vmem %s0, %s214
      $region28: #{forward.51} parent=23 // pred_fallthru
        _
      // Predicated region
      $region29: #{forward.51} parent=23 // pred_check
        %p216 = pneg %p58
      $region30: #{forward.51} parent=23 // pred_check_branch
        %218 = sbr.rel (%p216) target = $region32
      $region31: #{forward.51} parent=23 // pred_region
        %p219 = scmp.lt.s32.totalorder %s12, 1
        %s220 = scalar_select %p219, %s12, 1
        %s221 = smul.addr %s220, 2
        %s222 = scalar_lea.vmem %s1, %s221
      $region32: #{forward.51} parent=23 // pred_fallthru
        _
      // Predicated region
      $region33: #{forward.51} parent=23 // pred_check
        %p223 = pneg %p84
      $region34: #{forward.51} parent=23 // pred_check_branch
        %225 = sbr.rel (%p223) target = $region36
      $region35: #{forward.51} parent=23 // pred_region
        %p226 = scmp.lt.s32.totalorder %s12, 1
        %s227 = scalar_select %p226, %s12, 1
        %s228 = scalar_lea.vmem %s2, %s227
      $region36: #{forward.51} parent=23 // pred_fallthru
        _
      // Predicated region
      $region37: #{forward.51} parent=23 // pred_check
        %p229 = pneg %p110
      $region38: #{forward.51} parent=23 // pred_check_branch
        %231 = sbr.rel (%p229) target = $region40
      $region39: #{forward.51} parent=23 // pred_region
        %p232 = scmp.lt.s32.totalorder %s12, 1
        %s233 = scalar_select %p232, %s12, 1
        %s234 = scalar_lea.vmem %s3, %s233
      $region40: #{forward.51} parent=23 // pred_fallthru
        _
    $region24: #{forward.51} parent=5 // pred_fallthru
      _
    %p235 = scmp.le.s32.totalorder 1, %s12
    %p236 = scmp.lt.s32.totalorder %s12, 3
    %p237 = pnand %p235, %p236
    %p238 = pneg %p237
    // Predicated region
    $region41: #{forward.51} parent=5 // pred_check
      _
    $region42: #{forward.51} parent=5 // pred_check_branch
      %240 = sbr.rel (%p237) target = $region44
    $region43: #{forward.51} parent=5 // pred_region
      %s241 = ssub.s32 %s12, 1
      %p242 = scmp.lt.s32.totalorder %s17, 1
      %s243 = scalar_select %p242, %s17, 1
      %s244 = smul.addr %s243, 2
      %s245 = scalar_lea.vmem %s0, %s244
      %p246 = pneg %p38
      %p247 = pneg %p35
      %p248 = scmp.lt.s32.totalorder %s17, 1
      %s249 = scalar_select %p248, %s17, 1
      %s250 = smul.addr %s249, 2
      %s251 = scalar_lea.vmem %s1, %s250
      %p252 = pneg %p64
      %p253 = pneg %p61
      %p254 = scmp.lt.s32.totalorder %s17, 1
      %s255 = scalar_select %p254, %s17, 1
      %s256 = scalar_lea.vmem %s2, %s255
      %p257 = pneg %p90
      %p258 = pneg %p87
      %p259 = scmp.lt.s32.totalorder %s17, 1
      %s260 = scalar_select %p259, %s17, 1
      %s261 = scalar_lea.vmem %s3, %s260
      %p262 = pneg %p116
      %p263 = pneg %p113
      %p264 = pneg %p137
      %p265 = pneg %p134
      %p266 = pneg %p158
      %p267 = pneg %p155
      %p268 = pneg %p184
      %p269 = pneg %p181
      %p270 = scmp.lt.s32.totalorder %s17, 1
      %s271 = scalar_select %p270, %s17, 1
      %s272 = scalar_lea.vmem %s6, %s271
      %p273 = scmp.lt.s32.totalorder %s17, 1
      %s274 = scalar_select %p273, %s17, 1
      %s275 = smul.addr %s274, 2
      %s276 = scalar_lea.vmem %s0, %s275
      %p277 = scmp.lt.s32.totalorder %s17, 1
      %s278 = scalar_select %p277, %s17, 1
      %s279 = smul.addr %s278, 2
      %s280 = scalar_lea.vmem %s1, %s279
      %p281 = scmp.lt.s32.totalorder %s17, 1
      %s282 = scalar_select %p281, %s17, 1
      %s283 = scalar_lea.vmem %s2, %s282
      %p284 = scmp.lt.s32.totalorder %s17, 1
      %s285 = scalar_select %p284, %s17, 1
      %s286 = scalar_lea.vmem %s3, %s285
      %p287 = scmp.lt.s32.totalorder %s17, 1
      %s288 = scalar_select %p287, %s17, 1
      %s289 = scalar_lea.vmem %s6, %s288
      %v290 = vld [vmem:[%s276] sm:$0x1]
      %v291 = vld [vmem:[%s276 + $0x1] sm:$0x1]
      %v292 = vld [vmem:[%s280] sm:$0x1]
      %v293 = vld [vmem:[%s280 + $0x1] sm:$0x1]
      %v294 = vld [vmem:[%s283] sm:$0x1]
      %v295 = vld [vmem:[%s286] sm:$0x1]
      %v296 = vld [vmem:[%s4] sm:$0x1]
      %v297 = vunpack.c.l.bf16 %v290
      %v298 = vmul.f32 %v297, %v296
      %s299 = scalar_lea.vmem %s4, 1
      %v300 = vld [vmem:[%s299] sm:$0x1]
      %v301 = vunpack.c.l.bf16 %v292
      %v302 = vmul.f32 %v301, %v300
      %v303 = vadd.f32 %v298, %v302
      %s304 = scalar_lea.vmem %s4, 2
      %v305 = vld [vmem:[%s304] sm:$0x1]
      %v308 = vunpack.c.l.s4 857870592
      %v309 = vunpack.c.0.s8 %v308
      %v310 = vperm.slane %v305, %v309
      %v312 = vmul.f32 %v297, %v310
      %v314 = vrot.slane %v312, 7
      %v315 = vrot.slane %v314, 2
      %v317 = vadd.f32 %v303, %v315
      %s318 = scalar_lea.vmem %s4, 3
      %v319 = vld [vmem:[%s318] sm:$0x1]
      %v320 = vunpack.c.l.bf16 %v294
      %v321 = vmul.f32 %v320, %v319
      %v322 = vadd.f32 %v317, %v321
      %s323 = scalar_lea.vmem %s4, 4
      %v324 = vld [vmem:[%s323] sm:$0x1]
      %v325 = vunpack.c.l.bf16 %v295
      %v326 = vmul.f32 %v325, %v324
      %v327 = vadd.f32 %v322, %v326
      %s328 = scalar_lea.vmem %s4, 5
      %v329 = vld [vmem:[%s328] sm:$0x1]
      %v332 = vunpack.c.l.s4 857870592
      %v333 = vunpack.c.0.s8 %v332
      %v334 = vperm.slane %v329, %v333
      %v336 = vmul.f32 %v320, %v334
      %v338 = vrot.slane %v336, 7
      %v339 = vrot.slane %v338, 2
      %v341 = vadd.f32 %v327, %v339
      %s342 = scalar_lea.vmem %s4, 6
      %v343 = vld [vmem:[%s342] sm:$0x1]
      %v344 = vunpack.c.l.bf16 %v291
      %v345 = vmul.f32 %v344, %v343
      %v346 = vadd.f32 %v341, %v345
      %s347 = scalar_lea.vmem %s4, 7
      %v348 = vld [vmem:[%s347] sm:$0x1]
      %v349 = vunpack.c.l.bf16 %v293
      %v350 = vmul.f32 %v349, %v348
      %v351 = vadd.f32 %v346, %v350
      %s352 = scalar_lea.vmem %s4, 8
      %v353 = vld [vmem:[%s352] sm:$0x1]
      %v356 = vunpack.c.l.s4 857870592
      %v357 = vunpack.c.0.s8 %v356
      %v358 = vperm.slane %v353, %v357
      %v360 = vmul.f32 %v344, %v358
      %v362 = vrot.slane %v360, 7
      %v363 = vrot.slane %v362, 2
      %v365 = vadd.f32 %v351, %v363
      %v366 = vld [vmem:[%s5] sm:$0x1]
      %v367 = vadd.f32 %v365, %v366
      %v368 = vmax.f32 %v367, 0.0
      %v369 = vmin.f32 %v368, 6.0
      %v370 = vpack.c.bf16 %v369, %v369
      %vm371 = vcmask 1040384
      %vm372 = vsmask.f32 256
      %vm373 = vmand %vm371, %vm372
      %v374 = vld [vmem:[%s289] sm:$0x1]
      %v375 = vsel %vm373, %v370, %v374
      %376 = vst [vmem:[%s289] sm:$0x1] %v375
      %p377 = scmp.lt.s32.totalorder %s17, 1
      %s378 = scalar_select %p377, %s17, 1
      %s379 = scalar_lea.vmem %s6, %s378
      // Predicated region
      $region45: #{forward.51} parent=43 // pred_check
        %p380 = pneg %p181
      $region46: #{forward.51} parent=43 // pred_check_branch
        %382 = sbr.rel (%p380) target = $region48
      $region47: #{forward.51} parent=43 // pred_region
        _
      $region48: #{forward.51} parent=43 // pred_fallthru
        _
    $region44: #{forward.51} parent=5 // pred_fallthru
      _
    %p383 = scmp.le.s32.totalorder 2, %s12
    // Predicated region
    $region49: #{forward.51} parent=5 // pred_check
      %p384 = pneg %p383
    $region50: #{forward.51} parent=5 // pred_check_branch
      %386 = sbr.rel (%p384) target = $region52
    $region51: #{forward.51} parent=5 // pred_region
      %s387 = ssub.s32 %s12, 2
      // Predicated region
      $region53: #{forward.51} parent=51 // pred_check
        %p388 = pneg %p187
      $region54: #{forward.51} parent=51 // pred_check_branch
        %390 = sbr.rel (%p388) target = $region56
      $region55: #{forward.51} parent=51 // pred_region
        %p391 = scmp.lt.s32.totalorder %s18, 1
        %s392 = scalar_select %p391, %s18, 1
        %s393 = scalar_lea.vmem %s6, %s392
      $region56: #{forward.51} parent=51 // pred_fallthru
        _
    $region52: #{forward.51} parent=5 // pred_fallthru
      _
  $region6: #{forward.51} parent=0 // loop_footer
    %s16 = sadd.s32 1, %s12
  $region7: #{forward.51} parent=0 // loop_footer_branch
    %11 = sbr.rel target = $region3
  $region8: #{forward.51} parent=0 // loop_exit
    _

// kernel: forward.53
$region0: #{forward.53}
  #allocation0 [shape = 'u32[]', space=smem, size = 0x4, offset = 0x4, fixed_abs, tag = 'smem constant byte address 0x4 - core index']
  #allocation1 [shape = 'u32[72,128]{1,0:T(1,128)}', space=vmem, size = 0x9000, scoped, tag = 'internal scratch']
  %s0 = inlined_call_operand.vmem [shape: bf16[2,3,3,256], index: 0, kind: input, shape index: {}]
  %s1 = inlined_call_operand.vmem [shape: f32[9,1,256], index: 1, kind: input, shape index: {}]
  %s2 = inlined_call_operand.vmem [shape: f32[1,256], index: 2, kind: input, shape index: {}]
  %s3 = inlined_call_operand.vmem [shape: bf16[2,1,1,256], index: 3, kind: output, shape index: {}]
  %s4 = sld [smem:[#allocation0]]
  $region45: #{forward.53} parent=0
    _
  %s6 = ssub.s32 1, %s4
  %s7 = scalar_select 0, %s6, %s4
  loop: start=0, step=1, limit=4
  $region2: #{forward.53} parent=0 // loop_pre_header
    _
  $region3: #{forward.53} parent=0 // loop_header
    %s9 = sphi 0, %s13
    %p10 = scmp.ge.s32.totalorder %s9, 4
    %s19 = sphi 0, %s21
    %s22 = sphi 0, %s19
    %s23 = sphi 0, %s22
    %s39 = sphi 0, %s23
    %s43 = sphi 0, %s43
    %s45 = sphi 0, %s43
    %s46 = sphi 0, %s45
    %s60 = sphi 0, %s46
    %s64 = sphi 0, %s64
    %s66 = sphi 0, %s64
    %s67 = sphi 0, %s66
    %s81 = sphi 0, %s67
    %s87 = sphi 0, %s89
    %s90 = sphi 0, %s87
    %s91 = sphi 0, %s90
    %s107 = sphi 0, %s91
  $region4: #{forward.53} parent=0 // loop_header_branch
    %12 = sbr.rel (%p10) target = $region8
  $region5: #{forward.53} parent=0 // loop_body
    %s14 = ssub.s32 %s9, 1
    %s15 = ssub.s32 %s9, 2
    %s16 = sadd.s32 %s9, 1
    %s17 = ssub.s32 %s9, %s16
    %p18 = scmp.eq.s32.totalorder %s17, 0
    %s20 = sadd.s32 %s19, 1
    %s21 = scalar_select %p18, %s19, %s20
    %p24 = pneg %p18
    %p25 = scmp.eq.s32.totalorder %s9, 1
    %p26 = por %p24, %p25
    %p27 = scmp.ne.s32.totalorder %s19, %s22
    %p28 = scmp.eq.s32.totalorder %s9, 0
    %p29 = por %p27, %p28
    %p30 = scmp.ne.s32.totalorder %s19, %s22
    %p31 = scmp.eq.s32.totalorder %s14, 1
    %p32 = por %p30, %p31
    %p33 = scmp.ne.s32.totalorder %s22, %s23
    %p34 = scmp.eq.s32.totalorder %s14, 0
    %p35 = por %p33, %p34
    %p36 = scmp.ne.s32.totalorder %s22, %s23
    %p37 = scmp.eq.s32.totalorder %s15, 1
    %p38 = por %p36, %p37
    %p40 = scmp.ne.s32.totalorder %s23, %s39
    %p41 = scmp.eq.s32.totalorder %s15, 0
    %p42 = por %p40, %p41
    %s44 = sadd.s32 %s43, 1
    %p47 = scmp.eq.s32.totalorder %s9, 1
    %p48 = scmp.ne.s32.totalorder %s43, %s45
    %p49 = scmp.eq.s32.totalorder %s9, 0
    %p50 = por %p48, %p49
    %p51 = scmp.ne.s32.totalorder %s43, %s45
    %p52 = scmp.eq.s32.totalorder %s14, 1
    %p53 = por %p51, %p52
    %p54 = scmp.ne.s32.totalorder %s45, %s46
    %p55 = scmp.eq.s32.totalorder %s14, 0
    %p56 = por %p54, %p55
    %p57 = scmp.ne.s32.totalorder %s45, %s46
    %p58 = scmp.eq.s32.totalorder %s15, 1
    %p59 = por %p57, %p58
    %p61 = scmp.ne.s32.totalorder %s46, %s60
    %p62 = scmp.eq.s32.totalorder %s15, 0
    %p63 = por %p61, %p62
    %s65 = sadd.s32 %s64, 1
    %p68 = scmp.eq.s32.totalorder %s9, 1
    %p69 = scmp.ne.s32.totalorder %s64, %s66
    %p70 = scmp.eq.s32.totalorder %s9, 0
    %p71 = por %p69, %p70
    %p72 = scmp.ne.s32.totalorder %s64, %s66
    %p73 = scmp.eq.s32.totalorder %s14, 1
    %p74 = por %p72, %p73
    %p75 = scmp.ne.s32.totalorder %s66, %s67
    %p76 = scmp.eq.s32.totalorder %s14, 0
    %p77 = por %p75, %p76
    %p78 = scmp.ne.s32.totalorder %s66, %s67
    %p79 = scmp.eq.s32.totalorder %s15, 1
    %p80 = por %p78, %p79
    %p82 = scmp.ne.s32.totalorder %s67, %s81
    %p83 = scmp.eq.s32.totalorder %s15, 0
    %p84 = por %p82, %p83
    %s85 = ssub.s32 %s9, %s16
    %p86 = scmp.eq.s32.totalorder %s85, 0
    %s88 = sadd.s32 %s87, 1
    %s89 = scalar_select %p86, %s87, %s88
    %p92 = pneg %p86
    %p93 = scmp.eq.s32.totalorder %s9, 1
    %p94 = por %p92, %p93
    %p95 = scmp.ne.s32.totalorder %s87, %s90
    %p96 = scmp.eq.s32.totalorder %s9, 0
    %p97 = por %p95, %p96
    %p98 = scmp.ne.s32.totalorder %s87, %s90
    %p99 = scmp.eq.s32.totalorder %s14, 1
    %p100 = por %p98, %p99
    %p101 = scmp.ne.s32.totalorder %s90, %s91
    %p102 = scmp.eq.s32.totalorder %s14, 0
    %p103 = por %p101, %p102
    %p104 = scmp.ne.s32.totalorder %s90, %s91
    %p105 = scmp.eq.s32.totalorder %s15, 1
    %p106 = por %p104, %p105
    %p108 = scmp.ne.s32.totalorder %s91, %s107
    %p109 = scmp.eq.s32.totalorder %s15, 0
    %p110 = por %p108, %p109
    %p111 = scmp.le.s32.totalorder 1, %s9
    %p112 = scmp.lt.s32.totalorder %s9, 3
    %p113 = pnand %p111, %p112
    %p114 = pneg %p113
    // Predicated region
    $region9: #{forward.53} parent=5 // pred_check
      _
    $region10: #{forward.53} parent=5 // pred_check_branch
      %116 = sbr.rel (%p113) target = $region12
    $region11: #{forward.53} parent=5 // pred_region
      %s117 = ssub.s32 %s9, 1
      // Predicated region
      $region13: #{forward.53} parent=11 // pred_check
        %p118 = pneg %p56
      $region14: #{forward.53} parent=11 // pred_check_branch
        %120 = sbr.rel (%p118) target = $region16
      $region15: #{forward.53} parent=11 // pred_region
        _
      $region16: #{forward.53} parent=11 // pred_fallthru
        _
      // Predicated region
      $region17: #{forward.53} parent=11 // pred_check
        %p121 = pneg %p77
      $region18: #{forward.53} parent=11 // pred_check_branch
        %123 = sbr.rel (%p121) target = $region20
      $region19: #{forward.53} parent=11 // pred_region
        _
      $region20: #{forward.53} parent=11 // pred_fallthru
        _
    $region12: #{forward.53} parent=5 // pred_fallthru
      _
    %p124 = scmp.lt.s32.totalorder %s9, 2
    // Predicated region
    $region21: #{forward.53} parent=5 // pred_check
      %p125 = pneg %p124
    $region22: #{forward.53} parent=5 // pred_check_branch
      %127 = sbr.rel (%p125) target = $region24
    $region23: #{forward.53} parent=5 // pred_region
      // Predicated region
      $region25: #{forward.53} parent=23 // pred_check
        %p128 = pneg %p29
      $region26: #{forward.53} parent=23 // pred_check_branch
        %130 = sbr.rel (%p128) target = $region28
      $region27: #{forward.53} parent=23 // pred_region
        %p131 = scmp.lt.s32.totalorder %s9, 1
        %s132 = scalar_select %p131, %s9, 1
        %s133 = smul.addr %s132, 6
        %s134 = smul.addr %s133, 2
        %s135 = scalar_lea.vmem %s0, %s134
      $region28: #{forward.53} parent=23 // pred_fallthru
        _
    $region24: #{forward.53} parent=5 // pred_fallthru
      _
    %p136 = scmp.le.s32.totalorder 1, %s9
    %p137 = scmp.lt.s32.totalorder %s9, 3
    %p138 = pnand %p136, %p137
    %p139 = pneg %p138
    // Predicated region
    $region29: #{forward.53} parent=5 // pred_check
      _
    $region30: #{forward.53} parent=5 // pred_check_branch
      %141 = sbr.rel (%p138) target = $region32
    $region31: #{forward.53} parent=5 // pred_region
      %s142 = ssub.s32 %s9, 1
      %p143 = scmp.lt.s32.totalorder %s14, 1
      %s144 = scalar_select %p143, %s14, 1
      %s145 = smul.addr %s144, 6
      %s146 = smul.addr %s145, 2
      %s147 = scalar_lea.vmem %s0, %s146
      %p148 = pneg %p35
      %p149 = pneg %p32
      %p150 = pneg %p56
      %p151 = pneg %p53
      %p152 = pneg %p77
      %p153 = pneg %p74
      %p154 = pneg %p103
      %p155 = pneg %p100
      %p156 = scmp.lt.s32.totalorder %s14, 1
      %s157 = scalar_select %p156, %s14, 1
      %s158 = smul.addr %s157, 2
      %s159 = scalar_lea.vmem %s3, %s158
      %p160 = scmp.lt.s32.totalorder %s14, 1
      %s161 = scalar_select %p160, %s14, 1
      %s162 = smul.addr %s161, 6
      %s163 = smul.addr %s162, 2
      %s164 = scalar_lea.vmem %s0, %s163
      %p165 = scmp.lt.s32.totalorder %s14, 1
      %s166 = scalar_select %p165, %s14, 1
      %s167 = smul.addr %s166, 2
      %s168 = scalar_lea.vmem %s3, %s167
      %v169 = vld [vmem:[%s164] sm:$0xf]
      %v170 = vld [vmem:[%s164 + $0x4] sm:$0xf]
      %v171 = vld [vmem:[%s164 + $0x8] sm:$0xf]
      %v172 = vld [vmem:[%s1] sm:$0x3]
      %v173 = vunpack.c.l.bf16 %v169
      %v176 = vunpack.c.l.s4 286326784
      %v177 = vunpack.c.0.s8 %v176
      %v178 = vperm.slane %v172, %v177
      %v180 = vmul.f32 %v173, %v178
      %s181 = scalar_lea.vmem %s1, 2
      %v182 = vld [vmem:[%s181] sm:$0x3]
      %v185 = vunpack.c.l.s4 286326784
      %v186 = vunpack.c.0.s8 %v185
      %v187 = vperm.slane %v182, %v186
      %v189 = vmul.f32 %v173, %v187
      %v191 = vrot.slane %v189, 5
      %v192 = vrot.slane %v191, 4
      %v194 = vadd.f32 %v180, %v192
      %s195 = scalar_lea.vmem %s1, 4
      %v196 = vld [vmem:[%s195] sm:$0x3]
      %v199 = vunpack.c.l.s4 286326784
      %v200 = vunpack.c.0.s8 %v199
      %v201 = vperm.slane %v196, %v200
      %v203 = vmul.f32 %v173, %v201
      %v205 = vrot.slane %v203, 6
      %v206 = vrot.slane %v205, 4
      %v208 = vadd.f32 %v194, %v206
      %s209 = scalar_lea.vmem %s1, 6
      %v210 = vld [vmem:[%s209] sm:$0x3]
      %v211 = vunpack.c.l.bf16 %v170
      %v214 = vunpack.c.l.s4 286326784
      %v215 = vunpack.c.0.s8 %v214
      %v216 = vperm.slane %v210, %v215
      %v218 = vmul.f32 %v211, %v216
      %v219 = vadd.f32 %v208, %v218
      %s220 = scalar_lea.vmem %s1, 8
      %v221 = vld [vmem:[%s220] sm:$0x3]
      %v224 = vunpack.c.l.s4 286326784
      %v225 = vunpack.c.0.s8 %v224
      %v226 = vperm.slane %v221, %v225
      %v228 = vmul.f32 %v211, %v226
      %v230 = vrot.slane %v228, 5
      %v231 = vrot.slane %v230, 4
      %v233 = vadd.f32 %v219, %v231
      %s234 = scalar_lea.vmem %s1, 10
      %v235 = vld [vmem:[%s234] sm:$0x3]
      %v238 = vunpack.c.l.s4 286326784
      %v239 = vunpack.c.0.s8 %v238
      %v240 = vperm.slane %v235, %v239
      %v242 = vmul.f32 %v211, %v240
      %v244 = vrot.slane %v242, 6
      %v245 = vrot.slane %v244, 4
      %v247 = vadd.f32 %v233, %v245
      %s248 = scalar_lea.vmem %s1, 12
      %v249 = vld [vmem:[%s248] sm:$0x3]
      %v250 = vunpack.c.l.bf16 %v171
      %v253 = vunpack.c.l.s4 286326784
      %v254 = vunpack.c.0.s8 %v253
      %v255 = vperm.slane %v249, %v254
      %v257 = vmul.f32 %v250, %v255
      %v258 = vadd.f32 %v247, %v257
      %s259 = scalar_lea.vmem %s1, 14
      %v260 = vld [vmem:[%s259] sm:$0x3]
      %v263 = vunpack.c.l.s4 286326784
      %v264 = vunpack.c.0.s8 %v263
      %v265 = vperm.slane %v260, %v264
      %v267 = vmul.f32 %v250, %v265
      %v269 = vrot.slane %v267, 5
      %v270 = vrot.slane %v269, 4
      %v272 = vadd.f32 %v258, %v270
      %s273 = scalar_lea.vmem %s1, 16
      %v274 = vld [vmem:[%s273] sm:$0x3]
      %v277 = vunpack.c.l.s4 286326784
      %v278 = vunpack.c.0.s8 %v277
      %v279 = vperm.slane %v274, %v278
      %v281 = vmul.f32 %v250, %v279
      %v283 = vrot.slane %v281, 6
      %v284 = vrot.slane %v283, 4
      %v286 = vadd.f32 %v272, %v284
      %v287 = vld [vmem:[%s2] sm:$0x3]
      %v290 = vunpack.c.l.s4 286326784
      %v291 = vunpack.c.0.s8 %v290
      %v292 = vperm.slane %v287, %v291
      %v294 = vadd.f32 %v286, %v292
      %v295 = vmax.f32 %v294, 0.0
      %v296 = vmin.f32 %v295, 6.0
      %v298 = vperm.slane %v296, 0
      %v299 = vperm.slane %v296, 4
      %v302 = vpack.c.bf16 %v299, %v298
      %v304 = vrot.slane %v302, 3
      %vm305 = vcmask 1040384
      %v308 = vsel %vm305, %v302, %v304
      %vm310 = vcmask 1040384
      %vm311 = vsmask.f32 256
      %vm312 = vmand %vm310, %vm311
      %vm313 = vcmask 1041409
      %vm314 = vsmask.f32 1280
      %vm315 = vmand %vm313, %vm314
      %vm316 = vmor %vm315, %vm312
      %v317 = vld [vmem:[%s168] sm:$0x3]
      %v318 = vsel %vm316, %v308, %v317
      %319 = vst [vmem:[%s168] sm:$0x3] %v318
      %p320 = scmp.lt.s32.totalorder %s14, 1
      %s321 = scalar_select %p320, %s14, 1
      %s322 = smul.addr %s321, 2
      %s323 = scalar_lea.vmem %s3, %s322
      // Predicated region
      $region33: #{forward.53} parent=31 // pred_check
        %p324 = pneg %p100
      $region34: #{forward.53} parent=31 // pred_check_branch
        %326 = sbr.rel (%p324) target = $region36
      $region35: #{forward.53} parent=31 // pred_region
        _
      $region36: #{forward.53} parent=31 // pred_fallthru
        _
    $region32: #{forward.53} parent=5 // pred_fallthru
      _
    %p327 = scmp.le.s32.totalorder 2, %s9
    // Predicated region
    $region37: #{forward.53} parent=5 // pred_check
      %p328 = pneg %p327
    $region38: #{forward.53} parent=5 // pred_check_branch
      %330 = sbr.rel (%p328) target = $region40
    $region39: #{forward.53} parent=5 // pred_region
      %s331 = ssub.s32 %s9, 2
      // Predicated region
      $region41: #{forward.53} parent=39 // pred_check
        %p332 = pneg %p106
      $region42: #{forward.53} parent=39 // pred_check_branch
        %334 = sbr.rel (%p332) target = $region44
      $region43: #{forward.53} parent=39 // pred_region
        %p335 = scmp.lt.s32.totalorder %s15, 1
        %s336 = scalar_select %p335, %s15, 1
        %s337 = smul.addr %s336, 2
        %s338 = scalar_lea.vmem %s3, %s337
      $region44: #{forward.53} parent=39 // pred_fallthru
        _
    $region40: #{forward.53} parent=5 // pred_fallthru
      _
  $region6: #{forward.53} parent=0 // loop_footer
    %s13 = sadd.s32 1, %s9
  $region7: #{forward.53} parent=0 // loop_footer_branch
    %8 = sbr.rel target = $region3
  $region8: #{forward.53} parent=0 // loop_exit
    _

// kernel: forward.54
$region0: #{forward.54}
  #allocation0 [shape = 'u32[]', space=smem, size = 0x4, offset = 0x4, fixed_abs, tag = 'smem constant byte address 0x4 - core index']
  #allocation1 [shape = 'u32[72,128]{1,0:T(1,128)}', space=vmem, size = 0x9000, scoped, tag = 'internal scratch']
  %s0 = inlined_call_operand.vmem [shape: bf16[2,256], index: 0, kind: input, shape index: {}]
  %s1 = inlined_call_operand.vmem [shape: bf16[256,256], index: 1, kind: input, shape index: {}]
  %s2 = inlined_call_operand.vmem [shape: f32[1,256], index: 2, kind: input, shape index: {}]
  %s3 = inlined_call_operand.vmem [shape: bf16[2,256], index: 3, kind: output, shape index: {}]
  %s4 = sld [smem:[#allocation0]]
  $region22: #{forward.54} parent=0
    _
  %s6 = ssub.s32 1, %s4
  %s7 = scalar_select 0, %s6, %s4
  // Predicated region
  $region2: #{forward.54} parent=0 // pred_check
    _
  $region3: #{forward.54} parent=0 // pred_check_branch
    %9 = sbr.rel (0) target = $region5
  $region4: #{forward.54} parent=0 // pred_region
    _
  $region5: #{forward.54} parent=0 // pred_fallthru
    _
  // Predicated region
  $region6: #{forward.54} parent=0 // pred_check
    _
  $region7: #{forward.54} parent=0 // pred_check_branch
    %11 = sbr.rel (0) target = $region9
  $region8: #{forward.54} parent=0 // pred_region
    _
  $region9: #{forward.54} parent=0 // pred_fallthru
    _
  // Predicated region
  $region10: #{forward.54} parent=0 // pred_check
    _
  $region11: #{forward.54} parent=0 // pred_check_branch
    %13 = sbr.rel (0) target = $region13
  $region12: #{forward.54} parent=0 // pred_region
    _
  $region13: #{forward.54} parent=0 // pred_fallthru
    _
  %v14 = vld [vmem:[%s0] sm:$0x3]
  %v15 = vld [vmem:[%s1] sm:$0xff]
  %v16 = vld [vmem:[%s1 + $0x8] sm:$0xff]
  %v17 = vld [vmem:[%s1 + $0x10] sm:$0xff]
  %v18 = vld [vmem:[%s1 + $0x18] sm:$0xff]
  %v19 = vld [vmem:[%s1 + $0x20] sm:$0xff]
  %v20 = vld [vmem:[%s1 + $0x28] sm:$0xff]
  %v21 = vld [vmem:[%s1 + $0x30] sm:$0xff]
  %v22 = vld [vmem:[%s1 + $0x38] sm:$0xff]
  %v23 = vld [vmem:[%s1 + $0x40] sm:$0xff]
  %v24 = vld [vmem:[%s1 + $0x48] sm:$0xff]
  %v25 = vld [vmem:[%s1 + $0x50] sm:$0xff]
  %v26 = vld [vmem:[%s1 + $0x58] sm:$0xff]
  %v27 = vld [vmem:[%s1 + $0x60] sm:$0xff]
  %v28 = vld [vmem:[%s1 + $0x68] sm:$0xff]
  %v29 = vld [vmem:[%s1 + $0x70] sm:$0xff]
  %v30 = vld [vmem:[%s1 + $0x78] sm:$0xff]
  %v31 = vld [vmem:[%s1 + $0x80] sm:$0xff]
  %v32 = vld [vmem:[%s1 + $0x88] sm:$0xff]
  %v33 = vld [vmem:[%s1 + $0x90] sm:$0xff]
  %v34 = vld [vmem:[%s1 + $0x98] sm:$0xff]
  %v35 = vld [vmem:[%s1 + $0xa0] sm:$0xff]
  %v36 = vld [vmem:[%s1 + $0xa8] sm:$0xff]
  %v37 = vld [vmem:[%s1 + $0xb0] sm:$0xff]
  %v38 = vld [vmem:[%s1 + $0xb8] sm:$0xff]
  %v39 = vld [vmem:[%s1 + $0xc0] sm:$0xff]
  %v40 = vld [vmem:[%s1 + $0xc8] sm:$0xff]
  %v41 = vld [vmem:[%s1 + $0xd0] sm:$0xff]
  %v42 = vld [vmem:[%s1 + $0xd8] sm:$0xff]
  %v43 = vld [vmem:[%s1 + $0xe0] sm:$0xff]
  %v44 = vld [vmem:[%s1 + $0xe8] sm:$0xff]
  %v45 = vld [vmem:[%s1 + $0xf0] sm:$0xff]
  %v46 = vld [vmem:[%s1 + $0xf8] sm:$0xff]
  %v47 = vld [vmem:[%s2] sm:$0x3]
  %v49 = vperm.slane %v47, 0
  %v50 = vperm.slane %v47, 1
  %54 = vst [vmem:[#allocation1] ss:$9 sm:$0xff] %v14
  %v55 = vld [vmem:[#allocation1] sm:$0xff]
  %v56 = vld [vmem:[#allocation1 + $0x9] sm:$0xff]
  %v91 = vunpack.c.l.b16 %v15
  %v92 = vunpack.c.h.b16 %v15
  %v93 = vunpack.c.l.b16 %v16
  %v94 = vunpack.c.h.b16 %v16
  %v95 = vunpack.c.l.b16 %v17
  %v96 = vunpack.c.h.b16 %v17
  %v97 = vunpack.c.l.b16 %v18
  %v98 = vunpack.c.h.b16 %v18
  %v99 = vunpack.c.l.b16 %v19
  %v100 = vunpack.c.h.b16 %v19
  %v101 = vunpack.c.l.b16 %v20
  %v102 = vunpack.c.h.b16 %v20
  %v103 = vunpack.c.l.b16 %v21
  %v104 = vunpack.c.h.b16 %v21
  %v105 = vunpack.c.l.b16 %v22
  %v106 = vunpack.c.h.b16 %v22
  %v107 = vunpack.c.l.b16 %v23
  %v108 = vunpack.c.h.b16 %v23
  %v109 = vunpack.c.l.b16 %v24
  %v110 = vunpack.c.h.b16 %v24
  %v111 = vunpack.c.l.b16 %v25
  %v112 = vunpack.c.h.b16 %v25
  %v113 = vunpack.c.l.b16 %v26
  %v114 = vunpack.c.h.b16 %v26
  %v115 = vunpack.c.l.b16 %v27
  %v116 = vunpack.c.h.b16 %v27
  %v117 = vunpack.c.l.b16 %v28
  %v118 = vunpack.c.h.b16 %v28
  %v119 = vunpack.c.l.b16 %v29
  %v120 = vunpack.c.h.b16 %v29
  %v121 = vunpack.c.l.b16 %v30
  %v122 = vunpack.c.h.b16 %v30
  %v123 = vunpack.c.l.b16 %v31
  %v124 = vunpack.c.h.b16 %v31
  %v125 = vunpack.c.l.b16 %v32
  %v126 = vunpack.c.h.b16 %v32
  %v127 = vunpack.c.l.b16 %v33
  %v128 = vunpack.c.h.b16 %v33
  %v129 = vunpack.c.l.b16 %v34
  %v130 = vunpack.c.h.b16 %v34
  %v131 = vunpack.c.l.b16 %v35
  %v132 = vunpack.c.h.b16 %v35
  %v133 = vunpack.c.l.b16 %v36
  %v134 = vunpack.c.h.b16 %v36
  %v135 = vunpack.c.l.b16 %v37
  %v136 = vunpack.c.h.b16 %v37
  %v137 = vunpack.c.l.b16 %v38
  %v138 = vunpack.c.h.b16 %v38
  %v139 = vunpack.c.l.b16 %v39
  %v140 = vunpack.c.h.b16 %v39
  %v141 = vunpack.c.l.b16 %v40
  %v142 = vunpack.c.h.b16 %v40
  %v143 = vunpack.c.l.b16 %v41
  %v144 = vunpack.c.h.b16 %v41
  %v145 = vunpack.c.l.b16 %v42
  %v146 = vunpack.c.h.b16 %v42
  %v147 = vunpack.c.l.b16 %v43
  %v148 = vunpack.c.h.b16 %v43
  %v149 = vunpack.c.l.b16 %v44
  %v150 = vunpack.c.h.b16 %v44
  %v151 = vunpack.c.l.b16 %v45
  %v152 = vunpack.c.h.b16 %v45
  %v153 = vunpack.c.l.b16 %v46
  %v154 = vunpack.c.h.b16 %v46
  %v155 = vpack.c.b16 %v93, %v91
  %v156 = vpack.c.b16 %v94, %v92
  %v157 = vpack.c.b16 %v97, %v95
  %v158 = vpack.c.b16 %v98, %v96
  %v159 = vpack.c.b16 %v101, %v99
  %v160 = vpack.c.b16 %v102, %v100
  %v161 = vpack.c.b16 %v105, %v103
  %v162 = vpack.c.b16 %v106, %v104
  %v163 = vpack.c.b16 %v109, %v107
  %v164 = vpack.c.b16 %v110, %v108
  %v165 = vpack.c.b16 %v113, %v111
  %v166 = vpack.c.b16 %v114, %v112
  %v167 = vpack.c.b16 %v117, %v115
  %v168 = vpack.c.b16 %v118, %v116
  %v169 = vpack.c.b16 %v121, %v119
  %v170 = vpack.c.b16 %v122, %v120
  %v171 = vpack.c.b16 %v125, %v123
  %v172 = vpack.c.b16 %v126, %v124
  %v173 = vpack.c.b16 %v129, %v127
  %v174 = vpack.c.b16 %v130, %v128
  %v175 = vpack.c.b16 %v133, %v131
  %v176 = vpack.c.b16 %v134, %v132
  %v177 = vpack.c.b16 %v137, %v135
  %v178 = vpack.c.b16 %v138, %v136
  %v179 = vpack.c.b16 %v141, %v139
  %v180 = vpack.c.b16 %v142, %v140
  %v181 = vpack.c.b16 %v145, %v143
  %v182 = vpack.c.b16 %v146, %v144
  %v183 = vpack.c.b16 %v149, %v147
  %v184 = vpack.c.b16 %v150, %v148
  %v185 = vpack.c.b16 %v153, %v151
  %v186 = vpack.c.b16 %v154, %v152
  %219 = vmatpush.bf16.msra.mxu0 %v169
  %220 = vmatpush.bf16.msra.mxu0 %v167
  %221 = vmatpush.bf16.msra.mxu0 %v165
  %222 = vmatpush.bf16.msra.mxu0 %v163
  %223 = vmatpush.bf16.msra.mxu0 %v161
  %224 = vmatpush.bf16.msra.mxu0 %v159
  %225 = vmatpush.bf16.msra.mxu0 %v157
  %226 = vmatpush.bf16.msra.mxu0 %v155
  %227 = vmatmul.bf16.gmra.mxu0 %v55
  %v228 = vpop.f32.mrf.mxu0
  %v229 = vadd.f32 %v49, %v228
  %v230 = vpop.f32.mrf.mxu0
  %231 = vdwg.mxu0
  %232 = vmatpush.bf16.msra.mxu0 %v185
  %233 = vmatpush.bf16.msra.mxu0 %v183
  %234 = vmatpush.bf16.msra.mxu0 %v181
  %235 = vmatpush.bf16.msra.mxu0 %v179
  %236 = vmatpush.bf16.msra.mxu0 %v177
  %237 = vmatpush.bf16.msra.mxu0 %v175
  %238 = vmatpush.bf16.msra.mxu0 %v173
  %239 = vmatpush.bf16.msra.mxu0 %v171
  %240 = vmatmul.bf16.gmra.mxu0 %v56
  %v241 = vpop.f32.mrf.mxu0
  %v242 = vadd.f32 %v229, %v241
  %v243 = vpop.f32.mrf.mxu0
  %244 = vdwg.mxu0
  %245 = vmatpush.bf16.msra.mxu0 %v170
  %246 = vmatpush.bf16.msra.mxu0 %v168
  %247 = vmatpush.bf16.msra.mxu0 %v166
  %248 = vmatpush.bf16.msra.mxu0 %v164
  %249 = vmatpush.bf16.msra.mxu0 %v162
  %250 = vmatpush.bf16.msra.mxu0 %v160
  %251 = vmatpush.bf16.msra.mxu0 %v158
  %252 = vmatpush.bf16.msra.mxu0 %v156
  %253 = vmatmul.bf16.gmra.mxu0 %v55
  %v254 = vpop.f32.mrf.mxu0
  %v255 = vadd.f32 %v50, %v254
  %v256 = vpop.f32.mrf.mxu0
  %257 = vdwg.mxu0
  %258 = vmatpush.bf16.msra.mxu0 %v186
  %259 = vmatpush.bf16.msra.mxu0 %v184
  %260 = vmatpush.bf16.msra.mxu0 %v182
  %261 = vmatpush.bf16.msra.mxu0 %v180
  %262 = vmatpush.bf16.msra.mxu0 %v178
  %263 = vmatpush.bf16.msra.mxu0 %v176
  %264 = vmatpush.bf16.msra.mxu0 %v174
  %265 = vmatpush.bf16.msra.mxu0 %v172
  %266 = vmatmul.bf16.gmra.mxu0 %v56
  %v267 = vpop.f32.mrf.mxu0
  %v268 = vadd.f32 %v255, %v267
  %v269 = vpop.f32.mrf.mxu0
  %270 = vdwg.mxu0
  %v271 = vmax.f32 %v242, 0.0
  %v272 = vmax.f32 %v268, 0.0
  %v273 = vmin.f32 %v271, 6.0
  %v274 = vmin.f32 %v272, 6.0
  %v275 = vpack.c.bf16 %v274, %v273
  %v277 = vrot.slane %v275, 3
  %vm278 = vcmask 1040384
  %v281 = vsel %vm278, %v275, %v277
  %283 = vst [vmem:[%s3] sm:$0x3] %v281
  // Predicated region
  $region14: #{forward.54} parent=0 // pred_check
    _
  $region15: #{forward.54} parent=0 // pred_check_branch
    %285 = sbr.rel (0) target = $region17
  $region16: #{forward.54} parent=0 // pred_region
    _
  $region17: #{forward.54} parent=0 // pred_fallthru
    _
  // Predicated region
  $region18: #{forward.54} parent=0 // pred_check
    _
  $region19: #{forward.54} parent=0 // pred_check_branch
    %287 = sbr.rel (0) target = $region21
  $region20: #{forward.54} parent=0 // pred_region
    _
  $region21: #{forward.54} parent=0 // pred_fallthru
    _

// kernel: forward.55
$region0: #{forward.55}
  #allocation0 [shape = 'u32[]', space=smem, size = 0x4, offset = 0x4, fixed_abs, tag = 'smem constant byte address 0x4 - core index']
  #allocation1 [shape = 'u32[72,128]{1,0:T(1,128)}', space=vmem, size = 0x9000, scoped, tag = 'internal scratch']
  %s0 = inlined_call_operand.vmem [shape: bf16[2,1,256], index: 0, kind: input, shape index: {}]
  %s1 = inlined_call_operand.hbm [shape: f32[2,1,256], index: 1, kind: output, shape index: {}]
  %s2 = sld [smem:[#allocation0]]
  $region37: #{forward.55} parent=0
    _
  %s4 = ssub.s32 1, %s2
  %s5 = scalar_select 0, %s4, %s2
  $region1: #{forward.55} parent=0
    #allocation2 [shape = 'u8[2048]{0}', space=vmem, size = 0x800, scoped, tag = 'output window, operand 0']
    #allocation3 [shape = 's32[2]{0}', space=sflag, size = 0x8, scoped, tag = 'scoped memory for forward.55']
    %6 = vsyncpa [#allocation3], 0
    %s7 = scalar_lea.sflag [#allocation3], 1
    %8 = vsyncpa %s7, 0
    loop: start=0, step=1, limit=4
    $region2: #{forward.55} parent=1 // loop_pre_header
      _
    $region3: #{forward.55} parent=1 // loop_header
      %s10 = sphi 0, %s14
      %p11 = scmp.ge.s32.totalorder %s10, 4
      %s20 = sphi 0, %s22
      %s23 = sphi 0, %s20
      %s24 = sphi 0, %s23
      %s40 = sphi 0, %s24
      %s46 = sphi 0, %s48
      %s49 = sphi 0, %s46
      %s50 = sphi 0, %s49
      %s66 = sphi 0, %s50
    $region4: #{forward.55} parent=1 // loop_header_branch
      %13 = sbr.rel (%p11) target = $region8
    $region5: #{forward.55} parent=1 // loop_body
      %s15 = ssub.s32 %s10, 1
      %s16 = ssub.s32 %s10, 2
      %s17 = sadd.s32 %s10, 1
      %s18 = ssub.s32 %s10, %s17
      %p19 = scmp.eq.s32.totalorder %s18, 0
      %s21 = sadd.s32 %s20, 1
      %s22 = scalar_select %p19, %s20, %s21
      %p25 = pneg %p19
      %p26 = scmp.eq.s32.totalorder %s10, 1
      %p27 = por %p25, %p26
      %p28 = scmp.ne.s32.totalorder %s20, %s23
      %p29 = scmp.eq.s32.totalorder %s10, 0
      %p30 = por %p28, %p29
      %p31 = scmp.ne.s32.totalorder %s20, %s23
      %p32 = scmp.eq.s32.totalorder %s15, 1
      %p33 = por %p31, %p32
      %p34 = scmp.ne.s32.totalorder %s23, %s24
      %p35 = scmp.eq.s32.totalorder %s15, 0
      %p36 = por %p34, %p35
      %p37 = scmp.ne.s32.totalorder %s23, %s24
      %p38 = scmp.eq.s32.totalorder %s16, 1
      %p39 = por %p37, %p38
      %p41 = scmp.ne.s32.totalorder %s24, %s40
      %p42 = scmp.eq.s32.totalorder %s16, 0
      %p43 = por %p41, %p42
      %s44 = ssub.s32 %s10, %s17
      %p45 = scmp.eq.s32.totalorder %s44, 0
      %s47 = sadd.s32 %s46, 1
      %s48 = scalar_select %p45, %s46, %s47
      %p51 = pneg %p45
      %p52 = scmp.eq.s32.totalorder %s10, 1
      %p53 = por %p51, %p52
      %p54 = scmp.ne.s32.totalorder %s46, %s49
      %p55 = scmp.eq.s32.totalorder %s10, 0
      %p56 = por %p54, %p55
      %p57 = scmp.ne.s32.totalorder %s46, %s49
      %p58 = scmp.eq.s32.totalorder %s15, 1
      %p59 = por %p57, %p58
      %p60 = scmp.ne.s32.totalorder %s49, %s50
      %p61 = scmp.eq.s32.totalorder %s15, 0
      %p62 = por %p60, %p61
      %p63 = scmp.ne.s32.totalorder %s49, %s50
      %p64 = scmp.eq.s32.totalorder %s16, 1
      %p65 = por %p63, %p64
      %p67 = scmp.ne.s32.totalorder %s50, %s66
      %p68 = scmp.eq.s32.totalorder %s16, 0
      %p69 = por %p67, %p68
      %p70 = scmp.le.s32.totalorder 1, %s10
      %p71 = scmp.lt.s32.totalorder %s10, 3
      %p72 = pnand %p70, %p71
      %p73 = pneg %p72
      // Predicated region
      $region9: #{forward.55} parent=5 // pred_check
        _
      $region10: #{forward.55} parent=5 // pred_check_branch
        %75 = sbr.rel (%p72) target = $region12
      $region11: #{forward.55} parent=5 // pred_region
        %s76 = ssub.s32 %s10, 1
      $region12: #{forward.55} parent=5 // pred_fallthru
        _
      %p77 = scmp.lt.s32.totalorder %s10, 2
      // Predicated region
      $region13: #{forward.55} parent=5 // pred_check
        %p78 = pneg %p77
      $region14: #{forward.55} parent=5 // pred_check_branch
        %80 = sbr.rel (%p78) target = $region16
      $region15: #{forward.55} parent=5 // pred_region
        // Predicated region
        $region17: #{forward.55} parent=15 // pred_check
          %p81 = pneg %p30
        $region18: #{forward.55} parent=15 // pred_check_branch
          %83 = sbr.rel (%p81) target = $region20
        $region19: #{forward.55} parent=15 // pred_region
          %p84 = scmp.lt.s32.totalorder %s10, 1
          %s85 = scalar_select %p84, %s10, 1
          %s86 = smul.addr %s85, 2
          %s87 = scalar_lea.vmem %s0, %s86
        $region20: #{forward.55} parent=15 // pred_fallthru
          _
      $region16: #{forward.55} parent=5 // pred_fallthru
        _
      %p88 = scmp.le.s32.totalorder 1, %s10
      %p89 = scmp.lt.s32.totalorder %s10, 3
      %p90 = pnand %p88, %p89
      %p91 = pneg %p90
      // Predicated region
      $region21: #{forward.55} parent=5 // pred_check
        _
      $region22: #{forward.55} parent=5 // pred_check_branch
        %93 = sbr.rel (%p90) target = $region24
      $region23: #{forward.55} parent=5 // pred_region
        %s94 = ssub.s32 %s10, 1
        %p95 = scmp.lt.s32.totalorder %s15, 1
        %s96 = scalar_select %p95, %s15, 1
        %s97 = smul.addr %s96, 2
        %s98 = scalar_lea.vmem %s0, %s97
        %p99 = pneg %p36
        %p100 = pneg %p33
        %p101 = pneg %p62
        %p102 = pneg %p59
        %s103 = sand.u32 %s49, 1
        %s104 = scalar_lea.sflag [#allocation3], %s103
        %s105 = sand.u32 %s49, 1
        %s106 = smul.addr %s105, 2
        %s107 = scalar_lea.vmem [#allocation2], %s106
        %p108 = scmp.lt.s32.totalorder %s15, 1
        %s109 = scalar_select %p108, %s15, 1
        %s110 = smul.addr %s109, 2
        %s111 = scalar_lea.vmem %s0, %s110
        %v112 = vld [vmem:[%s111] sm:$0x3]
        %v113 = vunpack.c.l.bf16 %v112
        %v114 = vadd.f32 %v113, 0.0
        %v116 = vrot.slane %v114, 1
        %v117 = vrot.slane %v114, 2
        %v118 = vrot.slane %v114, 3
        %vm119 = vcmask 1040384
        %v120 = vsel %vm119, %v114, %v116
        %vm121 = vcmask 1042434
        %v122 = vsel %vm121, %v117, %v118
        %vm123 = vcmask 1041408
        %v124 = vsel %vm123, %v120, %v122
        %v126 = vlaneseq
        %vm127 = vcmp.ge.s32.totalorder %v126, 0
        %vm128 = vcmp.lt.s32.totalorder %v126, 256
        %vm129 = vmand %vm127, %vm128
        %130 = vst.msk [vmem:[%s107] sm:$0x3] %vm129, %v124
        %s131 = sand.u32 %s49, 1
        %s132 = scalar_lea.sflag [#allocation3], %s131
        %s133 = sand.u32 %s49, 1
        %s134 = smul.addr %s133, 2
        %s135 = scalar_lea.vmem [#allocation2], %s134
        // Predicated region
        $region25: #{forward.55} parent=23 // pred_check
          %p136 = pneg %p59
        $region26: #{forward.55} parent=23 // pred_check_branch
          %138 = sbr.rel (%p136) target = $region28
        $region27: #{forward.55} parent=23 // pred_region
          %140 = vsyncadd %s132, 0
          %s141 = smul.addr %s15, 2
          %s142 = scalar_lea.hbm %s1, %s141
          %s144 = sshll.u32 %s135, 4
          %s145 = int_to_ptr.vmem [resolvable:$true] %s144
          %s146 = sshll.u32 %s142, 4
          %s147 = int_to_ptr.hbm [resolvable:$true] %s146
          %149 = dma.vmem_to_hbm [thread:$0]  %s145, 32, %s147, %s132
        $region28: #{forward.55} parent=23 // pred_fallthru
          _
      $region24: #{forward.55} parent=5 // pred_fallthru
        _
      %p150 = scmp.le.s32.totalorder 2, %s10
      // Predicated region
      $region29: #{forward.55} parent=5 // pred_check
        %p151 = pneg %p150
      $region30: #{forward.55} parent=5 // pred_check_branch
        %153 = sbr.rel (%p151) target = $region32
      $region31: #{forward.55} parent=5 // pred_region
        %s154 = ssub.s32 %s10, 2
        // Predicated region
        $region33: #{forward.55} parent=31 // pred_check
          %p155 = pneg %p65
        $region34: #{forward.55} parent=31 // pred_check_branch
          %157 = sbr.rel (%p155) target = $region36
        $region35: #{forward.55} parent=31 // pred_region
          %s158 = sand.u32 %s50, 1
          %s159 = scalar_lea.sflag [#allocation3], %s158
          %s160 = sand.u32 %s50, 1
          %s161 = smul.addr %s160, 2
          %s162 = scalar_lea.vmem [#allocation2], %s161
          %164 = dma.done %s159, 32
        $region36: #{forward.55} parent=31 // pred_fallthru
          _
      $region32: #{forward.55} parent=5 // pred_fallthru
        _
    $region6: #{forward.55} parent=1 // loop_footer
      %s14 = sadd.s32 1, %s10
    $region7: #{forward.55} parent=1 // loop_footer_branch
      %9 = sbr.rel target = $region3
    $region8: #{forward.55} parent=1 // loop_exit
      _
    %165 = vsyncpa [#allocation3], 1
    %s166 = scalar_lea.sflag [#allocation3], 1
    %167 = vsyncpa %s166, 1

</llo_original>
